<compile_context>
chip_gen: v7x
topology: tpu7x:2x2x1
jax: 0.10.0
libtpu: 0.0.40
codegen_flags: <defaults>
</compile_context>

<pallas_src>
import functools

import jax
import jax.numpy as jnp
from jax.experimental import pallas as pl
from jax.experimental.pallas import tpu as pltpu

EPS = 1e-5     # nn.InstanceNorm2d default eps
LANE = 128     # TPU lane width / MXU N dim


def _round_up(x, m):
    return (x + m - 1) // m * m


def _single_buffer_kwargs():
    # Weights (and the column-index vector) have constant index_maps, so the
    # default double buffering only wastes VMEM.  Fall back silently if this
    # Pallas version rejects pl.Buffered(1).
    try:
        kw = {"pipeline_mode": pl.Buffered(1)}
        pl.BlockSpec((8, LANE), lambda i: (0, 0), **kw)   # construction probe
        return kw
    except Exception:
        return {}


_SINGLE_BUF = _single_buffer_kwargs()


# ---------------------------------------------------------------------------
# Fused kernel: reflect-pad -> conv3x3 -> IN -> ReLU -> reflect-pad ->
#               conv3x3 -> IN -> residual add   (one batch sample per step)
# ---------------------------------------------------------------------------
def _resnet_block_kernel(col_ref, x_ref, w1_ref, w2_ref, out_ref, pad_ref, *,
                         H, W, Wp, compute_dtype):
    # Flat "row-slot" layout: activation pixel (i, j) lives at flat row
    # i*Wp + j (j < W valid, remaining columns junk).  The padded scratch uses
    # the same stride: padded pixel (r, c), r in [-1, H], c in [-1, W], lives
    # at flat row (r + 2)*Wp + c, so every conv tap is one contiguous slice.
    R = H * Wp
    Cp = x_ref.shape[-1]
    n_valid = H * W

    col = col_ref[...]                            # (R, 1) int32: flat row % Wp
    valid_f = (col < W).astype(jnp.float32)       # interior columns
    is_right = col == W                           # right mirror-pad column
    is_left = col == Wp - 1                       # left mirror-pad column

    # The tap windows touch one row of the leading and one row of the trailing
    # scratch slot that the fill never writes; zero them so masked junk rows
    # stay finite (stale VMEM could hold NaNs).
    pad_ref[0:Wp, :] = jnp.zeros((Wp, Cp), compute_dtype)
    pad_ref[(H + 3) * Wp:(H + 4) * Wp, :] = jnp.zeros((Wp, Cp), compute_dtype)

    def fill(src):
        # Reflection pad, written directly from `src` (f32, flat layout):
        #  * rolls place the left/right mirror columns into the pad slots,
        #  * one contiguous aligned copy writes interior + side-pad columns,
        #  * top/bottom mirror rows are row-slot copies of rows 1 / H-2,
        #  * 3 single-row fixes repair the roll wrap-around corners.
        rpad = pltpu.roll(src, shift=2, axis=0)        # [p] = src[p - 2]
        lpad = pltpu.roll(src, shift=R - 2, axis=0)    # [p] = src[p + 2]
        s_pad = jnp.where(is_left, lpad,
                          jnp.where(is_right, rpad, src)).astype(compute_dtype)
        pad_ref[2 * Wp:(H + 2) * Wp, :] = s_pad                      # interior
        pad_ref[Wp:2 * Wp, :] = s_pad[Wp:2 * Wp, :]                  # top row
        pad_ref[(H + 2) * Wp:(H + 3) * Wp, :] = (                    # bottom row
            s_pad[(H - 2) * Wp:(H - 1) * Wp, :])
        pad_ref[Wp - 1:Wp, :] = (                                    # (-1,-1)
            src[Wp + 1:Wp + 2, :].astype(compute_dtype))
        pad_ref[2 * Wp - 1:2 * Wp, :] = (                            # (0,-1)
            src[1:2, :].astype(compute_dtype))
        pad_ref[(H + 2) * Wp - 1:(H + 2) * Wp, :] = (                # (H,-1)
            src[(H - 2) * Wp + 1:(H - 2) * Wp + 2, :].astype(compute_dtype))

    def conv3x3(w_ref):
        # 9 shifted, accumulating MXU matmuls over contiguous row slices of the
        # flat padded scratch (f32 accumulation).
        # TODO(synk): on v6e/v7x, concatenate taps along K (pairwise or full
        # in-VMEM im2col) to fill the 256-deep MXU; K=Cp already matches
        # v5e's 128-deep MXU, so keep 9 separate matmuls there.
        acc = None
        for ky in range(3):
            for kx in range(3):
                start = (ky + 1) * Wp + (kx - 1)
                win = pad_ref[start:start + R, :]
                part = jnp.dot(win, w_ref[ky * 3 + kx],
                               preferred_element_type=jnp.float32)
                acc = part if acc is None else acc + part
        return acc

    def instance_norm(y):
        # Biased per-channel statistics over the valid (interior) rows only.
        ym = y * valid_f
        s1 = jnp.sum(ym, axis=0, keepdims=True)
        s2 = jnp.sum(ym * y, axis=0, keepdims=True)
        inv_n = 1.0 / n_valid
        mean = s1 * inv_n
        var = jnp.maximum(s2 * inv_n - mean * mean, 0.0)
        return (y - mean) * jax.lax.rsqrt(var + EPS)

    # Stage 1: reflect-pad -> conv -> IN -> ReLU.  (Conv bias omitted: a
    # per-channel bias is exactly cancelled by the non-affine IN mean.)
    fill(x_ref[0])
    h = jnp.maximum(instance_norm(conv3x3(w1_ref)), 0.0)

    # Stage 2: reflect-pad -> conv -> IN, then residual add (x re-read from the
    # input ref so it is not held live across the 18 matmuls).
    fill(h)
    y = instance_norm(conv3x3(w2_ref))
    out_ref[0] = (x_ref[0] + y).astype(out_ref.dtype)


# ---------------------------------------------------------------------------
# Wrapper: layout prep (NCHW -> flat row-slot NHWC, lane/channel padding,
# weight reshape) + pallas_call
# ---------------------------------------------------------------------------
def _weights_to_taps(w_oihw, c_pad, dtype):
    # (Cout, Cin, 3, 3) -> (9, Cin_pad, Cout_pad); tap index k = ky*3 + kx.
    c = w_oihw.shape[0]
    wm = jnp.transpose(w_oihw, (2, 3, 1, 0)).reshape(9, c, c)
    if c_pad != c:
        wm = jnp.pad(wm, ((0, 0), (0, c_pad - c), (0, c_pad - c)))
    return wm.astype(dtype)


@functools.partial(jax.jit, static_argnames=("compute_dtype",))
def resnet_block_forward(x_nchw, w1, b1, w2, b2, *, compute_dtype=jnp.bfloat16):
    # b1/b2 accepted for parity with the PyTorch module but unused: a
    # per-channel conv bias is exactly cancelled by the non-affine InstanceNorm.
    del b1, b2
    N, C, H, W = x_nchw.shape
    assert H >= 2 and W >= 2, "ReflectionPad2d(1) needs spatial dims >= 2"

    Cp = _round_up(C, LANE)                   # lane-dense channels / MXU N dim
    # TODO(synk): if tiny C (like this test's C=8) is a real deployment case,
    # map spatial tiles into the lane dim instead of padding channels to 128.
    sub = 8 if jnp.dtype(compute_dtype).itemsize == 4 else 16
    Wp = _round_up(W + 2, sub)                # row-slot width (sublane-aligned)
    R = H * Wp                                # flat rows per sample

    # NCHW -> flat row-slot NHWC layout (N, H*Wp, Cp), f32, zero-filled pads.
    # TODO(synk): optionally keep I/O in bf16 to halve HBM traffic (v5e).
    x = jnp.transpose(x_nchw, (0, 2, 3, 1)).astype(jnp.float32)
    x = jnp.pad(x, ((0, 0), (0, 0), (0, Wp - W), (0, Cp - C)))
    x = x.reshape(N, R, Cp)

    col = (jnp.arange(R, dtype=jnp.int32) % Wp).reshape(R, 1)

    w1m = _weights_to_taps(w1, Cp, compute_dtype)
    w2m = _weights_to_taps(w2, Cp, compute_dtype)

    kernel = functools.partial(_resnet_block_kernel, H=H, W=W, Wp=Wp,
                               compute_dtype=compute_dtype)

    cbytes = jnp.dtype(compute_dtype).itemsize
    est = (2 * 2 * R * Cp * 4                 # x/out blocks, double-buffered
           + 2 * 9 * Cp * Cp * cbytes         # weight taps
           + (H + 4) * Wp * Cp * cbytes       # pad scratch
           + R * LANE * 4                     # column-index block
           + 6 * R * Cp * 4)                  # f32 intermediates headroom
    vmem_limit = int(min(max(est + (4 << 20), 32 << 20), 96 << 20))

    # TODO(synk): for production pix2pixHD sizes (and v7x's 64 MiB VMEM) tile
    # H into row blocks with a 2-row halo, split InstanceNorm into
    # accumulate/normalize grid phases, and mark that axis "parallel" so both
    # v7x TensorCores get work.
    out = pl.pallas_call(
        kernel,
        out_shape=jax.ShapeDtypeStruct((N, R, Cp), jnp.float32),
        grid_spec=pltpu.PrefetchScalarGridSpec(
            num_scalar_prefetch=0,
            grid=(N,),
            in_specs=[
                pl.BlockSpec((R, 1), lambda n: (0, 0), **_SINGLE_BUF),
                pl.BlockSpec((1, R, Cp), lambda n: (n, 0, 0)),
                pl.BlockSpec((9, Cp, Cp), lambda n: (0, 0, 0), **_SINGLE_BUF),
                pl.BlockSpec((9, Cp, Cp), lambda n: (0, 0, 0), **_SINGLE_BUF),
            ],
            out_specs=pl.BlockSpec((1, R, Cp), lambda n: (n, 0, 0)),
            scratch_shapes=[pltpu.VMEM(((H + 4) * Wp, Cp), compute_dtype)],
        ),
        compiler_params=pltpu.CompilerParams(
            dimension_semantics=("parallel",),
            vmem_limit_bytes=vmem_limit,
        ),
    )(col, x, w1m, w2m)

    out = out.reshape(N, H, Wp, Cp)[:, :, :W, :C]
    return jnp.transpose(out, (0, 3, 1, 2))              # back to NCHW


# ---------------------------------------------------------------------------
# Pure-JAX reference (correctness check only; matches the PyTorch module)
# ---------------------------------------------------------------------------
def resnet_block_reference(x, w1, b1, w2, b2):
    def conv_in(t, w, b):
        tp = jnp.pad(t, ((0, 0), (0, 0), (1, 1), (1, 1)), mode="reflect")
        y = jax.lax.conv_general_dilated(
            tp, w, window_strides=(1, 1), padding="VALID",
            dimension_numbers=("NCHW", "OIHW", "NCHW"),
            precision=jax.lax.Precision.HIGHEST)
        y = y + b[None, :, None, None]
        mean = jnp.mean(y, axis=(2, 3), keepdims=True)
        var = jnp.mean(jnp.square(y - mean), axis=(2, 3), keepdims=True)
        return (y - mean) / jnp.sqrt(var + EPS)

    h = jax.nn.relu(conv_in(x, w1, b1))
    return x + conv_in(h, w2, b2)


# ---------------------------------------------------------------------------
if __name__ == "__main__":
    key = jax.random.PRNGKey(0)
    N, C, H, W = 2, 8, 16, 16  # batch, dim, spatial
    k1, k2, k3, k4, k5 = jax.random.split(key, 5)
    x = jax.random.normal(k1, (N, C, H, W), dtype=jnp.float32)
    # deterministic synthetic parameters (Conv2d(dim, dim, 3) x 2, with bias)
    w1 = 0.1 * jax.random.normal(k2, (C, C, 3, 3), dtype=jnp.float32)
    b1 = 0.1 * jax.random.normal(k3, (C,), dtype=jnp.float32)
    w2 = 0.1 * jax.random.normal(k4, (C, C, 3, 3), dtype=jnp.float32)
    b2 = 0.1 * jax.random.normal(k5, (C,), dtype=jnp.float32)

    ref = jax.block_until_ready(resnet_block_reference(x, w1, b1, w2, b2))

    # f32 matmul path: tight numerical validation of the fused kernel.
    out_f32 = jax.block_until_ready(
        resnet_block_forward(x, w1, b1, w2, b2, compute_dtype=jnp.float32))
    assert out_f32.shape == (N, C, H, W), out_f32.shape
    err_f32 = float(jnp.max(jnp.abs(out_f32 - ref)))
    assert err_f32 < 2e-3, f"f32 mismatch vs reference: {err_f32}"

    # bf16 matmul path (default / fast path): relative-error check.
    out_bf16 = jax.block_until_ready(
        resnet_block_forward(x, w1, b1, w2, b2, compute_dtype=jnp.bfloat16))
    assert out_bf16.shape == (N, C, H, W), out_bf16.shape
    err_bf16 = float(jnp.max(jnp.abs(out_bf16 - ref) / (1.0 + jnp.abs(ref))))
    assert err_bf16 < 1e-1, f"bf16 mismatch vs reference: {err_bf16}"

    print("KERNEL_OK")
</pallas_src>

<mosaic_0001>
module attributes {stable_mosaic.version = 11 : i64} {
  func.func @_resnet_block_kernel(%arg0: i32, %arg1: memref<384x1xi32, #tpu.memory_space<vmem>>, %arg2: memref<1x384x128xf32, #tpu.memory_space<vmem>>, %arg3: memref<9x128x128xf32, #tpu.memory_space<vmem>>, %arg4: memref<9x128x128xf32, #tpu.memory_space<vmem>>, %arg5: memref<1x384x128xf32, #tpu.memory_space<vmem>>, %arg6: memref<480x128xf32, #tpu.memory_space<vmem>>) attributes {dimension_semantics = [#tpu.dimension_semantics<parallel>], iteration_bounds = array<i64: 2>, scalar_prefetch = 0 : i64, scratch_operands = 1 : i64, tpu.core_type = #tpu.core_type<tc>, window_params = [{pipeline_mode = #tpu.pipeline_mode<synchronous>, transform_indices = @transform_0, window_bounds = array<i64: 384, 1>}, {transform_indices = @transform_1, window_bounds = array<i64: 1, 384, 128>}, {pipeline_mode = #tpu.pipeline_mode<synchronous>, transform_indices = @transform_2, window_bounds = array<i64: 9, 128, 128>}, {pipeline_mode = #tpu.pipeline_mode<synchronous>, transform_indices = @transform_3, window_bounds = array<i64: 9, 128, 128>}, {transform_indices = @transform_4, window_bounds = array<i64: 1, 384, 128>}]} {
    %c0 = arith.constant 0 : index
    %c0_0 = arith.constant 0 : index
    %0 = vector.load %arg1[%c0, %c0_0] : memref<384x1xi32, #tpu.memory_space<vmem>>, vector<384x1xi32>
    %c16_i32 = arith.constant 16 : i32
    %1 = vector.broadcast %c16_i32 : i32 to vector<384x1xi32>
    %2 = arith.cmpi slt, %0, %1 : vector<384x1xi32>
    %3 = arith.extui %2 : vector<384x1xi1> to vector<384x1xi32>
    %4 = arith.sitofp %3 : vector<384x1xi32> to vector<384x1xf32>
    %c16_i32_1 = arith.constant 16 : i32
    %5 = vector.broadcast %c16_i32_1 : i32 to vector<384x1xi32>
    %6 = arith.cmpi eq, %0, %5 : vector<384x1xi32>
    %c23_i32 = arith.constant 23 : i32
    %7 = vector.broadcast %c23_i32 : i32 to vector<384x1xi32>
    %8 = arith.cmpi eq, %0, %7 : vector<384x1xi32>
    %cst = arith.constant 0.000000e+00 : f32
    %9 = vector.broadcast %cst : f32 to vector<24x128xf32>
    %c0_2 = arith.constant 0 : index
    %c0_3 = arith.constant 0 : index
    %10 = vector.load %arg6[%c0_2, %c0_3] : memref<480x128xf32, #tpu.memory_space<vmem>>, vector<24x128xf32>
    tpu.vector_store %arg6[%c0_2, %c0_3], %9 {strides = array<i32>} : memref<480x128xf32, #tpu.memory_space<vmem>>, vector<24x128xf32>,
    %cst_4 = arith.constant 0.000000e+00 : f32
    %11 = vector.broadcast %cst_4 : f32 to vector<24x128xf32>
    %c456 = arith.constant 456 : index
    %c0_5 = arith.constant 0 : index
    %12 = vector.load %arg6[%c456, %c0_5] : memref<480x128xf32, #tpu.memory_space<vmem>>, vector<24x128xf32>
    tpu.vector_store %arg6[%c456, %c0_5], %11 {strides = array<i32>} : memref<480x128xf32, #tpu.memory_space<vmem>>, vector<24x128xf32>,
    %c0_6 = arith.constant 0 : index
    %c0_7 = arith.constant 0 : index
    %c0_8 = arith.constant 0 : index
    %13 = vector.load %arg2[%c0_6, %c0_7, %c0_8] : memref<1x384x128xf32, #tpu.memory_space<vmem>>, vector<1x384x128xf32>
    %14 = vector.shape_cast %13 : vector<1x384x128xf32> to vector<384x128xf32>
    %c2_i32 = arith.constant 2 : i32
    %15 = tpu.dynamic_rotate %14 by %c2_i32 dim 0 : vector<384x128xf32>, i32 -> vector<384x128xf32>
    %c382_i32 = arith.constant 382 : i32
    %16 = tpu.dynamic_rotate %14 by %c382_i32 dim 0 : vector<384x128xf32>, i32 -> vector<384x128xf32>
    %17 = vector.shape_cast %6 : vector<384x1xi1> to vector<384x1xi1>
    %18 = vector.broadcast %17 : vector<384x1xi1> to vector<384x128xi1>
    %19 = arith.select %18, %15, %14 : vector<384x128xi1>, vector<384x128xf32>
    %20 = vector.shape_cast %8 : vector<384x1xi1> to vector<384x1xi1>
    %21 = vector.broadcast %20 : vector<384x1xi1> to vector<384x128xi1>
    %22 = arith.select %21, %16, %19 : vector<384x128xi1>, vector<384x128xf32>
    %c48 = arith.constant 48 : index
    %c0_9 = arith.constant 0 : index
    %23 = vector.load %arg6[%c48, %c0_9] : memref<480x128xf32, #tpu.memory_space<vmem>>, vector<384x128xf32>
    tpu.vector_store %arg6[%c48, %c0_9], %22 {strides = array<i32>} : memref<480x128xf32, #tpu.memory_space<vmem>>, vector<384x128xf32>,
    %24 = vector.extract_strided_slice %22 {offsets = [24, 0], sizes = [24, 128], strides = [1, 1]} : vector<384x128xf32> to vector<24x128xf32>
    %c24 = arith.constant 24 : index
    %c0_10 = arith.constant 0 : index
    %25 = vector.load %arg6[%c24, %c0_10] : memref<480x128xf32, #tpu.memory_space<vmem>>, vector<24x128xf32>
    tpu.vector_store %arg6[%c24, %c0_10], %24 {strides = array<i32>} : memref<480x128xf32, #tpu.memory_space<vmem>>, vector<24x128xf32>,
    %26 = vector.extract_strided_slice %22 {offsets = [336, 0], sizes = [24, 128], strides = [1, 1]} : vector<384x128xf32> to vector<24x128xf32>
    %c432 = arith.constant 432 : index
    %c0_11 = arith.constant 0 : index
    %27 = vector.load %arg6[%c432, %c0_11] : memref<480x128xf32, #tpu.memory_space<vmem>>, vector<24x128xf32>
    tpu.vector_store %arg6[%c432, %c0_11], %26 {strides = array<i32>} : memref<480x128xf32, #tpu.memory_space<vmem>>, vector<24x128xf32>,
    %28 = vector.extract_strided_slice %14 {offsets = [25, 0], sizes = [1, 128], strides = [1, 1]} : vector<384x128xf32> to vector<1x128xf32>
    %c23 = arith.constant 23 : index
    %c0_12 = arith.constant 0 : index
    %29 = vector.load %arg6[%c23, %c0_12] : memref<480x128xf32, #tpu.memory_space<vmem>>, vector<1x128xf32>
    tpu.vector_store %arg6[%c23, %c0_12], %28 {strides = array<i32>} : memref<480x128xf32, #tpu.memory_space<vmem>>, vector<1x128xf32>,
    %30 = vector.extract_strided_slice %14 {offsets = [1, 0], sizes = [1, 128], strides = [1, 1]} : vector<384x128xf32> to vector<1x128xf32>
    %c47 = arith.constant 47 : index
    %c0_13 = arith.constant 0 : index
    %31 = vector.load %arg6[%c47, %c0_13] : memref<480x128xf32, #tpu.memory_space<vmem>>, vector<1x128xf32>
    tpu.vector_store %arg6[%c47, %c0_13], %30 {strides = array<i32>} : memref<480x128xf32, #tpu.memory_space<vmem>>, vector<1x128xf32>,
    %32 = vector.extract_strided_slice %14 {offsets = [337, 0], sizes = [1, 128], strides = [1, 1]} : vector<384x128xf32> to vector<1x128xf32>
    %c431 = arith.constant 431 : index
    %c0_14 = arith.constant 0 : index
    %33 = vector.load %arg6[%c431, %c0_14] : memref<480x128xf32, #tpu.memory_space<vmem>>, vector<1x128xf32>
    tpu.vector_store %arg6[%c431, %c0_14], %32 {strides = array<i32>} : memref<480x128xf32, #tpu.memory_space<vmem>>, vector<1x128xf32>,
    %c23_15 = arith.constant 23 : index
    %c0_16 = arith.constant 0 : index
    %34 = vector.load %arg6[%c23_15, %c0_16] : memref<480x128xf32, #tpu.memory_space<vmem>>, vector<384x128xf32>
    %c0_17 = arith.constant 0 : index
    %c0_18 = arith.constant 0 : index
    %c0_19 = arith.constant 0 : index
    %35 = vector.load %arg3[%c0_17, %c0_18, %c0_19] : memref<9x128x128xf32, #tpu.memory_space<vmem>>, vector<1x128x128xf32>
    %36 = vector.shape_cast %35 : vector<1x128x128xf32> to vector<128x128xf32>
    %cst_20 = arith.constant dense<0.000000e+00> : vector<384x128xf32>
    %37 = tpu.matmul %34, %36, %cst_20 {dimension_numbers = #tpu.dot_dimension_numbers<[1], [0], [0], [1], [0, 0, 1, 1], [], []>} : vector<384x128xf32>, vector<128x128xf32>, vector<384x128xf32> -> vector<384x128xf32>
    %c24_21 = arith.constant 24 : index
    %c0_22 = arith.constant 0 : index
    %38 = vector.load %arg6[%c24_21, %c0_22] : memref<480x128xf32, #tpu.memory_space<vmem>>, vector<384x128xf32>
    %c1 = arith.constant 1 : index
    %c0_23 = arith.constant 0 : index
    %c0_24 = arith.constant 0 : index
    %39 = vector.load %arg3[%c1, %c0_23, %c0_24] : memref<9x128x128xf32, #tpu.memory_space<vmem>>, vector<1x128x128xf32>
    %40 = vector.shape_cast %39 : vector<1x128x128xf32> to vector<128x128xf32>
    %cst_25 = arith.constant dense<0.000000e+00> : vector<384x128xf32>
    %41 = tpu.matmul %38, %40, %cst_25 {dimension_numbers = #tpu.dot_dimension_numbers<[1], [0], [0], [1], [0, 0, 1, 1], [], []>} : vector<384x128xf32>, vector<128x128xf32>, vector<384x128xf32> -> vector<384x128xf32>
    %42 = arith.addf %37, %41 : vector<384x128xf32>
    %c25 = arith.constant 25 : index
    %c0_26 = arith.constant 0 : index
    %43 = vector.load %arg6[%c25, %c0_26] : memref<480x128xf32, #tpu.memory_space<vmem>>, vector<384x128xf32>
    %c2 = arith.constant 2 : index
    %c0_27 = arith.constant 0 : index
    %c0_28 = arith.constant 0 : index
    %44 = vector.load %arg3[%c2, %c0_27, %c0_28] : memref<9x128x128xf32, #tpu.memory_space<vmem>>, vector<1x128x128xf32>
    %45 = vector.shape_cast %44 : vector<1x128x128xf32> to vector<128x128xf32>
    %cst_29 = arith.constant dense<0.000000e+00> : vector<384x128xf32>
    %46 = tpu.matmul %43, %45, %cst_29 {dimension_numbers = #tpu.dot_dimension_numbers<[1], [0], [0], [1], [0, 0, 1, 1], [], []>} : vector<384x128xf32>, vector<128x128xf32>, vector<384x128xf32> -> vector<384x128xf32>
    %47 = arith.addf %42, %46 : vector<384x128xf32>
    %c47_30 = arith.constant 47 : index
    %c0_31 = arith.constant 0 : index
    %48 = vector.load %arg6[%c47_30, %c0_31] : memref<480x128xf32, #tpu.memory_space<vmem>>, vector<384x128xf32>
    %c3 = arith.constant 3 : index
    %c0_32 = arith.constant 0 : index
    %c0_33 = arith.constant 0 : index
    %49 = vector.load %arg3[%c3, %c0_32, %c0_33] : memref<9x128x128xf32, #tpu.memory_space<vmem>>, vector<1x128x128xf32>
    %50 = vector.shape_cast %49 : vector<1x128x128xf32> to vector<128x128xf32>
    %cst_34 = arith.constant dense<0.000000e+00> : vector<384x128xf32>
    %51 = tpu.matmul %48, %50, %cst_34 {dimension_numbers = #tpu.dot_dimension_numbers<[1], [0], [0], [1], [0, 0, 1, 1], [], []>} : vector<384x128xf32>, vector<128x128xf32>, vector<384x128xf32> -> vector<384x128xf32>
    %52 = arith.addf %47, %51 : vector<384x128xf32>
    %c48_35 = arith.constant 48 : index
    %c0_36 = arith.constant 0 : index
    %53 = vector.load %arg6[%c48_35, %c0_36] : memref<480x128xf32, #tpu.memory_space<vmem>>, vector<384x128xf32>
    %c4 = arith.constant 4 : index
    %c0_37 = arith.constant 0 : index
    %c0_38 = arith.constant 0 : index
    %54 = vector.load %arg3[%c4, %c0_37, %c0_38] : memref<9x128x128xf32, #tpu.memory_space<vmem>>, vector<1x128x128xf32>
    %55 = vector.shape_cast %54 : vector<1x128x128xf32> to vector<128x128xf32>
    %cst_39 = arith.constant dense<0.000000e+00> : vector<384x128xf32>
    %56 = tpu.matmul %53, %55, %cst_39 {dimension_numbers = #tpu.dot_dimension_numbers<[1], [0], [0], [1], [0, 0, 1, 1], [], []>} : vector<384x128xf32>, vector<128x128xf32>, vector<384x128xf32> -> vector<384x128xf32>
    %57 = arith.addf %52, %56 : vector<384x128xf32>
    %c49 = arith.constant 49 : index
    %c0_40 = arith.constant 0 : index
    %58 = vector.load %arg6[%c49, %c0_40] : memref<480x128xf32, #tpu.memory_space<vmem>>, vector<384x128xf32>
    %c5 = arith.constant 5 : index
    %c0_41 = arith.constant 0 : index
    %c0_42 = arith.constant 0 : index
    %59 = vector.load %arg3[%c5, %c0_41, %c0_42] : memref<9x128x128xf32, #tpu.memory_space<vmem>>, vector<1x128x128xf32>
    %60 = vector.shape_cast %59 : vector<1x128x128xf32> to vector<128x128xf32>
    %cst_43 = arith.constant dense<0.000000e+00> : vector<384x128xf32>
    %61 = tpu.matmul %58, %60, %cst_43 {dimension_numbers = #tpu.dot_dimension_numbers<[1], [0], [0], [1], [0, 0, 1, 1], [], []>} : vector<384x128xf32>, vector<128x128xf32>, vector<384x128xf32> -> vector<384x128xf32>
    %62 = arith.addf %57, %61 : vector<384x128xf32>
    %c71 = arith.constant 71 : index
    %c0_44 = arith.constant 0 : index
    %63 = vector.load %arg6[%c71, %c0_44] : memref<480x128xf32, #tpu.memory_space<vmem>>, vector<384x128xf32>
    %c6 = arith.constant 6 : index
    %c0_45 = arith.constant 0 : index
    %c0_46 = arith.constant 0 : index
    %64 = vector.load %arg3[%c6, %c0_45, %c0_46] : memref<9x128x128xf32, #tpu.memory_space<vmem>>, vector<1x128x128xf32>
    %65 = vector.shape_cast %64 : vector<1x128x128xf32> to vector<128x128xf32>
    %cst_47 = arith.constant dense<0.000000e+00> : vector<384x128xf32>
    %66 = tpu.matmul %63, %65, %cst_47 {dimension_numbers = #tpu.dot_dimension_numbers<[1], [0], [0], [1], [0, 0, 1, 1], [], []>} : vector<384x128xf32>, vector<128x128xf32>, vector<384x128xf32> -> vector<384x128xf32>
    %67 = arith.addf %62, %66 : vector<384x128xf32>
    %c72 = arith.constant 72 : index
    %c0_48 = arith.constant 0 : index
    %68 = vector.load %arg6[%c72, %c0_48] : memref<480x128xf32, #tpu.memory_space<vmem>>, vector<384x128xf32>
    %c7 = arith.constant 7 : index
    %c0_49 = arith.constant 0 : index
    %c0_50 = arith.constant 0 : index
    %69 = vector.load %arg3[%c7, %c0_49, %c0_50] : memref<9x128x128xf32, #tpu.memory_space<vmem>>, vector<1x128x128xf32>
    %70 = vector.shape_cast %69 : vector<1x128x128xf32> to vector<128x128xf32>
    %cst_51 = arith.constant dense<0.000000e+00> : vector<384x128xf32>
    %71 = tpu.matmul %68, %70, %cst_51 {dimension_numbers = #tpu.dot_dimension_numbers<[1], [0], [0], [1], [0, 0, 1, 1], [], []>} : vector<384x128xf32>, vector<128x128xf32>, vector<384x128xf32> -> vector<384x128xf32>
    %72 = arith.addf %67, %71 : vector<384x128xf32>
    %c73 = arith.constant 73 : index
    %c0_52 = arith.constant 0 : index
    %73 = vector.load %arg6[%c73, %c0_52] : memref<480x128xf32, #tpu.memory_space<vmem>>, vector<384x128xf32>
    %c8 = arith.constant 8 : index
    %c0_53 = arith.constant 0 : index
    %c0_54 = arith.constant 0 : index
    %74 = vector.load %arg3[%c8, %c0_53, %c0_54] : memref<9x128x128xf32, #tpu.memory_space<vmem>>, vector<1x128x128xf32>
    %75 = vector.shape_cast %74 : vector<1x128x128xf32> to vector<128x128xf32>
    %cst_55 = arith.constant dense<0.000000e+00> : vector<384x128xf32>
    %76 = tpu.matmul %73, %75, %cst_55 {dimension_numbers = #tpu.dot_dimension_numbers<[1], [0], [0], [1], [0, 0, 1, 1], [], []>} : vector<384x128xf32>, vector<128x128xf32>, vector<384x128xf32> -> vector<384x128xf32>
    %77 = arith.addf %72, %76 : vector<384x128xf32>
    %78 = vector.broadcast %4 : vector<384x1xf32> to vector<384x128xf32>
    %79 = arith.mulf %77, %78 : vector<384x128xf32>
    %cst_56 = arith.constant dense<0.000000e+00> : vector<128xf32>
    %80 = vector.multi_reduction <add>, %79, %cst_56 [0] : vector<384x128xf32> to vector<128xf32>
    %81 = vector.shape_cast %80 : vector<128xf32> to vector<1x128xf32>
    %82 = arith.mulf %79, %77 : vector<384x128xf32>
    %cst_57 = arith.constant dense<0.000000e+00> : vector<128xf32>
    %83 = vector.multi_reduction <add>, %82, %cst_57 [0] : vector<384x128xf32> to vector<128xf32>
    %84 = vector.shape_cast %83 : vector<128xf32> to vector<1x128xf32>
    %cst_58 = arith.constant 3.906250e-03 : f32
    %85 = vector.broadcast %cst_58 : f32 to vector<1x128xf32>
    %86 = arith.mulf %81, %85 : vector<1x128xf32>
    %cst_59 = arith.constant 3.906250e-03 : f32
    %87 = vector.broadcast %cst_59 : f32 to vector<1x128xf32>
    %88 = arith.mulf %84, %87 : vector<1x128xf32>
    %89 = arith.mulf %86, %86 : vector<1x128xf32>
    %90 = arith.subf %88, %89 : vector<1x128xf32>
    %cst_60 = arith.constant 0.000000e+00 : f32
    %91 = vector.broadcast %cst_60 : f32 to vector<1x128xf32>
    %92 = arith.maximumf %90, %91 : vector<1x128xf32>
    %93 = vector.broadcast %86 : vector<1x128xf32> to vector<384x128xf32>
    %94 = arith.subf %77, %93 : vector<384x128xf32>
    %cst_61 = arith.constant 9.99999974E-6 : f32
    %95 = vector.broadcast %cst_61 : f32 to vector<1x128xf32>
    %96 = arith.addf %92, %95 : vector<1x128xf32>
    %97 = math.rsqrt %96 : vector<1x128xf32>
    %98 = vector.broadcast %97 : vector<1x128xf32> to vector<384x128xf32>
    %99 = arith.mulf %94, %98 : vector<384x128xf32>
    %cst_62 = arith.constant 0.000000e+00 : f32
    %100 = vector.broadcast %cst_62 : f32 to vector<384x128xf32>
    %101 = arith.maximumf %99, %100 : vector<384x128xf32>
    %c2_i32_63 = arith.constant 2 : i32
    %102 = tpu.dynamic_rotate %101 by %c2_i32_63 dim 0 : vector<384x128xf32>, i32 -> vector<384x128xf32>
    %c382_i32_64 = arith.constant 382 : i32
    %103 = tpu.dynamic_rotate %101 by %c382_i32_64 dim 0 : vector<384x128xf32>, i32 -> vector<384x128xf32>
    %104 = vector.shape_cast %6 : vector<384x1xi1> to vector<384x1xi1>
    %105 = vector.broadcast %104 : vector<384x1xi1> to vector<384x128xi1>
    %106 = arith.select %105, %102, %101 : vector<384x128xi1>, vector<384x128xf32>
    %107 = vector.shape_cast %8 : vector<384x1xi1> to vector<384x1xi1>
    %108 = vector.broadcast %107 : vector<384x1xi1> to vector<384x128xi1>
    %109 = arith.select %108, %103, %106 : vector<384x128xi1>, vector<384x128xf32>
    %c48_65 = arith.constant 48 : index
    %c0_66 = arith.constant 0 : index
    %110 = vector.load %arg6[%c48_65, %c0_66] : memref<480x128xf32, #tpu.memory_space<vmem>>, vector<384x128xf32>
    tpu.vector_store %arg6[%c48_65, %c0_66], %109 {strides = array<i32>} : memref<480x128xf32, #tpu.memory_space<vmem>>, vector<384x128xf32>,
    %111 = vector.extract_strided_slice %109 {offsets = [24, 0], sizes = [24, 128], strides = [1, 1]} : vector<384x128xf32> to vector<24x128xf32>
    %c24_67 = arith.constant 24 : index
    %c0_68 = arith.constant 0 : index
    %112 = vector.load %arg6[%c24_67, %c0_68] : memref<480x128xf32, #tpu.memory_space<vmem>>, vector<24x128xf32>
    tpu.vector_store %arg6[%c24_67, %c0_68], %111 {strides = array<i32>} : memref<480x128xf32, #tpu.memory_space<vmem>>, vector<24x128xf32>,
    %113 = vector.extract_strided_slice %109 {offsets = [336, 0], sizes = [24, 128], strides = [1, 1]} : vector<384x128xf32> to vector<24x128xf32>
    %c432_69 = arith.constant 432 : index
    %c0_70 = arith.constant 0 : index
    %114 = vector.load %arg6[%c432_69, %c0_70] : memref<480x128xf32, #tpu.memory_space<vmem>>, vector<24x128xf32>
    tpu.vector_store %arg6[%c432_69, %c0_70], %113 {strides = array<i32>} : memref<480x128xf32, #tpu.memory_space<vmem>>, vector<24x128xf32>,
    %115 = vector.extract_strided_slice %101 {offsets = [25, 0], sizes = [1, 128], strides = [1, 1]} : vector<384x128xf32> to vector<1x128xf32>
    %c23_71 = arith.constant 23 : index
    %c0_72 = arith.constant 0 : index
    %116 = vector.load %arg6[%c23_71, %c0_72] : memref<480x128xf32, #tpu.memory_space<vmem>>, vector<1x128xf32>
    tpu.vector_store %arg6[%c23_71, %c0_72], %115 {strides = array<i32>} : memref<480x128xf32, #tpu.memory_space<vmem>>, vector<1x128xf32>,
    %117 = vector.extract_strided_slice %101 {offsets = [1, 0], sizes = [1, 128], strides = [1, 1]} : vector<384x128xf32> to vector<1x128xf32>
    %c47_73 = arith.constant 47 : index
    %c0_74 = arith.constant 0 : index
    %118 = vector.load %arg6[%c47_73, %c0_74] : memref<480x128xf32, #tpu.memory_space<vmem>>, vector<1x128xf32>
    tpu.vector_store %arg6[%c47_73, %c0_74], %117 {strides = array<i32>} : memref<480x128xf32, #tpu.memory_space<vmem>>, vector<1x128xf32>,
    %119 = vector.extract_strided_slice %101 {offsets = [337, 0], sizes = [1, 128], strides = [1, 1]} : vector<384x128xf32> to vector<1x128xf32>
    %c431_75 = arith.constant 431 : index
    %c0_76 = arith.constant 0 : index
    %120 = vector.load %arg6[%c431_75, %c0_76] : memref<480x128xf32, #tpu.memory_space<vmem>>, vector<1x128xf32>
    tpu.vector_store %arg6[%c431_75, %c0_76], %119 {strides = array<i32>} : memref<480x128xf32, #tpu.memory_space<vmem>>, vector<1x128xf32>,
    %c23_77 = arith.constant 23 : index
    %c0_78 = arith.constant 0 : index
    %121 = vector.load %arg6[%c23_77, %c0_78] : memref<480x128xf32, #tpu.memory_space<vmem>>, vector<384x128xf32>
    %c0_79 = arith.constant 0 : index
    %c0_80 = arith.constant 0 : index
    %c0_81 = arith.constant 0 : index
    %122 = vector.load %arg4[%c0_79, %c0_80, %c0_81] : memref<9x128x128xf32, #tpu.memory_space<vmem>>, vector<1x128x128xf32>
    %123 = vector.shape_cast %122 : vector<1x128x128xf32> to vector<128x128xf32>
    %cst_82 = arith.constant dense<0.000000e+00> : vector<384x128xf32>
    %124 = tpu.matmul %121, %123, %cst_82 {dimension_numbers = #tpu.dot_dimension_numbers<[1], [0], [0], [1], [0, 0, 1, 1], [], []>} : vector<384x128xf32>, vector<128x128xf32>, vector<384x128xf32> -> vector<384x128xf32>
    %c24_83 = arith.constant 24 : index
    %c0_84 = arith.constant 0 : index
    %125 = vector.load %arg6[%c24_83, %c0_84] : memref<480x128xf32, #tpu.memory_space<vmem>>, vector<384x128xf32>
    %c1_85 = arith.constant 1 : index
    %c0_86 = arith.constant 0 : index
    %c0_87 = arith.constant 0 : index
    %126 = vector.load %arg4[%c1_85, %c0_86, %c0_87] : memref<9x128x128xf32, #tpu.memory_space<vmem>>, vector<1x128x128xf32>
    %127 = vector.shape_cast %126 : vector<1x128x128xf32> to vector<128x128xf32>
    %cst_88 = arith.constant dense<0.000000e+00> : vector<384x128xf32>
    %128 = tpu.matmul %125, %127, %cst_88 {dimension_numbers = #tpu.dot_dimension_numbers<[1], [0], [0], [1], [0, 0, 1, 1], [], []>} : vector<384x128xf32>, vector<128x128xf32>, vector<384x128xf32> -> vector<384x128xf32>
    %129 = arith.addf %124, %128 : vector<384x128xf32>
    %c25_89 = arith.constant 25 : index
    %c0_90 = arith.constant 0 : index
    %130 = vector.load %arg6[%c25_89, %c0_90] : memref<480x128xf32, #tpu.memory_space<vmem>>, vector<384x128xf32>
    %c2_91 = arith.constant 2 : index
    %c0_92 = arith.constant 0 : index
    %c0_93 = arith.constant 0 : index
    %131 = vector.load %arg4[%c2_91, %c0_92, %c0_93] : memref<9x128x128xf32, #tpu.memory_space<vmem>>, vector<1x128x128xf32>
    %132 = vector.shape_cast %131 : vector<1x128x128xf32> to vector<128x128xf32>
    %cst_94 = arith.constant dense<0.000000e+00> : vector<384x128xf32>
    %133 = tpu.matmul %130, %132, %cst_94 {dimension_numbers = #tpu.dot_dimension_numbers<[1], [0], [0], [1], [0, 0, 1, 1], [], []>} : vector<384x128xf32>, vector<128x128xf32>, vector<384x128xf32> -> vector<384x128xf32>
    %134 = arith.addf %129, %133 : vector<384x128xf32>
    %c47_95 = arith.constant 47 : index
    %c0_96 = arith.constant 0 : index
    %135 = vector.load %arg6[%c47_95, %c0_96] : memref<480x128xf32, #tpu.memory_space<vmem>>, vector<384x128xf32>
    %c3_97 = arith.constant 3 : index
    %c0_98 = arith.constant 0 : index
    %c0_99 = arith.constant 0 : index
    %136 = vector.load %arg4[%c3_97, %c0_98, %c0_99] : memref<9x128x128xf32, #tpu.memory_space<vmem>>, vector<1x128x128xf32>
    %137 = vector.shape_cast %136 : vector<1x128x128xf32> to vector<128x128xf32>
    %cst_100 = arith.constant dense<0.000000e+00> : vector<384x128xf32>
    %138 = tpu.matmul %135, %137, %cst_100 {dimension_numbers = #tpu.dot_dimension_numbers<[1], [0], [0], [1], [0, 0, 1, 1], [], []>} : vector<384x128xf32>, vector<128x128xf32>, vector<384x128xf32> -> vector<384x128xf32>
    %139 = arith.addf %134, %138 : vector<384x128xf32>
    %c48_101 = arith.constant 48 : index
    %c0_102 = arith.constant 0 : index
    %140 = vector.load %arg6[%c48_101, %c0_102] : memref<480x128xf32, #tpu.memory_space<vmem>>, vector<384x128xf32>
    %c4_103 = arith.constant 4 : index
    %c0_104 = arith.constant 0 : index
    %c0_105 = arith.constant 0 : index
    %141 = vector.load %arg4[%c4_103, %c0_104, %c0_105] : memref<9x128x128xf32, #tpu.memory_space<vmem>>, vector<1x128x128xf32>
    %142 = vector.shape_cast %141 : vector<1x128x128xf32> to vector<128x128xf32>
    %cst_106 = arith.constant dense<0.000000e+00> : vector<384x128xf32>
    %143 = tpu.matmul %140, %142, %cst_106 {dimension_numbers = #tpu.dot_dimension_numbers<[1], [0], [0], [1], [0, 0, 1, 1], [], []>} : vector<384x128xf32>, vector<128x128xf32>, vector<384x128xf32> -> vector<384x128xf32>
    %144 = arith.addf %139, %143 : vector<384x128xf32>
    %c49_107 = arith.constant 49 : index
    %c0_108 = arith.constant 0 : index
    %145 = vector.load %arg6[%c49_107, %c0_108] : memref<480x128xf32, #tpu.memory_space<vmem>>, vector<384x128xf32>
    %c5_109 = arith.constant 5 : index
    %c0_110 = arith.constant 0 : index
    %c0_111 = arith.constant 0 : index
    %146 = vector.load %arg4[%c5_109, %c0_110, %c0_111] : memref<9x128x128xf32, #tpu.memory_space<vmem>>, vector<1x128x128xf32>
    %147 = vector.shape_cast %146 : vector<1x128x128xf32> to vector<128x128xf32>
    %cst_112 = arith.constant dense<0.000000e+00> : vector<384x128xf32>
    %148 = tpu.matmul %145, %147, %cst_112 {dimension_numbers = #tpu.dot_dimension_numbers<[1], [0], [0], [1], [0, 0, 1, 1], [], []>} : vector<384x128xf32>, vector<128x128xf32>, vector<384x128xf32> -> vector<384x128xf32>
    %149 = arith.addf %144, %148 : vector<384x128xf32>
    %c71_113 = arith.constant 71 : index
    %c0_114 = arith.constant 0 : index
    %150 = vector.load %arg6[%c71_113, %c0_114] : memref<480x128xf32, #tpu.memory_space<vmem>>, vector<384x128xf32>
    %c6_115 = arith.constant 6 : index
    %c0_116 = arith.constant 0 : index
    %c0_117 = arith.constant 0 : index
    %151 = vector.load %arg4[%c6_115, %c0_116, %c0_117] : memref<9x128x128xf32, #tpu.memory_space<vmem>>, vector<1x128x128xf32>
    %152 = vector.shape_cast %151 : vector<1x128x128xf32> to vector<128x128xf32>
    %cst_118 = arith.constant dense<0.000000e+00> : vector<384x128xf32>
    %153 = tpu.matmul %150, %152, %cst_118 {dimension_numbers = #tpu.dot_dimension_numbers<[1], [0], [0], [1], [0, 0, 1, 1], [], []>} : vector<384x128xf32>, vector<128x128xf32>, vector<384x128xf32> -> vector<384x128xf32>
    %154 = arith.addf %149, %153 : vector<384x128xf32>
    %c72_119 = arith.constant 72 : index
    %c0_120 = arith.constant 0 : index
    %155 = vector.load %arg6[%c72_119, %c0_120] : memref<480x128xf32, #tpu.memory_space<vmem>>, vector<384x128xf32>
    %c7_121 = arith.constant 7 : index
    %c0_122 = arith.constant 0 : index
    %c0_123 = arith.constant 0 : index
    %156 = vector.load %arg4[%c7_121, %c0_122, %c0_123] : memref<9x128x128xf32, #tpu.memory_space<vmem>>, vector<1x128x128xf32>
    %157 = vector.shape_cast %156 : vector<1x128x128xf32> to vector<128x128xf32>
    %cst_124 = arith.constant dense<0.000000e+00> : vector<384x128xf32>
    %158 = tpu.matmul %155, %157, %cst_124 {dimension_numbers = #tpu.dot_dimension_numbers<[1], [0], [0], [1], [0, 0, 1, 1], [], []>} : vector<384x128xf32>, vector<128x128xf32>, vector<384x128xf32> -> vector<384x128xf32>
    %159 = arith.addf %154, %158 : vector<384x128xf32>
    %c73_125 = arith.constant 73 : index
    %c0_126 = arith.constant 0 : index
    %160 = vector.load %arg6[%c73_125, %c0_126] : memref<480x128xf32, #tpu.memory_space<vmem>>, vector<384x128xf32>
    %c8_127 = arith.constant 8 : index
    %c0_128 = arith.constant 0 : index
    %c0_129 = arith.constant 0 : index
    %161 = vector.load %arg4[%c8_127, %c0_128, %c0_129] : memref<9x128x128xf32, #tpu.memory_space<vmem>>, vector<1x128x128xf32>
    %162 = vector.shape_cast %161 : vector<1x128x128xf32> to vector<128x128xf32>
    %cst_130 = arith.constant dense<0.000000e+00> : vector<384x128xf32>
    %163 = tpu.matmul %160, %162, %cst_130 {dimension_numbers = #tpu.dot_dimension_numbers<[1], [0], [0], [1], [0, 0, 1, 1], [], []>} : vector<384x128xf32>, vector<128x128xf32>, vector<384x128xf32> -> vector<384x128xf32>
    %164 = arith.addf %159, %163 : vector<384x128xf32>
    %165 = vector.broadcast %4 : vector<384x1xf32> to vector<384x128xf32>
    %166 = arith.mulf %164, %165 : vector<384x128xf32>
    %cst_131 = arith.constant dense<0.000000e+00> : vector<128xf32>
    %167 = vector.multi_reduction <add>, %166, %cst_131 [0] : vector<384x128xf32> to vector<128xf32>
    %168 = vector.shape_cast %167 : vector<128xf32> to vector<1x128xf32>
    %169 = arith.mulf %166, %164 : vector<384x128xf32>
    %cst_132 = arith.constant dense<0.000000e+00> : vector<128xf32>
    %170 = vector.multi_reduction <add>, %169, %cst_132 [0] : vector<384x128xf32> to vector<128xf32>
    %171 = vector.shape_cast %170 : vector<128xf32> to vector<1x128xf32>
    %cst_133 = arith.constant 3.906250e-03 : f32
    %172 = vector.broadcast %cst_133 : f32 to vector<1x128xf32>
    %173 = arith.mulf %168, %172 : vector<1x128xf32>
    %cst_134 = arith.constant 3.906250e-03 : f32
    %174 = vector.broadcast %cst_134 : f32 to vector<1x128xf32>
    %175 = arith.mulf %171, %174 : vector<1x128xf32>
    %176 = arith.mulf %173, %173 : vector<1x128xf32>
    %177 = arith.subf %175, %176 : vector<1x128xf32>
    %cst_135 = arith.constant 0.000000e+00 : f32
    %178 = vector.broadcast %cst_135 : f32 to vector<1x128xf32>
    %179 = arith.maximumf %177, %178 : vector<1x128xf32>
    %180 = vector.broadcast %173 : vector<1x128xf32> to vector<384x128xf32>
    %181 = arith.subf %164, %180 : vector<384x128xf32>
    %cst_136 = arith.constant 9.99999974E-6 : f32
    %182 = vector.broadcast %cst_136 : f32 to vector<1x128xf32>
    %183 = arith.addf %179, %182 : vector<1x128xf32>
    %184 = math.rsqrt %183 : vector<1x128xf32>
    %185 = vector.broadcast %184 : vector<1x128xf32> to vector<384x128xf32>
    %186 = arith.mulf %181, %185 : vector<384x128xf32>
    %c0_137 = arith.constant 0 : index
    %c0_138 = arith.constant 0 : index
    %c0_139 = arith.constant 0 : index
    %187 = vector.load %arg2[%c0_137, %c0_138, %c0_139] : memref<1x384x128xf32, #tpu.memory_space<vmem>>, vector<1x384x128xf32>
    %188 = vector.shape_cast %187 : vector<1x384x128xf32> to vector<384x128xf32>
    %189 = arith.addf %188, %186 : vector<384x128xf32>
    %c0_140 = arith.constant 0 : index
    %c0_141 = arith.constant 0 : index
    %c0_142 = arith.constant 0 : index
    %190 = vector.load %arg5[%c0_140, %c0_141, %c0_142] : memref<1x384x128xf32, #tpu.memory_space<vmem>>, vector<1x384x128xf32>
    %191 = vector.shape_cast %190 : vector<1x384x128xf32> to vector<384x128xf32>
    %192 = vector.shape_cast %189 : vector<384x128xf32> to vector<1x384x128xf32>
    tpu.vector_store %arg5[%c0_140, %c0_141, %c0_142], %192 {strides = array<i32>} : memref<1x384x128xf32, #tpu.memory_space<vmem>>, vector<1x384x128xf32>,
    return
  }
  func.func @transform_0(%arg0: i32) -> (i32, i32) {
    %c0_i32 = arith.constant 0 : i32
    %c0_i32_0 = arith.constant 0 : i32
    %c0_i32_1 = arith.constant 0 : i32
    return %c0_i32, %c0_i32_0 : i32, i32
  }
  func.func @transform_1(%arg0: i32) -> (i32, i32, i32) {
    %c0_i32 = arith.constant 0 : i32
    %c0_i32_0 = arith.constant 0 : i32
    %c0_i32_1 = arith.constant 0 : i32
    return %arg0, %c0_i32, %c0_i32_0 : i32, i32, i32
  }
  func.func @transform_2(%arg0: i32) -> (i32, i32, i32) {
    %c0_i32 = arith.constant 0 : i32
    %c0_i32_0 = arith.constant 0 : i32
    %c0_i32_1 = arith.constant 0 : i32
    %c0_i32_2 = arith.constant 0 : i32
    return %c0_i32, %c0_i32_0, %c0_i32_1 : i32, i32, i32
  }
  func.func @transform_3(%arg0: i32) -> (i32, i32, i32) {
    %c0_i32 = arith.constant 0 : i32
    %c0_i32_0 = arith.constant 0 : i32
    %c0_i32_1 = arith.constant 0 : i32
    %c0_i32_2 = arith.constant 0 : i32
    return %c0_i32, %c0_i32_0, %c0_i32_1 : i32, i32, i32
  }
  func.func @transform_4(%arg0: i32) -> (i32, i32, i32) {
    %c0_i32 = arith.constant 0 : i32
    %c0_i32_0 = arith.constant 0 : i32
    %c0_i32_1 = arith.constant 0 : i32
    return %arg0, %c0_i32, %c0_i32_0 : i32, i32, i32
  }
}

</mosaic_0001>

<llo_original>
// kernel: resnet_block_forward.1
$region0: #{resnet_block_forward.1}
  #allocation0 [shape = 'u32[]', space=smem, size = 0x4, offset = 0x4, fixed_abs, tag = 'smem constant byte address 0x4 - core index']
  #allocation1 [shape = 'u32[144,128]{1,0:T(1,128)}', space=vmem, size = 0x12000, scoped, tag = 'internal scratch']
  #allocation2 [shape = 'f32[480,128]{1,0:T(8,128)}', space=vmem, size = 0x3c000, scoped, tag = 'scratch operand']
  %s0 = inlined_call_operand.vmem [shape: s32[384,1], index: 0, kind: input, shape index: {}]
  %s1 = inlined_call_operand.vmem [shape: f32[2,384,128], index: 1, kind: input, shape index: {}]
  %s2 = inlined_call_operand.vmem [shape: f32[9,128,128], index: 2, kind: input, shape index: {}]
  %s3 = inlined_call_operand.vmem [shape: f32[9,128,128], index: 3, kind: input, shape index: {}]
  %s4 = inlined_call_operand.vmem [shape: f32[2,384,128], index: 4, kind: output, shape index: {}]
  %s5 = sld [smem:[#allocation0]]
  $region49: #{resnet_block_forward.1} parent=0
    _
  %s7 = ssub.s32 1, %s5
  %s8 = scalar_select 0, %s7, %s5
  loop: start=0, step=1, limit=4
  $region2: #{resnet_block_forward.1} parent=0 // loop_pre_header
    _
  $region3: #{resnet_block_forward.1} parent=0 // loop_header
    %s10 = sphi 0, %s14
    %p11 = scmp.ge.s32.totalorder %s10, 4
    %s18 = sphi 0, %s18
    %s20 = sphi 0, %s18
    %s21 = sphi 0, %s20
    %s35 = sphi 0, %s21
    %s41 = sphi 0, %s43
    %s44 = sphi 0, %s41
    %s45 = sphi 0, %s44
    %s61 = sphi 0, %s45
    %s65 = sphi 0, %s65
    %s67 = sphi 0, %s65
    %s68 = sphi 0, %s67
    %s82 = sphi 0, %s68
    %s86 = sphi 0, %s86
    %s88 = sphi 0, %s86
    %s89 = sphi 0, %s88
    %s103 = sphi 0, %s89
    %s109 = sphi 0, %s111
    %s112 = sphi 0, %s109
    %s113 = sphi 0, %s112
    %s129 = sphi 0, %s113
  $region4: #{resnet_block_forward.1} parent=0 // loop_header_branch
    %13 = sbr.rel (%p11) target = $region8
  $region5: #{resnet_block_forward.1} parent=0 // loop_body
    %s15 = ssub.s32 %s10, 1
    %s16 = ssub.s32 %s10, 2
    %s17 = sadd.s32 %s10, 1
    %s19 = sadd.s32 %s18, 1
    %p22 = scmp.eq.s32.totalorder %s10, 1
    %p23 = scmp.ne.s32.totalorder %s18, %s20
    %p24 = scmp.eq.s32.totalorder %s10, 0
    %p25 = por %p23, %p24
    %p26 = scmp.ne.s32.totalorder %s18, %s20
    %p27 = scmp.eq.s32.totalorder %s15, 1
    %p28 = por %p26, %p27
    %p29 = scmp.ne.s32.totalorder %s20, %s21
    %p30 = scmp.eq.s32.totalorder %s15, 0
    %p31 = por %p29, %p30
    %p32 = scmp.ne.s32.totalorder %s20, %s21
    %p33 = scmp.eq.s32.totalorder %s16, 1
    %p34 = por %p32, %p33
    %p36 = scmp.ne.s32.totalorder %s21, %s35
    %p37 = scmp.eq.s32.totalorder %s16, 0
    %p38 = por %p36, %p37
    %s39 = ssub.s32 %s10, %s17
    %p40 = scmp.eq.s32.totalorder %s39, 0
    %s42 = sadd.s32 %s41, 1
    %s43 = scalar_select %p40, %s41, %s42
    %p46 = pneg %p40
    %p47 = scmp.eq.s32.totalorder %s10, 1
    %p48 = por %p46, %p47
    %p49 = scmp.ne.s32.totalorder %s41, %s44
    %p50 = scmp.eq.s32.totalorder %s10, 0
    %p51 = por %p49, %p50
    %p52 = scmp.ne.s32.totalorder %s41, %s44
    %p53 = scmp.eq.s32.totalorder %s15, 1
    %p54 = por %p52, %p53
    %p55 = scmp.ne.s32.totalorder %s44, %s45
    %p56 = scmp.eq.s32.totalorder %s15, 0
    %p57 = por %p55, %p56
    %p58 = scmp.ne.s32.totalorder %s44, %s45
    %p59 = scmp.eq.s32.totalorder %s16, 1
    %p60 = por %p58, %p59
    %p62 = scmp.ne.s32.totalorder %s45, %s61
    %p63 = scmp.eq.s32.totalorder %s16, 0
    %p64 = por %p62, %p63
    %s66 = sadd.s32 %s65, 1
    %p69 = scmp.eq.s32.totalorder %s10, 1
    %p70 = scmp.ne.s32.totalorder %s65, %s67
    %p71 = scmp.eq.s32.totalorder %s10, 0
    %p72 = por %p70, %p71
    %p73 = scmp.ne.s32.totalorder %s65, %s67
    %p74 = scmp.eq.s32.totalorder %s15, 1
    %p75 = por %p73, %p74
    %p76 = scmp.ne.s32.totalorder %s67, %s68
    %p77 = scmp.eq.s32.totalorder %s15, 0
    %p78 = por %p76, %p77
    %p79 = scmp.ne.s32.totalorder %s67, %s68
    %p80 = scmp.eq.s32.totalorder %s16, 1
    %p81 = por %p79, %p80
    %p83 = scmp.ne.s32.totalorder %s68, %s82
    %p84 = scmp.eq.s32.totalorder %s16, 0
    %p85 = por %p83, %p84
    %s87 = sadd.s32 %s86, 1
    %p90 = scmp.eq.s32.totalorder %s10, 1
    %p91 = scmp.ne.s32.totalorder %s86, %s88
    %p92 = scmp.eq.s32.totalorder %s10, 0
    %p93 = por %p91, %p92
    %p94 = scmp.ne.s32.totalorder %s86, %s88
    %p95 = scmp.eq.s32.totalorder %s15, 1
    %p96 = por %p94, %p95
    %p97 = scmp.ne.s32.totalorder %s88, %s89
    %p98 = scmp.eq.s32.totalorder %s15, 0
    %p99 = por %p97, %p98
    %p100 = scmp.ne.s32.totalorder %s88, %s89
    %p101 = scmp.eq.s32.totalorder %s16, 1
    %p102 = por %p100, %p101
    %p104 = scmp.ne.s32.totalorder %s89, %s103
    %p105 = scmp.eq.s32.totalorder %s16, 0
    %p106 = por %p104, %p105
    %s107 = ssub.s32 %s10, %s17
    %p108 = scmp.eq.s32.totalorder %s107, 0
    %s110 = sadd.s32 %s109, 1
    %s111 = scalar_select %p108, %s109, %s110
    %p114 = pneg %p108
    %p115 = scmp.eq.s32.totalorder %s10, 1
    %p116 = por %p114, %p115
    %p117 = scmp.ne.s32.totalorder %s109, %s112
    %p118 = scmp.eq.s32.totalorder %s10, 0
    %p119 = por %p117, %p118
    %p120 = scmp.ne.s32.totalorder %s109, %s112
    %p121 = scmp.eq.s32.totalorder %s15, 1
    %p122 = por %p120, %p121
    %p123 = scmp.ne.s32.totalorder %s112, %s113
    %p124 = scmp.eq.s32.totalorder %s15, 0
    %p125 = por %p123, %p124
    %p126 = scmp.ne.s32.totalorder %s112, %s113
    %p127 = scmp.eq.s32.totalorder %s16, 1
    %p128 = por %p126, %p127
    %p130 = scmp.ne.s32.totalorder %s113, %s129
    %p131 = scmp.eq.s32.totalorder %s16, 0
    %p132 = por %p130, %p131
    %p133 = scmp.le.s32.totalorder 1, %s10
    %p134 = scmp.lt.s32.totalorder %s10, 3
    %p135 = pnand %p133, %p134
    %p136 = pneg %p135
    // Predicated region
    $region9: #{resnet_block_forward.1} parent=5 // pred_check
      _
    $region10: #{resnet_block_forward.1} parent=5 // pred_check_branch
      %138 = sbr.rel (%p135) target = $region12
    $region11: #{resnet_block_forward.1} parent=5 // pred_region
      %s139 = ssub.s32 %s10, 1
      // Predicated region
      $region13: #{resnet_block_forward.1} parent=11 // pred_check
        %p140 = pneg %p31
      $region14: #{resnet_block_forward.1} parent=11 // pred_check_branch
        %142 = sbr.rel (%p140) target = $region16
      $region15: #{resnet_block_forward.1} parent=11 // pred_region
        _
      $region16: #{resnet_block_forward.1} parent=11 // pred_fallthru
        _
      // Predicated region
      $region17: #{resnet_block_forward.1} parent=11 // pred_check
        %p143 = pneg %p78
      $region18: #{resnet_block_forward.1} parent=11 // pred_check_branch
        %145 = sbr.rel (%p143) target = $region20
      $region19: #{resnet_block_forward.1} parent=11 // pred_region
        _
      $region20: #{resnet_block_forward.1} parent=11 // pred_fallthru
        _
      // Predicated region
      $region21: #{resnet_block_forward.1} parent=11 // pred_check
        %p146 = pneg %p99
      $region22: #{resnet_block_forward.1} parent=11 // pred_check_branch
        %148 = sbr.rel (%p146) target = $region24
      $region23: #{resnet_block_forward.1} parent=11 // pred_region
        _
      $region24: #{resnet_block_forward.1} parent=11 // pred_fallthru
        _
    $region12: #{resnet_block_forward.1} parent=5 // pred_fallthru
      _
    %p149 = scmp.lt.s32.totalorder %s10, 2
    // Predicated region
    $region25: #{resnet_block_forward.1} parent=5 // pred_check
      %p150 = pneg %p149
    $region26: #{resnet_block_forward.1} parent=5 // pred_check_branch
      %152 = sbr.rel (%p150) target = $region28
    $region27: #{resnet_block_forward.1} parent=5 // pred_region
      // Predicated region
      $region29: #{resnet_block_forward.1} parent=27 // pred_check
        %p153 = pneg %p51
      $region30: #{resnet_block_forward.1} parent=27 // pred_check_branch
        %155 = sbr.rel (%p153) target = $region32
      $region31: #{resnet_block_forward.1} parent=27 // pred_region
        %p156 = scmp.lt.s32.totalorder %s10, 1
        %s157 = scalar_select %p156, %s10, 1
        %s158 = smul.addr %s157, 48
        %s159 = smul.addr %s158, 8
        %s160 = scalar_lea.vmem %s1, %s159
      $region32: #{resnet_block_forward.1} parent=27 // pred_fallthru
        _
    $region28: #{resnet_block_forward.1} parent=5 // pred_fallthru
      _
    %p161 = scmp.le.s32.totalorder 1, %s10
    %p162 = scmp.lt.s32.totalorder %s10, 3
    %p163 = pnand %p161, %p162
    %p164 = pneg %p163
    // Predicated region
    $region33: #{resnet_block_forward.1} parent=5 // pred_check
      _
    $region34: #{resnet_block_forward.1} parent=5 // pred_check_branch
      %166 = sbr.rel (%p163) target = $region36
    $region35: #{resnet_block_forward.1} parent=5 // pred_region
      %s167 = ssub.s32 %s10, 1
      %p168 = pneg %p31
      %p169 = pneg %p28
      %p170 = scmp.lt.s32.totalorder %s15, 1
      %s171 = scalar_select %p170, %s15, 1
      %s172 = smul.addr %s171, 48
      %s173 = smul.addr %s172, 8
      %s174 = scalar_lea.vmem %s1, %s173
      %p175 = pneg %p57
      %p176 = pneg %p54
      %p177 = pneg %p78
      %p178 = pneg %p75
      %p179 = pneg %p99
      %p180 = pneg %p96
      %p181 = pneg %p125
      %p182 = pneg %p122
      %p183 = scmp.lt.s32.totalorder %s15, 1
      %s184 = scalar_select %p183, %s15, 1
      %s185 = smul.addr %s184, 48
      %s186 = smul.addr %s185, 8
      %s187 = scalar_lea.vmem %s4, %s186
      %p188 = scmp.lt.s32.totalorder %s15, 1
      %s189 = scalar_select %p188, %s15, 1
      %s190 = smul.addr %s189, 48
      %s191 = smul.addr %s190, 8
      %s192 = scalar_lea.vmem %s1, %s191
      %p193 = scmp.lt.s32.totalorder %s15, 1
      %s194 = scalar_select %p193, %s15, 1
      %s195 = smul.addr %s194, 48
      %s196 = smul.addr %s195, 8
      %s197 = scalar_lea.vmem %s4, %s196
      %v198 = vld [vmem:[%s0] sm:$0xff]
      %v199 = vld [vmem:[%s0 + $0x8] sm:$0xff]
      %v200 = vld [vmem:[%s0 + $0x10] sm:$0xff]
      %v201 = vld [vmem:[%s0 + $0x18] sm:$0xff]
      %v202 = vld [vmem:[%s0 + $0x20] sm:$0xff]
      %v203 = vld [vmem:[%s0 + $0x28] sm:$0xff]
      %v204 = vld [vmem:[%s0 + $0x30] sm:$0xff]
      %v205 = vld [vmem:[%s0 + $0x38] sm:$0xff]
      %v206 = vld [vmem:[%s0 + $0x40] sm:$0xff]
      %v207 = vld [vmem:[%s0 + $0x48] sm:$0xff]
      %v208 = vld [vmem:[%s0 + $0x50] sm:$0xff]
      %v209 = vld [vmem:[%s0 + $0x58] sm:$0xff]
      %v210 = vld [vmem:[%s0 + $0x60] sm:$0xff]
      %v211 = vld [vmem:[%s0 + $0x68] sm:$0xff]
      %v212 = vld [vmem:[%s0 + $0x70] sm:$0xff]
      %v213 = vld [vmem:[%s0 + $0x78] sm:$0xff]
      %v214 = vld [vmem:[%s0 + $0x80] sm:$0xff]
      %v215 = vld [vmem:[%s0 + $0x88] sm:$0xff]
      %v216 = vld [vmem:[%s0 + $0x90] sm:$0xff]
      %v217 = vld [vmem:[%s0 + $0x98] sm:$0xff]
      %v218 = vld [vmem:[%s0 + $0xa0] sm:$0xff]
      %v219 = vld [vmem:[%s0 + $0xa8] sm:$0xff]
      %v220 = vld [vmem:[%s0 + $0xb0] sm:$0xff]
      %v221 = vld [vmem:[%s0 + $0xb8] sm:$0xff]
      %v222 = vld [vmem:[%s0 + $0xc0] sm:$0xff]
      %v223 = vld [vmem:[%s0 + $0xc8] sm:$0xff]
      %v224 = vld [vmem:[%s0 + $0xd0] sm:$0xff]
      %v225 = vld [vmem:[%s0 + $0xd8] sm:$0xff]
      %v226 = vld [vmem:[%s0 + $0xe0] sm:$0xff]
      %v227 = vld [vmem:[%s0 + $0xe8] sm:$0xff]
      %v228 = vld [vmem:[%s0 + $0xf0] sm:$0xff]
      %v229 = vld [vmem:[%s0 + $0xf8] sm:$0xff]
      %v230 = vld [vmem:[%s0 + $0x100] sm:$0xff]
      %v231 = vld [vmem:[%s0 + $0x108] sm:$0xff]
      %v232 = vld [vmem:[%s0 + $0x110] sm:$0xff]
      %v233 = vld [vmem:[%s0 + $0x118] sm:$0xff]
      %v234 = vld [vmem:[%s0 + $0x120] sm:$0xff]
      %v235 = vld [vmem:[%s0 + $0x128] sm:$0xff]
      %v236 = vld [vmem:[%s0 + $0x130] sm:$0xff]
      %v237 = vld [vmem:[%s0 + $0x138] sm:$0xff]
      %v238 = vld [vmem:[%s0 + $0x140] sm:$0xff]
      %v239 = vld [vmem:[%s0 + $0x148] sm:$0xff]
      %v240 = vld [vmem:[%s0 + $0x150] sm:$0xff]
      %v241 = vld [vmem:[%s0 + $0x158] sm:$0xff]
      %v242 = vld [vmem:[%s0 + $0x160] sm:$0xff]
      %v243 = vld [vmem:[%s0 + $0x168] sm:$0xff]
      %v244 = vld [vmem:[%s0 + $0x170] sm:$0xff]
      %v245 = vld [vmem:[%s0 + $0x178] sm:$0xff]
      %vm246 = vcmp.lt.s32.totalorder %v198, 16
      %vm247 = vcmp.lt.s32.totalorder %v199, 16
      %vm248 = vcmp.lt.s32.totalorder %v200, 16
      %vm249 = vcmp.lt.s32.totalorder %v201, 16
      %vm250 = vcmp.lt.s32.totalorder %v202, 16
      %vm251 = vcmp.lt.s32.totalorder %v203, 16
      %vm252 = vcmp.lt.s32.totalorder %v204, 16
      %vm253 = vcmp.lt.s32.totalorder %v205, 16
      %vm254 = vcmp.lt.s32.totalorder %v206, 16
      %vm255 = vcmp.lt.s32.totalorder %v207, 16
      %vm256 = vcmp.lt.s32.totalorder %v208, 16
      %vm257 = vcmp.lt.s32.totalorder %v209, 16
      %vm258 = vcmp.lt.s32.totalorder %v210, 16
      %vm259 = vcmp.lt.s32.totalorder %v211, 16
      %vm260 = vcmp.lt.s32.totalorder %v212, 16
      %vm261 = vcmp.lt.s32.totalorder %v213, 16
      %vm262 = vcmp.lt.s32.totalorder %v214, 16
      %vm263 = vcmp.lt.s32.totalorder %v215, 16
      %vm264 = vcmp.lt.s32.totalorder %v216, 16
      %vm265 = vcmp.lt.s32.totalorder %v217, 16
      %vm266 = vcmp.lt.s32.totalorder %v218, 16
      %vm267 = vcmp.lt.s32.totalorder %v219, 16
      %vm268 = vcmp.lt.s32.totalorder %v220, 16
      %vm269 = vcmp.lt.s32.totalorder %v221, 16
      %vm270 = vcmp.lt.s32.totalorder %v222, 16
      %vm271 = vcmp.lt.s32.totalorder %v223, 16
      %vm272 = vcmp.lt.s32.totalorder %v224, 16
      %vm273 = vcmp.lt.s32.totalorder %v225, 16
      %vm274 = vcmp.lt.s32.totalorder %v226, 16
      %vm275 = vcmp.lt.s32.totalorder %v227, 16
      %vm276 = vcmp.lt.s32.totalorder %v228, 16
      %vm277 = vcmp.lt.s32.totalorder %v229, 16
      %vm278 = vcmp.lt.s32.totalorder %v230, 16
      %vm279 = vcmp.lt.s32.totalorder %v231, 16
      %vm280 = vcmp.lt.s32.totalorder %v232, 16
      %vm281 = vcmp.lt.s32.totalorder %v233, 16
      %vm282 = vcmp.lt.s32.totalorder %v234, 16
      %vm283 = vcmp.lt.s32.totalorder %v235, 16
      %vm284 = vcmp.lt.s32.totalorder %v236, 16
      %vm285 = vcmp.lt.s32.totalorder %v237, 16
      %vm286 = vcmp.lt.s32.totalorder %v238, 16
      %vm287 = vcmp.lt.s32.totalorder %v239, 16
      %vm288 = vcmp.lt.s32.totalorder %v240, 16
      %vm289 = vcmp.lt.s32.totalorder %v241, 16
      %vm290 = vcmp.lt.s32.totalorder %v242, 16
      %vm291 = vcmp.lt.s32.totalorder %v243, 16
      %vm292 = vcmp.lt.s32.totalorder %v244, 16
      %vm293 = vcmp.lt.s32.totalorder %v245, 16
      %v294 = vsel %vm246, 1, 0
      %v295 = vsel %vm247, 1, 0
      %v296 = vsel %vm248, 1, 0
      %v297 = vsel %vm249, 1, 0
      %v298 = vsel %vm250, 1, 0
      %v299 = vsel %vm251, 1, 0
      %v300 = vsel %vm252, 1, 0
      %v301 = vsel %vm253, 1, 0
      %v302 = vsel %vm254, 1, 0
      %v303 = vsel %vm255, 1, 0
      %v304 = vsel %vm256, 1, 0
      %v305 = vsel %vm257, 1, 0
      %v306 = vsel %vm258, 1, 0
      %v307 = vsel %vm259, 1, 0
      %v308 = vsel %vm260, 1, 0
      %v309 = vsel %vm261, 1, 0
      %v310 = vsel %vm262, 1, 0
      %v311 = vsel %vm263, 1, 0
      %v312 = vsel %vm264, 1, 0
      %v313 = vsel %vm265, 1, 0
      %v314 = vsel %vm266, 1, 0
      %v315 = vsel %vm267, 1, 0
      %v316 = vsel %vm268, 1, 0
      %v317 = vsel %vm269, 1, 0
      %v318 = vsel %vm270, 1, 0
      %v319 = vsel %vm271, 1, 0
      %v320 = vsel %vm272, 1, 0
      %v321 = vsel %vm273, 1, 0
      %v322 = vsel %vm274, 1, 0
      %v323 = vsel %vm275, 1, 0
      %v324 = vsel %vm276, 1, 0
      %v325 = vsel %vm277, 1, 0
      %v326 = vsel %vm278, 1, 0
      %v327 = vsel %vm279, 1, 0
      %v328 = vsel %vm280, 1, 0
      %v329 = vsel %vm281, 1, 0
      %v330 = vsel %vm282, 1, 0
      %v331 = vsel %vm283, 1, 0
      %v332 = vsel %vm284, 1, 0
      %v333 = vsel %vm285, 1, 0
      %v334 = vsel %vm286, 1, 0
      %v335 = vsel %vm287, 1, 0
      %v336 = vsel %vm288, 1, 0
      %v337 = vsel %vm289, 1, 0
      %v338 = vsel %vm290, 1, 0
      %v339 = vsel %vm291, 1, 0
      %v340 = vsel %vm292, 1, 0
      %v341 = vsel %vm293, 1, 0
      %v342 = vcvt.s32.f32 %v294
      %v343 = vcvt.s32.f32 %v295
      %v344 = vcvt.s32.f32 %v296
      %v345 = vcvt.s32.f32 %v297
      %v346 = vcvt.s32.f32 %v298
      %v347 = vcvt.s32.f32 %v299
      %v348 = vcvt.s32.f32 %v300
      %v349 = vcvt.s32.f32 %v301
      %v350 = vcvt.s32.f32 %v302
      %v351 = vcvt.s32.f32 %v303
      %v352 = vcvt.s32.f32 %v304
      %v353 = vcvt.s32.f32 %v305
      %v354 = vcvt.s32.f32 %v306
      %v355 = vcvt.s32.f32 %v307
      %v356 = vcvt.s32.f32 %v308
      %v357 = vcvt.s32.f32 %v309
      %v358 = vcvt.s32.f32 %v310
      %v359 = vcvt.s32.f32 %v311
      %v360 = vcvt.s32.f32 %v312
      %v361 = vcvt.s32.f32 %v313
      %v362 = vcvt.s32.f32 %v314
      %v363 = vcvt.s32.f32 %v315
      %v364 = vcvt.s32.f32 %v316
      %v365 = vcvt.s32.f32 %v317
      %v366 = vcvt.s32.f32 %v318
      %v367 = vcvt.s32.f32 %v319
      %v368 = vcvt.s32.f32 %v320
      %v369 = vcvt.s32.f32 %v321
      %v370 = vcvt.s32.f32 %v322
      %v371 = vcvt.s32.f32 %v323
      %v372 = vcvt.s32.f32 %v324
      %v373 = vcvt.s32.f32 %v325
      %v374 = vcvt.s32.f32 %v326
      %v375 = vcvt.s32.f32 %v327
      %v376 = vcvt.s32.f32 %v328
      %v377 = vcvt.s32.f32 %v329
      %v378 = vcvt.s32.f32 %v330
      %v379 = vcvt.s32.f32 %v331
      %v380 = vcvt.s32.f32 %v332
      %v381 = vcvt.s32.f32 %v333
      %v382 = vcvt.s32.f32 %v334
      %v383 = vcvt.s32.f32 %v335
      %v384 = vcvt.s32.f32 %v336
      %v385 = vcvt.s32.f32 %v337
      %v386 = vcvt.s32.f32 %v338
      %v387 = vcvt.s32.f32 %v339
      %v388 = vcvt.s32.f32 %v340
      %v389 = vcvt.s32.f32 %v341
      %vm390 = vcmp.eq.s32.totalorder %v198, 16
      %vm391 = vcmp.eq.s32.totalorder %v199, 16
      %vm392 = vcmp.eq.s32.totalorder %v200, 16
      %vm393 = vcmp.eq.s32.totalorder %v201, 16
      %vm394 = vcmp.eq.s32.totalorder %v202, 16
      %vm395 = vcmp.eq.s32.totalorder %v203, 16
      %vm396 = vcmp.eq.s32.totalorder %v204, 16
      %vm397 = vcmp.eq.s32.totalorder %v205, 16
      %vm398 = vcmp.eq.s32.totalorder %v206, 16
      %vm399 = vcmp.eq.s32.totalorder %v207, 16
      %vm400 = vcmp.eq.s32.totalorder %v208, 16
      %vm401 = vcmp.eq.s32.totalorder %v209, 16
      %vm402 = vcmp.eq.s32.totalorder %v210, 16
      %vm403 = vcmp.eq.s32.totalorder %v211, 16
      %vm404 = vcmp.eq.s32.totalorder %v212, 16
      %vm405 = vcmp.eq.s32.totalorder %v213, 16
      %vm406 = vcmp.eq.s32.totalorder %v214, 16
      %vm407 = vcmp.eq.s32.totalorder %v215, 16
      %vm408 = vcmp.eq.s32.totalorder %v216, 16
      %vm409 = vcmp.eq.s32.totalorder %v217, 16
      %vm410 = vcmp.eq.s32.totalorder %v218, 16
      %vm411 = vcmp.eq.s32.totalorder %v219, 16
      %vm412 = vcmp.eq.s32.totalorder %v220, 16
      %vm413 = vcmp.eq.s32.totalorder %v221, 16
      %vm414 = vcmp.eq.s32.totalorder %v222, 16
      %vm415 = vcmp.eq.s32.totalorder %v223, 16
      %vm416 = vcmp.eq.s32.totalorder %v224, 16
      %vm417 = vcmp.eq.s32.totalorder %v225, 16
      %vm418 = vcmp.eq.s32.totalorder %v226, 16
      %vm419 = vcmp.eq.s32.totalorder %v227, 16
      %vm420 = vcmp.eq.s32.totalorder %v228, 16
      %vm421 = vcmp.eq.s32.totalorder %v229, 16
      %vm422 = vcmp.eq.s32.totalorder %v230, 16
      %vm423 = vcmp.eq.s32.totalorder %v231, 16
      %vm424 = vcmp.eq.s32.totalorder %v232, 16
      %vm425 = vcmp.eq.s32.totalorder %v233, 16
      %vm426 = vcmp.eq.s32.totalorder %v234, 16
      %vm427 = vcmp.eq.s32.totalorder %v235, 16
      %vm428 = vcmp.eq.s32.totalorder %v236, 16
      %vm429 = vcmp.eq.s32.totalorder %v237, 16
      %vm430 = vcmp.eq.s32.totalorder %v238, 16
      %vm431 = vcmp.eq.s32.totalorder %v239, 16
      %vm432 = vcmp.eq.s32.totalorder %v240, 16
      %vm433 = vcmp.eq.s32.totalorder %v241, 16
      %vm434 = vcmp.eq.s32.totalorder %v242, 16
      %vm435 = vcmp.eq.s32.totalorder %v243, 16
      %vm436 = vcmp.eq.s32.totalorder %v244, 16
      %vm437 = vcmp.eq.s32.totalorder %v245, 16
      %vm438 = vcmp.eq.s32.totalorder %v198, 23
      %vm439 = vcmp.eq.s32.totalorder %v199, 23
      %vm440 = vcmp.eq.s32.totalorder %v200, 23
      %vm441 = vcmp.eq.s32.totalorder %v201, 23
      %vm442 = vcmp.eq.s32.totalorder %v202, 23
      %vm443 = vcmp.eq.s32.totalorder %v203, 23
      %vm444 = vcmp.eq.s32.totalorder %v204, 23
      %vm445 = vcmp.eq.s32.totalorder %v205, 23
      %vm446 = vcmp.eq.s32.totalorder %v206, 23
      %vm447 = vcmp.eq.s32.totalorder %v207, 23
      %vm448 = vcmp.eq.s32.totalorder %v208, 23
      %vm449 = vcmp.eq.s32.totalorder %v209, 23
      %vm450 = vcmp.eq.s32.totalorder %v210, 23
      %vm451 = vcmp.eq.s32.totalorder %v211, 23
      %vm452 = vcmp.eq.s32.totalorder %v212, 23
      %vm453 = vcmp.eq.s32.totalorder %v213, 23
      %vm454 = vcmp.eq.s32.totalorder %v214, 23
      %vm455 = vcmp.eq.s32.totalorder %v215, 23
      %vm456 = vcmp.eq.s32.totalorder %v216, 23
      %vm457 = vcmp.eq.s32.totalorder %v217, 23
      %vm458 = vcmp.eq.s32.totalorder %v218, 23
      %vm459 = vcmp.eq.s32.totalorder %v219, 23
      %vm460 = vcmp.eq.s32.totalorder %v220, 23
      %vm461 = vcmp.eq.s32.totalorder %v221, 23
      %vm462 = vcmp.eq.s32.totalorder %v222, 23
      %vm463 = vcmp.eq.s32.totalorder %v223, 23
      %vm464 = vcmp.eq.s32.totalorder %v224, 23
      %vm465 = vcmp.eq.s32.totalorder %v225, 23
      %vm466 = vcmp.eq.s32.totalorder %v226, 23
      %vm467 = vcmp.eq.s32.totalorder %v227, 23
      %vm468 = vcmp.eq.s32.totalorder %v228, 23
      %vm469 = vcmp.eq.s32.totalorder %v229, 23
      %vm470 = vcmp.eq.s32.totalorder %v230, 23
      %vm471 = vcmp.eq.s32.totalorder %v231, 23
      %vm472 = vcmp.eq.s32.totalorder %v232, 23
      %vm473 = vcmp.eq.s32.totalorder %v233, 23
      %vm474 = vcmp.eq.s32.totalorder %v234, 23
      %vm475 = vcmp.eq.s32.totalorder %v235, 23
      %vm476 = vcmp.eq.s32.totalorder %v236, 23
      %vm477 = vcmp.eq.s32.totalorder %v237, 23
      %vm478 = vcmp.eq.s32.totalorder %v238, 23
      %vm479 = vcmp.eq.s32.totalorder %v239, 23
      %vm480 = vcmp.eq.s32.totalorder %v240, 23
      %vm481 = vcmp.eq.s32.totalorder %v241, 23
      %vm482 = vcmp.eq.s32.totalorder %v242, 23
      %vm483 = vcmp.eq.s32.totalorder %v243, 23
      %vm484 = vcmp.eq.s32.totalorder %v244, 23
      %vm485 = vcmp.eq.s32.totalorder %v245, 23
      %486 = vst [vmem:[#allocation2] sm:$0xff] 0.0
      %487 = vst [vmem:[#allocation2 + $0x8] sm:$0xff] 0.0
      %488 = vst [vmem:[#allocation2 + $0x10] sm:$0xff] 0.0
      %489 = vst [vmem:[#allocation2 + $0x1c8] sm:$0xff] 0.0
      %490 = vst [vmem:[#allocation2 + $0x1d0] sm:$0xff] 0.0
      %491 = vst [vmem:[#allocation2 + $0x1d8] sm:$0xff] 0.0
      %v492 = vld [vmem:[%s192] sm:$0xff]
      %v493 = vld [vmem:[%s192 + $0x8] sm:$0xff]
      %v494 = vld [vmem:[%s192 + $0x10] sm:$0xff]
      %v495 = vld [vmem:[%s192 + $0x18] sm:$0xff]
      %v496 = vld [vmem:[%s192 + $0x20] sm:$0xff]
      %v497 = vld [vmem:[%s192 + $0x28] sm:$0xff]
      %v498 = vld [vmem:[%s192 + $0x30] sm:$0xff]
      %v499 = vld [vmem:[%s192 + $0x38] sm:$0xff]
      %v500 = vld [vmem:[%s192 + $0x40] sm:$0xff]
      %v501 = vld [vmem:[%s192 + $0x48] sm:$0xff]
      %v502 = vld [vmem:[%s192 + $0x50] sm:$0xff]
      %v503 = vld [vmem:[%s192 + $0x58] sm:$0xff]
      %v504 = vld [vmem:[%s192 + $0x60] sm:$0xff]
      %v505 = vld [vmem:[%s192 + $0x68] sm:$0xff]
      %v506 = vld [vmem:[%s192 + $0x70] sm:$0xff]
      %v507 = vld [vmem:[%s192 + $0x78] sm:$0xff]
      %v508 = vld [vmem:[%s192 + $0x80] sm:$0xff]
      %v509 = vld [vmem:[%s192 + $0x88] sm:$0xff]
      %v510 = vld [vmem:[%s192 + $0x90] sm:$0xff]
      %v511 = vld [vmem:[%s192 + $0x98] sm:$0xff]
      %v512 = vld [vmem:[%s192 + $0xa0] sm:$0xff]
      %v513 = vld [vmem:[%s192 + $0xa8] sm:$0xff]
      %v514 = vld [vmem:[%s192 + $0xb0] sm:$0xff]
      %v515 = vld [vmem:[%s192 + $0xb8] sm:$0xff]
      %v516 = vld [vmem:[%s192 + $0xc0] sm:$0xff]
      %v517 = vld [vmem:[%s192 + $0xc8] sm:$0xff]
      %v518 = vld [vmem:[%s192 + $0xd0] sm:$0xff]
      %v519 = vld [vmem:[%s192 + $0xd8] sm:$0xff]
      %v520 = vld [vmem:[%s192 + $0xe0] sm:$0xff]
      %v521 = vld [vmem:[%s192 + $0xe8] sm:$0xff]
      %v522 = vld [vmem:[%s192 + $0xf0] sm:$0xff]
      %v523 = vld [vmem:[%s192 + $0xf8] sm:$0xff]
      %v524 = vld [vmem:[%s192 + $0x100] sm:$0xff]
      %v525 = vld [vmem:[%s192 + $0x108] sm:$0xff]
      %v526 = vld [vmem:[%s192 + $0x110] sm:$0xff]
      %v527 = vld [vmem:[%s192 + $0x118] sm:$0xff]
      %v528 = vld [vmem:[%s192 + $0x120] sm:$0xff]
      %v529 = vld [vmem:[%s192 + $0x128] sm:$0xff]
      %v530 = vld [vmem:[%s192 + $0x130] sm:$0xff]
      %v531 = vld [vmem:[%s192 + $0x138] sm:$0xff]
      %v532 = vld [vmem:[%s192 + $0x140] sm:$0xff]
      %v533 = vld [vmem:[%s192 + $0x148] sm:$0xff]
      %v534 = vld [vmem:[%s192 + $0x150] sm:$0xff]
      %v535 = vld [vmem:[%s192 + $0x158] sm:$0xff]
      %v536 = vld [vmem:[%s192 + $0x160] sm:$0xff]
      %v537 = vld [vmem:[%s192 + $0x168] sm:$0xff]
      %v538 = vld [vmem:[%s192 + $0x170] sm:$0xff]
      %v539 = vld [vmem:[%s192 + $0x178] sm:$0xff]
      %v540 = vrot.slane %v492, 6
      %v541 = vrot.slane %v493, 6
      %v542 = vrot.slane %v494, 6
      %v543 = vrot.slane %v495, 6
      %v544 = vrot.slane %v496, 6
      %v545 = vrot.slane %v497, 6
      %v546 = vrot.slane %v498, 6
      %v547 = vrot.slane %v499, 6
      %v548 = vrot.slane %v500, 6
      %v549 = vrot.slane %v501, 6
      %v550 = vrot.slane %v502, 6
      %v551 = vrot.slane %v503, 6
      %v552 = vrot.slane %v504, 6
      %v553 = vrot.slane %v505, 6
      %v554 = vrot.slane %v506, 6
      %v555 = vrot.slane %v507, 6
      %v556 = vrot.slane %v508, 6
      %v557 = vrot.slane %v509, 6
      %v558 = vrot.slane %v510, 6
      %v559 = vrot.slane %v511, 6
      %v560 = vrot.slane %v512, 6
      %v561 = vrot.slane %v513, 6
      %v562 = vrot.slane %v514, 6
      %v563 = vrot.slane %v515, 6
      %v564 = vrot.slane %v516, 6
      %v565 = vrot.slane %v517, 6
      %v566 = vrot.slane %v518, 6
      %v567 = vrot.slane %v519, 6
      %v568 = vrot.slane %v520, 6
      %v569 = vrot.slane %v521, 6
      %v570 = vrot.slane %v522, 6
      %v571 = vrot.slane %v523, 6
      %v572 = vrot.slane %v524, 6
      %v573 = vrot.slane %v525, 6
      %v574 = vrot.slane %v526, 6
      %v575 = vrot.slane %v527, 6
      %v576 = vrot.slane %v528, 6
      %v577 = vrot.slane %v529, 6
      %v578 = vrot.slane %v530, 6
      %v579 = vrot.slane %v531, 6
      %v580 = vrot.slane %v532, 6
      %v581 = vrot.slane %v533, 6
      %v582 = vrot.slane %v534, 6
      %v583 = vrot.slane %v535, 6
      %v584 = vrot.slane %v536, 6
      %v585 = vrot.slane %v537, 6
      %v586 = vrot.slane %v538, 6
      %v587 = vrot.slane %v539, 6
      %v588 = vlaneseq
      %v589 = vshrl.u32 %v588, 7
      %vm590 = vcmp.lt.s32.totalorder %v589, 2
      %v591 = vsel %vm590, %v586, %v587
      %v592 = vsel %vm590, %v585, %v586
      %v593 = vsel %vm590, %v584, %v585
      %v594 = vsel %vm590, %v583, %v584
      %v595 = vsel %vm590, %v582, %v583
      %v596 = vsel %vm590, %v581, %v582
      %v597 = vsel %vm590, %v580, %v581
      %v598 = vsel %vm590, %v579, %v580
      %v599 = vsel %vm590, %v578, %v579
      %v600 = vsel %vm590, %v577, %v578
      %v601 = vsel %vm590, %v576, %v577
      %v602 = vsel %vm590, %v575, %v576
      %v603 = vsel %vm590, %v574, %v575
      %v604 = vsel %vm590, %v573, %v574
      %v605 = vsel %vm590, %v572, %v573
      %v606 = vsel %vm590, %v571, %v572
      %v607 = vsel %vm590, %v570, %v571
      %v608 = vsel %vm590, %v569, %v570
      %v609 = vsel %vm590, %v568, %v569
      %v610 = vsel %vm590, %v567, %v568
      %v611 = vsel %vm590, %v566, %v567
      %v612 = vsel %vm590, %v565, %v566
      %v613 = vsel %vm590, %v564, %v565
      %v614 = vsel %vm590, %v563, %v564
      %v615 = vsel %vm590, %v562, %v563
      %v616 = vsel %vm590, %v561, %v562
      %v617 = vsel %vm590, %v560, %v561
      %v618 = vsel %vm590, %v559, %v560
      %v619 = vsel %vm590, %v558, %v559
      %v620 = vsel %vm590, %v557, %v558
      %v621 = vsel %vm590, %v556, %v557
      %v622 = vsel %vm590, %v555, %v556
      %v623 = vsel %vm590, %v554, %v555
      %v624 = vsel %vm590, %v553, %v554
      %v625 = vsel %vm590, %v552, %v553
      %v626 = vsel %vm590, %v551, %v552
      %v627 = vsel %vm590, %v550, %v551
      %v628 = vsel %vm590, %v549, %v550
      %v629 = vsel %vm590, %v548, %v549
      %v630 = vsel %vm590, %v547, %v548
      %v631 = vsel %vm590, %v546, %v547
      %v632 = vsel %vm590, %v545, %v546
      %v633 = vsel %vm590, %v544, %v545
      %v634 = vsel %vm590, %v543, %v544
      %v635 = vsel %vm590, %v542, %v543
      %v636 = vsel %vm590, %v541, %v542
      %v637 = vsel %vm590, %v540, %v541
      %v638 = vsel %vm590, %v587, %v540
      %v639 = vrot.slane %v492, 2
      %v640 = vrot.slane %v493, 2
      %v641 = vrot.slane %v494, 2
      %v642 = vrot.slane %v495, 2
      %v643 = vrot.slane %v496, 2
      %v644 = vrot.slane %v497, 2
      %v645 = vrot.slane %v498, 2
      %v646 = vrot.slane %v499, 2
      %v647 = vrot.slane %v500, 2
      %v648 = vrot.slane %v501, 2
      %v649 = vrot.slane %v502, 2
      %v650 = vrot.slane %v503, 2
      %v651 = vrot.slane %v504, 2
      %v652 = vrot.slane %v505, 2
      %v653 = vrot.slane %v506, 2
      %v654 = vrot.slane %v507, 2
      %v655 = vrot.slane %v508, 2
      %v656 = vrot.slane %v509, 2
      %v657 = vrot.slane %v510, 2
      %v658 = vrot.slane %v511, 2
      %v659 = vrot.slane %v512, 2
      %v660 = vrot.slane %v513, 2
      %v661 = vrot.slane %v514, 2
      %v662 = vrot.slane %v515, 2
      %v663 = vrot.slane %v516, 2
      %v664 = vrot.slane %v517, 2
      %v665 = vrot.slane %v518, 2
      %v666 = vrot.slane %v519, 2
      %v667 = vrot.slane %v520, 2
      %v668 = vrot.slane %v521, 2
      %v669 = vrot.slane %v522, 2
      %v670 = vrot.slane %v523, 2
      %v671 = vrot.slane %v524, 2
      %v672 = vrot.slane %v525, 2
      %v673 = vrot.slane %v526, 2
      %v674 = vrot.slane %v527, 2
      %v675 = vrot.slane %v528, 2
      %v676 = vrot.slane %v529, 2
      %v677 = vrot.slane %v530, 2
      %v678 = vrot.slane %v531, 2
      %v679 = vrot.slane %v532, 2
      %v680 = vrot.slane %v533, 2
      %v681 = vrot.slane %v534, 2
      %v682 = vrot.slane %v535, 2
      %v683 = vrot.slane %v536, 2
      %v684 = vrot.slane %v537, 2
      %v685 = vrot.slane %v538, 2
      %v686 = vrot.slane %v539, 2
      %vm687 = vcmp.lt.s32.totalorder %v589, 6
      %v688 = vsel %vm687, %v685, %v686
      %v689 = vsel %vm687, %v684, %v685
      %v690 = vsel %vm687, %v683, %v684
      %v691 = vsel %vm687, %v682, %v683
      %v692 = vsel %vm687, %v681, %v682
      %v693 = vsel %vm687, %v680, %v681
      %v694 = vsel %vm687, %v679, %v680
      %v695 = vsel %vm687, %v678, %v679
      %v696 = vsel %vm687, %v677, %v678
      %v697 = vsel %vm687, %v676, %v677
      %v698 = vsel %vm687, %v675, %v676
      %v699 = vsel %vm687, %v674, %v675
      %v700 = vsel %vm687, %v673, %v674
      %v701 = vsel %vm687, %v672, %v673
      %v702 = vsel %vm687, %v671, %v672
      %v703 = vsel %vm687, %v670, %v671
      %v704 = vsel %vm687, %v669, %v670
      %v705 = vsel %vm687, %v668, %v669
      %v706 = vsel %vm687, %v667, %v668
      %v707 = vsel %vm687, %v666, %v667
      %v708 = vsel %vm687, %v665, %v666
      %v709 = vsel %vm687, %v664, %v665
      %v710 = vsel %vm687, %v663, %v664
      %v711 = vsel %vm687, %v662, %v663
      %v712 = vsel %vm687, %v661, %v662
      %v713 = vsel %vm687, %v660, %v661
      %v714 = vsel %vm687, %v659, %v660
      %v715 = vsel %vm687, %v658, %v659
      %v716 = vsel %vm687, %v657, %v658
      %v717 = vsel %vm687, %v656, %v657
      %v718 = vsel %vm687, %v655, %v656
      %v719 = vsel %vm687, %v654, %v655
      %v720 = vsel %vm687, %v653, %v654
      %v721 = vsel %vm687, %v652, %v653
      %v722 = vsel %vm687, %v651, %v652
      %v723 = vsel %vm687, %v650, %v651
      %v724 = vsel %vm687, %v649, %v650
      %v725 = vsel %vm687, %v648, %v649
      %v726 = vsel %vm687, %v647, %v648
      %v727 = vsel %vm687, %v646, %v647
      %v728 = vsel %vm687, %v645, %v646
      %v729 = vsel %vm687, %v644, %v645
      %v730 = vsel %vm687, %v643, %v644
      %v731 = vsel %vm687, %v642, %v643
      %v732 = vsel %vm687, %v641, %v642
      %v733 = vsel %vm687, %v640, %v641
      %v734 = vsel %vm687, %v639, %v640
      %v735 = vsel %vm687, %v686, %v639
      %v736 = vsel %vm390, 1, 0
      %v737 = vsel %vm391, 1, 0
      %v738 = vsel %vm392, 1, 0
      %v739 = vsel %vm393, 1, 0
      %v740 = vsel %vm394, 1, 0
      %v741 = vsel %vm395, 1, 0
      %v742 = vsel %vm396, 1, 0
      %v743 = vsel %vm397, 1, 0
      %v744 = vsel %vm398, 1, 0
      %v745 = vsel %vm399, 1, 0
      %v746 = vsel %vm400, 1, 0
      %v747 = vsel %vm401, 1, 0
      %v748 = vsel %vm402, 1, 0
      %v749 = vsel %vm403, 1, 0
      %v750 = vsel %vm404, 1, 0
      %v751 = vsel %vm405, 1, 0
      %v752 = vsel %vm406, 1, 0
      %v753 = vsel %vm407, 1, 0
      %v754 = vsel %vm408, 1, 0
      %v755 = vsel %vm409, 1, 0
      %v756 = vsel %vm410, 1, 0
      %v757 = vsel %vm411, 1, 0
      %v758 = vsel %vm412, 1, 0
      %v759 = vsel %vm413, 1, 0
      %v760 = vsel %vm414, 1, 0
      %v761 = vsel %vm415, 1, 0
      %v762 = vsel %vm416, 1, 0
      %v763 = vsel %vm417, 1, 0
      %v764 = vsel %vm418, 1, 0
      %v765 = vsel %vm419, 1, 0
      %v766 = vsel %vm420, 1, 0
      %v767 = vsel %vm421, 1, 0
      %v768 = vsel %vm422, 1, 0
      %v769 = vsel %vm423, 1, 0
      %v770 = vsel %vm424, 1, 0
      %v771 = vsel %vm425, 1, 0
      %v772 = vsel %vm426, 1, 0
      %v773 = vsel %vm427, 1, 0
      %v774 = vsel %vm428, 1, 0
      %v775 = vsel %vm429, 1, 0
      %v776 = vsel %vm430, 1, 0
      %v777 = vsel %vm431, 1, 0
      %v778 = vsel %vm432, 1, 0
      %v779 = vsel %vm433, 1, 0
      %v780 = vsel %vm434, 1, 0
      %v781 = vsel %vm435, 1, 0
      %v782 = vsel %vm436, 1, 0
      %v783 = vsel %vm437, 1, 0
      %784 = vset.pattern.permute.xlu0 0
      %785 = vperm.xlu0 %784, %v736
      %v786 = vpop.permute.xlu0 %785
      %787 = vset.pattern.permute.xlu0 0
      %788 = vperm.xlu0 %787, %v737
      %v789 = vpop.permute.xlu0 %788
      %790 = vset.pattern.permute.xlu0 0
      %791 = vperm.xlu0 %790, %v738
      %v792 = vpop.permute.xlu0 %791
      %793 = vset.pattern.permute.xlu0 0
      %794 = vperm.xlu0 %793, %v739
      %v795 = vpop.permute.xlu0 %794
      %796 = vset.pattern.permute.xlu0 0
      %797 = vperm.xlu0 %796, %v740
      %v798 = vpop.permute.xlu0 %797
      %799 = vset.pattern.permute.xlu0 0
      %800 = vperm.xlu0 %799, %v741
      %v801 = vpop.permute.xlu0 %800
      %802 = vset.pattern.permute.xlu0 0
      %803 = vperm.xlu0 %802, %v742
      %v804 = vpop.permute.xlu0 %803
      %805 = vset.pattern.permute.xlu0 0
      %806 = vperm.xlu0 %805, %v743
      %v807 = vpop.permute.xlu0 %806
      %808 = vset.pattern.permute.xlu0 0
      %809 = vperm.xlu0 %808, %v744
      %v810 = vpop.permute.xlu0 %809
      %811 = vset.pattern.permute.xlu0 0
      %812 = vperm.xlu0 %811, %v745
      %v813 = vpop.permute.xlu0 %812
      %814 = vset.pattern.permute.xlu0 0
      %815 = vperm.xlu0 %814, %v746
      %v816 = vpop.permute.xlu0 %815
      %817 = vset.pattern.permute.xlu0 0
      %818 = vperm.xlu0 %817, %v747
      %v819 = vpop.permute.xlu0 %818
      %820 = vset.pattern.permute.xlu0 0
      %821 = vperm.xlu0 %820, %v748
      %v822 = vpop.permute.xlu0 %821
      %823 = vset.pattern.permute.xlu0 0
      %824 = vperm.xlu0 %823, %v749
      %v825 = vpop.permute.xlu0 %824
      %826 = vset.pattern.permute.xlu0 0
      %827 = vperm.xlu0 %826, %v750
      %v828 = vpop.permute.xlu0 %827
      %829 = vset.pattern.permute.xlu0 0
      %830 = vperm.xlu0 %829, %v751
      %v831 = vpop.permute.xlu0 %830
      %832 = vset.pattern.permute.xlu0 0
      %833 = vperm.xlu0 %832, %v752
      %v834 = vpop.permute.xlu0 %833
      %835 = vset.pattern.permute.xlu0 0
      %836 = vperm.xlu0 %835, %v753
      %v837 = vpop.permute.xlu0 %836
      %838 = vset.pattern.permute.xlu0 0
      %839 = vperm.xlu0 %838, %v754
      %v840 = vpop.permute.xlu0 %839
      %841 = vset.pattern.permute.xlu0 0
      %842 = vperm.xlu0 %841, %v755
      %v843 = vpop.permute.xlu0 %842
      %844 = vset.pattern.permute.xlu0 0
      %845 = vperm.xlu0 %844, %v756
      %v846 = vpop.permute.xlu0 %845
      %847 = vset.pattern.permute.xlu0 0
      %848 = vperm.xlu0 %847, %v757
      %v849 = vpop.permute.xlu0 %848
      %850 = vset.pattern.permute.xlu0 0
      %851 = vperm.xlu0 %850, %v758
      %v852 = vpop.permute.xlu0 %851
      %853 = vset.pattern.permute.xlu0 0
      %854 = vperm.xlu0 %853, %v759
      %v855 = vpop.permute.xlu0 %854
      %856 = vset.pattern.permute.xlu0 0
      %857 = vperm.xlu0 %856, %v760
      %v858 = vpop.permute.xlu0 %857
      %859 = vset.pattern.permute.xlu0 0
      %860 = vperm.xlu0 %859, %v761
      %v861 = vpop.permute.xlu0 %860
      %862 = vset.pattern.permute.xlu0 0
      %863 = vperm.xlu0 %862, %v762
      %v864 = vpop.permute.xlu0 %863
      %865 = vset.pattern.permute.xlu0 0
      %866 = vperm.xlu0 %865, %v763
      %v867 = vpop.permute.xlu0 %866
      %868 = vset.pattern.permute.xlu0 0
      %869 = vperm.xlu0 %868, %v764
      %v870 = vpop.permute.xlu0 %869
      %871 = vset.pattern.permute.xlu0 0
      %872 = vperm.xlu0 %871, %v765
      %v873 = vpop.permute.xlu0 %872
      %874 = vset.pattern.permute.xlu0 0
      %875 = vperm.xlu0 %874, %v766
      %v876 = vpop.permute.xlu0 %875
      %877 = vset.pattern.permute.xlu0 0
      %878 = vperm.xlu0 %877, %v767
      %v879 = vpop.permute.xlu0 %878
      %880 = vset.pattern.permute.xlu0 0
      %881 = vperm.xlu0 %880, %v768
      %v882 = vpop.permute.xlu0 %881
      %883 = vset.pattern.permute.xlu0 0
      %884 = vperm.xlu0 %883, %v769
      %v885 = vpop.permute.xlu0 %884
      %886 = vset.pattern.permute.xlu0 0
      %887 = vperm.xlu0 %886, %v770
      %v888 = vpop.permute.xlu0 %887
      %889 = vset.pattern.permute.xlu0 0
      %890 = vperm.xlu0 %889, %v771
      %v891 = vpop.permute.xlu0 %890
      %892 = vset.pattern.permute.xlu0 0
      %893 = vperm.xlu0 %892, %v772
      %v894 = vpop.permute.xlu0 %893
      %895 = vset.pattern.permute.xlu0 0
      %896 = vperm.xlu0 %895, %v773
      %v897 = vpop.permute.xlu0 %896
      %898 = vset.pattern.permute.xlu0 0
      %899 = vperm.xlu0 %898, %v774
      %v900 = vpop.permute.xlu0 %899
      %901 = vset.pattern.permute.xlu0 0
      %902 = vperm.xlu0 %901, %v775
      %v903 = vpop.permute.xlu0 %902
      %904 = vset.pattern.permute.xlu0 0
      %905 = vperm.xlu0 %904, %v776
      %v906 = vpop.permute.xlu0 %905
      %907 = vset.pattern.permute.xlu0 0
      %908 = vperm.xlu0 %907, %v777
      %v909 = vpop.permute.xlu0 %908
      %910 = vset.pattern.permute.xlu0 0
      %911 = vperm.xlu0 %910, %v778
      %v912 = vpop.permute.xlu0 %911
      %913 = vset.pattern.permute.xlu0 0
      %914 = vperm.xlu0 %913, %v779
      %v915 = vpop.permute.xlu0 %914
      %916 = vset.pattern.permute.xlu0 0
      %917 = vperm.xlu0 %916, %v780
      %v918 = vpop.permute.xlu0 %917
      %919 = vset.pattern.permute.xlu0 0
      %920 = vperm.xlu0 %919, %v781
      %v921 = vpop.permute.xlu0 %920
      %922 = vset.pattern.permute.xlu0 0
      %923 = vperm.xlu0 %922, %v782
      %v924 = vpop.permute.xlu0 %923
      %925 = vset.pattern.permute.xlu0 0
      %926 = vperm.xlu0 %925, %v783
      %v927 = vpop.permute.xlu0 %926
      %vm928 = vcmp.eq.s32.totalorder %v786, 1
      %vm929 = vcmp.eq.s32.totalorder %v789, 1
      %vm930 = vcmp.eq.s32.totalorder %v792, 1
      %vm931 = vcmp.eq.s32.totalorder %v795, 1
      %vm932 = vcmp.eq.s32.totalorder %v798, 1
      %vm933 = vcmp.eq.s32.totalorder %v801, 1
      %vm934 = vcmp.eq.s32.totalorder %v804, 1
      %vm935 = vcmp.eq.s32.totalorder %v807, 1
      %vm936 = vcmp.eq.s32.totalorder %v810, 1
      %vm937 = vcmp.eq.s32.totalorder %v813, 1
      %vm938 = vcmp.eq.s32.totalorder %v816, 1
      %vm939 = vcmp.eq.s32.totalorder %v819, 1
      %vm940 = vcmp.eq.s32.totalorder %v822, 1
      %vm941 = vcmp.eq.s32.totalorder %v825, 1
      %vm942 = vcmp.eq.s32.totalorder %v828, 1
      %vm943 = vcmp.eq.s32.totalorder %v831, 1
      %vm944 = vcmp.eq.s32.totalorder %v834, 1
      %vm945 = vcmp.eq.s32.totalorder %v837, 1
      %vm946 = vcmp.eq.s32.totalorder %v840, 1
      %vm947 = vcmp.eq.s32.totalorder %v843, 1
      %vm948 = vcmp.eq.s32.totalorder %v846, 1
      %vm949 = vcmp.eq.s32.totalorder %v849, 1
      %vm950 = vcmp.eq.s32.totalorder %v852, 1
      %vm951 = vcmp.eq.s32.totalorder %v855, 1
      %vm952 = vcmp.eq.s32.totalorder %v858, 1
      %vm953 = vcmp.eq.s32.totalorder %v861, 1
      %vm954 = vcmp.eq.s32.totalorder %v864, 1
      %vm955 = vcmp.eq.s32.totalorder %v867, 1
      %vm956 = vcmp.eq.s32.totalorder %v870, 1
      %vm957 = vcmp.eq.s32.totalorder %v873, 1
      %vm958 = vcmp.eq.s32.totalorder %v876, 1
      %vm959 = vcmp.eq.s32.totalorder %v879, 1
      %vm960 = vcmp.eq.s32.totalorder %v882, 1
      %vm961 = vcmp.eq.s32.totalorder %v885, 1
      %vm962 = vcmp.eq.s32.totalorder %v888, 1
      %vm963 = vcmp.eq.s32.totalorder %v891, 1
      %vm964 = vcmp.eq.s32.totalorder %v894, 1
      %vm965 = vcmp.eq.s32.totalorder %v897, 1
      %vm966 = vcmp.eq.s32.totalorder %v900, 1
      %vm967 = vcmp.eq.s32.totalorder %v903, 1
      %vm968 = vcmp.eq.s32.totalorder %v906, 1
      %vm969 = vcmp.eq.s32.totalorder %v909, 1
      %vm970 = vcmp.eq.s32.totalorder %v912, 1
      %vm971 = vcmp.eq.s32.totalorder %v915, 1
      %vm972 = vcmp.eq.s32.totalorder %v918, 1
      %vm973 = vcmp.eq.s32.totalorder %v921, 1
      %vm974 = vcmp.eq.s32.totalorder %v924, 1
      %vm975 = vcmp.eq.s32.totalorder %v927, 1
      %v976 = vsel %vm928, %v638, %v492
      %v977 = vsel %vm929, %v637, %v493
      %v978 = vsel %vm930, %v636, %v494
      %v979 = vsel %vm931, %v635, %v495
      %v980 = vsel %vm932, %v634, %v496
      %v981 = vsel %vm933, %v633, %v497
      %v982 = vsel %vm934, %v632, %v498
      %v983 = vsel %vm935, %v631, %v499
      %v984 = vsel %vm936, %v630, %v500
      %v985 = vsel %vm937, %v629, %v501
      %v986 = vsel %vm938, %v628, %v502
      %v987 = vsel %vm939, %v627, %v503
      %v988 = vsel %vm940, %v626, %v504
      %v989 = vsel %vm941, %v625, %v505
      %v990 = vsel %vm942, %v624, %v506
      %v991 = vsel %vm943, %v623, %v507
      %v992 = vsel %vm944, %v622, %v508
      %v993 = vsel %vm945, %v621, %v509
      %v994 = vsel %vm946, %v620, %v510
      %v995 = vsel %vm947, %v619, %v511
      %v996 = vsel %vm948, %v618, %v512
      %v997 = vsel %vm949, %v617, %v513
      %v998 = vsel %vm950, %v616, %v514
      %v999 = vsel %vm951, %v615, %v515
      %v1000 = vsel %vm952, %v614, %v516
      %v1001 = vsel %vm953, %v613, %v517
      %v1002 = vsel %vm954, %v612, %v518
      %v1003 = vsel %vm955, %v611, %v519
      %v1004 = vsel %vm956, %v610, %v520
      %v1005 = vsel %vm957, %v609, %v521
      %v1006 = vsel %vm958, %v608, %v522
      %v1007 = vsel %vm959, %v607, %v523
      %v1008 = vsel %vm960, %v606, %v524
      %v1009 = vsel %vm961, %v605, %v525
      %v1010 = vsel %vm962, %v604, %v526
      %v1011 = vsel %vm963, %v603, %v527
      %v1012 = vsel %vm964, %v602, %v528
      %v1013 = vsel %vm965, %v601, %v529
      %v1014 = vsel %vm966, %v600, %v530
      %v1015 = vsel %vm967, %v599, %v531
      %v1016 = vsel %vm968, %v598, %v532
      %v1017 = vsel %vm969, %v597, %v533
      %v1018 = vsel %vm970, %v596, %v534
      %v1019 = vsel %vm971, %v595, %v535
      %v1020 = vsel %vm972, %v594, %v536
      %v1021 = vsel %vm973, %v593, %v537
      %v1022 = vsel %vm974, %v592, %v538
      %v1023 = vsel %vm975, %v591, %v539
      %v1024 = vsel %vm438, 1, 0
      %v1025 = vsel %vm439, 1, 0
      %v1026 = vsel %vm440, 1, 0
      %v1027 = vsel %vm441, 1, 0
      %v1028 = vsel %vm442, 1, 0
      %v1029 = vsel %vm443, 1, 0
      %v1030 = vsel %vm444, 1, 0
      %v1031 = vsel %vm445, 1, 0
      %v1032 = vsel %vm446, 1, 0
      %v1033 = vsel %vm447, 1, 0
      %v1034 = vsel %vm448, 1, 0
      %v1035 = vsel %vm449, 1, 0
      %v1036 = vsel %vm450, 1, 0
      %v1037 = vsel %vm451, 1, 0
      %v1038 = vsel %vm452, 1, 0
      %v1039 = vsel %vm453, 1, 0
      %v1040 = vsel %vm454, 1, 0
      %v1041 = vsel %vm455, 1, 0
      %v1042 = vsel %vm456, 1, 0
      %v1043 = vsel %vm457, 1, 0
      %v1044 = vsel %vm458, 1, 0
      %v1045 = vsel %vm459, 1, 0
      %v1046 = vsel %vm460, 1, 0
      %v1047 = vsel %vm461, 1, 0
      %v1048 = vsel %vm462, 1, 0
      %v1049 = vsel %vm463, 1, 0
      %v1050 = vsel %vm464, 1, 0
      %v1051 = vsel %vm465, 1, 0
      %v1052 = vsel %vm466, 1, 0
      %v1053 = vsel %vm467, 1, 0
      %v1054 = vsel %vm468, 1, 0
      %v1055 = vsel %vm469, 1, 0
      %v1056 = vsel %vm470, 1, 0
      %v1057 = vsel %vm471, 1, 0
      %v1058 = vsel %vm472, 1, 0
      %v1059 = vsel %vm473, 1, 0
      %v1060 = vsel %vm474, 1, 0
      %v1061 = vsel %vm475, 1, 0
      %v1062 = vsel %vm476, 1, 0
      %v1063 = vsel %vm477, 1, 0
      %v1064 = vsel %vm478, 1, 0
      %v1065 = vsel %vm479, 1, 0
      %v1066 = vsel %vm480, 1, 0
      %v1067 = vsel %vm481, 1, 0
      %v1068 = vsel %vm482, 1, 0
      %v1069 = vsel %vm483, 1, 0
      %v1070 = vsel %vm484, 1, 0
      %v1071 = vsel %vm485, 1, 0
      %1072 = vset.pattern.permute.xlu0 0
      %1073 = vperm.xlu0 %1072, %v1024
      %v1074 = vpop.permute.xlu0 %1073
      %1075 = vset.pattern.permute.xlu0 0
      %1076 = vperm.xlu0 %1075, %v1025
      %v1077 = vpop.permute.xlu0 %1076
      %1078 = vset.pattern.permute.xlu0 0
      %1079 = vperm.xlu0 %1078, %v1026
      %v1080 = vpop.permute.xlu0 %1079
      %1081 = vset.pattern.permute.xlu0 0
      %1082 = vperm.xlu0 %1081, %v1027
      %v1083 = vpop.permute.xlu0 %1082
      %1084 = vset.pattern.permute.xlu0 0
      %1085 = vperm.xlu0 %1084, %v1028
      %v1086 = vpop.permute.xlu0 %1085
      %1087 = vset.pattern.permute.xlu0 0
      %1088 = vperm.xlu0 %1087, %v1029
      %v1089 = vpop.permute.xlu0 %1088
      %1090 = vset.pattern.permute.xlu0 0
      %1091 = vperm.xlu0 %1090, %v1030
      %v1092 = vpop.permute.xlu0 %1091
      %1093 = vset.pattern.permute.xlu0 0
      %1094 = vperm.xlu0 %1093, %v1031
      %v1095 = vpop.permute.xlu0 %1094
      %1096 = vset.pattern.permute.xlu0 0
      %1097 = vperm.xlu0 %1096, %v1032
      %v1098 = vpop.permute.xlu0 %1097
      %1099 = vset.pattern.permute.xlu0 0
      %1100 = vperm.xlu0 %1099, %v1033
      %v1101 = vpop.permute.xlu0 %1100
      %1102 = vset.pattern.permute.xlu0 0
      %1103 = vperm.xlu0 %1102, %v1034
      %v1104 = vpop.permute.xlu0 %1103
      %1105 = vset.pattern.permute.xlu0 0
      %1106 = vperm.xlu0 %1105, %v1035
      %v1107 = vpop.permute.xlu0 %1106
      %1108 = vset.pattern.permute.xlu0 0
      %1109 = vperm.xlu0 %1108, %v1036
      %v1110 = vpop.permute.xlu0 %1109
      %1111 = vset.pattern.permute.xlu0 0
      %1112 = vperm.xlu0 %1111, %v1037
      %v1113 = vpop.permute.xlu0 %1112
      %1114 = vset.pattern.permute.xlu0 0
      %1115 = vperm.xlu0 %1114, %v1038
      %v1116 = vpop.permute.xlu0 %1115
      %1117 = vset.pattern.permute.xlu0 0
      %1118 = vperm.xlu0 %1117, %v1039
      %v1119 = vpop.permute.xlu0 %1118
      %1120 = vset.pattern.permute.xlu0 0
      %1121 = vperm.xlu0 %1120, %v1040
      %v1122 = vpop.permute.xlu0 %1121
      %1123 = vset.pattern.permute.xlu0 0
      %1124 = vperm.xlu0 %1123, %v1041
      %v1125 = vpop.permute.xlu0 %1124
      %1126 = vset.pattern.permute.xlu0 0
      %1127 = vperm.xlu0 %1126, %v1042
      %v1128 = vpop.permute.xlu0 %1127
      %1129 = vset.pattern.permute.xlu0 0
      %1130 = vperm.xlu0 %1129, %v1043
      %v1131 = vpop.permute.xlu0 %1130
      %1132 = vset.pattern.permute.xlu0 0
      %1133 = vperm.xlu0 %1132, %v1044
      %v1134 = vpop.permute.xlu0 %1133
      %1135 = vset.pattern.permute.xlu0 0
      %1136 = vperm.xlu0 %1135, %v1045
      %v1137 = vpop.permute.xlu0 %1136
      %1138 = vset.pattern.permute.xlu0 0
      %1139 = vperm.xlu0 %1138, %v1046
      %v1140 = vpop.permute.xlu0 %1139
      %1141 = vset.pattern.permute.xlu0 0
      %1142 = vperm.xlu0 %1141, %v1047
      %v1143 = vpop.permute.xlu0 %1142
      %1144 = vset.pattern.permute.xlu0 0
      %1145 = vperm.xlu0 %1144, %v1048
      %v1146 = vpop.permute.xlu0 %1145
      %1147 = vset.pattern.permute.xlu0 0
      %1148 = vperm.xlu0 %1147, %v1049
      %v1149 = vpop.permute.xlu0 %1148
      %1150 = vset.pattern.permute.xlu0 0
      %1151 = vperm.xlu0 %1150, %v1050
      %v1152 = vpop.permute.xlu0 %1151
      %1153 = vset.pattern.permute.xlu0 0
      %1154 = vperm.xlu0 %1153, %v1051
      %v1155 = vpop.permute.xlu0 %1154
      %1156 = vset.pattern.permute.xlu0 0
      %1157 = vperm.xlu0 %1156, %v1052
      %v1158 = vpop.permute.xlu0 %1157
      %1159 = vset.pattern.permute.xlu0 0
      %1160 = vperm.xlu0 %1159, %v1053
      %v1161 = vpop.permute.xlu0 %1160
      %1162 = vset.pattern.permute.xlu0 0
      %1163 = vperm.xlu0 %1162, %v1054
      %v1164 = vpop.permute.xlu0 %1163
      %1165 = vset.pattern.permute.xlu0 0
      %1166 = vperm.xlu0 %1165, %v1055
      %v1167 = vpop.permute.xlu0 %1166
      %1168 = vset.pattern.permute.xlu0 0
      %1169 = vperm.xlu0 %1168, %v1056
      %v1170 = vpop.permute.xlu0 %1169
      %1171 = vset.pattern.permute.xlu0 0
      %1172 = vperm.xlu0 %1171, %v1057
      %v1173 = vpop.permute.xlu0 %1172
      %1174 = vset.pattern.permute.xlu0 0
      %1175 = vperm.xlu0 %1174, %v1058
      %v1176 = vpop.permute.xlu0 %1175
      %1177 = vset.pattern.permute.xlu0 0
      %1178 = vperm.xlu0 %1177, %v1059
      %v1179 = vpop.permute.xlu0 %1178
      %1180 = vset.pattern.permute.xlu0 0
      %1181 = vperm.xlu0 %1180, %v1060
      %v1182 = vpop.permute.xlu0 %1181
      %1183 = vset.pattern.permute.xlu0 0
      %1184 = vperm.xlu0 %1183, %v1061
      %v1185 = vpop.permute.xlu0 %1184
      %1186 = vset.pattern.permute.xlu0 0
      %1187 = vperm.xlu0 %1186, %v1062
      %v1188 = vpop.permute.xlu0 %1187
      %1189 = vset.pattern.permute.xlu0 0
      %1190 = vperm.xlu0 %1189, %v1063
      %v1191 = vpop.permute.xlu0 %1190
      %1192 = vset.pattern.permute.xlu0 0
      %1193 = vperm.xlu0 %1192, %v1064
      %v1194 = vpop.permute.xlu0 %1193
      %1195 = vset.pattern.permute.xlu0 0
      %1196 = vperm.xlu0 %1195, %v1065
      %v1197 = vpop.permute.xlu0 %1196
      %1198 = vset.pattern.permute.xlu0 0
      %1199 = vperm.xlu0 %1198, %v1066
      %v1200 = vpop.permute.xlu0 %1199
      %1201 = vset.pattern.permute.xlu0 0
      %1202 = vperm.xlu0 %1201, %v1067
      %v1203 = vpop.permute.xlu0 %1202
      %1204 = vset.pattern.permute.xlu0 0
      %1205 = vperm.xlu0 %1204, %v1068
      %v1206 = vpop.permute.xlu0 %1205
      %1207 = vset.pattern.permute.xlu0 0
      %1208 = vperm.xlu0 %1207, %v1069
      %v1209 = vpop.permute.xlu0 %1208
      %1210 = vset.pattern.permute.xlu0 0
      %1211 = vperm.xlu0 %1210, %v1070
      %v1212 = vpop.permute.xlu0 %1211
      %1213 = vset.pattern.permute.xlu0 0
      %1214 = vperm.xlu0 %1213, %v1071
      %v1215 = vpop.permute.xlu0 %1214
      %vm1216 = vcmp.eq.s32.totalorder %v1074, 1
      %vm1217 = vcmp.eq.s32.totalorder %v1077, 1
      %vm1218 = vcmp.eq.s32.totalorder %v1080, 1
      %vm1219 = vcmp.eq.s32.totalorder %v1083, 1
      %vm1220 = vcmp.eq.s32.totalorder %v1086, 1
      %vm1221 = vcmp.eq.s32.totalorder %v1089, 1
      %vm1222 = vcmp.eq.s32.totalorder %v1092, 1
      %vm1223 = vcmp.eq.s32.totalorder %v1095, 1
      %vm1224 = vcmp.eq.s32.totalorder %v1098, 1
      %vm1225 = vcmp.eq.s32.totalorder %v1101, 1
      %vm1226 = vcmp.eq.s32.totalorder %v1104, 1
      %vm1227 = vcmp.eq.s32.totalorder %v1107, 1
      %vm1228 = vcmp.eq.s32.totalorder %v1110, 1
      %vm1229 = vcmp.eq.s32.totalorder %v1113, 1
      %vm1230 = vcmp.eq.s32.totalorder %v1116, 1
      %vm1231 = vcmp.eq.s32.totalorder %v1119, 1
      %vm1232 = vcmp.eq.s32.totalorder %v1122, 1
      %vm1233 = vcmp.eq.s32.totalorder %v1125, 1
      %vm1234 = vcmp.eq.s32.totalorder %v1128, 1
      %vm1235 = vcmp.eq.s32.totalorder %v1131, 1
      %vm1236 = vcmp.eq.s32.totalorder %v1134, 1
      %vm1237 = vcmp.eq.s32.totalorder %v1137, 1
      %vm1238 = vcmp.eq.s32.totalorder %v1140, 1
      %vm1239 = vcmp.eq.s32.totalorder %v1143, 1
      %vm1240 = vcmp.eq.s32.totalorder %v1146, 1
      %vm1241 = vcmp.eq.s32.totalorder %v1149, 1
      %vm1242 = vcmp.eq.s32.totalorder %v1152, 1
      %vm1243 = vcmp.eq.s32.totalorder %v1155, 1
      %vm1244 = vcmp.eq.s32.totalorder %v1158, 1
      %vm1245 = vcmp.eq.s32.totalorder %v1161, 1
      %vm1246 = vcmp.eq.s32.totalorder %v1164, 1
      %vm1247 = vcmp.eq.s32.totalorder %v1167, 1
      %vm1248 = vcmp.eq.s32.totalorder %v1170, 1
      %vm1249 = vcmp.eq.s32.totalorder %v1173, 1
      %vm1250 = vcmp.eq.s32.totalorder %v1176, 1
      %vm1251 = vcmp.eq.s32.totalorder %v1179, 1
      %vm1252 = vcmp.eq.s32.totalorder %v1182, 1
      %vm1253 = vcmp.eq.s32.totalorder %v1185, 1
      %vm1254 = vcmp.eq.s32.totalorder %v1188, 1
      %vm1255 = vcmp.eq.s32.totalorder %v1191, 1
      %vm1256 = vcmp.eq.s32.totalorder %v1194, 1
      %vm1257 = vcmp.eq.s32.totalorder %v1197, 1
      %vm1258 = vcmp.eq.s32.totalorder %v1200, 1
      %vm1259 = vcmp.eq.s32.totalorder %v1203, 1
      %vm1260 = vcmp.eq.s32.totalorder %v1206, 1
      %vm1261 = vcmp.eq.s32.totalorder %v1209, 1
      %vm1262 = vcmp.eq.s32.totalorder %v1212, 1
      %vm1263 = vcmp.eq.s32.totalorder %v1215, 1
      %v1264 = vsel %vm1216, %v734, %v976
      %v1265 = vsel %vm1217, %v733, %v977
      %v1266 = vsel %vm1218, %v732, %v978
      %v1267 = vsel %vm1219, %v731, %v979
      %v1268 = vsel %vm1220, %v730, %v980
      %v1269 = vsel %vm1221, %v729, %v981
      %v1270 = vsel %vm1222, %v728, %v982
      %v1271 = vsel %vm1223, %v727, %v983
      %v1272 = vsel %vm1224, %v726, %v984
      %v1273 = vsel %vm1225, %v725, %v985
      %v1274 = vsel %vm1226, %v724, %v986
      %v1275 = vsel %vm1227, %v723, %v987
      %v1276 = vsel %vm1228, %v722, %v988
      %v1277 = vsel %vm1229, %v721, %v989
      %v1278 = vsel %vm1230, %v720, %v990
      %v1279 = vsel %vm1231, %v719, %v991
      %v1280 = vsel %vm1232, %v718, %v992
      %v1281 = vsel %vm1233, %v717, %v993
      %v1282 = vsel %vm1234, %v716, %v994
      %v1283 = vsel %vm1235, %v715, %v995
      %v1284 = vsel %vm1236, %v714, %v996
      %v1285 = vsel %vm1237, %v713, %v997
      %v1286 = vsel %vm1238, %v712, %v998
      %v1287 = vsel %vm1239, %v711, %v999
      %v1288 = vsel %vm1240, %v710, %v1000
      %v1289 = vsel %vm1241, %v709, %v1001
      %v1290 = vsel %vm1242, %v708, %v1002
      %v1291 = vsel %vm1243, %v707, %v1003
      %v1292 = vsel %vm1244, %v706, %v1004
      %v1293 = vsel %vm1245, %v705, %v1005
      %v1294 = vsel %vm1246, %v704, %v1006
      %v1295 = vsel %vm1247, %v703, %v1007
      %v1296 = vsel %vm1248, %v702, %v1008
      %v1297 = vsel %vm1249, %v701, %v1009
      %v1298 = vsel %vm1250, %v700, %v1010
      %v1299 = vsel %vm1251, %v699, %v1011
      %v1300 = vsel %vm1252, %v698, %v1012
      %v1301 = vsel %vm1253, %v697, %v1013
      %v1302 = vsel %vm1254, %v696, %v1014
      %v1303 = vsel %vm1255, %v695, %v1015
      %v1304 = vsel %vm1256, %v694, %v1016
      %v1305 = vsel %vm1257, %v693, %v1017
      %v1306 = vsel %vm1258, %v692, %v1018
      %v1307 = vsel %vm1259, %v691, %v1019
      %v1308 = vsel %vm1260, %v690, %v1020
      %v1309 = vsel %vm1261, %v689, %v1021
      %v1310 = vsel %vm1262, %v688, %v1022
      %v1311 = vsel %vm1263, %v735, %v1023
      %1312 = vst [vmem:[#allocation2 + $0x30] sm:$0xff] %v1264
      %1313 = vst [vmem:[#allocation2 + $0x38] sm:$0xff] %v1265
      %1314 = vst [vmem:[#allocation2 + $0x40] sm:$0xff] %v1266
      %1315 = vst [vmem:[#allocation2 + $0x48] sm:$0xff] %v1267
      %1316 = vst [vmem:[#allocation2 + $0x50] sm:$0xff] %v1268
      %1317 = vst [vmem:[#allocation2 + $0x58] sm:$0xff] %v1269
      %1318 = vst [vmem:[#allocation2 + $0x60] sm:$0xff] %v1270
      %1319 = vst [vmem:[#allocation2 + $0x68] sm:$0xff] %v1271
      %1320 = vst [vmem:[#allocation2 + $0x70] sm:$0xff] %v1272
      %1321 = vst [vmem:[#allocation2 + $0x78] sm:$0xff] %v1273
      %1322 = vst [vmem:[#allocation2 + $0x80] sm:$0xff] %v1274
      %1323 = vst [vmem:[#allocation2 + $0x88] sm:$0xff] %v1275
      %1324 = vst [vmem:[#allocation2 + $0x90] sm:$0xff] %v1276
      %1325 = vst [vmem:[#allocation2 + $0x98] sm:$0xff] %v1277
      %1326 = vst [vmem:[#allocation2 + $0xa0] sm:$0xff] %v1278
      %1327 = vst [vmem:[#allocation2 + $0xa8] sm:$0xff] %v1279
      %1328 = vst [vmem:[#allocation2 + $0xb0] sm:$0xff] %v1280
      %1329 = vst [vmem:[#allocation2 + $0xb8] sm:$0xff] %v1281
      %1330 = vst [vmem:[#allocation2 + $0xc0] sm:$0xff] %v1282
      %1331 = vst [vmem:[#allocation2 + $0xc8] sm:$0xff] %v1283
      %1332 = vst [vmem:[#allocation2 + $0xd0] sm:$0xff] %v1284
      %1333 = vst [vmem:[#allocation2 + $0xd8] sm:$0xff] %v1285
      %1334 = vst [vmem:[#allocation2 + $0xe0] sm:$0xff] %v1286
      %1335 = vst [vmem:[#allocation2 + $0xe8] sm:$0xff] %v1287
      %1336 = vst [vmem:[#allocation2 + $0xf0] sm:$0xff] %v1288
      %1337 = vst [vmem:[#allocation2 + $0xf8] sm:$0xff] %v1289
      %1338 = vst [vmem:[#allocation2 + $0x100] sm:$0xff] %v1290
      %1339 = vst [vmem:[#allocation2 + $0x108] sm:$0xff] %v1291
      %1340 = vst [vmem:[#allocation2 + $0x110] sm:$0xff] %v1292
      %1341 = vst [vmem:[#allocation2 + $0x118] sm:$0xff] %v1293
      %1342 = vst [vmem:[#allocation2 + $0x120] sm:$0xff] %v1294
      %1343 = vst [vmem:[#allocation2 + $0x128] sm:$0xff] %v1295
      %1344 = vst [vmem:[#allocation2 + $0x130] sm:$0xff] %v1296
      %1345 = vst [vmem:[#allocation2 + $0x138] sm:$0xff] %v1297
      %1346 = vst [vmem:[#allocation2 + $0x140] sm:$0xff] %v1298
      %1347 = vst [vmem:[#allocation2 + $0x148] sm:$0xff] %v1299
      %1348 = vst [vmem:[#allocation2 + $0x150] sm:$0xff] %v1300
      %1349 = vst [vmem:[#allocation2 + $0x158] sm:$0xff] %v1301
      %1350 = vst [vmem:[#allocation2 + $0x160] sm:$0xff] %v1302
      %1351 = vst [vmem:[#allocation2 + $0x168] sm:$0xff] %v1303
      %1352 = vst [vmem:[#allocation2 + $0x170] sm:$0xff] %v1304
      %1353 = vst [vmem:[#allocation2 + $0x178] sm:$0xff] %v1305
      %1354 = vst [vmem:[#allocation2 + $0x180] sm:$0xff] %v1306
      %1355 = vst [vmem:[#allocation2 + $0x188] sm:$0xff] %v1307
      %1356 = vst [vmem:[#allocation2 + $0x190] sm:$0xff] %v1308
      %1357 = vst [vmem:[#allocation2 + $0x198] sm:$0xff] %v1309
      %1358 = vst [vmem:[#allocation2 + $0x1a0] sm:$0xff] %v1310
      %1359 = vst [vmem:[#allocation2 + $0x1a8] sm:$0xff] %v1311
      %1360 = vst [vmem:[#allocation2 + $0x18] sm:$0xff] %v1267
      %1361 = vst [vmem:[#allocation2 + $0x20] sm:$0xff] %v1268
      %1362 = vst [vmem:[#allocation2 + $0x28] sm:$0xff] %v1269
      %1363 = vst [vmem:[#allocation2 + $0x1b0] sm:$0xff] %v1306
      %1364 = vst [vmem:[#allocation2 + $0x1b8] sm:$0xff] %v1307
      %1365 = vst [vmem:[#allocation2 + $0x1c0] sm:$0xff] %v1308
      %1366 = vst [vmem:[#allocation2 + $0x16] sm:$0x2] %v495
      %1367 = vst [vmem:[#allocation2 + $0x2e] sm:$0x2] %v492
      %1368 = vst [vmem:[#allocation2 + $0x1ae] sm:$0x2] %v534
      %v1369 = vld [vmem:[#allocation2 + $0x17] sm:$0xff]
      %v1370 = vld [vmem:[#allocation2 + $0x1f] sm:$0xff]
      %v1371 = vld [vmem:[#allocation2 + $0x27] sm:$0xff]
      %v1372 = vld [vmem:[#allocation2 + $0x2f] sm:$0xff]
      %v1373 = vld [vmem:[#allocation2 + $0x37] sm:$0xff]
      %v1374 = vld [vmem:[#allocation2 + $0x3f] sm:$0xff]
      %v1375 = vld [vmem:[#allocation2 + $0x47] sm:$0xff]
      %v1376 = vld [vmem:[#allocation2 + $0x4f] sm:$0xff]
      %v1377 = vld [vmem:[#allocation2 + $0x57] sm:$0xff]
      %v1378 = vld [vmem:[#allocation2 + $0x5f] sm:$0xff]
      %v1379 = vld [vmem:[#allocation2 + $0x67] sm:$0xff]
      %v1380 = vld [vmem:[#allocation2 + $0x6f] sm:$0xff]
      %v1381 = vld [vmem:[#allocation2 + $0x77] sm:$0xff]
      %v1382 = vld [vmem:[#allocation2 + $0x7f] sm:$0xff]
      %v1383 = vld [vmem:[#allocation2 + $0x87] sm:$0xff]
      %v1384 = vld [vmem:[#allocation2 + $0x8f] sm:$0xff]
      %v1385 = vld [vmem:[#allocation2 + $0x97] sm:$0xff]
      %v1386 = vld [vmem:[#allocation2 + $0x9f] sm:$0xff]
      %v1387 = vld [vmem:[#allocation2 + $0xa7] sm:$0xff]
      %v1388 = vld [vmem:[#allocation2 + $0xaf] sm:$0xff]
      %v1389 = vld [vmem:[#allocation2 + $0xb7] sm:$0xff]
      %v1390 = vld [vmem:[#allocation2 + $0xbf] sm:$0xff]
      %v1391 = vld [vmem:[#allocation2 + $0xc7] sm:$0xff]
      %v1392 = vld [vmem:[#allocation2 + $0xcf] sm:$0xff]
      %v1393 = vld [vmem:[#allocation2 + $0xd7] sm:$0xff]
      %v1394 = vld [vmem:[#allocation2 + $0xdf] sm:$0xff]
      %v1395 = vld [vmem:[#allocation2 + $0xe7] sm:$0xff]
      %v1396 = vld [vmem:[#allocation2 + $0xef] sm:$0xff]
      %v1397 = vld [vmem:[#allocation2 + $0xf7] sm:$0xff]
      %v1398 = vld [vmem:[#allocation2 + $0xff] sm:$0xff]
      %v1399 = vld [vmem:[#allocation2 + $0x107] sm:$0xff]
      %v1400 = vld [vmem:[#allocation2 + $0x10f] sm:$0xff]
      %v1401 = vld [vmem:[#allocation2 + $0x117] sm:$0xff]
      %v1402 = vld [vmem:[#allocation2 + $0x11f] sm:$0xff]
      %v1403 = vld [vmem:[#allocation2 + $0x127] sm:$0xff]
      %v1404 = vld [vmem:[#allocation2 + $0x12f] sm:$0xff]
      %v1405 = vld [vmem:[#allocation2 + $0x137] sm:$0xff]
      %v1406 = vld [vmem:[#allocation2 + $0x13f] sm:$0xff]
      %v1407 = vld [vmem:[#allocation2 + $0x147] sm:$0xff]
      %v1408 = vld [vmem:[#allocation2 + $0x14f] sm:$0xff]
      %v1409 = vld [vmem:[#allocation2 + $0x157] sm:$0xff]
      %v1410 = vld [vmem:[#allocation2 + $0x15f] sm:$0xff]
      %v1411 = vld [vmem:[#allocation2 + $0x167] sm:$0xff]
      %v1412 = vld [vmem:[#allocation2 + $0x16f] sm:$0xff]
      %v1413 = vld [vmem:[#allocation2 + $0x177] sm:$0xff]
      %v1414 = vld [vmem:[#allocation2 + $0x17f] sm:$0xff]
      %v1415 = vld [vmem:[#allocation2 + $0x187] sm:$0xff]
      %v1416 = vld [vmem:[#allocation2 + $0x18f] sm:$0xff]
      %v1417 = vld [vmem:[%s2] sm:$0xff]
      %v1418 = vld [vmem:[%s2 + $0x8] sm:$0xff]
      %v1419 = vld [vmem:[%s2 + $0x10] sm:$0xff]
      %v1420 = vld [vmem:[%s2 + $0x18] sm:$0xff]
      %v1421 = vld [vmem:[%s2 + $0x20] sm:$0xff]
      %v1422 = vld [vmem:[%s2 + $0x28] sm:$0xff]
      %v1423 = vld [vmem:[%s2 + $0x30] sm:$0xff]
      %v1424 = vld [vmem:[%s2 + $0x38] sm:$0xff]
      %v1425 = vld [vmem:[%s2 + $0x40] sm:$0xff]
      %v1426 = vld [vmem:[%s2 + $0x48] sm:$0xff]
      %v1427 = vld [vmem:[%s2 + $0x50] sm:$0xff]
      %v1428 = vld [vmem:[%s2 + $0x58] sm:$0xff]
      %v1429 = vld [vmem:[%s2 + $0x60] sm:$0xff]
      %v1430 = vld [vmem:[%s2 + $0x68] sm:$0xff]
      %v1431 = vld [vmem:[%s2 + $0x70] sm:$0xff]
      %v1432 = vld [vmem:[%s2 + $0x78] sm:$0xff]
      %v1433 = vld [vmem:[#allocation2 + $0x18] sm:$0xff]
      %v1434 = vld [vmem:[#allocation2 + $0x20] sm:$0xff]
      %v1435 = vld [vmem:[#allocation2 + $0x28] sm:$0xff]
      %v1436 = vld [vmem:[#allocation2 + $0x30] sm:$0xff]
      %v1437 = vld [vmem:[#allocation2 + $0x38] sm:$0xff]
      %v1438 = vld [vmem:[#allocation2 + $0x40] sm:$0xff]
      %v1439 = vld [vmem:[#allocation2 + $0x48] sm:$0xff]
      %v1440 = vld [vmem:[#allocation2 + $0x50] sm:$0xff]
      %v1441 = vld [vmem:[#allocation2 + $0x58] sm:$0xff]
      %v1442 = vld [vmem:[#allocation2 + $0x60] sm:$0xff]
      %v1443 = vld [vmem:[#allocation2 + $0x68] sm:$0xff]
      %v1444 = vld [vmem:[#allocation2 + $0x70] sm:$0xff]
      %v1445 = vld [vmem:[#allocation2 + $0x78] sm:$0xff]
      %v1446 = vld [vmem:[#allocation2 + $0x80] sm:$0xff]
      %v1447 = vld [vmem:[#allocation2 + $0x88] sm:$0xff]
      %v1448 = vld [vmem:[#allocation2 + $0x90] sm:$0xff]
      %v1449 = vld [vmem:[#allocation2 + $0x98] sm:$0xff]
      %v1450 = vld [vmem:[#allocation2 + $0xa0] sm:$0xff]
      %v1451 = vld [vmem:[#allocation2 + $0xa8] sm:$0xff]
      %v1452 = vld [vmem:[#allocation2 + $0xb0] sm:$0xff]
      %v1453 = vld [vmem:[#allocation2 + $0xb8] sm:$0xff]
      %v1454 = vld [vmem:[#allocation2 + $0xc0] sm:$0xff]
      %v1455 = vld [vmem:[#allocation2 + $0xc8] sm:$0xff]
      %v1456 = vld [vmem:[#allocation2 + $0xd0] sm:$0xff]
      %v1457 = vld [vmem:[#allocation2 + $0xd8] sm:$0xff]
      %v1458 = vld [vmem:[#allocation2 + $0xe0] sm:$0xff]
      %v1459 = vld [vmem:[#allocation2 + $0xe8] sm:$0xff]
      %v1460 = vld [vmem:[#allocation2 + $0xf0] sm:$0xff]
      %v1461 = vld [vmem:[#allocation2 + $0xf8] sm:$0xff]
      %v1462 = vld [vmem:[#allocation2 + $0x100] sm:$0xff]
      %v1463 = vld [vmem:[#allocation2 + $0x108] sm:$0xff]
      %v1464 = vld [vmem:[#allocation2 + $0x110] sm:$0xff]
      %v1465 = vld [vmem:[#allocation2 + $0x118] sm:$0xff]
      %v1466 = vld [vmem:[#allocation2 + $0x120] sm:$0xff]
      %v1467 = vld [vmem:[#allocation2 + $0x128] sm:$0xff]
      %v1468 = vld [vmem:[#allocation2 + $0x130] sm:$0xff]
      %v1469 = vld [vmem:[#allocation2 + $0x138] sm:$0xff]
      %v1470 = vld [vmem:[#allocation2 + $0x140] sm:$0xff]
      %v1471 = vld [vmem:[#allocation2 + $0x148] sm:$0xff]
      %v1472 = vld [vmem:[#allocation2 + $0x150] sm:$0xff]
      %v1473 = vld [vmem:[#allocation2 + $0x158] sm:$0xff]
      %v1474 = vld [vmem:[#allocation2 + $0x160] sm:$0xff]
      %v1475 = vld [vmem:[#allocation2 + $0x168] sm:$0xff]
      %v1476 = vld [vmem:[#allocation2 + $0x170] sm:$0xff]
      %v1477 = vld [vmem:[#allocation2 + $0x178] sm:$0xff]
      %v1478 = vld [vmem:[#allocation2 + $0x180] sm:$0xff]
      %v1479 = vld [vmem:[#allocation2 + $0x188] sm:$0xff]
      %v1480 = vld [vmem:[#allocation2 + $0x190] sm:$0xff]
      %s1481 = scalar_lea.vmem %s2, 128
      %v1482 = vld [vmem:[%s1481] sm:$0xff]
      %v1483 = vld [vmem:[%s1481 + $0x8] sm:$0xff]
      %v1484 = vld [vmem:[%s1481 + $0x10] sm:$0xff]
      %v1485 = vld [vmem:[%s1481 + $0x18] sm:$0xff]
      %v1486 = vld [vmem:[%s1481 + $0x20] sm:$0xff]
      %v1487 = vld [vmem:[%s1481 + $0x28] sm:$0xff]
      %v1488 = vld [vmem:[%s1481 + $0x30] sm:$0xff]
      %v1489 = vld [vmem:[%s1481 + $0x38] sm:$0xff]
      %v1490 = vld [vmem:[%s1481 + $0x40] sm:$0xff]
      %v1491 = vld [vmem:[%s1481 + $0x48] sm:$0xff]
      %v1492 = vld [vmem:[%s1481 + $0x50] sm:$0xff]
      %v1493 = vld [vmem:[%s1481 + $0x58] sm:$0xff]
      %v1494 = vld [vmem:[%s1481 + $0x60] sm:$0xff]
      %v1495 = vld [vmem:[%s1481 + $0x68] sm:$0xff]
      %v1496 = vld [vmem:[%s1481 + $0x70] sm:$0xff]
      %v1497 = vld [vmem:[%s1481 + $0x78] sm:$0xff]
      %1498 = vmatprep.subr.mxu0 0.0
      %1499 = vmatpush1.msra.mxu0 %v1482
      %1500 = vmatprep.subr.mxu0 0.0
      %1501 = vmatpush1.msra.mxu0 %v1483
      %1502 = vmatprep.subr.mxu0 0.0
      %1503 = vmatpush1.msra.mxu0 %v1484
      %1504 = vmatprep.subr.mxu0 0.0
      %1505 = vmatpush1.msra.mxu0 %v1485
      %1506 = vmatprep.subr.mxu0 0.0
      %1507 = vmatpush1.msra.mxu0 %v1486
      %1508 = vmatprep.subr.mxu0 0.0
      %1509 = vmatpush1.msra.mxu0 %v1487
      %1510 = vmatprep.subr.mxu0 0.0
      %1511 = vmatpush1.msra.mxu0 %v1488
      %1512 = vmatprep.subr.mxu0 0.0
      %1513 = vmatpush1.msra.mxu0 %v1489
      %1514 = vmatprep.subr.mxu0 0.0
      %1515 = vmatpush1.msra.mxu0 %v1490
      %1516 = vmatprep.subr.mxu0 0.0
      %1517 = vmatpush1.msra.mxu0 %v1491
      %1518 = vmatprep.subr.mxu0 0.0
      %1519 = vmatpush1.msra.mxu0 %v1492
      %1520 = vmatprep.subr.mxu0 0.0
      %1521 = vmatpush1.msra.mxu0 %v1493
      %1522 = vmatprep.subr.mxu0 0.0
      %1523 = vmatpush1.msra.mxu0 %v1494
      %1524 = vmatprep.subr.mxu0 0.0
      %1525 = vmatpush1.msra.mxu0 %v1495
      %1526 = vmatprep.subr.mxu0 0.0
      %1527 = vmatpush1.msra.mxu0 %v1496
      %1528 = vmatprep.subr.mxu0 0.0
      %1529 = vmatpush1.msra.mxu0 %v1497
      %1530 = vmatprep.subr.mxu0 0.0
      %1531 = vmatpush1.msra.mxu0 0.0
      %1532 = vmatprep.subr.mxu0 0.0
      %1533 = vmatpush1.msra.mxu0 0.0
      %1534 = vmatprep.subr.mxu0 0.0
      %1535 = vmatpush1.msra.mxu0 0.0
      %1536 = vmatprep.subr.mxu0 0.0
      %1537 = vmatpush1.msra.mxu0 0.0
      %1538 = vmatprep.subr.mxu0 0.0
      %1539 = vmatpush1.msra.mxu0 0.0
      %1540 = vmatprep.subr.mxu0 0.0
      %1541 = vmatpush1.msra.mxu0 0.0
      %1542 = vmatprep.subr.mxu0 0.0
      %1543 = vmatpush1.msra.mxu0 0.0
      %1544 = vmatprep.subr.mxu0 0.0
      %1545 = vmatpush1.msra.mxu0 0.0
      %1546 = vmatprep.subr.mxu0 0.0
      %1547 = vmatpush1.msra.mxu0 0.0
      %1548 = vmatprep.subr.mxu0 0.0
      %1549 = vmatpush1.msra.mxu0 0.0
      %1550 = vmatprep.subr.mxu0 0.0
      %1551 = vmatpush1.msra.mxu0 0.0
      %1552 = vmatprep.subr.mxu0 0.0
      %1553 = vmatpush1.msra.mxu0 0.0
      %1554 = vmatprep.subr.mxu0 0.0
      %1555 = vmatpush1.msra.mxu0 0.0
      %1556 = vmatprep.subr.mxu0 0.0
      %1557 = vmatpush1.msra.mxu0 0.0
      %1558 = vmatprep.subr.mxu0 0.0
      %1559 = vmatpush1.msra.mxu0 0.0
      %1560 = vmatprep.subr.mxu0 0.0
      %1561 = vmatpush1.msra.mxu0 0.0
      %1562 = vmatprep.mubr.f32.mxu0 0.0
      %1563 = vmatmul.mubr.f32.gmra.mrb[0].mxu0 %v1433
      %v1564 = vpop.f32.mrb[0].mxu0
      %v1565 = vadd.f32 0.0, %v1564
      %v1566 = vpop.f32.mrb[0].mxu0
      %1567 = vmatprep.mubr.f32.mxu0 0.0
      %1568 = vmatmul.mubr.f32.gmra.mrb[0].mxu0 %v1434
      %v1569 = vpop.f32.mrb[0].mxu0
      %v1570 = vadd.f32 0.0, %v1569
      %v1571 = vpop.f32.mrb[0].mxu0
      %1572 = vmatprep.mubr.f32.mxu0 0.0
      %1573 = vmatmul.mubr.f32.gmra.mrb[0].mxu0 %v1435
      %v1574 = vpop.f32.mrb[0].mxu0
      %v1575 = vadd.f32 0.0, %v1574
      %v1576 = vpop.f32.mrb[0].mxu0
      %1577 = vmatprep.mubr.f32.mxu0 0.0
      %1578 = vmatmul.mubr.f32.gmra.mrb[0].mxu0 %v1436
      %v1579 = vpop.f32.mrb[0].mxu0
      %v1580 = vadd.f32 0.0, %v1579
      %v1581 = vpop.f32.mrb[0].mxu0
      %1582 = vmatprep.mubr.f32.mxu0 0.0
      %1583 = vmatmul.mubr.f32.gmra.mrb[0].mxu0 %v1437
      %v1584 = vpop.f32.mrb[0].mxu0
      %v1585 = vadd.f32 0.0, %v1584
      %v1586 = vpop.f32.mrb[0].mxu0
      %1587 = vmatprep.mubr.f32.mxu0 0.0
      %1588 = vmatmul.mubr.f32.gmra.mrb[0].mxu0 %v1438
      %v1589 = vpop.f32.mrb[0].mxu0
      %v1590 = vadd.f32 0.0, %v1589
      %v1591 = vpop.f32.mrb[0].mxu0
      %1592 = vmatprep.mubr.f32.mxu0 0.0
      %1593 = vmatmul.mubr.f32.gmra.mrb[0].mxu0 %v1439
      %v1594 = vpop.f32.mrb[0].mxu0
      %v1595 = vadd.f32 0.0, %v1594
      %v1596 = vpop.f32.mrb[0].mxu0
      %1597 = vmatprep.mubr.f32.mxu0 0.0
      %1598 = vmatmul.mubr.f32.gmra.mrb[0].mxu0 %v1440
      %v1599 = vpop.f32.mrb[0].mxu0
      %v1600 = vadd.f32 0.0, %v1599
      %v1601 = vpop.f32.mrb[0].mxu0
      %1602 = vmatprep.mubr.f32.mxu0 0.0
      %1603 = vmatmul.mubr.f32.gmra.mrb[0].mxu0 %v1441
      %v1604 = vpop.f32.mrb[0].mxu0
      %v1605 = vadd.f32 0.0, %v1604
      %v1606 = vpop.f32.mrb[0].mxu0
      %1607 = vmatprep.mubr.f32.mxu0 0.0
      %1608 = vmatmul.mubr.f32.gmra.mrb[0].mxu0 %v1442
      %v1609 = vpop.f32.mrb[0].mxu0
      %v1610 = vadd.f32 0.0, %v1609
      %v1611 = vpop.f32.mrb[0].mxu0
      %1612 = vmatprep.mubr.f32.mxu0 0.0
      %1613 = vmatmul.mubr.f32.gmra.mrb[0].mxu0 %v1443
      %v1614 = vpop.f32.mrb[0].mxu0
      %v1615 = vadd.f32 0.0, %v1614
      %v1616 = vpop.f32.mrb[0].mxu0
      %1617 = vmatprep.mubr.f32.mxu0 0.0
      %1618 = vmatmul.mubr.f32.gmra.mrb[0].mxu0 %v1444
      %v1619 = vpop.f32.mrb[0].mxu0
      %v1620 = vadd.f32 0.0, %v1619
      %v1621 = vpop.f32.mrb[0].mxu0
      %1622 = vmatprep.mubr.f32.mxu0 0.0
      %1623 = vmatmul.mubr.f32.gmra.mrb[0].mxu0 %v1445
      %v1624 = vpop.f32.mrb[0].mxu0
      %v1625 = vadd.f32 0.0, %v1624
      %v1626 = vpop.f32.mrb[0].mxu0
      %1627 = vmatprep.mubr.f32.mxu0 0.0
      %1628 = vmatmul.mubr.f32.gmra.mrb[0].mxu0 %v1446
      %v1629 = vpop.f32.mrb[0].mxu0
      %v1630 = vadd.f32 0.0, %v1629
      %v1631 = vpop.f32.mrb[0].mxu0
      %1632 = vmatprep.mubr.f32.mxu0 0.0
      %1633 = vmatmul.mubr.f32.gmra.mrb[0].mxu0 %v1447
      %v1634 = vpop.f32.mrb[0].mxu0
      %v1635 = vadd.f32 0.0, %v1634
      %v1636 = vpop.f32.mrb[0].mxu0
      %1637 = vmatprep.mubr.f32.mxu0 0.0
      %1638 = vmatmul.mubr.f32.gmra.mrb[0].mxu0 %v1448
      %v1639 = vpop.f32.mrb[0].mxu0
      %v1640 = vadd.f32 0.0, %v1639
      %v1641 = vpop.f32.mrb[0].mxu0
      %1642 = vmatprep.mubr.f32.mxu0 0.0
      %1643 = vmatmul.mubr.f32.gmra.mrb[0].mxu0 %v1449
      %v1644 = vpop.f32.mrb[0].mxu0
      %v1645 = vadd.f32 0.0, %v1644
      %v1646 = vpop.f32.mrb[0].mxu0
      %1647 = vmatprep.mubr.f32.mxu0 0.0
      %1648 = vmatmul.mubr.f32.gmra.mrb[0].mxu0 %v1450
      %v1649 = vpop.f32.mrb[0].mxu0
      %v1650 = vadd.f32 0.0, %v1649
      %v1651 = vpop.f32.mrb[0].mxu0
      %1652 = vmatprep.mubr.f32.mxu0 0.0
      %1653 = vmatmul.mubr.f32.gmra.mrb[0].mxu0 %v1451
      %v1654 = vpop.f32.mrb[0].mxu0
      %v1655 = vadd.f32 0.0, %v1654
      %v1656 = vpop.f32.mrb[0].mxu0
      %1657 = vmatprep.mubr.f32.mxu0 0.0
      %1658 = vmatmul.mubr.f32.gmra.mrb[0].mxu0 %v1452
      %v1659 = vpop.f32.mrb[0].mxu0
      %v1660 = vadd.f32 0.0, %v1659
      %v1661 = vpop.f32.mrb[0].mxu0
      %1662 = vmatprep.mubr.f32.mxu0 0.0
      %1663 = vmatmul.mubr.f32.gmra.mrb[0].mxu0 %v1453
      %v1664 = vpop.f32.mrb[0].mxu0
      %v1665 = vadd.f32 0.0, %v1664
      %v1666 = vpop.f32.mrb[0].mxu0
      %1667 = vmatprep.mubr.f32.mxu0 0.0
      %1668 = vmatmul.mubr.f32.gmra.mrb[0].mxu0 %v1454
      %v1669 = vpop.f32.mrb[0].mxu0
      %v1670 = vadd.f32 0.0, %v1669
      %v1671 = vpop.f32.mrb[0].mxu0
      %1672 = vmatprep.mubr.f32.mxu0 0.0
      %1673 = vmatmul.mubr.f32.gmra.mrb[0].mxu0 %v1455
      %v1674 = vpop.f32.mrb[0].mxu0
      %v1675 = vadd.f32 0.0, %v1674
      %v1676 = vpop.f32.mrb[0].mxu0
      %1677 = vmatprep.mubr.f32.mxu0 0.0
      %1678 = vmatmul.mubr.f32.gmra.mrb[0].mxu0 %v1456
      %v1679 = vpop.f32.mrb[0].mxu0
      %v1680 = vadd.f32 0.0, %v1679
      %v1681 = vpop.f32.mrb[0].mxu0
      %1682 = vmatprep.mubr.f32.mxu0 0.0
      %1683 = vmatmul.mubr.f32.gmra.mrb[0].mxu0 %v1457
      %v1684 = vpop.f32.mrb[0].mxu0
      %v1685 = vadd.f32 0.0, %v1684
      %v1686 = vpop.f32.mrb[0].mxu0
      %1687 = vmatprep.mubr.f32.mxu0 0.0
      %1688 = vmatmul.mubr.f32.gmra.mrb[0].mxu0 %v1458
      %v1689 = vpop.f32.mrb[0].mxu0
      %v1690 = vadd.f32 0.0, %v1689
      %v1691 = vpop.f32.mrb[0].mxu0
      %1692 = vmatprep.mubr.f32.mxu0 0.0
      %1693 = vmatmul.mubr.f32.gmra.mrb[0].mxu0 %v1459
      %v1694 = vpop.f32.mrb[0].mxu0
      %v1695 = vadd.f32 0.0, %v1694
      %v1696 = vpop.f32.mrb[0].mxu0
      %1697 = vmatprep.mubr.f32.mxu0 0.0
      %1698 = vmatmul.mubr.f32.gmra.mrb[0].mxu0 %v1460
      %v1699 = vpop.f32.mrb[0].mxu0
      %v1700 = vadd.f32 0.0, %v1699
      %v1701 = vpop.f32.mrb[0].mxu0
      %1702 = vmatprep.mubr.f32.mxu0 0.0
      %1703 = vmatmul.mubr.f32.gmra.mrb[0].mxu0 %v1461
      %v1704 = vpop.f32.mrb[0].mxu0
      %v1705 = vadd.f32 0.0, %v1704
      %v1706 = vpop.f32.mrb[0].mxu0
      %1707 = vmatprep.mubr.f32.mxu0 0.0
      %1708 = vmatmul.mubr.f32.gmra.mrb[0].mxu0 %v1462
      %v1709 = vpop.f32.mrb[0].mxu0
      %v1710 = vadd.f32 0.0, %v1709
      %v1711 = vpop.f32.mrb[0].mxu0
      %1712 = vmatprep.mubr.f32.mxu0 0.0
      %1713 = vmatmul.mubr.f32.gmra.mrb[0].mxu0 %v1463
      %v1714 = vpop.f32.mrb[0].mxu0
      %v1715 = vadd.f32 0.0, %v1714
      %v1716 = vpop.f32.mrb[0].mxu0
      %1717 = vmatprep.mubr.f32.mxu0 0.0
      %1718 = vmatmul.mubr.f32.gmra.mrb[0].mxu0 %v1464
      %v1719 = vpop.f32.mrb[0].mxu0
      %v1720 = vadd.f32 0.0, %v1719
      %v1721 = vpop.f32.mrb[0].mxu0
      %1722 = vmatprep.mubr.f32.mxu0 0.0
      %1723 = vmatmul.mubr.f32.gmra.mrb[0].mxu0 %v1465
      %v1724 = vpop.f32.mrb[0].mxu0
      %v1725 = vadd.f32 0.0, %v1724
      %v1726 = vpop.f32.mrb[0].mxu0
      %1727 = vmatprep.mubr.f32.mxu0 0.0
      %1728 = vmatmul.mubr.f32.gmra.mrb[0].mxu0 %v1466
      %v1729 = vpop.f32.mrb[0].mxu0
      %v1730 = vadd.f32 0.0, %v1729
      %v1731 = vpop.f32.mrb[0].mxu0
      %1732 = vmatprep.mubr.f32.mxu0 0.0
      %1733 = vmatmul.mubr.f32.gmra.mrb[0].mxu0 %v1467
      %v1734 = vpop.f32.mrb[0].mxu0
      %v1735 = vadd.f32 0.0, %v1734
      %v1736 = vpop.f32.mrb[0].mxu0
      %1737 = vmatprep.mubr.f32.mxu0 0.0
      %1738 = vmatmul.mubr.f32.gmra.mrb[0].mxu0 %v1468
      %v1739 = vpop.f32.mrb[0].mxu0
      %v1740 = vadd.f32 0.0, %v1739
      %v1741 = vpop.f32.mrb[0].mxu0
      %1742 = vmatprep.mubr.f32.mxu0 0.0
      %1743 = vmatmul.mubr.f32.gmra.mrb[0].mxu0 %v1469
      %v1744 = vpop.f32.mrb[0].mxu0
      %v1745 = vadd.f32 0.0, %v1744
      %v1746 = vpop.f32.mrb[0].mxu0
      %1747 = vmatprep.mubr.f32.mxu0 0.0
      %1748 = vmatmul.mubr.f32.gmra.mrb[0].mxu0 %v1470
      %v1749 = vpop.f32.mrb[0].mxu0
      %v1750 = vadd.f32 0.0, %v1749
      %v1751 = vpop.f32.mrb[0].mxu0
      %1752 = vmatprep.mubr.f32.mxu0 0.0
      %1753 = vmatmul.mubr.f32.gmra.mrb[0].mxu0 %v1471
      %v1754 = vpop.f32.mrb[0].mxu0
      %v1755 = vadd.f32 0.0, %v1754
      %v1756 = vpop.f32.mrb[0].mxu0
      %1757 = vmatprep.mubr.f32.mxu0 0.0
      %1758 = vmatmul.mubr.f32.gmra.mrb[0].mxu0 %v1472
      %v1759 = vpop.f32.mrb[0].mxu0
      %v1760 = vadd.f32 0.0, %v1759
      %v1761 = vpop.f32.mrb[0].mxu0
      %1762 = vmatprep.mubr.f32.mxu0 0.0
      %1763 = vmatmul.mubr.f32.gmra.mrb[0].mxu0 %v1473
      %v1764 = vpop.f32.mrb[0].mxu0
      %v1765 = vadd.f32 0.0, %v1764
      %v1766 = vpop.f32.mrb[0].mxu0
      %1767 = vmatprep.mubr.f32.mxu0 0.0
      %1768 = vmatmul.mubr.f32.gmra.mrb[0].mxu0 %v1474
      %v1769 = vpop.f32.mrb[0].mxu0
      %v1770 = vadd.f32 0.0, %v1769
      %v1771 = vpop.f32.mrb[0].mxu0
      %1772 = vmatprep.mubr.f32.mxu0 0.0
      %1773 = vmatmul.mubr.f32.gmra.mrb[0].mxu0 %v1475
      %v1774 = vpop.f32.mrb[0].mxu0
      %v1775 = vadd.f32 0.0, %v1774
      %v1776 = vpop.f32.mrb[0].mxu0
      %1777 = vmatprep.mubr.f32.mxu0 0.0
      %1778 = vmatmul.mubr.f32.gmra.mrb[0].mxu0 %v1476
      %v1779 = vpop.f32.mrb[0].mxu0
      %v1780 = vadd.f32 0.0, %v1779
      %v1781 = vpop.f32.mrb[0].mxu0
      %1782 = vmatprep.mubr.f32.mxu0 0.0
      %1783 = vmatmul.mubr.f32.gmra.mrb[0].mxu0 %v1477
      %v1784 = vpop.f32.mrb[0].mxu0
      %v1785 = vadd.f32 0.0, %v1784
      %v1786 = vpop.f32.mrb[0].mxu0
      %1787 = vmatprep.mubr.f32.mxu0 0.0
      %1788 = vmatmul.mubr.f32.gmra.mrb[0].mxu0 %v1478
      %v1789 = vpop.f32.mrb[0].mxu0
      %v1790 = vadd.f32 0.0, %v1789
      %v1791 = vpop.f32.mrb[0].mxu0
      %1792 = vmatprep.mubr.f32.mxu0 0.0
      %1793 = vmatmul.mubr.f32.gmra.mrb[0].mxu0 %v1479
      %v1794 = vpop.f32.mrb[0].mxu0
      %v1795 = vadd.f32 0.0, %v1794
      %v1796 = vpop.f32.mrb[0].mxu0
      %1797 = vmatprep.mubr.f32.mxu0 0.0
      %1798 = vmatmul.mubr.f32.gmra.mrb[0].mxu0 %v1480
      %v1799 = vpop.f32.mrb[0].mxu0
      %v1800 = vadd.f32 0.0, %v1799
      %v1801 = vpop.f32.mrb[0].mxu0
      %1802 = vdwg.mxu0
      %1803 = vmatprep.subr.mxu0 0.0
      %1804 = vmatpush1.msra.mxu0 %v1417
      %1805 = vmatprep.subr.mxu0 0.0
      %1806 = vmatpush1.msra.mxu0 %v1418
      %1807 = vmatprep.subr.mxu0 0.0
      %1808 = vmatpush1.msra.mxu0 %v1419
      %1809 = vmatprep.subr.mxu0 0.0
      %1810 = vmatpush1.msra.mxu0 %v1420
      %1811 = vmatprep.subr.mxu0 0.0
      %1812 = vmatpush1.msra.mxu0 %v1421
      %1813 = vmatprep.subr.mxu0 0.0
      %1814 = vmatpush1.msra.mxu0 %v1422
      %1815 = vmatprep.subr.mxu0 0.0
      %1816 = vmatpush1.msra.mxu0 %v1423
      %1817 = vmatprep.subr.mxu0 0.0
      %1818 = vmatpush1.msra.mxu0 %v1424
      %1819 = vmatprep.subr.mxu0 0.0
      %1820 = vmatpush1.msra.mxu0 %v1425
      %1821 = vmatprep.subr.mxu0 0.0
      %1822 = vmatpush1.msra.mxu0 %v1426
      %1823 = vmatprep.subr.mxu0 0.0
      %1824 = vmatpush1.msra.mxu0 %v1427
      %1825 = vmatprep.subr.mxu0 0.0
      %1826 = vmatpush1.msra.mxu0 %v1428
      %1827 = vmatprep.subr.mxu0 0.0
      %1828 = vmatpush1.msra.mxu0 %v1429
      %1829 = vmatprep.subr.mxu0 0.0
      %1830 = vmatpush1.msra.mxu0 %v1430
      %1831 = vmatprep.subr.mxu0 0.0
      %1832 = vmatpush1.msra.mxu0 %v1431
      %1833 = vmatprep.subr.mxu0 0.0
      %1834 = vmatpush1.msra.mxu0 %v1432
      %1835 = vmatprep.subr.mxu0 0.0
      %1836 = vmatpush1.msra.mxu0 0.0
      %1837 = vmatprep.subr.mxu0 0.0
      %1838 = vmatpush1.msra.mxu0 0.0
      %1839 = vmatprep.subr.mxu0 0.0
      %1840 = vmatpush1.msra.mxu0 0.0
      %1841 = vmatprep.subr.mxu0 0.0
      %1842 = vmatpush1.msra.mxu0 0.0
      %1843 = vmatprep.subr.mxu0 0.0
      %1844 = vmatpush1.msra.mxu0 0.0
      %1845 = vmatprep.subr.mxu0 0.0
      %1846 = vmatpush1.msra.mxu0 0.0
      %1847 = vmatprep.subr.mxu0 0.0
      %1848 = vmatpush1.msra.mxu0 0.0
      %1849 = vmatprep.subr.mxu0 0.0
      %1850 = vmatpush1.msra.mxu0 0.0
      %1851 = vmatprep.subr.mxu0 0.0
      %1852 = vmatpush1.msra.mxu0 0.0
      %1853 = vmatprep.subr.mxu0 0.0
      %1854 = vmatpush1.msra.mxu0 0.0
      %1855 = vmatprep.subr.mxu0 0.0
      %1856 = vmatpush1.msra.mxu0 0.0
      %1857 = vmatprep.subr.mxu0 0.0
      %1858 = vmatpush1.msra.mxu0 0.0
      %1859 = vmatprep.subr.mxu0 0.0
      %1860 = vmatpush1.msra.mxu0 0.0
      %1861 = vmatprep.subr.mxu0 0.0
      %1862 = vmatpush1.msra.mxu0 0.0
      %1863 = vmatprep.subr.mxu0 0.0
      %1864 = vmatpush1.msra.mxu0 0.0
      %1865 = vmatprep.subr.mxu0 0.0
      %1866 = vmatpush1.msra.mxu0 0.0
      %1867 = vmatprep.mubr.f32.mxu0 0.0
      %1868 = vmatmul.mubr.f32.gmra.mrb[0].mxu0 %v1369
      %v1869 = vpop.f32.mrb[0].mxu0
      %v1870 = vadd.f32 %v1565, %v1869
      %v1871 = vpop.f32.mrb[0].mxu0
      %1872 = vmatprep.mubr.f32.mxu0 0.0
      %1873 = vmatmul.mubr.f32.gmra.mrb[0].mxu0 %v1370
      %v1874 = vpop.f32.mrb[0].mxu0
      %v1875 = vadd.f32 %v1570, %v1874
      %v1876 = vpop.f32.mrb[0].mxu0
      %1877 = vmatprep.mubr.f32.mxu0 0.0
      %1878 = vmatmul.mubr.f32.gmra.mrb[0].mxu0 %v1371
      %v1879 = vpop.f32.mrb[0].mxu0
      %v1880 = vadd.f32 %v1575, %v1879
      %v1881 = vpop.f32.mrb[0].mxu0
      %1882 = vmatprep.mubr.f32.mxu0 0.0
      %1883 = vmatmul.mubr.f32.gmra.mrb[0].mxu0 %v1372
      %v1884 = vpop.f32.mrb[0].mxu0
      %v1885 = vadd.f32 %v1580, %v1884
      %v1886 = vpop.f32.mrb[0].mxu0
      %1887 = vmatprep.mubr.f32.mxu0 0.0
      %1888 = vmatmul.mubr.f32.gmra.mrb[0].mxu0 %v1373
      %v1889 = vpop.f32.mrb[0].mxu0
      %v1890 = vadd.f32 %v1585, %v1889
      %v1891 = vpop.f32.mrb[0].mxu0
      %1892 = vmatprep.mubr.f32.mxu0 0.0
      %1893 = vmatmul.mubr.f32.gmra.mrb[0].mxu0 %v1374
      %v1894 = vpop.f32.mrb[0].mxu0
      %v1895 = vadd.f32 %v1590, %v1894
      %v1896 = vpop.f32.mrb[0].mxu0
      %1897 = vmatprep.mubr.f32.mxu0 0.0
      %1898 = vmatmul.mubr.f32.gmra.mrb[0].mxu0 %v1375
      %v1899 = vpop.f32.mrb[0].mxu0
      %v1900 = vadd.f32 %v1595, %v1899
      %v1901 = vpop.f32.mrb[0].mxu0
      %1902 = vmatprep.mubr.f32.mxu0 0.0
      %1903 = vmatmul.mubr.f32.gmra.mrb[0].mxu0 %v1376
      %v1904 = vpop.f32.mrb[0].mxu0
      %v1905 = vadd.f32 %v1600, %v1904
      %v1906 = vpop.f32.mrb[0].mxu0
      %1907 = vmatprep.mubr.f32.mxu0 0.0
      %1908 = vmatmul.mubr.f32.gmra.mrb[0].mxu0 %v1377
      %v1909 = vpop.f32.mrb[0].mxu0
      %v1910 = vadd.f32 %v1605, %v1909
      %v1911 = vpop.f32.mrb[0].mxu0
      %1912 = vmatprep.mubr.f32.mxu0 0.0
      %1913 = vmatmul.mubr.f32.gmra.mrb[0].mxu0 %v1378
      %v1914 = vpop.f32.mrb[0].mxu0
      %v1915 = vadd.f32 %v1610, %v1914
      %v1916 = vpop.f32.mrb[0].mxu0
      %1917 = vmatprep.mubr.f32.mxu0 0.0
      %1918 = vmatmul.mubr.f32.gmra.mrb[0].mxu0 %v1379
      %v1919 = vpop.f32.mrb[0].mxu0
      %v1920 = vadd.f32 %v1615, %v1919
      %v1921 = vpop.f32.mrb[0].mxu0
      %1922 = vmatprep.mubr.f32.mxu0 0.0
      %1923 = vmatmul.mubr.f32.gmra.mrb[0].mxu0 %v1380
      %v1924 = vpop.f32.mrb[0].mxu0
      %v1925 = vadd.f32 %v1620, %v1924
      %v1926 = vpop.f32.mrb[0].mxu0
      %1927 = vmatprep.mubr.f32.mxu0 0.0
      %1928 = vmatmul.mubr.f32.gmra.mrb[0].mxu0 %v1381
      %v1929 = vpop.f32.mrb[0].mxu0
      %v1930 = vadd.f32 %v1625, %v1929
      %v1931 = vpop.f32.mrb[0].mxu0
      %1932 = vmatprep.mubr.f32.mxu0 0.0
      %1933 = vmatmul.mubr.f32.gmra.mrb[0].mxu0 %v1382
      %v1934 = vpop.f32.mrb[0].mxu0
      %v1935 = vadd.f32 %v1630, %v1934
      %v1936 = vpop.f32.mrb[0].mxu0
      %1937 = vmatprep.mubr.f32.mxu0 0.0
      %1938 = vmatmul.mubr.f32.gmra.mrb[0].mxu0 %v1383
      %v1939 = vpop.f32.mrb[0].mxu0
      %v1940 = vadd.f32 %v1635, %v1939
      %v1941 = vpop.f32.mrb[0].mxu0
      %1942 = vmatprep.mubr.f32.mxu0 0.0
      %1943 = vmatmul.mubr.f32.gmra.mrb[0].mxu0 %v1384
      %v1944 = vpop.f32.mrb[0].mxu0
      %v1945 = vadd.f32 %v1640, %v1944
      %v1946 = vpop.f32.mrb[0].mxu0
      %1947 = vmatprep.mubr.f32.mxu0 0.0
      %1948 = vmatmul.mubr.f32.gmra.mrb[0].mxu0 %v1385
      %v1949 = vpop.f32.mrb[0].mxu0
      %v1950 = vadd.f32 %v1645, %v1949
      %v1951 = vpop.f32.mrb[0].mxu0
      %1952 = vmatprep.mubr.f32.mxu0 0.0
      %1953 = vmatmul.mubr.f32.gmra.mrb[0].mxu0 %v1386
      %v1954 = vpop.f32.mrb[0].mxu0
      %v1955 = vadd.f32 %v1650, %v1954
      %v1956 = vpop.f32.mrb[0].mxu0
      %1957 = vmatprep.mubr.f32.mxu0 0.0
      %1958 = vmatmul.mubr.f32.gmra.mrb[0].mxu0 %v1387
      %v1959 = vpop.f32.mrb[0].mxu0
      %v1960 = vadd.f32 %v1655, %v1959
      %v1961 = vpop.f32.mrb[0].mxu0
      %1962 = vmatprep.mubr.f32.mxu0 0.0
      %1963 = vmatmul.mubr.f32.gmra.mrb[0].mxu0 %v1388
      %v1964 = vpop.f32.mrb[0].mxu0
      %v1965 = vadd.f32 %v1660, %v1964
      %v1966 = vpop.f32.mrb[0].mxu0
      %1967 = vmatprep.mubr.f32.mxu0 0.0
      %1968 = vmatmul.mubr.f32.gmra.mrb[0].mxu0 %v1389
      %v1969 = vpop.f32.mrb[0].mxu0
      %v1970 = vadd.f32 %v1665, %v1969
      %v1971 = vpop.f32.mrb[0].mxu0
      %1972 = vmatprep.mubr.f32.mxu0 0.0
      %1973 = vmatmul.mubr.f32.gmra.mrb[0].mxu0 %v1390
      %v1974 = vpop.f32.mrb[0].mxu0
      %v1975 = vadd.f32 %v1670, %v1974
      %v1976 = vpop.f32.mrb[0].mxu0
      %1977 = vmatprep.mubr.f32.mxu0 0.0
      %1978 = vmatmul.mubr.f32.gmra.mrb[0].mxu0 %v1391
      %v1979 = vpop.f32.mrb[0].mxu0
      %v1980 = vadd.f32 %v1675, %v1979
      %v1981 = vpop.f32.mrb[0].mxu0
      %1982 = vmatprep.mubr.f32.mxu0 0.0
      %1983 = vmatmul.mubr.f32.gmra.mrb[0].mxu0 %v1392
      %v1984 = vpop.f32.mrb[0].mxu0
      %v1985 = vadd.f32 %v1680, %v1984
      %v1986 = vpop.f32.mrb[0].mxu0
      %1987 = vmatprep.mubr.f32.mxu0 0.0
      %1988 = vmatmul.mubr.f32.gmra.mrb[0].mxu0 %v1393
      %v1989 = vpop.f32.mrb[0].mxu0
      %v1990 = vadd.f32 %v1685, %v1989
      %v1991 = vpop.f32.mrb[0].mxu0
      %1992 = vmatprep.mubr.f32.mxu0 0.0
      %1993 = vmatmul.mubr.f32.gmra.mrb[0].mxu0 %v1394
      %v1994 = vpop.f32.mrb[0].mxu0
      %v1995 = vadd.f32 %v1690, %v1994
      %v1996 = vpop.f32.mrb[0].mxu0
      %1997 = vmatprep.mubr.f32.mxu0 0.0
      %1998 = vmatmul.mubr.f32.gmra.mrb[0].mxu0 %v1395
      %v1999 = vpop.f32.mrb[0].mxu0
      %v2000 = vadd.f32 %v1695, %v1999
      %v2001 = vpop.f32.mrb[0].mxu0
      %2002 = vmatprep.mubr.f32.mxu0 0.0
      %2003 = vmatmul.mubr.f32.gmra.mrb[0].mxu0 %v1396
      %v2004 = vpop.f32.mrb[0].mxu0
      %v2005 = vadd.f32 %v1700, %v2004
      %v2006 = vpop.f32.mrb[0].mxu0
      %2007 = vmatprep.mubr.f32.mxu0 0.0
      %2008 = vmatmul.mubr.f32.gmra.mrb[0].mxu0 %v1397
      %v2009 = vpop.f32.mrb[0].mxu0
      %v2010 = vadd.f32 %v1705, %v2009
      %v2011 = vpop.f32.mrb[0].mxu0
      %2012 = vmatprep.mubr.f32.mxu0 0.0
      %2013 = vmatmul.mubr.f32.gmra.mrb[0].mxu0 %v1398
      %v2014 = vpop.f32.mrb[0].mxu0
      %v2015 = vadd.f32 %v1710, %v2014
      %v2016 = vpop.f32.mrb[0].mxu0
      %2017 = vmatprep.mubr.f32.mxu0 0.0
      %2018 = vmatmul.mubr.f32.gmra.mrb[0].mxu0 %v1399
      %v2019 = vpop.f32.mrb[0].mxu0
      %v2020 = vadd.f32 %v1715, %v2019
      %v2021 = vpop.f32.mrb[0].mxu0
      %2022 = vmatprep.mubr.f32.mxu0 0.0
      %2023 = vmatmul.mubr.f32.gmra.mrb[0].mxu0 %v1400
      %v2024 = vpop.f32.mrb[0].mxu0
      %v2025 = vadd.f32 %v1720, %v2024
      %v2026 = vpop.f32.mrb[0].mxu0
      %2027 = vmatprep.mubr.f32.mxu0 0.0
      %2028 = vmatmul.mubr.f32.gmra.mrb[0].mxu0 %v1401
      %v2029 = vpop.f32.mrb[0].mxu0
      %v2030 = vadd.f32 %v1725, %v2029
      %v2031 = vpop.f32.mrb[0].mxu0
      %2032 = vmatprep.mubr.f32.mxu0 0.0
      %2033 = vmatmul.mubr.f32.gmra.mrb[0].mxu0 %v1402
      %v2034 = vpop.f32.mrb[0].mxu0
      %v2035 = vadd.f32 %v1730, %v2034
      %v2036 = vpop.f32.mrb[0].mxu0
      %2037 = vmatprep.mubr.f32.mxu0 0.0
      %2038 = vmatmul.mubr.f32.gmra.mrb[0].mxu0 %v1403
      %v2039 = vpop.f32.mrb[0].mxu0
      %v2040 = vadd.f32 %v1735, %v2039
      %v2041 = vpop.f32.mrb[0].mxu0
      %2042 = vmatprep.mubr.f32.mxu0 0.0
      %2043 = vmatmul.mubr.f32.gmra.mrb[0].mxu0 %v1404
      %v2044 = vpop.f32.mrb[0].mxu0
      %v2045 = vadd.f32 %v1740, %v2044
      %v2046 = vpop.f32.mrb[0].mxu0
      %2047 = vmatprep.mubr.f32.mxu0 0.0
      %2048 = vmatmul.mubr.f32.gmra.mrb[0].mxu0 %v1405
      %v2049 = vpop.f32.mrb[0].mxu0
      %v2050 = vadd.f32 %v1745, %v2049
      %v2051 = vpop.f32.mrb[0].mxu0
      %2052 = vmatprep.mubr.f32.mxu0 0.0
      %2053 = vmatmul.mubr.f32.gmra.mrb[0].mxu0 %v1406
      %v2054 = vpop.f32.mrb[0].mxu0
      %v2055 = vadd.f32 %v1750, %v2054
      %v2056 = vpop.f32.mrb[0].mxu0
      %2057 = vmatprep.mubr.f32.mxu0 0.0
      %2058 = vmatmul.mubr.f32.gmra.mrb[0].mxu0 %v1407
      %v2059 = vpop.f32.mrb[0].mxu0
      %v2060 = vadd.f32 %v1755, %v2059
      %v2061 = vpop.f32.mrb[0].mxu0
      %2062 = vmatprep.mubr.f32.mxu0 0.0
      %2063 = vmatmul.mubr.f32.gmra.mrb[0].mxu0 %v1408
      %v2064 = vpop.f32.mrb[0].mxu0
      %v2065 = vadd.f32 %v1760, %v2064
      %v2066 = vpop.f32.mrb[0].mxu0
      %2067 = vmatprep.mubr.f32.mxu0 0.0
      %2068 = vmatmul.mubr.f32.gmra.mrb[0].mxu0 %v1409
      %v2069 = vpop.f32.mrb[0].mxu0
      %v2070 = vadd.f32 %v1765, %v2069
      %v2071 = vpop.f32.mrb[0].mxu0
      %2072 = vmatprep.mubr.f32.mxu0 0.0
      %2073 = vmatmul.mubr.f32.gmra.mrb[0].mxu0 %v1410
      %v2074 = vpop.f32.mrb[0].mxu0
      %v2075 = vadd.f32 %v1770, %v2074
      %v2076 = vpop.f32.mrb[0].mxu0
      %2077 = vmatprep.mubr.f32.mxu0 0.0
      %2078 = vmatmul.mubr.f32.gmra.mrb[0].mxu0 %v1411
      %v2079 = vpop.f32.mrb[0].mxu0
      %v2080 = vadd.f32 %v1775, %v2079
      %v2081 = vpop.f32.mrb[0].mxu0
      %2082 = vmatprep.mubr.f32.mxu0 0.0
      %2083 = vmatmul.mubr.f32.gmra.mrb[0].mxu0 %v1412
      %v2084 = vpop.f32.mrb[0].mxu0
      %v2085 = vadd.f32 %v1780, %v2084
      %v2086 = vpop.f32.mrb[0].mxu0
      %2087 = vmatprep.mubr.f32.mxu0 0.0
      %2088 = vmatmul.mubr.f32.gmra.mrb[0].mxu0 %v1413
      %v2089 = vpop.f32.mrb[0].mxu0
      %v2090 = vadd.f32 %v1785, %v2089
      %v2091 = vpop.f32.mrb[0].mxu0
      %2092 = vmatprep.mubr.f32.mxu0 0.0
      %2093 = vmatmul.mubr.f32.gmra.mrb[0].mxu0 %v1414
      %v2094 = vpop.f32.mrb[0].mxu0
      %v2095 = vadd.f32 %v1790, %v2094
      %v2096 = vpop.f32.mrb[0].mxu0
      %2097 = vmatprep.mubr.f32.mxu0 0.0
      %2098 = vmatmul.mubr.f32.gmra.mrb[0].mxu0 %v1415
      %v2099 = vpop.f32.mrb[0].mxu0
      %v2100 = vadd.f32 %v1795, %v2099
      %v2101 = vpop.f32.mrb[0].mxu0
      %2102 = vmatprep.mubr.f32.mxu0 0.0
      %2103 = vmatmul.mubr.f32.gmra.mrb[0].mxu0 %v1416
      %v2104 = vpop.f32.mrb[0].mxu0
      %v2105 = vadd.f32 %v1800, %v2104
      %v2106 = vpop.f32.mrb[0].mxu0
      %2107 = vdwg.mxu0
      %v2108 = vld [vmem:[#allocation2 + $0x19] sm:$0xff]
      %v2109 = vld [vmem:[#allocation2 + $0x21] sm:$0xff]
      %v2110 = vld [vmem:[#allocation2 + $0x29] sm:$0xff]
      %v2111 = vld [vmem:[#allocation2 + $0x31] sm:$0xff]
      %v2112 = vld [vmem:[#allocation2 + $0x39] sm:$0xff]
      %v2113 = vld [vmem:[#allocation2 + $0x41] sm:$0xff]
      %v2114 = vld [vmem:[#allocation2 + $0x49] sm:$0xff]
      %v2115 = vld [vmem:[#allocation2 + $0x51] sm:$0xff]
      %v2116 = vld [vmem:[#allocation2 + $0x59] sm:$0xff]
      %v2117 = vld [vmem:[#allocation2 + $0x61] sm:$0xff]
      %v2118 = vld [vmem:[#allocation2 + $0x69] sm:$0xff]
      %v2119 = vld [vmem:[#allocation2 + $0x71] sm:$0xff]
      %v2120 = vld [vmem:[#allocation2 + $0x79] sm:$0xff]
      %v2121 = vld [vmem:[#allocation2 + $0x81] sm:$0xff]
      %v2122 = vld [vmem:[#allocation2 + $0x89] sm:$0xff]
      %v2123 = vld [vmem:[#allocation2 + $0x91] sm:$0xff]
      %v2124 = vld [vmem:[#allocation2 + $0x99] sm:$0xff]
      %v2125 = vld [vmem:[#allocation2 + $0xa1] sm:$0xff]
      %v2126 = vld [vmem:[#allocation2 + $0xa9] sm:$0xff]
      %v2127 = vld [vmem:[#allocation2 + $0xb1] sm:$0xff]
      %v2128 = vld [vmem:[#allocation2 + $0xb9] sm:$0xff]
      %v2129 = vld [vmem:[#allocation2 + $0xc1] sm:$0xff]
      %v2130 = vld [vmem:[#allocation2 + $0xc9] sm:$0xff]
      %v2131 = vld [vmem:[#allocation2 + $0xd1] sm:$0xff]
      %v2132 = vld [vmem:[#allocation2 + $0xd9] sm:$0xff]
      %v2133 = vld [vmem:[#allocation2 + $0xe1] sm:$0xff]
      %v2134 = vld [vmem:[#allocation2 + $0xe9] sm:$0xff]
      %v2135 = vld [vmem:[#allocation2 + $0xf1] sm:$0xff]
      %v2136 = vld [vmem:[#allocation2 + $0xf9] sm:$0xff]
      %v2137 = vld [vmem:[#allocation2 + $0x101] sm:$0xff]
      %v2138 = vld [vmem:[#allocation2 + $0x109] sm:$0xff]
      %v2139 = vld [vmem:[#allocation2 + $0x111] sm:$0xff]
      %v2140 = vld [vmem:[#allocation2 + $0x119] sm:$0xff]
      %v2141 = vld [vmem:[#allocation2 + $0x121] sm:$0xff]
      %v2142 = vld [vmem:[#allocation2 + $0x129] sm:$0xff]
      %v2143 = vld [vmem:[#allocation2 + $0x131] sm:$0xff]
      %v2144 = vld [vmem:[#allocation2 + $0x139] sm:$0xff]
      %v2145 = vld [vmem:[#allocation2 + $0x141] sm:$0xff]
      %v2146 = vld [vmem:[#allocation2 + $0x149] sm:$0xff]
      %v2147 = vld [vmem:[#allocation2 + $0x151] sm:$0xff]
      %v2148 = vld [vmem:[#allocation2 + $0x159] sm:$0xff]
      %v2149 = vld [vmem:[#allocation2 + $0x161] sm:$0xff]
      %v2150 = vld [vmem:[#allocation2 + $0x169] sm:$0xff]
      %v2151 = vld [vmem:[#allocation2 + $0x171] sm:$0xff]
      %v2152 = vld [vmem:[#allocation2 + $0x179] sm:$0xff]
      %v2153 = vld [vmem:[#allocation2 + $0x181] sm:$0xff]
      %v2154 = vld [vmem:[#allocation2 + $0x189] sm:$0xff]
      %v2155 = vld [vmem:[#allocation2 + $0x191] sm:$0xff]
      %s2156 = scalar_lea.vmem %s2, 256
      %v2157 = vld [vmem:[%s2156] sm:$0xff]
      %v2158 = vld [vmem:[%s2156 + $0x8] sm:$0xff]
      %v2159 = vld [vmem:[%s2156 + $0x10] sm:$0xff]
      %v2160 = vld [vmem:[%s2156 + $0x18] sm:$0xff]
      %v2161 = vld [vmem:[%s2156 + $0x20] sm:$0xff]
      %v2162 = vld [vmem:[%s2156 + $0x28] sm:$0xff]
      %v2163 = vld [vmem:[%s2156 + $0x30] sm:$0xff]
      %v2164 = vld [vmem:[%s2156 + $0x38] sm:$0xff]
      %v2165 = vld [vmem:[%s2156 + $0x40] sm:$0xff]
      %v2166 = vld [vmem:[%s2156 + $0x48] sm:$0xff]
      %v2167 = vld [vmem:[%s2156 + $0x50] sm:$0xff]
      %v2168 = vld [vmem:[%s2156 + $0x58] sm:$0xff]
      %v2169 = vld [vmem:[%s2156 + $0x60] sm:$0xff]
      %v2170 = vld [vmem:[%s2156 + $0x68] sm:$0xff]
      %v2171 = vld [vmem:[%s2156 + $0x70] sm:$0xff]
      %v2172 = vld [vmem:[%s2156 + $0x78] sm:$0xff]
      %2173 = vmatprep.subr.mxu0 0.0
      %2174 = vmatpush1.msra.mxu0 %v2157
      %2175 = vmatprep.subr.mxu0 0.0
      %2176 = vmatpush1.msra.mxu0 %v2158
      %2177 = vmatprep.subr.mxu0 0.0
      %2178 = vmatpush1.msra.mxu0 %v2159
      %2179 = vmatprep.subr.mxu0 0.0
      %2180 = vmatpush1.msra.mxu0 %v2160
      %2181 = vmatprep.subr.mxu0 0.0
      %2182 = vmatpush1.msra.mxu0 %v2161
      %2183 = vmatprep.subr.mxu0 0.0
      %2184 = vmatpush1.msra.mxu0 %v2162
      %2185 = vmatprep.subr.mxu0 0.0
      %2186 = vmatpush1.msra.mxu0 %v2163
      %2187 = vmatprep.subr.mxu0 0.0
      %2188 = vmatpush1.msra.mxu0 %v2164
      %2189 = vmatprep.subr.mxu0 0.0
      %2190 = vmatpush1.msra.mxu0 %v2165
      %2191 = vmatprep.subr.mxu0 0.0
      %2192 = vmatpush1.msra.mxu0 %v2166
      %2193 = vmatprep.subr.mxu0 0.0
      %2194 = vmatpush1.msra.mxu0 %v2167
      %2195 = vmatprep.subr.mxu0 0.0
      %2196 = vmatpush1.msra.mxu0 %v2168
      %2197 = vmatprep.subr.mxu0 0.0
      %2198 = vmatpush1.msra.mxu0 %v2169
      %2199 = vmatprep.subr.mxu0 0.0
      %2200 = vmatpush1.msra.mxu0 %v2170
      %2201 = vmatprep.subr.mxu0 0.0
      %2202 = vmatpush1.msra.mxu0 %v2171
      %2203 = vmatprep.subr.mxu0 0.0
      %2204 = vmatpush1.msra.mxu0 %v2172
      %2205 = vmatprep.subr.mxu0 0.0
      %2206 = vmatpush1.msra.mxu0 0.0
      %2207 = vmatprep.subr.mxu0 0.0
      %2208 = vmatpush1.msra.mxu0 0.0
      %2209 = vmatprep.subr.mxu0 0.0
      %2210 = vmatpush1.msra.mxu0 0.0
      %2211 = vmatprep.subr.mxu0 0.0
      %2212 = vmatpush1.msra.mxu0 0.0
      %2213 = vmatprep.subr.mxu0 0.0
      %2214 = vmatpush1.msra.mxu0 0.0
      %2215 = vmatprep.subr.mxu0 0.0
      %2216 = vmatpush1.msra.mxu0 0.0
      %2217 = vmatprep.subr.mxu0 0.0
      %2218 = vmatpush1.msra.mxu0 0.0
      %2219 = vmatprep.subr.mxu0 0.0
      %2220 = vmatpush1.msra.mxu0 0.0
      %2221 = vmatprep.subr.mxu0 0.0
      %2222 = vmatpush1.msra.mxu0 0.0
      %2223 = vmatprep.subr.mxu0 0.0
      %2224 = vmatpush1.msra.mxu0 0.0
      %2225 = vmatprep.subr.mxu0 0.0
      %2226 = vmatpush1.msra.mxu0 0.0
      %2227 = vmatprep.subr.mxu0 0.0
      %2228 = vmatpush1.msra.mxu0 0.0
      %2229 = vmatprep.subr.mxu0 0.0
      %2230 = vmatpush1.msra.mxu0 0.0
      %2231 = vmatprep.subr.mxu0 0.0
      %2232 = vmatpush1.msra.mxu0 0.0
      %2233 = vmatprep.subr.mxu0 0.0
      %2234 = vmatpush1.msra.mxu0 0.0
      %2235 = vmatprep.subr.mxu0 0.0
      %2236 = vmatpush1.msra.mxu0 0.0
      %2237 = vmatprep.mubr.f32.mxu0 0.0
      %2238 = vmatmul.mubr.f32.gmra.mrb[0].mxu0 %v2108
      %v2239 = vpop.f32.mrb[0].mxu0
      %v2240 = vadd.f32 0.0, %v2239
      %v2241 = vpop.f32.mrb[0].mxu0
      %2242 = vmatprep.mubr.f32.mxu0 0.0
      %2243 = vmatmul.mubr.f32.gmra.mrb[0].mxu0 %v2109
      %v2244 = vpop.f32.mrb[0].mxu0
      %v2245 = vadd.f32 0.0, %v2244
      %v2246 = vpop.f32.mrb[0].mxu0
      %2247 = vmatprep.mubr.f32.mxu0 0.0
      %2248 = vmatmul.mubr.f32.gmra.mrb[0].mxu0 %v2110
      %v2249 = vpop.f32.mrb[0].mxu0
      %v2250 = vadd.f32 0.0, %v2249
      %v2251 = vpop.f32.mrb[0].mxu0
      %2252 = vmatprep.mubr.f32.mxu0 0.0
      %2253 = vmatmul.mubr.f32.gmra.mrb[0].mxu0 %v2111
      %v2254 = vpop.f32.mrb[0].mxu0
      %v2255 = vadd.f32 0.0, %v2254
      %v2256 = vpop.f32.mrb[0].mxu0
      %2257 = vmatprep.mubr.f32.mxu0 0.0
      %2258 = vmatmul.mubr.f32.gmra.mrb[0].mxu0 %v2112
      %v2259 = vpop.f32.mrb[0].mxu0
      %v2260 = vadd.f32 0.0, %v2259
      %v2261 = vpop.f32.mrb[0].mxu0
      %2262 = vmatprep.mubr.f32.mxu0 0.0
      %2263 = vmatmul.mubr.f32.gmra.mrb[0].mxu0 %v2113
      %v2264 = vpop.f32.mrb[0].mxu0
      %v2265 = vadd.f32 0.0, %v2264
      %v2266 = vpop.f32.mrb[0].mxu0
      %2267 = vmatprep.mubr.f32.mxu0 0.0
      %2268 = vmatmul.mubr.f32.gmra.mrb[0].mxu0 %v2114
      %v2269 = vpop.f32.mrb[0].mxu0
      %v2270 = vadd.f32 0.0, %v2269
      %v2271 = vpop.f32.mrb[0].mxu0
      %2272 = vmatprep.mubr.f32.mxu0 0.0
      %2273 = vmatmul.mubr.f32.gmra.mrb[0].mxu0 %v2115
      %v2274 = vpop.f32.mrb[0].mxu0
      %v2275 = vadd.f32 0.0, %v2274
      %v2276 = vpop.f32.mrb[0].mxu0
      %2277 = vmatprep.mubr.f32.mxu0 0.0
      %2278 = vmatmul.mubr.f32.gmra.mrb[0].mxu0 %v2116
      %v2279 = vpop.f32.mrb[0].mxu0
      %v2280 = vadd.f32 0.0, %v2279
      %v2281 = vpop.f32.mrb[0].mxu0
      %2282 = vmatprep.mubr.f32.mxu0 0.0
      %2283 = vmatmul.mubr.f32.gmra.mrb[0].mxu0 %v2117
      %v2284 = vpop.f32.mrb[0].mxu0
      %v2285 = vadd.f32 0.0, %v2284
      %v2286 = vpop.f32.mrb[0].mxu0
      %2287 = vmatprep.mubr.f32.mxu0 0.0
      %2288 = vmatmul.mubr.f32.gmra.mrb[0].mxu0 %v2118
      %v2289 = vpop.f32.mrb[0].mxu0
      %v2290 = vadd.f32 0.0, %v2289
      %v2291 = vpop.f32.mrb[0].mxu0
      %2292 = vmatprep.mubr.f32.mxu0 0.0
      %2293 = vmatmul.mubr.f32.gmra.mrb[0].mxu0 %v2119
      %v2294 = vpop.f32.mrb[0].mxu0
      %v2295 = vadd.f32 0.0, %v2294
      %v2296 = vpop.f32.mrb[0].mxu0
      %2297 = vmatprep.mubr.f32.mxu0 0.0
      %2298 = vmatmul.mubr.f32.gmra.mrb[0].mxu0 %v2120
      %v2299 = vpop.f32.mrb[0].mxu0
      %v2300 = vadd.f32 0.0, %v2299
      %v2301 = vpop.f32.mrb[0].mxu0
      %2302 = vmatprep.mubr.f32.mxu0 0.0
      %2303 = vmatmul.mubr.f32.gmra.mrb[0].mxu0 %v2121
      %v2304 = vpop.f32.mrb[0].mxu0
      %v2305 = vadd.f32 0.0, %v2304
      %v2306 = vpop.f32.mrb[0].mxu0
      %2307 = vmatprep.mubr.f32.mxu0 0.0
      %2308 = vmatmul.mubr.f32.gmra.mrb[0].mxu0 %v2122
      %v2309 = vpop.f32.mrb[0].mxu0
      %v2310 = vadd.f32 0.0, %v2309
      %v2311 = vpop.f32.mrb[0].mxu0
      %2312 = vmatprep.mubr.f32.mxu0 0.0
      %2313 = vmatmul.mubr.f32.gmra.mrb[0].mxu0 %v2123
      %v2314 = vpop.f32.mrb[0].mxu0
      %v2315 = vadd.f32 0.0, %v2314
      %v2316 = vpop.f32.mrb[0].mxu0
      %2317 = vmatprep.mubr.f32.mxu0 0.0
      %2318 = vmatmul.mubr.f32.gmra.mrb[0].mxu0 %v2124
      %v2319 = vpop.f32.mrb[0].mxu0
      %v2320 = vadd.f32 0.0, %v2319
      %v2321 = vpop.f32.mrb[0].mxu0
      %2322 = vmatprep.mubr.f32.mxu0 0.0
      %2323 = vmatmul.mubr.f32.gmra.mrb[0].mxu0 %v2125
      %v2324 = vpop.f32.mrb[0].mxu0
      %v2325 = vadd.f32 0.0, %v2324
      %v2326 = vpop.f32.mrb[0].mxu0
      %2327 = vmatprep.mubr.f32.mxu0 0.0
      %2328 = vmatmul.mubr.f32.gmra.mrb[0].mxu0 %v2126
      %v2329 = vpop.f32.mrb[0].mxu0
      %v2330 = vadd.f32 0.0, %v2329
      %v2331 = vpop.f32.mrb[0].mxu0
      %2332 = vmatprep.mubr.f32.mxu0 0.0
      %2333 = vmatmul.mubr.f32.gmra.mrb[0].mxu0 %v2127
      %v2334 = vpop.f32.mrb[0].mxu0
      %v2335 = vadd.f32 0.0, %v2334
      %v2336 = vpop.f32.mrb[0].mxu0
      %2337 = vmatprep.mubr.f32.mxu0 0.0
      %2338 = vmatmul.mubr.f32.gmra.mrb[0].mxu0 %v2128
      %v2339 = vpop.f32.mrb[0].mxu0
      %v2340 = vadd.f32 0.0, %v2339
      %v2341 = vpop.f32.mrb[0].mxu0
      %2342 = vmatprep.mubr.f32.mxu0 0.0
      %2343 = vmatmul.mubr.f32.gmra.mrb[0].mxu0 %v2129
      %v2344 = vpop.f32.mrb[0].mxu0
      %v2345 = vadd.f32 0.0, %v2344
      %v2346 = vpop.f32.mrb[0].mxu0
      %2347 = vmatprep.mubr.f32.mxu0 0.0
      %2348 = vmatmul.mubr.f32.gmra.mrb[0].mxu0 %v2130
      %v2349 = vpop.f32.mrb[0].mxu0
      %v2350 = vadd.f32 0.0, %v2349
      %v2351 = vpop.f32.mrb[0].mxu0
      %2352 = vmatprep.mubr.f32.mxu0 0.0
      %2353 = vmatmul.mubr.f32.gmra.mrb[0].mxu0 %v2131
      %v2354 = vpop.f32.mrb[0].mxu0
      %v2355 = vadd.f32 0.0, %v2354
      %v2356 = vpop.f32.mrb[0].mxu0
      %2357 = vmatprep.mubr.f32.mxu0 0.0
      %2358 = vmatmul.mubr.f32.gmra.mrb[0].mxu0 %v2132
      %v2359 = vpop.f32.mrb[0].mxu0
      %v2360 = vadd.f32 0.0, %v2359
      %v2361 = vpop.f32.mrb[0].mxu0
      %2362 = vmatprep.mubr.f32.mxu0 0.0
      %2363 = vmatmul.mubr.f32.gmra.mrb[0].mxu0 %v2133
      %v2364 = vpop.f32.mrb[0].mxu0
      %v2365 = vadd.f32 0.0, %v2364
      %v2366 = vpop.f32.mrb[0].mxu0
      %2367 = vmatprep.mubr.f32.mxu0 0.0
      %2368 = vmatmul.mubr.f32.gmra.mrb[0].mxu0 %v2134
      %v2369 = vpop.f32.mrb[0].mxu0
      %v2370 = vadd.f32 0.0, %v2369
      %v2371 = vpop.f32.mrb[0].mxu0
      %2372 = vmatprep.mubr.f32.mxu0 0.0
      %2373 = vmatmul.mubr.f32.gmra.mrb[0].mxu0 %v2135
      %v2374 = vpop.f32.mrb[0].mxu0
      %v2375 = vadd.f32 0.0, %v2374
      %v2376 = vpop.f32.mrb[0].mxu0
      %2377 = vmatprep.mubr.f32.mxu0 0.0
      %2378 = vmatmul.mubr.f32.gmra.mrb[0].mxu0 %v2136
      %v2379 = vpop.f32.mrb[0].mxu0
      %v2380 = vadd.f32 0.0, %v2379
      %v2381 = vpop.f32.mrb[0].mxu0
      %2382 = vmatprep.mubr.f32.mxu0 0.0
      %2383 = vmatmul.mubr.f32.gmra.mrb[0].mxu0 %v2137
      %v2384 = vpop.f32.mrb[0].mxu0
      %v2385 = vadd.f32 0.0, %v2384
      %v2386 = vpop.f32.mrb[0].mxu0
      %2387 = vmatprep.mubr.f32.mxu0 0.0
      %2388 = vmatmul.mubr.f32.gmra.mrb[0].mxu0 %v2138
      %v2389 = vpop.f32.mrb[0].mxu0
      %v2390 = vadd.f32 0.0, %v2389
      %v2391 = vpop.f32.mrb[0].mxu0
      %2392 = vmatprep.mubr.f32.mxu0 0.0
      %2393 = vmatmul.mubr.f32.gmra.mrb[0].mxu0 %v2139
      %v2394 = vpop.f32.mrb[0].mxu0
      %v2395 = vadd.f32 0.0, %v2394
      %v2396 = vpop.f32.mrb[0].mxu0
      %2397 = vmatprep.mubr.f32.mxu0 0.0
      %2398 = vmatmul.mubr.f32.gmra.mrb[0].mxu0 %v2140
      %v2399 = vpop.f32.mrb[0].mxu0
      %v2400 = vadd.f32 0.0, %v2399
      %v2401 = vpop.f32.mrb[0].mxu0
      %2402 = vmatprep.mubr.f32.mxu0 0.0
      %2403 = vmatmul.mubr.f32.gmra.mrb[0].mxu0 %v2141
      %v2404 = vpop.f32.mrb[0].mxu0
      %v2405 = vadd.f32 0.0, %v2404
      %v2406 = vpop.f32.mrb[0].mxu0
      %2407 = vmatprep.mubr.f32.mxu0 0.0
      %2408 = vmatmul.mubr.f32.gmra.mrb[0].mxu0 %v2142
      %v2409 = vpop.f32.mrb[0].mxu0
      %v2410 = vadd.f32 0.0, %v2409
      %v2411 = vpop.f32.mrb[0].mxu0
      %2412 = vmatprep.mubr.f32.mxu0 0.0
      %2413 = vmatmul.mubr.f32.gmra.mrb[0].mxu0 %v2143
      %v2414 = vpop.f32.mrb[0].mxu0
      %v2415 = vadd.f32 0.0, %v2414
      %v2416 = vpop.f32.mrb[0].mxu0
      %2417 = vmatprep.mubr.f32.mxu0 0.0
      %2418 = vmatmul.mubr.f32.gmra.mrb[0].mxu0 %v2144
      %v2419 = vpop.f32.mrb[0].mxu0
      %v2420 = vadd.f32 0.0, %v2419
      %v2421 = vpop.f32.mrb[0].mxu0
      %2422 = vmatprep.mubr.f32.mxu0 0.0
      %2423 = vmatmul.mubr.f32.gmra.mrb[0].mxu0 %v2145
      %v2424 = vpop.f32.mrb[0].mxu0
      %v2425 = vadd.f32 0.0, %v2424
      %v2426 = vpop.f32.mrb[0].mxu0
      %2427 = vmatprep.mubr.f32.mxu0 0.0
      %2428 = vmatmul.mubr.f32.gmra.mrb[0].mxu0 %v2146
      %v2429 = vpop.f32.mrb[0].mxu0
      %v2430 = vadd.f32 0.0, %v2429
      %v2431 = vpop.f32.mrb[0].mxu0
      %2432 = vmatprep.mubr.f32.mxu0 0.0
      %2433 = vmatmul.mubr.f32.gmra.mrb[0].mxu0 %v2147
      %v2434 = vpop.f32.mrb[0].mxu0
      %v2435 = vadd.f32 0.0, %v2434
      %v2436 = vpop.f32.mrb[0].mxu0
      %2437 = vmatprep.mubr.f32.mxu0 0.0
      %2438 = vmatmul.mubr.f32.gmra.mrb[0].mxu0 %v2148
      %v2439 = vpop.f32.mrb[0].mxu0
      %v2440 = vadd.f32 0.0, %v2439
      %v2441 = vpop.f32.mrb[0].mxu0
      %2442 = vmatprep.mubr.f32.mxu0 0.0
      %2443 = vmatmul.mubr.f32.gmra.mrb[0].mxu0 %v2149
      %v2444 = vpop.f32.mrb[0].mxu0
      %v2445 = vadd.f32 0.0, %v2444
      %v2446 = vpop.f32.mrb[0].mxu0
      %2447 = vmatprep.mubr.f32.mxu0 0.0
      %2448 = vmatmul.mubr.f32.gmra.mrb[0].mxu0 %v2150
      %v2449 = vpop.f32.mrb[0].mxu0
      %v2450 = vadd.f32 0.0, %v2449
      %v2451 = vpop.f32.mrb[0].mxu0
      %2452 = vmatprep.mubr.f32.mxu0 0.0
      %2453 = vmatmul.mubr.f32.gmra.mrb[0].mxu0 %v2151
      %v2454 = vpop.f32.mrb[0].mxu0
      %v2455 = vadd.f32 0.0, %v2454
      %v2456 = vpop.f32.mrb[0].mxu0
      %2457 = vmatprep.mubr.f32.mxu0 0.0
      %2458 = vmatmul.mubr.f32.gmra.mrb[0].mxu0 %v2152
      %v2459 = vpop.f32.mrb[0].mxu0
      %v2460 = vadd.f32 0.0, %v2459
      %v2461 = vpop.f32.mrb[0].mxu0
      %2462 = vmatprep.mubr.f32.mxu0 0.0
      %2463 = vmatmul.mubr.f32.gmra.mrb[0].mxu0 %v2153
      %v2464 = vpop.f32.mrb[0].mxu0
      %v2465 = vadd.f32 0.0, %v2464
      %v2466 = vpop.f32.mrb[0].mxu0
      %2467 = vmatprep.mubr.f32.mxu0 0.0
      %2468 = vmatmul.mubr.f32.gmra.mrb[0].mxu0 %v2154
      %v2469 = vpop.f32.mrb[0].mxu0
      %v2470 = vadd.f32 0.0, %v2469
      %v2471 = vpop.f32.mrb[0].mxu0
      %2472 = vmatprep.mubr.f32.mxu0 0.0
      %2473 = vmatmul.mubr.f32.gmra.mrb[0].mxu0 %v2155
      %v2474 = vpop.f32.mrb[0].mxu0
      %v2475 = vadd.f32 0.0, %v2474
      %v2476 = vpop.f32.mrb[0].mxu0
      %2477 = vdwg.mxu0
      %v2478 = vadd.f32 %v1870, %v2240
      %v2479 = vadd.f32 %v1875, %v2245
      %v2480 = vadd.f32 %v1880, %v2250
      %v2481 = vadd.f32 %v1885, %v2255
      %v2482 = vadd.f32 %v1890, %v2260
      %v2483 = vadd.f32 %v1895, %v2265
      %v2484 = vadd.f32 %v1900, %v2270
      %v2485 = vadd.f32 %v1905, %v2275
      %v2486 = vadd.f32 %v1910, %v2280
      %v2487 = vadd.f32 %v1915, %v2285
      %v2488 = vadd.f32 %v1920, %v2290
      %v2489 = vadd.f32 %v1925, %v2295
      %v2490 = vadd.f32 %v1930, %v2300
      %v2491 = vadd.f32 %v1935, %v2305
      %v2492 = vadd.f32 %v1940, %v2310
      %v2493 = vadd.f32 %v1945, %v2315
      %v2494 = vadd.f32 %v1950, %v2320
      %v2495 = vadd.f32 %v1955, %v2325
      %v2496 = vadd.f32 %v1960, %v2330
      %v2497 = vadd.f32 %v1965, %v2335
      %v2498 = vadd.f32 %v1970, %v2340
      %v2499 = vadd.f32 %v1975, %v2345
      %v2500 = vadd.f32 %v1980, %v2350
      %v2501 = vadd.f32 %v1985, %v2355
      %v2502 = vadd.f32 %v1990, %v2360
      %v2503 = vadd.f32 %v1995, %v2365
      %v2504 = vadd.f32 %v2000, %v2370
      %v2505 = vadd.f32 %v2005, %v2375
      %v2506 = vadd.f32 %v2010, %v2380
      %v2507 = vadd.f32 %v2015, %v2385
      %v2508 = vadd.f32 %v2020, %v2390
      %v2509 = vadd.f32 %v2025, %v2395
      %v2510 = vadd.f32 %v2030, %v2400
      %v2511 = vadd.f32 %v2035, %v2405
      %v2512 = vadd.f32 %v2040, %v2410
      %v2513 = vadd.f32 %v2045, %v2415
      %v2514 = vadd.f32 %v2050, %v2420
      %v2515 = vadd.f32 %v2055, %v2425
      %v2516 = vadd.f32 %v2060, %v2430
      %v2517 = vadd.f32 %v2065, %v2435
      %v2518 = vadd.f32 %v2070, %v2440
      %v2519 = vadd.f32 %v2075, %v2445
      %v2520 = vadd.f32 %v2080, %v2450
      %v2521 = vadd.f32 %v2085, %v2455
      %v2522 = vadd.f32 %v2090, %v2460
      %v2523 = vadd.f32 %v2095, %v2465
      %v2524 = vadd.f32 %v2100, %v2470
      %v2525 = vadd.f32 %v2105, %v2475
      %v2526 = vld [vmem:[#allocation2 + $0x2f] sm:$0xff]
      %v2527 = vld [vmem:[#allocation2 + $0x37] sm:$0xff]
      %v2528 = vld [vmem:[#allocation2 + $0x3f] sm:$0xff]
      %v2529 = vld [vmem:[#allocation2 + $0x47] sm:$0xff]
      %v2530 = vld [vmem:[#allocation2 + $0x4f] sm:$0xff]
      %v2531 = vld [vmem:[#allocation2 + $0x57] sm:$0xff]
      %v2532 = vld [vmem:[#allocation2 + $0x5f] sm:$0xff]
      %v2533 = vld [vmem:[#allocation2 + $0x67] sm:$0xff]
      %v2534 = vld [vmem:[#allocation2 + $0x6f] sm:$0xff]
      %v2535 = vld [vmem:[#allocation2 + $0x77] sm:$0xff]
      %v2536 = vld [vmem:[#allocation2 + $0x7f] sm:$0xff]
      %v2537 = vld [vmem:[#allocation2 + $0x87] sm:$0xff]
      %v2538 = vld [vmem:[#allocation2 + $0x8f] sm:$0xff]
      %v2539 = vld [vmem:[#allocation2 + $0x97] sm:$0xff]
      %v2540 = vld [vmem:[#allocation2 + $0x9f] sm:$0xff]
      %v2541 = vld [vmem:[#allocation2 + $0xa7] sm:$0xff]
      %v2542 = vld [vmem:[#allocation2 + $0xaf] sm:$0xff]
      %v2543 = vld [vmem:[#allocation2 + $0xb7] sm:$0xff]
      %v2544 = vld [vmem:[#allocation2 + $0xbf] sm:$0xff]
      %v2545 = vld [vmem:[#allocation2 + $0xc7] sm:$0xff]
      %v2546 = vld [vmem:[#allocation2 + $0xcf] sm:$0xff]
      %v2547 = vld [vmem:[#allocation2 + $0xd7] sm:$0xff]
      %v2548 = vld [vmem:[#allocation2 + $0xdf] sm:$0xff]
      %v2549 = vld [vmem:[#allocation2 + $0xe7] sm:$0xff]
      %v2550 = vld [vmem:[#allocation2 + $0xef] sm:$0xff]
      %v2551 = vld [vmem:[#allocation2 + $0xf7] sm:$0xff]
      %v2552 = vld [vmem:[#allocation2 + $0xff] sm:$0xff]
      %v2553 = vld [vmem:[#allocation2 + $0x107] sm:$0xff]
      %v2554 = vld [vmem:[#allocation2 + $0x10f] sm:$0xff]
      %v2555 = vld [vmem:[#allocation2 + $0x117] sm:$0xff]
      %v2556 = vld [vmem:[#allocation2 + $0x11f] sm:$0xff]
      %v2557 = vld [vmem:[#allocation2 + $0x127] sm:$0xff]
      %v2558 = vld [vmem:[#allocation2 + $0x12f] sm:$0xff]
      %v2559 = vld [vmem:[#allocation2 + $0x137] sm:$0xff]
      %v2560 = vld [vmem:[#allocation2 + $0x13f] sm:$0xff]
      %v2561 = vld [vmem:[#allocation2 + $0x147] sm:$0xff]
      %v2562 = vld [vmem:[#allocation2 + $0x14f] sm:$0xff]
      %v2563 = vld [vmem:[#allocation2 + $0x157] sm:$0xff]
      %v2564 = vld [vmem:[#allocation2 + $0x15f] sm:$0xff]
      %v2565 = vld [vmem:[#allocation2 + $0x167] sm:$0xff]
      %v2566 = vld [vmem:[#allocation2 + $0x16f] sm:$0xff]
      %v2567 = vld [vmem:[#allocation2 + $0x177] sm:$0xff]
      %v2568 = vld [vmem:[#allocation2 + $0x17f] sm:$0xff]
      %v2569 = vld [vmem:[#allocation2 + $0x187] sm:$0xff]
      %v2570 = vld [vmem:[#allocation2 + $0x18f] sm:$0xff]
      %v2571 = vld [vmem:[#allocation2 + $0x197] sm:$0xff]
      %v2572 = vld [vmem:[#allocation2 + $0x19f] sm:$0xff]
      %v2573 = vld [vmem:[#allocation2 + $0x1a7] sm:$0xff]
      %s2574 = scalar_lea.vmem %s2, 384
      %v2575 = vld [vmem:[%s2574] sm:$0xff]
      %v2576 = vld [vmem:[%s2574 + $0x8] sm:$0xff]
      %v2577 = vld [vmem:[%s2574 + $0x10] sm:$0xff]
      %v2578 = vld [vmem:[%s2574 + $0x18] sm:$0xff]
      %v2579 = vld [vmem:[%s2574 + $0x20] sm:$0xff]
      %v2580 = vld [vmem:[%s2574 + $0x28] sm:$0xff]
      %v2581 = vld [vmem:[%s2574 + $0x30] sm:$0xff]
      %v2582 = vld [vmem:[%s2574 + $0x38] sm:$0xff]
      %v2583 = vld [vmem:[%s2574 + $0x40] sm:$0xff]
      %v2584 = vld [vmem:[%s2574 + $0x48] sm:$0xff]
      %v2585 = vld [vmem:[%s2574 + $0x50] sm:$0xff]
      %v2586 = vld [vmem:[%s2574 + $0x58] sm:$0xff]
      %v2587 = vld [vmem:[%s2574 + $0x60] sm:$0xff]
      %v2588 = vld [vmem:[%s2574 + $0x68] sm:$0xff]
      %v2589 = vld [vmem:[%s2574 + $0x70] sm:$0xff]
      %v2590 = vld [vmem:[%s2574 + $0x78] sm:$0xff]
      %2591 = vmatprep.subr.mxu0 0.0
      %2592 = vmatpush1.msra.mxu0 %v2575
      %2593 = vmatprep.subr.mxu0 0.0
      %2594 = vmatpush1.msra.mxu0 %v2576
      %2595 = vmatprep.subr.mxu0 0.0
      %2596 = vmatpush1.msra.mxu0 %v2577
      %2597 = vmatprep.subr.mxu0 0.0
      %2598 = vmatpush1.msra.mxu0 %v2578
      %2599 = vmatprep.subr.mxu0 0.0
      %2600 = vmatpush1.msra.mxu0 %v2579
      %2601 = vmatprep.subr.mxu0 0.0
      %2602 = vmatpush1.msra.mxu0 %v2580
      %2603 = vmatprep.subr.mxu0 0.0
      %2604 = vmatpush1.msra.mxu0 %v2581
      %2605 = vmatprep.subr.mxu0 0.0
      %2606 = vmatpush1.msra.mxu0 %v2582
      %2607 = vmatprep.subr.mxu0 0.0
      %2608 = vmatpush1.msra.mxu0 %v2583
      %2609 = vmatprep.subr.mxu0 0.0
      %2610 = vmatpush1.msra.mxu0 %v2584
      %2611 = vmatprep.subr.mxu0 0.0
      %2612 = vmatpush1.msra.mxu0 %v2585
      %2613 = vmatprep.subr.mxu0 0.0
      %2614 = vmatpush1.msra.mxu0 %v2586
      %2615 = vmatprep.subr.mxu0 0.0
      %2616 = vmatpush1.msra.mxu0 %v2587
      %2617 = vmatprep.subr.mxu0 0.0
      %2618 = vmatpush1.msra.mxu0 %v2588
      %2619 = vmatprep.subr.mxu0 0.0
      %2620 = vmatpush1.msra.mxu0 %v2589
      %2621 = vmatprep.subr.mxu0 0.0
      %2622 = vmatpush1.msra.mxu0 %v2590
      %2623 = vmatprep.subr.mxu0 0.0
      %2624 = vmatpush1.msra.mxu0 0.0
      %2625 = vmatprep.subr.mxu0 0.0
      %2626 = vmatpush1.msra.mxu0 0.0
      %2627 = vmatprep.subr.mxu0 0.0
      %2628 = vmatpush1.msra.mxu0 0.0
      %2629 = vmatprep.subr.mxu0 0.0
      %2630 = vmatpush1.msra.mxu0 0.0
      %2631 = vmatprep.subr.mxu0 0.0
      %2632 = vmatpush1.msra.mxu0 0.0
      %2633 = vmatprep.subr.mxu0 0.0
      %2634 = vmatpush1.msra.mxu0 0.0
      %2635 = vmatprep.subr.mxu0 0.0
      %2636 = vmatpush1.msra.mxu0 0.0
      %2637 = vmatprep.subr.mxu0 0.0
      %2638 = vmatpush1.msra.mxu0 0.0
      %2639 = vmatprep.subr.mxu0 0.0
      %2640 = vmatpush1.msra.mxu0 0.0
      %2641 = vmatprep.subr.mxu0 0.0
      %2642 = vmatpush1.msra.mxu0 0.0
      %2643 = vmatprep.subr.mxu0 0.0
      %2644 = vmatpush1.msra.mxu0 0.0
      %2645 = vmatprep.subr.mxu0 0.0
      %2646 = vmatpush1.msra.mxu0 0.0
      %2647 = vmatprep.subr.mxu0 0.0
      %2648 = vmatpush1.msra.mxu0 0.0
      %2649 = vmatprep.subr.mxu0 0.0
      %2650 = vmatpush1.msra.mxu0 0.0
      %2651 = vmatprep.subr.mxu0 0.0
      %2652 = vmatpush1.msra.mxu0 0.0
      %2653 = vmatprep.subr.mxu0 0.0
      %2654 = vmatpush1.msra.mxu0 0.0
      %2655 = vmatprep.mubr.f32.mxu0 0.0
      %2656 = vmatmul.mubr.f32.gmra.mrb[0].mxu0 %v2526
      %v2657 = vpop.f32.mrb[0].mxu0
      %v2658 = vadd.f32 0.0, %v2657
      %v2659 = vpop.f32.mrb[0].mxu0
      %2660 = vmatprep.mubr.f32.mxu0 0.0
      %2661 = vmatmul.mubr.f32.gmra.mrb[0].mxu0 %v2527
      %v2662 = vpop.f32.mrb[0].mxu0
      %v2663 = vadd.f32 0.0, %v2662
      %v2664 = vpop.f32.mrb[0].mxu0
      %2665 = vmatprep.mubr.f32.mxu0 0.0
      %2666 = vmatmul.mubr.f32.gmra.mrb[0].mxu0 %v2528
      %v2667 = vpop.f32.mrb[0].mxu0
      %v2668 = vadd.f32 0.0, %v2667
      %v2669 = vpop.f32.mrb[0].mxu0
      %2670 = vmatprep.mubr.f32.mxu0 0.0
      %2671 = vmatmul.mubr.f32.gmra.mrb[0].mxu0 %v2529
      %v2672 = vpop.f32.mrb[0].mxu0
      %v2673 = vadd.f32 0.0, %v2672
      %v2674 = vpop.f32.mrb[0].mxu0
      %2675 = vmatprep.mubr.f32.mxu0 0.0
      %2676 = vmatmul.mubr.f32.gmra.mrb[0].mxu0 %v2530
      %v2677 = vpop.f32.mrb[0].mxu0
      %v2678 = vadd.f32 0.0, %v2677
      %v2679 = vpop.f32.mrb[0].mxu0
      %2680 = vmatprep.mubr.f32.mxu0 0.0
      %2681 = vmatmul.mubr.f32.gmra.mrb[0].mxu0 %v2531
      %v2682 = vpop.f32.mrb[0].mxu0
      %v2683 = vadd.f32 0.0, %v2682
      %v2684 = vpop.f32.mrb[0].mxu0
      %2685 = vmatprep.mubr.f32.mxu0 0.0
      %2686 = vmatmul.mubr.f32.gmra.mrb[0].mxu0 %v2532
      %v2687 = vpop.f32.mrb[0].mxu0
      %v2688 = vadd.f32 0.0, %v2687
      %v2689 = vpop.f32.mrb[0].mxu0
      %2690 = vmatprep.mubr.f32.mxu0 0.0
      %2691 = vmatmul.mubr.f32.gmra.mrb[0].mxu0 %v2533
      %v2692 = vpop.f32.mrb[0].mxu0
      %v2693 = vadd.f32 0.0, %v2692
      %v2694 = vpop.f32.mrb[0].mxu0
      %2695 = vmatprep.mubr.f32.mxu0 0.0
      %2696 = vmatmul.mubr.f32.gmra.mrb[0].mxu0 %v2534
      %v2697 = vpop.f32.mrb[0].mxu0
      %v2698 = vadd.f32 0.0, %v2697
      %v2699 = vpop.f32.mrb[0].mxu0
      %2700 = vmatprep.mubr.f32.mxu0 0.0
      %2701 = vmatmul.mubr.f32.gmra.mrb[0].mxu0 %v2535
      %v2702 = vpop.f32.mrb[0].mxu0
      %v2703 = vadd.f32 0.0, %v2702
      %v2704 = vpop.f32.mrb[0].mxu0
      %2705 = vmatprep.mubr.f32.mxu0 0.0
      %2706 = vmatmul.mubr.f32.gmra.mrb[0].mxu0 %v2536
      %v2707 = vpop.f32.mrb[0].mxu0
      %v2708 = vadd.f32 0.0, %v2707
      %v2709 = vpop.f32.mrb[0].mxu0
      %2710 = vmatprep.mubr.f32.mxu0 0.0
      %2711 = vmatmul.mubr.f32.gmra.mrb[0].mxu0 %v2537
      %v2712 = vpop.f32.mrb[0].mxu0
      %v2713 = vadd.f32 0.0, %v2712
      %v2714 = vpop.f32.mrb[0].mxu0
      %2715 = vmatprep.mubr.f32.mxu0 0.0
      %2716 = vmatmul.mubr.f32.gmra.mrb[0].mxu0 %v2538
      %v2717 = vpop.f32.mrb[0].mxu0
      %v2718 = vadd.f32 0.0, %v2717
      %v2719 = vpop.f32.mrb[0].mxu0
      %2720 = vmatprep.mubr.f32.mxu0 0.0
      %2721 = vmatmul.mubr.f32.gmra.mrb[0].mxu0 %v2539
      %v2722 = vpop.f32.mrb[0].mxu0
      %v2723 = vadd.f32 0.0, %v2722
      %v2724 = vpop.f32.mrb[0].mxu0
      %2725 = vmatprep.mubr.f32.mxu0 0.0
      %2726 = vmatmul.mubr.f32.gmra.mrb[0].mxu0 %v2540
      %v2727 = vpop.f32.mrb[0].mxu0
      %v2728 = vadd.f32 0.0, %v2727
      %v2729 = vpop.f32.mrb[0].mxu0
      %2730 = vmatprep.mubr.f32.mxu0 0.0
      %2731 = vmatmul.mubr.f32.gmra.mrb[0].mxu0 %v2541
      %v2732 = vpop.f32.mrb[0].mxu0
      %v2733 = vadd.f32 0.0, %v2732
      %v2734 = vpop.f32.mrb[0].mxu0
      %2735 = vmatprep.mubr.f32.mxu0 0.0
      %2736 = vmatmul.mubr.f32.gmra.mrb[0].mxu0 %v2542
      %v2737 = vpop.f32.mrb[0].mxu0
      %v2738 = vadd.f32 0.0, %v2737
      %v2739 = vpop.f32.mrb[0].mxu0
      %2740 = vmatprep.mubr.f32.mxu0 0.0
      %2741 = vmatmul.mubr.f32.gmra.mrb[0].mxu0 %v2543
      %v2742 = vpop.f32.mrb[0].mxu0
      %v2743 = vadd.f32 0.0, %v2742
      %v2744 = vpop.f32.mrb[0].mxu0
      %2745 = vmatprep.mubr.f32.mxu0 0.0
      %2746 = vmatmul.mubr.f32.gmra.mrb[0].mxu0 %v2544
      %v2747 = vpop.f32.mrb[0].mxu0
      %v2748 = vadd.f32 0.0, %v2747
      %v2749 = vpop.f32.mrb[0].mxu0
      %2750 = vmatprep.mubr.f32.mxu0 0.0
      %2751 = vmatmul.mubr.f32.gmra.mrb[0].mxu0 %v2545
      %v2752 = vpop.f32.mrb[0].mxu0
      %v2753 = vadd.f32 0.0, %v2752
      %v2754 = vpop.f32.mrb[0].mxu0
      %2755 = vmatprep.mubr.f32.mxu0 0.0
      %2756 = vmatmul.mubr.f32.gmra.mrb[0].mxu0 %v2546
      %v2757 = vpop.f32.mrb[0].mxu0
      %v2758 = vadd.f32 0.0, %v2757
      %v2759 = vpop.f32.mrb[0].mxu0
      %2760 = vmatprep.mubr.f32.mxu0 0.0
      %2761 = vmatmul.mubr.f32.gmra.mrb[0].mxu0 %v2547
      %v2762 = vpop.f32.mrb[0].mxu0
      %v2763 = vadd.f32 0.0, %v2762
      %v2764 = vpop.f32.mrb[0].mxu0
      %2765 = vmatprep.mubr.f32.mxu0 0.0
      %2766 = vmatmul.mubr.f32.gmra.mrb[0].mxu0 %v2548
      %v2767 = vpop.f32.mrb[0].mxu0
      %v2768 = vadd.f32 0.0, %v2767
      %v2769 = vpop.f32.mrb[0].mxu0
      %2770 = vmatprep.mubr.f32.mxu0 0.0
      %2771 = vmatmul.mubr.f32.gmra.mrb[0].mxu0 %v2549
      %v2772 = vpop.f32.mrb[0].mxu0
      %v2773 = vadd.f32 0.0, %v2772
      %v2774 = vpop.f32.mrb[0].mxu0
      %2775 = vmatprep.mubr.f32.mxu0 0.0
      %2776 = vmatmul.mubr.f32.gmra.mrb[0].mxu0 %v2550
      %v2777 = vpop.f32.mrb[0].mxu0
      %v2778 = vadd.f32 0.0, %v2777
      %v2779 = vpop.f32.mrb[0].mxu0
      %2780 = vmatprep.mubr.f32.mxu0 0.0
      %2781 = vmatmul.mubr.f32.gmra.mrb[0].mxu0 %v2551
      %v2782 = vpop.f32.mrb[0].mxu0
      %v2783 = vadd.f32 0.0, %v2782
      %v2784 = vpop.f32.mrb[0].mxu0
      %2785 = vmatprep.mubr.f32.mxu0 0.0
      %2786 = vmatmul.mubr.f32.gmra.mrb[0].mxu0 %v2552
      %v2787 = vpop.f32.mrb[0].mxu0
      %v2788 = vadd.f32 0.0, %v2787
      %v2789 = vpop.f32.mrb[0].mxu0
      %2790 = vmatprep.mubr.f32.mxu0 0.0
      %2791 = vmatmul.mubr.f32.gmra.mrb[0].mxu0 %v2553
      %v2792 = vpop.f32.mrb[0].mxu0
      %v2793 = vadd.f32 0.0, %v2792
      %v2794 = vpop.f32.mrb[0].mxu0
      %2795 = vmatprep.mubr.f32.mxu0 0.0
      %2796 = vmatmul.mubr.f32.gmra.mrb[0].mxu0 %v2554
      %v2797 = vpop.f32.mrb[0].mxu0
      %v2798 = vadd.f32 0.0, %v2797
      %v2799 = vpop.f32.mrb[0].mxu0
      %2800 = vmatprep.mubr.f32.mxu0 0.0
      %2801 = vmatmul.mubr.f32.gmra.mrb[0].mxu0 %v2555
      %v2802 = vpop.f32.mrb[0].mxu0
      %v2803 = vadd.f32 0.0, %v2802
      %v2804 = vpop.f32.mrb[0].mxu0
      %2805 = vmatprep.mubr.f32.mxu0 0.0
      %2806 = vmatmul.mubr.f32.gmra.mrb[0].mxu0 %v2556
      %v2807 = vpop.f32.mrb[0].mxu0
      %v2808 = vadd.f32 0.0, %v2807
      %v2809 = vpop.f32.mrb[0].mxu0
      %2810 = vmatprep.mubr.f32.mxu0 0.0
      %2811 = vmatmul.mubr.f32.gmra.mrb[0].mxu0 %v2557
      %v2812 = vpop.f32.mrb[0].mxu0
      %v2813 = vadd.f32 0.0, %v2812
      %v2814 = vpop.f32.mrb[0].mxu0
      %2815 = vmatprep.mubr.f32.mxu0 0.0
      %2816 = vmatmul.mubr.f32.gmra.mrb[0].mxu0 %v2558
      %v2817 = vpop.f32.mrb[0].mxu0
      %v2818 = vadd.f32 0.0, %v2817
      %v2819 = vpop.f32.mrb[0].mxu0
      %2820 = vmatprep.mubr.f32.mxu0 0.0
      %2821 = vmatmul.mubr.f32.gmra.mrb[0].mxu0 %v2559
      %v2822 = vpop.f32.mrb[0].mxu0
      %v2823 = vadd.f32 0.0, %v2822
      %v2824 = vpop.f32.mrb[0].mxu0
      %2825 = vmatprep.mubr.f32.mxu0 0.0
      %2826 = vmatmul.mubr.f32.gmra.mrb[0].mxu0 %v2560
      %v2827 = vpop.f32.mrb[0].mxu0
      %v2828 = vadd.f32 0.0, %v2827
      %v2829 = vpop.f32.mrb[0].mxu0
      %2830 = vmatprep.mubr.f32.mxu0 0.0
      %2831 = vmatmul.mubr.f32.gmra.mrb[0].mxu0 %v2561
      %v2832 = vpop.f32.mrb[0].mxu0
      %v2833 = vadd.f32 0.0, %v2832
      %v2834 = vpop.f32.mrb[0].mxu0
      %2835 = vmatprep.mubr.f32.mxu0 0.0
      %2836 = vmatmul.mubr.f32.gmra.mrb[0].mxu0 %v2562
      %v2837 = vpop.f32.mrb[0].mxu0
      %v2838 = vadd.f32 0.0, %v2837
      %v2839 = vpop.f32.mrb[0].mxu0
      %2840 = vmatprep.mubr.f32.mxu0 0.0
      %2841 = vmatmul.mubr.f32.gmra.mrb[0].mxu0 %v2563
      %v2842 = vpop.f32.mrb[0].mxu0
      %v2843 = vadd.f32 0.0, %v2842
      %v2844 = vpop.f32.mrb[0].mxu0
      %2845 = vmatprep.mubr.f32.mxu0 0.0
      %2846 = vmatmul.mubr.f32.gmra.mrb[0].mxu0 %v2564
      %v2847 = vpop.f32.mrb[0].mxu0
      %v2848 = vadd.f32 0.0, %v2847
      %v2849 = vpop.f32.mrb[0].mxu0
      %2850 = vmatprep.mubr.f32.mxu0 0.0
      %2851 = vmatmul.mubr.f32.gmra.mrb[0].mxu0 %v2565
      %v2852 = vpop.f32.mrb[0].mxu0
      %v2853 = vadd.f32 0.0, %v2852
      %v2854 = vpop.f32.mrb[0].mxu0
      %2855 = vmatprep.mubr.f32.mxu0 0.0
      %2856 = vmatmul.mubr.f32.gmra.mrb[0].mxu0 %v2566
      %v2857 = vpop.f32.mrb[0].mxu0
      %v2858 = vadd.f32 0.0, %v2857
      %v2859 = vpop.f32.mrb[0].mxu0
      %2860 = vmatprep.mubr.f32.mxu0 0.0
      %2861 = vmatmul.mubr.f32.gmra.mrb[0].mxu0 %v2567
      %v2862 = vpop.f32.mrb[0].mxu0
      %v2863 = vadd.f32 0.0, %v2862
      %v2864 = vpop.f32.mrb[0].mxu0
      %2865 = vmatprep.mubr.f32.mxu0 0.0
      %2866 = vmatmul.mubr.f32.gmra.mrb[0].mxu0 %v2568
      %v2867 = vpop.f32.mrb[0].mxu0
      %v2868 = vadd.f32 0.0, %v2867
      %v2869 = vpop.f32.mrb[0].mxu0
      %2870 = vmatprep.mubr.f32.mxu0 0.0
      %2871 = vmatmul.mubr.f32.gmra.mrb[0].mxu0 %v2569
      %v2872 = vpop.f32.mrb[0].mxu0
      %v2873 = vadd.f32 0.0, %v2872
      %v2874 = vpop.f32.mrb[0].mxu0
      %2875 = vmatprep.mubr.f32.mxu0 0.0
      %2876 = vmatmul.mubr.f32.gmra.mrb[0].mxu0 %v2570
      %v2877 = vpop.f32.mrb[0].mxu0
      %v2878 = vadd.f32 0.0, %v2877
      %v2879 = vpop.f32.mrb[0].mxu0
      %2880 = vmatprep.mubr.f32.mxu0 0.0
      %2881 = vmatmul.mubr.f32.gmra.mrb[0].mxu0 %v2571
      %v2882 = vpop.f32.mrb[0].mxu0
      %v2883 = vadd.f32 0.0, %v2882
      %v2884 = vpop.f32.mrb[0].mxu0
      %2885 = vmatprep.mubr.f32.mxu0 0.0
      %2886 = vmatmul.mubr.f32.gmra.mrb[0].mxu0 %v2572
      %v2887 = vpop.f32.mrb[0].mxu0
      %v2888 = vadd.f32 0.0, %v2887
      %v2889 = vpop.f32.mrb[0].mxu0
      %2890 = vmatprep.mubr.f32.mxu0 0.0
      %2891 = vmatmul.mubr.f32.gmra.mrb[0].mxu0 %v2573
      %v2892 = vpop.f32.mrb[0].mxu0
      %v2893 = vadd.f32 0.0, %v2892
      %v2894 = vpop.f32.mrb[0].mxu0
      %2895 = vdwg.mxu0
      %v2896 = vadd.f32 %v2478, %v2658
      %v2897 = vadd.f32 %v2479, %v2663
      %v2898 = vadd.f32 %v2480, %v2668
      %v2899 = vadd.f32 %v2481, %v2673
      %v2900 = vadd.f32 %v2482, %v2678
      %v2901 = vadd.f32 %v2483, %v2683
      %v2902 = vadd.f32 %v2484, %v2688
      %v2903 = vadd.f32 %v2485, %v2693
      %v2904 = vadd.f32 %v2486, %v2698
      %v2905 = vadd.f32 %v2487, %v2703
      %v2906 = vadd.f32 %v2488, %v2708
      %v2907 = vadd.f32 %v2489, %v2713
      %v2908 = vadd.f32 %v2490, %v2718
      %v2909 = vadd.f32 %v2491, %v2723
      %v2910 = vadd.f32 %v2492, %v2728
      %v2911 = vadd.f32 %v2493, %v2733
      %v2912 = vadd.f32 %v2494, %v2738
      %v2913 = vadd.f32 %v2495, %v2743
      %v2914 = vadd.f32 %v2496, %v2748
      %v2915 = vadd.f32 %v2497, %v2753
      %v2916 = vadd.f32 %v2498, %v2758
      %v2917 = vadd.f32 %v2499, %v2763
      %v2918 = vadd.f32 %v2500, %v2768
      %v2919 = vadd.f32 %v2501, %v2773
      %v2920 = vadd.f32 %v2502, %v2778
      %v2921 = vadd.f32 %v2503, %v2783
      %v2922 = vadd.f32 %v2504, %v2788
      %v2923 = vadd.f32 %v2505, %v2793
      %v2924 = vadd.f32 %v2506, %v2798
      %v2925 = vadd.f32 %v2507, %v2803
      %v2926 = vadd.f32 %v2508, %v2808
      %v2927 = vadd.f32 %v2509, %v2813
      %v2928 = vadd.f32 %v2510, %v2818
      %v2929 = vadd.f32 %v2511, %v2823
      %v2930 = vadd.f32 %v2512, %v2828
      %v2931 = vadd.f32 %v2513, %v2833
      %v2932 = vadd.f32 %v2514, %v2838
      %v2933 = vadd.f32 %v2515, %v2843
      %v2934 = vadd.f32 %v2516, %v2848
      %v2935 = vadd.f32 %v2517, %v2853
      %v2936 = vadd.f32 %v2518, %v2858
      %v2937 = vadd.f32 %v2519, %v2863
      %v2938 = vadd.f32 %v2520, %v2868
      %v2939 = vadd.f32 %v2521, %v2873
      %v2940 = vadd.f32 %v2522, %v2878
      %v2941 = vadd.f32 %v2523, %v2883
      %v2942 = vadd.f32 %v2524, %v2888
      %v2943 = vadd.f32 %v2525, %v2893
      %v2944 = vld [vmem:[#allocation2 + $0x30] sm:$0xff]
      %v2945 = vld [vmem:[#allocation2 + $0x38] sm:$0xff]
      %v2946 = vld [vmem:[#allocation2 + $0x40] sm:$0xff]
      %v2947 = vld [vmem:[#allocation2 + $0x48] sm:$0xff]
      %v2948 = vld [vmem:[#allocation2 + $0x50] sm:$0xff]
      %v2949 = vld [vmem:[#allocation2 + $0x58] sm:$0xff]
      %v2950 = vld [vmem:[#allocation2 + $0x60] sm:$0xff]
      %v2951 = vld [vmem:[#allocation2 + $0x68] sm:$0xff]
      %v2952 = vld [vmem:[#allocation2 + $0x70] sm:$0xff]
      %v2953 = vld [vmem:[#allocation2 + $0x78] sm:$0xff]
      %v2954 = vld [vmem:[#allocation2 + $0x80] sm:$0xff]
      %v2955 = vld [vmem:[#allocation2 + $0x88] sm:$0xff]
      %v2956 = vld [vmem:[#allocation2 + $0x90] sm:$0xff]
      %v2957 = vld [vmem:[#allocation2 + $0x98] sm:$0xff]
      %v2958 = vld [vmem:[#allocation2 + $0xa0] sm:$0xff]
      %v2959 = vld [vmem:[#allocation2 + $0xa8] sm:$0xff]
      %v2960 = vld [vmem:[#allocation2 + $0xb0] sm:$0xff]
      %v2961 = vld [vmem:[#allocation2 + $0xb8] sm:$0xff]
      %v2962 = vld [vmem:[#allocation2 + $0xc0] sm:$0xff]
      %v2963 = vld [vmem:[#allocation2 + $0xc8] sm:$0xff]
      %v2964 = vld [vmem:[#allocation2 + $0xd0] sm:$0xff]
      %v2965 = vld [vmem:[#allocation2 + $0xd8] sm:$0xff]
      %v2966 = vld [vmem:[#allocation2 + $0xe0] sm:$0xff]
      %v2967 = vld [vmem:[#allocation2 + $0xe8] sm:$0xff]
      %v2968 = vld [vmem:[#allocation2 + $0xf0] sm:$0xff]
      %v2969 = vld [vmem:[#allocation2 + $0xf8] sm:$0xff]
      %v2970 = vld [vmem:[#allocation2 + $0x100] sm:$0xff]
      %v2971 = vld [vmem:[#allocation2 + $0x108] sm:$0xff]
      %v2972 = vld [vmem:[#allocation2 + $0x110] sm:$0xff]
      %v2973 = vld [vmem:[#allocation2 + $0x118] sm:$0xff]
      %v2974 = vld [vmem:[#allocation2 + $0x120] sm:$0xff]
      %v2975 = vld [vmem:[#allocation2 + $0x128] sm:$0xff]
      %v2976 = vld [vmem:[#allocation2 + $0x130] sm:$0xff]
      %v2977 = vld [vmem:[#allocation2 + $0x138] sm:$0xff]
      %v2978 = vld [vmem:[#allocation2 + $0x140] sm:$0xff]
      %v2979 = vld [vmem:[#allocation2 + $0x148] sm:$0xff]
      %v2980 = vld [vmem:[#allocation2 + $0x150] sm:$0xff]
      %v2981 = vld [vmem:[#allocation2 + $0x158] sm:$0xff]
      %v2982 = vld [vmem:[#allocation2 + $0x160] sm:$0xff]
      %v2983 = vld [vmem:[#allocation2 + $0x168] sm:$0xff]
      %v2984 = vld [vmem:[#allocation2 + $0x170] sm:$0xff]
      %v2985 = vld [vmem:[#allocation2 + $0x178] sm:$0xff]
      %v2986 = vld [vmem:[#allocation2 + $0x180] sm:$0xff]
      %v2987 = vld [vmem:[#allocation2 + $0x188] sm:$0xff]
      %v2988 = vld [vmem:[#allocation2 + $0x190] sm:$0xff]
      %v2989 = vld [vmem:[#allocation2 + $0x198] sm:$0xff]
      %v2990 = vld [vmem:[#allocation2 + $0x1a0] sm:$0xff]
      %v2991 = vld [vmem:[#allocation2 + $0x1a8] sm:$0xff]
      %s2992 = scalar_lea.vmem %s2, 512
      %v2993 = vld [vmem:[%s2992] sm:$0xff]
      %v2994 = vld [vmem:[%s2992 + $0x8] sm:$0xff]
      %v2995 = vld [vmem:[%s2992 + $0x10] sm:$0xff]
      %v2996 = vld [vmem:[%s2992 + $0x18] sm:$0xff]
      %v2997 = vld [vmem:[%s2992 + $0x20] sm:$0xff]
      %v2998 = vld [vmem:[%s2992 + $0x28] sm:$0xff]
      %v2999 = vld [vmem:[%s2992 + $0x30] sm:$0xff]
      %v3000 = vld [vmem:[%s2992 + $0x38] sm:$0xff]
      %v3001 = vld [vmem:[%s2992 + $0x40] sm:$0xff]
      %v3002 = vld [vmem:[%s2992 + $0x48] sm:$0xff]
      %v3003 = vld [vmem:[%s2992 + $0x50] sm:$0xff]
      %v3004 = vld [vmem:[%s2992 + $0x58] sm:$0xff]
      %v3005 = vld [vmem:[%s2992 + $0x60] sm:$0xff]
      %v3006 = vld [vmem:[%s2992 + $0x68] sm:$0xff]
      %v3007 = vld [vmem:[%s2992 + $0x70] sm:$0xff]
      %v3008 = vld [vmem:[%s2992 + $0x78] sm:$0xff]
      %3009 = vmatprep.subr.mxu0 0.0
      %3010 = vmatpush1.msra.mxu0 %v2993
      %3011 = vmatprep.subr.mxu0 0.0
      %3012 = vmatpush1.msra.mxu0 %v2994
      %3013 = vmatprep.subr.mxu0 0.0
      %3014 = vmatpush1.msra.mxu0 %v2995
      %3015 = vmatprep.subr.mxu0 0.0
      %3016 = vmatpush1.msra.mxu0 %v2996
      %3017 = vmatprep.subr.mxu0 0.0
      %3018 = vmatpush1.msra.mxu0 %v2997
      %3019 = vmatprep.subr.mxu0 0.0
      %3020 = vmatpush1.msra.mxu0 %v2998
      %3021 = vmatprep.subr.mxu0 0.0
      %3022 = vmatpush1.msra.mxu0 %v2999
      %3023 = vmatprep.subr.mxu0 0.0
      %3024 = vmatpush1.msra.mxu0 %v3000
      %3025 = vmatprep.subr.mxu0 0.0
      %3026 = vmatpush1.msra.mxu0 %v3001
      %3027 = vmatprep.subr.mxu0 0.0
      %3028 = vmatpush1.msra.mxu0 %v3002
      %3029 = vmatprep.subr.mxu0 0.0
      %3030 = vmatpush1.msra.mxu0 %v3003
      %3031 = vmatprep.subr.mxu0 0.0
      %3032 = vmatpush1.msra.mxu0 %v3004
      %3033 = vmatprep.subr.mxu0 0.0
      %3034 = vmatpush1.msra.mxu0 %v3005
      %3035 = vmatprep.subr.mxu0 0.0
      %3036 = vmatpush1.msra.mxu0 %v3006
      %3037 = vmatprep.subr.mxu0 0.0
      %3038 = vmatpush1.msra.mxu0 %v3007
      %3039 = vmatprep.subr.mxu0 0.0
      %3040 = vmatpush1.msra.mxu0 %v3008
      %3041 = vmatprep.subr.mxu0 0.0
      %3042 = vmatpush1.msra.mxu0 0.0
      %3043 = vmatprep.subr.mxu0 0.0
      %3044 = vmatpush1.msra.mxu0 0.0
      %3045 = vmatprep.subr.mxu0 0.0
      %3046 = vmatpush1.msra.mxu0 0.0
      %3047 = vmatprep.subr.mxu0 0.0
      %3048 = vmatpush1.msra.mxu0 0.0
      %3049 = vmatprep.subr.mxu0 0.0
      %3050 = vmatpush1.msra.mxu0 0.0
      %3051 = vmatprep.subr.mxu0 0.0
      %3052 = vmatpush1.msra.mxu0 0.0
      %3053 = vmatprep.subr.mxu0 0.0
      %3054 = vmatpush1.msra.mxu0 0.0
      %3055 = vmatprep.subr.mxu0 0.0
      %3056 = vmatpush1.msra.mxu0 0.0
      %3057 = vmatprep.subr.mxu0 0.0
      %3058 = vmatpush1.msra.mxu0 0.0
      %3059 = vmatprep.subr.mxu0 0.0
      %3060 = vmatpush1.msra.mxu0 0.0
      %3061 = vmatprep.subr.mxu0 0.0
      %3062 = vmatpush1.msra.mxu0 0.0
      %3063 = vmatprep.subr.mxu0 0.0
      %3064 = vmatpush1.msra.mxu0 0.0
      %3065 = vmatprep.subr.mxu0 0.0
      %3066 = vmatpush1.msra.mxu0 0.0
      %3067 = vmatprep.subr.mxu0 0.0
      %3068 = vmatpush1.msra.mxu0 0.0
      %3069 = vmatprep.subr.mxu0 0.0
      %3070 = vmatpush1.msra.mxu0 0.0
      %3071 = vmatprep.subr.mxu0 0.0
      %3072 = vmatpush1.msra.mxu0 0.0
      %3073 = vmatprep.mubr.f32.mxu0 0.0
      %3074 = vmatmul.mubr.f32.gmra.mrb[0].mxu0 %v2944
      %v3075 = vpop.f32.mrb[0].mxu0
      %v3076 = vadd.f32 0.0, %v3075
      %v3077 = vpop.f32.mrb[0].mxu0
      %3078 = vmatprep.mubr.f32.mxu0 0.0
      %3079 = vmatmul.mubr.f32.gmra.mrb[0].mxu0 %v2945
      %v3080 = vpop.f32.mrb[0].mxu0
      %v3081 = vadd.f32 0.0, %v3080
      %v3082 = vpop.f32.mrb[0].mxu0
      %3083 = vmatprep.mubr.f32.mxu0 0.0
      %3084 = vmatmul.mubr.f32.gmra.mrb[0].mxu0 %v2946
      %v3085 = vpop.f32.mrb[0].mxu0
      %v3086 = vadd.f32 0.0, %v3085
      %v3087 = vpop.f32.mrb[0].mxu0
      %3088 = vmatprep.mubr.f32.mxu0 0.0
      %3089 = vmatmul.mubr.f32.gmra.mrb[0].mxu0 %v2947
      %v3090 = vpop.f32.mrb[0].mxu0
      %v3091 = vadd.f32 0.0, %v3090
      %v3092 = vpop.f32.mrb[0].mxu0
      %3093 = vmatprep.mubr.f32.mxu0 0.0
      %3094 = vmatmul.mubr.f32.gmra.mrb[0].mxu0 %v2948
      %v3095 = vpop.f32.mrb[0].mxu0
      %v3096 = vadd.f32 0.0, %v3095
      %v3097 = vpop.f32.mrb[0].mxu0
      %3098 = vmatprep.mubr.f32.mxu0 0.0
      %3099 = vmatmul.mubr.f32.gmra.mrb[0].mxu0 %v2949
      %v3100 = vpop.f32.mrb[0].mxu0
      %v3101 = vadd.f32 0.0, %v3100
      %v3102 = vpop.f32.mrb[0].mxu0
      %3103 = vmatprep.mubr.f32.mxu0 0.0
      %3104 = vmatmul.mubr.f32.gmra.mrb[0].mxu0 %v2950
      %v3105 = vpop.f32.mrb[0].mxu0
      %v3106 = vadd.f32 0.0, %v3105
      %v3107 = vpop.f32.mrb[0].mxu0
      %3108 = vmatprep.mubr.f32.mxu0 0.0
      %3109 = vmatmul.mubr.f32.gmra.mrb[0].mxu0 %v2951
      %v3110 = vpop.f32.mrb[0].mxu0
      %v3111 = vadd.f32 0.0, %v3110
      %v3112 = vpop.f32.mrb[0].mxu0
      %3113 = vmatprep.mubr.f32.mxu0 0.0
      %3114 = vmatmul.mubr.f32.gmra.mrb[0].mxu0 %v2952
      %v3115 = vpop.f32.mrb[0].mxu0
      %v3116 = vadd.f32 0.0, %v3115
      %v3117 = vpop.f32.mrb[0].mxu0
      %3118 = vmatprep.mubr.f32.mxu0 0.0
      %3119 = vmatmul.mubr.f32.gmra.mrb[0].mxu0 %v2953
      %v3120 = vpop.f32.mrb[0].mxu0
      %v3121 = vadd.f32 0.0, %v3120
      %v3122 = vpop.f32.mrb[0].mxu0
      %3123 = vmatprep.mubr.f32.mxu0 0.0
      %3124 = vmatmul.mubr.f32.gmra.mrb[0].mxu0 %v2954
      %v3125 = vpop.f32.mrb[0].mxu0
      %v3126 = vadd.f32 0.0, %v3125
      %v3127 = vpop.f32.mrb[0].mxu0
      %3128 = vmatprep.mubr.f32.mxu0 0.0
      %3129 = vmatmul.mubr.f32.gmra.mrb[0].mxu0 %v2955
      %v3130 = vpop.f32.mrb[0].mxu0
      %v3131 = vadd.f32 0.0, %v3130
      %v3132 = vpop.f32.mrb[0].mxu0
      %3133 = vmatprep.mubr.f32.mxu0 0.0
      %3134 = vmatmul.mubr.f32.gmra.mrb[0].mxu0 %v2956
      %v3135 = vpop.f32.mrb[0].mxu0
      %v3136 = vadd.f32 0.0, %v3135
      %v3137 = vpop.f32.mrb[0].mxu0
      %3138 = vmatprep.mubr.f32.mxu0 0.0
      %3139 = vmatmul.mubr.f32.gmra.mrb[0].mxu0 %v2957
      %v3140 = vpop.f32.mrb[0].mxu0
      %v3141 = vadd.f32 0.0, %v3140
      %v3142 = vpop.f32.mrb[0].mxu0
      %3143 = vmatprep.mubr.f32.mxu0 0.0
      %3144 = vmatmul.mubr.f32.gmra.mrb[0].mxu0 %v2958
      %v3145 = vpop.f32.mrb[0].mxu0
      %v3146 = vadd.f32 0.0, %v3145
      %v3147 = vpop.f32.mrb[0].mxu0
      %3148 = vmatprep.mubr.f32.mxu0 0.0
      %3149 = vmatmul.mubr.f32.gmra.mrb[0].mxu0 %v2959
      %v3150 = vpop.f32.mrb[0].mxu0
      %v3151 = vadd.f32 0.0, %v3150
      %v3152 = vpop.f32.mrb[0].mxu0
      %3153 = vmatprep.mubr.f32.mxu0 0.0
      %3154 = vmatmul.mubr.f32.gmra.mrb[0].mxu0 %v2960
      %v3155 = vpop.f32.mrb[0].mxu0
      %v3156 = vadd.f32 0.0, %v3155
      %v3157 = vpop.f32.mrb[0].mxu0
      %3158 = vmatprep.mubr.f32.mxu0 0.0
      %3159 = vmatmul.mubr.f32.gmra.mrb[0].mxu0 %v2961
      %v3160 = vpop.f32.mrb[0].mxu0
      %v3161 = vadd.f32 0.0, %v3160
      %v3162 = vpop.f32.mrb[0].mxu0
      %3163 = vmatprep.mubr.f32.mxu0 0.0
      %3164 = vmatmul.mubr.f32.gmra.mrb[0].mxu0 %v2962
      %v3165 = vpop.f32.mrb[0].mxu0
      %v3166 = vadd.f32 0.0, %v3165
      %v3167 = vpop.f32.mrb[0].mxu0
      %3168 = vmatprep.mubr.f32.mxu0 0.0
      %3169 = vmatmul.mubr.f32.gmra.mrb[0].mxu0 %v2963
      %v3170 = vpop.f32.mrb[0].mxu0
      %v3171 = vadd.f32 0.0, %v3170
      %v3172 = vpop.f32.mrb[0].mxu0
      %3173 = vmatprep.mubr.f32.mxu0 0.0
      %3174 = vmatmul.mubr.f32.gmra.mrb[0].mxu0 %v2964
      %v3175 = vpop.f32.mrb[0].mxu0
      %v3176 = vadd.f32 0.0, %v3175
      %v3177 = vpop.f32.mrb[0].mxu0
      %3178 = vmatprep.mubr.f32.mxu0 0.0
      %3179 = vmatmul.mubr.f32.gmra.mrb[0].mxu0 %v2965
      %v3180 = vpop.f32.mrb[0].mxu0
      %v3181 = vadd.f32 0.0, %v3180
      %v3182 = vpop.f32.mrb[0].mxu0
      %3183 = vmatprep.mubr.f32.mxu0 0.0
      %3184 = vmatmul.mubr.f32.gmra.mrb[0].mxu0 %v2966
      %v3185 = vpop.f32.mrb[0].mxu0
      %v3186 = vadd.f32 0.0, %v3185
      %v3187 = vpop.f32.mrb[0].mxu0
      %3188 = vmatprep.mubr.f32.mxu0 0.0
      %3189 = vmatmul.mubr.f32.gmra.mrb[0].mxu0 %v2967
      %v3190 = vpop.f32.mrb[0].mxu0
      %v3191 = vadd.f32 0.0, %v3190
      %v3192 = vpop.f32.mrb[0].mxu0
      %3193 = vmatprep.mubr.f32.mxu0 0.0
      %3194 = vmatmul.mubr.f32.gmra.mrb[0].mxu0 %v2968
      %v3195 = vpop.f32.mrb[0].mxu0
      %v3196 = vadd.f32 0.0, %v3195
      %v3197 = vpop.f32.mrb[0].mxu0
      %3198 = vmatprep.mubr.f32.mxu0 0.0
      %3199 = vmatmul.mubr.f32.gmra.mrb[0].mxu0 %v2969
      %v3200 = vpop.f32.mrb[0].mxu0
      %v3201 = vadd.f32 0.0, %v3200
      %v3202 = vpop.f32.mrb[0].mxu0
      %3203 = vmatprep.mubr.f32.mxu0 0.0
      %3204 = vmatmul.mubr.f32.gmra.mrb[0].mxu0 %v2970
      %v3205 = vpop.f32.mrb[0].mxu0
      %v3206 = vadd.f32 0.0, %v3205
      %v3207 = vpop.f32.mrb[0].mxu0
      %3208 = vmatprep.mubr.f32.mxu0 0.0
      %3209 = vmatmul.mubr.f32.gmra.mrb[0].mxu0 %v2971
      %v3210 = vpop.f32.mrb[0].mxu0
      %v3211 = vadd.f32 0.0, %v3210
      %v3212 = vpop.f32.mrb[0].mxu0
      %3213 = vmatprep.mubr.f32.mxu0 0.0
      %3214 = vmatmul.mubr.f32.gmra.mrb[0].mxu0 %v2972
      %v3215 = vpop.f32.mrb[0].mxu0
      %v3216 = vadd.f32 0.0, %v3215
      %v3217 = vpop.f32.mrb[0].mxu0
      %3218 = vmatprep.mubr.f32.mxu0 0.0
      %3219 = vmatmul.mubr.f32.gmra.mrb[0].mxu0 %v2973
      %v3220 = vpop.f32.mrb[0].mxu0
      %v3221 = vadd.f32 0.0, %v3220
      %v3222 = vpop.f32.mrb[0].mxu0
      %3223 = vmatprep.mubr.f32.mxu0 0.0
      %3224 = vmatmul.mubr.f32.gmra.mrb[0].mxu0 %v2974
      %v3225 = vpop.f32.mrb[0].mxu0
      %v3226 = vadd.f32 0.0, %v3225
      %v3227 = vpop.f32.mrb[0].mxu0
      %3228 = vmatprep.mubr.f32.mxu0 0.0
      %3229 = vmatmul.mubr.f32.gmra.mrb[0].mxu0 %v2975
      %v3230 = vpop.f32.mrb[0].mxu0
      %v3231 = vadd.f32 0.0, %v3230
      %v3232 = vpop.f32.mrb[0].mxu0
      %3233 = vmatprep.mubr.f32.mxu0 0.0
      %3234 = vmatmul.mubr.f32.gmra.mrb[0].mxu0 %v2976
      %v3235 = vpop.f32.mrb[0].mxu0
      %v3236 = vadd.f32 0.0, %v3235
      %v3237 = vpop.f32.mrb[0].mxu0
      %3238 = vmatprep.mubr.f32.mxu0 0.0
      %3239 = vmatmul.mubr.f32.gmra.mrb[0].mxu0 %v2977
      %v3240 = vpop.f32.mrb[0].mxu0
      %v3241 = vadd.f32 0.0, %v3240
      %v3242 = vpop.f32.mrb[0].mxu0
      %3243 = vmatprep.mubr.f32.mxu0 0.0
      %3244 = vmatmul.mubr.f32.gmra.mrb[0].mxu0 %v2978
      %v3245 = vpop.f32.mrb[0].mxu0
      %v3246 = vadd.f32 0.0, %v3245
      %v3247 = vpop.f32.mrb[0].mxu0
      %3248 = vmatprep.mubr.f32.mxu0 0.0
      %3249 = vmatmul.mubr.f32.gmra.mrb[0].mxu0 %v2979
      %v3250 = vpop.f32.mrb[0].mxu0
      %v3251 = vadd.f32 0.0, %v3250
      %v3252 = vpop.f32.mrb[0].mxu0
      %3253 = vmatprep.mubr.f32.mxu0 0.0
      %3254 = vmatmul.mubr.f32.gmra.mrb[0].mxu0 %v2980
      %v3255 = vpop.f32.mrb[0].mxu0
      %v3256 = vadd.f32 0.0, %v3255
      %v3257 = vpop.f32.mrb[0].mxu0
      %3258 = vmatprep.mubr.f32.mxu0 0.0
      %3259 = vmatmul.mubr.f32.gmra.mrb[0].mxu0 %v2981
      %v3260 = vpop.f32.mrb[0].mxu0
      %v3261 = vadd.f32 0.0, %v3260
      %v3262 = vpop.f32.mrb[0].mxu0
      %3263 = vmatprep.mubr.f32.mxu0 0.0
      %3264 = vmatmul.mubr.f32.gmra.mrb[0].mxu0 %v2982
      %v3265 = vpop.f32.mrb[0].mxu0
      %v3266 = vadd.f32 0.0, %v3265
      %v3267 = vpop.f32.mrb[0].mxu0
      %3268 = vmatprep.mubr.f32.mxu0 0.0
      %3269 = vmatmul.mubr.f32.gmra.mrb[0].mxu0 %v2983
      %v3270 = vpop.f32.mrb[0].mxu0
      %v3271 = vadd.f32 0.0, %v3270
      %v3272 = vpop.f32.mrb[0].mxu0
      %3273 = vmatprep.mubr.f32.mxu0 0.0
      %3274 = vmatmul.mubr.f32.gmra.mrb[0].mxu0 %v2984
      %v3275 = vpop.f32.mrb[0].mxu0
      %v3276 = vadd.f32 0.0, %v3275
      %v3277 = vpop.f32.mrb[0].mxu0
      %3278 = vmatprep.mubr.f32.mxu0 0.0
      %3279 = vmatmul.mubr.f32.gmra.mrb[0].mxu0 %v2985
      %v3280 = vpop.f32.mrb[0].mxu0
      %v3281 = vadd.f32 0.0, %v3280
      %v3282 = vpop.f32.mrb[0].mxu0
      %3283 = vmatprep.mubr.f32.mxu0 0.0
      %3284 = vmatmul.mubr.f32.gmra.mrb[0].mxu0 %v2986
      %v3285 = vpop.f32.mrb[0].mxu0
      %v3286 = vadd.f32 0.0, %v3285
      %v3287 = vpop.f32.mrb[0].mxu0
      %3288 = vmatprep.mubr.f32.mxu0 0.0
      %3289 = vmatmul.mubr.f32.gmra.mrb[0].mxu0 %v2987
      %v3290 = vpop.f32.mrb[0].mxu0
      %v3291 = vadd.f32 0.0, %v3290
      %v3292 = vpop.f32.mrb[0].mxu0
      %3293 = vmatprep.mubr.f32.mxu0 0.0
      %3294 = vmatmul.mubr.f32.gmra.mrb[0].mxu0 %v2988
      %v3295 = vpop.f32.mrb[0].mxu0
      %v3296 = vadd.f32 0.0, %v3295
      %v3297 = vpop.f32.mrb[0].mxu0
      %3298 = vmatprep.mubr.f32.mxu0 0.0
      %3299 = vmatmul.mubr.f32.gmra.mrb[0].mxu0 %v2989
      %v3300 = vpop.f32.mrb[0].mxu0
      %v3301 = vadd.f32 0.0, %v3300
      %v3302 = vpop.f32.mrb[0].mxu0
      %3303 = vmatprep.mubr.f32.mxu0 0.0
      %3304 = vmatmul.mubr.f32.gmra.mrb[0].mxu0 %v2990
      %v3305 = vpop.f32.mrb[0].mxu0
      %v3306 = vadd.f32 0.0, %v3305
      %v3307 = vpop.f32.mrb[0].mxu0
      %3308 = vmatprep.mubr.f32.mxu0 0.0
      %3309 = vmatmul.mubr.f32.gmra.mrb[0].mxu0 %v2991
      %v3310 = vpop.f32.mrb[0].mxu0
      %v3311 = vadd.f32 0.0, %v3310
      %v3312 = vpop.f32.mrb[0].mxu0
      %3313 = vdwg.mxu0
      %v3314 = vadd.f32 %v2896, %v3076
      %v3315 = vadd.f32 %v2897, %v3081
      %v3316 = vadd.f32 %v2898, %v3086
      %v3317 = vadd.f32 %v2899, %v3091
      %v3318 = vadd.f32 %v2900, %v3096
      %v3319 = vadd.f32 %v2901, %v3101
      %v3320 = vadd.f32 %v2902, %v3106
      %v3321 = vadd.f32 %v2903, %v3111
      %v3322 = vadd.f32 %v2904, %v3116
      %v3323 = vadd.f32 %v2905, %v3121
      %v3324 = vadd.f32 %v2906, %v3126
      %v3325 = vadd.f32 %v2907, %v3131
      %v3326 = vadd.f32 %v2908, %v3136
      %v3327 = vadd.f32 %v2909, %v3141
      %v3328 = vadd.f32 %v2910, %v3146
      %v3329 = vadd.f32 %v2911, %v3151
      %v3330 = vadd.f32 %v2912, %v3156
      %v3331 = vadd.f32 %v2913, %v3161
      %v3332 = vadd.f32 %v2914, %v3166
      %v3333 = vadd.f32 %v2915, %v3171
      %v3334 = vadd.f32 %v2916, %v3176
      %v3335 = vadd.f32 %v2917, %v3181
      %v3336 = vadd.f32 %v2918, %v3186
      %v3337 = vadd.f32 %v2919, %v3191
      %v3338 = vadd.f32 %v2920, %v3196
      %v3339 = vadd.f32 %v2921, %v3201
      %v3340 = vadd.f32 %v2922, %v3206
      %v3341 = vadd.f32 %v2923, %v3211
      %v3342 = vadd.f32 %v2924, %v3216
      %v3343 = vadd.f32 %v2925, %v3221
      %v3344 = vadd.f32 %v2926, %v3226
      %v3345 = vadd.f32 %v2927, %v3231
      %v3346 = vadd.f32 %v2928, %v3236
      %v3347 = vadd.f32 %v2929, %v3241
      %v3348 = vadd.f32 %v2930, %v3246
      %v3349 = vadd.f32 %v2931, %v3251
      %v3350 = vadd.f32 %v2932, %v3256
      %v3351 = vadd.f32 %v2933, %v3261
      %v3352 = vadd.f32 %v2934, %v3266
      %v3353 = vadd.f32 %v2935, %v3271
      %v3354 = vadd.f32 %v2936, %v3276
      %v3355 = vadd.f32 %v2937, %v3281
      %v3356 = vadd.f32 %v2938, %v3286
      %v3357 = vadd.f32 %v2939, %v3291
      %v3358 = vadd.f32 %v2940, %v3296
      %v3359 = vadd.f32 %v2941, %v3301
      %v3360 = vadd.f32 %v2942, %v3306
      %v3361 = vadd.f32 %v2943, %v3311
      %v3362 = vld [vmem:[#allocation2 + $0x31] sm:$0xff]
      %v3363 = vld [vmem:[#allocation2 + $0x39] sm:$0xff]
      %v3364 = vld [vmem:[#allocation2 + $0x41] sm:$0xff]
      %v3365 = vld [vmem:[#allocation2 + $0x49] sm:$0xff]
      %v3366 = vld [vmem:[#allocation2 + $0x51] sm:$0xff]
      %v3367 = vld [vmem:[#allocation2 + $0x59] sm:$0xff]
      %v3368 = vld [vmem:[#allocation2 + $0x61] sm:$0xff]
      %v3369 = vld [vmem:[#allocation2 + $0x69] sm:$0xff]
      %v3370 = vld [vmem:[#allocation2 + $0x71] sm:$0xff]
      %v3371 = vld [vmem:[#allocation2 + $0x79] sm:$0xff]
      %v3372 = vld [vmem:[#allocation2 + $0x81] sm:$0xff]
      %v3373 = vld [vmem:[#allocation2 + $0x89] sm:$0xff]
      %v3374 = vld [vmem:[#allocation2 + $0x91] sm:$0xff]
      %v3375 = vld [vmem:[#allocation2 + $0x99] sm:$0xff]
      %v3376 = vld [vmem:[#allocation2 + $0xa1] sm:$0xff]
      %v3377 = vld [vmem:[#allocation2 + $0xa9] sm:$0xff]
      %v3378 = vld [vmem:[#allocation2 + $0xb1] sm:$0xff]
      %v3379 = vld [vmem:[#allocation2 + $0xb9] sm:$0xff]
      %v3380 = vld [vmem:[#allocation2 + $0xc1] sm:$0xff]
      %v3381 = vld [vmem:[#allocation2 + $0xc9] sm:$0xff]
      %v3382 = vld [vmem:[#allocation2 + $0xd1] sm:$0xff]
      %v3383 = vld [vmem:[#allocation2 + $0xd9] sm:$0xff]
      %v3384 = vld [vmem:[#allocation2 + $0xe1] sm:$0xff]
      %v3385 = vld [vmem:[#allocation2 + $0xe9] sm:$0xff]
      %v3386 = vld [vmem:[#allocation2 + $0xf1] sm:$0xff]
      %v3387 = vld [vmem:[#allocation2 + $0xf9] sm:$0xff]
      %v3388 = vld [vmem:[#allocation2 + $0x101] sm:$0xff]
      %v3389 = vld [vmem:[#allocation2 + $0x109] sm:$0xff]
      %v3390 = vld [vmem:[#allocation2 + $0x111] sm:$0xff]
      %v3391 = vld [vmem:[#allocation2 + $0x119] sm:$0xff]
      %v3392 = vld [vmem:[#allocation2 + $0x121] sm:$0xff]
      %v3393 = vld [vmem:[#allocation2 + $0x129] sm:$0xff]
      %v3394 = vld [vmem:[#allocation2 + $0x131] sm:$0xff]
      %v3395 = vld [vmem:[#allocation2 + $0x139] sm:$0xff]
      %v3396 = vld [vmem:[#allocation2 + $0x141] sm:$0xff]
      %v3397 = vld [vmem:[#allocation2 + $0x149] sm:$0xff]
      %v3398 = vld [vmem:[#allocation2 + $0x151] sm:$0xff]
      %v3399 = vld [vmem:[#allocation2 + $0x159] sm:$0xff]
      %v3400 = vld [vmem:[#allocation2 + $0x161] sm:$0xff]
      %v3401 = vld [vmem:[#allocation2 + $0x169] sm:$0xff]
      %v3402 = vld [vmem:[#allocation2 + $0x171] sm:$0xff]
      %v3403 = vld [vmem:[#allocation2 + $0x179] sm:$0xff]
      %v3404 = vld [vmem:[#allocation2 + $0x181] sm:$0xff]
      %v3405 = vld [vmem:[#allocation2 + $0x189] sm:$0xff]
      %v3406 = vld [vmem:[#allocation2 + $0x191] sm:$0xff]
      %v3407 = vld [vmem:[#allocation2 + $0x199] sm:$0xff]
      %v3408 = vld [vmem:[#allocation2 + $0x1a1] sm:$0xff]
      %v3409 = vld [vmem:[#allocation2 + $0x1a9] sm:$0xff]
      %s3410 = scalar_lea.vmem %s2, 640
      %v3411 = vld [vmem:[%s3410] sm:$0xff]
      %v3412 = vld [vmem:[%s3410 + $0x8] sm:$0xff]
      %v3413 = vld [vmem:[%s3410 + $0x10] sm:$0xff]
      %v3414 = vld [vmem:[%s3410 + $0x18] sm:$0xff]
      %v3415 = vld [vmem:[%s3410 + $0x20] sm:$0xff]
      %v3416 = vld [vmem:[%s3410 + $0x28] sm:$0xff]
      %v3417 = vld [vmem:[%s3410 + $0x30] sm:$0xff]
      %v3418 = vld [vmem:[%s3410 + $0x38] sm:$0xff]
      %v3419 = vld [vmem:[%s3410 + $0x40] sm:$0xff]
      %v3420 = vld [vmem:[%s3410 + $0x48] sm:$0xff]
      %v3421 = vld [vmem:[%s3410 + $0x50] sm:$0xff]
      %v3422 = vld [vmem:[%s3410 + $0x58] sm:$0xff]
      %v3423 = vld [vmem:[%s3410 + $0x60] sm:$0xff]
      %v3424 = vld [vmem:[%s3410 + $0x68] sm:$0xff]
      %v3425 = vld [vmem:[%s3410 + $0x70] sm:$0xff]
      %v3426 = vld [vmem:[%s3410 + $0x78] sm:$0xff]
      %3427 = vmatprep.subr.mxu0 0.0
      %3428 = vmatpush1.msra.mxu0 %v3411
      %3429 = vmatprep.subr.mxu0 0.0
      %3430 = vmatpush1.msra.mxu0 %v3412
      %3431 = vmatprep.subr.mxu0 0.0
      %3432 = vmatpush1.msra.mxu0 %v3413
      %3433 = vmatprep.subr.mxu0 0.0
      %3434 = vmatpush1.msra.mxu0 %v3414
      %3435 = vmatprep.subr.mxu0 0.0
      %3436 = vmatpush1.msra.mxu0 %v3415
      %3437 = vmatprep.subr.mxu0 0.0
      %3438 = vmatpush1.msra.mxu0 %v3416
      %3439 = vmatprep.subr.mxu0 0.0
      %3440 = vmatpush1.msra.mxu0 %v3417
      %3441 = vmatprep.subr.mxu0 0.0
      %3442 = vmatpush1.msra.mxu0 %v3418
      %3443 = vmatprep.subr.mxu0 0.0
      %3444 = vmatpush1.msra.mxu0 %v3419
      %3445 = vmatprep.subr.mxu0 0.0
      %3446 = vmatpush1.msra.mxu0 %v3420
      %3447 = vmatprep.subr.mxu0 0.0
      %3448 = vmatpush1.msra.mxu0 %v3421
      %3449 = vmatprep.subr.mxu0 0.0
      %3450 = vmatpush1.msra.mxu0 %v3422
      %3451 = vmatprep.subr.mxu0 0.0
      %3452 = vmatpush1.msra.mxu0 %v3423
      %3453 = vmatprep.subr.mxu0 0.0
      %3454 = vmatpush1.msra.mxu0 %v3424
      %3455 = vmatprep.subr.mxu0 0.0
      %3456 = vmatpush1.msra.mxu0 %v3425
      %3457 = vmatprep.subr.mxu0 0.0
      %3458 = vmatpush1.msra.mxu0 %v3426
      %3459 = vmatprep.subr.mxu0 0.0
      %3460 = vmatpush1.msra.mxu0 0.0
      %3461 = vmatprep.subr.mxu0 0.0
      %3462 = vmatpush1.msra.mxu0 0.0
      %3463 = vmatprep.subr.mxu0 0.0
      %3464 = vmatpush1.msra.mxu0 0.0
      %3465 = vmatprep.subr.mxu0 0.0
      %3466 = vmatpush1.msra.mxu0 0.0
      %3467 = vmatprep.subr.mxu0 0.0
      %3468 = vmatpush1.msra.mxu0 0.0
      %3469 = vmatprep.subr.mxu0 0.0
      %3470 = vmatpush1.msra.mxu0 0.0
      %3471 = vmatprep.subr.mxu0 0.0
      %3472 = vmatpush1.msra.mxu0 0.0
      %3473 = vmatprep.subr.mxu0 0.0
      %3474 = vmatpush1.msra.mxu0 0.0
      %3475 = vmatprep.subr.mxu0 0.0
      %3476 = vmatpush1.msra.mxu0 0.0
      %3477 = vmatprep.subr.mxu0 0.0
      %3478 = vmatpush1.msra.mxu0 0.0
      %3479 = vmatprep.subr.mxu0 0.0
      %3480 = vmatpush1.msra.mxu0 0.0
      %3481 = vmatprep.subr.mxu0 0.0
      %3482 = vmatpush1.msra.mxu0 0.0
      %3483 = vmatprep.subr.mxu0 0.0
      %3484 = vmatpush1.msra.mxu0 0.0
      %3485 = vmatprep.subr.mxu0 0.0
      %3486 = vmatpush1.msra.mxu0 0.0
      %3487 = vmatprep.subr.mxu0 0.0
      %3488 = vmatpush1.msra.mxu0 0.0
      %3489 = vmatprep.subr.mxu0 0.0
      %3490 = vmatpush1.msra.mxu0 0.0
      %3491 = vmatprep.mubr.f32.mxu0 0.0
      %3492 = vmatmul.mubr.f32.gmra.mrb[0].mxu0 %v3362
      %v3493 = vpop.f32.mrb[0].mxu0
      %v3494 = vadd.f32 0.0, %v3493
      %v3495 = vpop.f32.mrb[0].mxu0
      %3496 = vmatprep.mubr.f32.mxu0 0.0
      %3497 = vmatmul.mubr.f32.gmra.mrb[0].mxu0 %v3363
      %v3498 = vpop.f32.mrb[0].mxu0
      %v3499 = vadd.f32 0.0, %v3498
      %v3500 = vpop.f32.mrb[0].mxu0
      %3501 = vmatprep.mubr.f32.mxu0 0.0
      %3502 = vmatmul.mubr.f32.gmra.mrb[0].mxu0 %v3364
      %v3503 = vpop.f32.mrb[0].mxu0
      %v3504 = vadd.f32 0.0, %v3503
      %v3505 = vpop.f32.mrb[0].mxu0
      %3506 = vmatprep.mubr.f32.mxu0 0.0
      %3507 = vmatmul.mubr.f32.gmra.mrb[0].mxu0 %v3365
      %v3508 = vpop.f32.mrb[0].mxu0
      %v3509 = vadd.f32 0.0, %v3508
      %v3510 = vpop.f32.mrb[0].mxu0
      %3511 = vmatprep.mubr.f32.mxu0 0.0
      %3512 = vmatmul.mubr.f32.gmra.mrb[0].mxu0 %v3366
      %v3513 = vpop.f32.mrb[0].mxu0
      %v3514 = vadd.f32 0.0, %v3513
      %v3515 = vpop.f32.mrb[0].mxu0
      %3516 = vmatprep.mubr.f32.mxu0 0.0
      %3517 = vmatmul.mubr.f32.gmra.mrb[0].mxu0 %v3367
      %v3518 = vpop.f32.mrb[0].mxu0
      %v3519 = vadd.f32 0.0, %v3518
      %v3520 = vpop.f32.mrb[0].mxu0
      %3521 = vmatprep.mubr.f32.mxu0 0.0
      %3522 = vmatmul.mubr.f32.gmra.mrb[0].mxu0 %v3368
      %v3523 = vpop.f32.mrb[0].mxu0
      %v3524 = vadd.f32 0.0, %v3523
      %v3525 = vpop.f32.mrb[0].mxu0
      %3526 = vmatprep.mubr.f32.mxu0 0.0
      %3527 = vmatmul.mubr.f32.gmra.mrb[0].mxu0 %v3369
      %v3528 = vpop.f32.mrb[0].mxu0
      %v3529 = vadd.f32 0.0, %v3528
      %v3530 = vpop.f32.mrb[0].mxu0
      %3531 = vmatprep.mubr.f32.mxu0 0.0
      %3532 = vmatmul.mubr.f32.gmra.mrb[0].mxu0 %v3370
      %v3533 = vpop.f32.mrb[0].mxu0
      %v3534 = vadd.f32 0.0, %v3533
      %v3535 = vpop.f32.mrb[0].mxu0
      %3536 = vmatprep.mubr.f32.mxu0 0.0
      %3537 = vmatmul.mubr.f32.gmra.mrb[0].mxu0 %v3371
      %v3538 = vpop.f32.mrb[0].mxu0
      %v3539 = vadd.f32 0.0, %v3538
      %v3540 = vpop.f32.mrb[0].mxu0
      %3541 = vmatprep.mubr.f32.mxu0 0.0
      %3542 = vmatmul.mubr.f32.gmra.mrb[0].mxu0 %v3372
      %v3543 = vpop.f32.mrb[0].mxu0
      %v3544 = vadd.f32 0.0, %v3543
      %v3545 = vpop.f32.mrb[0].mxu0
      %3546 = vmatprep.mubr.f32.mxu0 0.0
      %3547 = vmatmul.mubr.f32.gmra.mrb[0].mxu0 %v3373
      %v3548 = vpop.f32.mrb[0].mxu0
      %v3549 = vadd.f32 0.0, %v3548
      %v3550 = vpop.f32.mrb[0].mxu0
      %3551 = vmatprep.mubr.f32.mxu0 0.0
      %3552 = vmatmul.mubr.f32.gmra.mrb[0].mxu0 %v3374
      %v3553 = vpop.f32.mrb[0].mxu0
      %v3554 = vadd.f32 0.0, %v3553
      %v3555 = vpop.f32.mrb[0].mxu0
      %3556 = vmatprep.mubr.f32.mxu0 0.0
      %3557 = vmatmul.mubr.f32.gmra.mrb[0].mxu0 %v3375
      %v3558 = vpop.f32.mrb[0].mxu0
      %v3559 = vadd.f32 0.0, %v3558
      %v3560 = vpop.f32.mrb[0].mxu0
      %3561 = vmatprep.mubr.f32.mxu0 0.0
      %3562 = vmatmul.mubr.f32.gmra.mrb[0].mxu0 %v3376
      %v3563 = vpop.f32.mrb[0].mxu0
      %v3564 = vadd.f32 0.0, %v3563
      %v3565 = vpop.f32.mrb[0].mxu0
      %3566 = vmatprep.mubr.f32.mxu0 0.0
      %3567 = vmatmul.mubr.f32.gmra.mrb[0].mxu0 %v3377
      %v3568 = vpop.f32.mrb[0].mxu0
      %v3569 = vadd.f32 0.0, %v3568
      %v3570 = vpop.f32.mrb[0].mxu0
      %3571 = vmatprep.mubr.f32.mxu0 0.0
      %3572 = vmatmul.mubr.f32.gmra.mrb[0].mxu0 %v3378
      %v3573 = vpop.f32.mrb[0].mxu0
      %v3574 = vadd.f32 0.0, %v3573
      %v3575 = vpop.f32.mrb[0].mxu0
      %3576 = vmatprep.mubr.f32.mxu0 0.0
      %3577 = vmatmul.mubr.f32.gmra.mrb[0].mxu0 %v3379
      %v3578 = vpop.f32.mrb[0].mxu0
      %v3579 = vadd.f32 0.0, %v3578
      %v3580 = vpop.f32.mrb[0].mxu0
      %3581 = vmatprep.mubr.f32.mxu0 0.0
      %3582 = vmatmul.mubr.f32.gmra.mrb[0].mxu0 %v3380
      %v3583 = vpop.f32.mrb[0].mxu0
      %v3584 = vadd.f32 0.0, %v3583
      %v3585 = vpop.f32.mrb[0].mxu0
      %3586 = vmatprep.mubr.f32.mxu0 0.0
      %3587 = vmatmul.mubr.f32.gmra.mrb[0].mxu0 %v3381
      %v3588 = vpop.f32.mrb[0].mxu0
      %v3589 = vadd.f32 0.0, %v3588
      %v3590 = vpop.f32.mrb[0].mxu0
      %3591 = vmatprep.mubr.f32.mxu0 0.0
      %3592 = vmatmul.mubr.f32.gmra.mrb[0].mxu0 %v3382
      %v3593 = vpop.f32.mrb[0].mxu0
      %v3594 = vadd.f32 0.0, %v3593
      %v3595 = vpop.f32.mrb[0].mxu0
      %3596 = vmatprep.mubr.f32.mxu0 0.0
      %3597 = vmatmul.mubr.f32.gmra.mrb[0].mxu0 %v3383
      %v3598 = vpop.f32.mrb[0].mxu0
      %v3599 = vadd.f32 0.0, %v3598
      %v3600 = vpop.f32.mrb[0].mxu0
      %3601 = vmatprep.mubr.f32.mxu0 0.0
      %3602 = vmatmul.mubr.f32.gmra.mrb[0].mxu0 %v3384
      %v3603 = vpop.f32.mrb[0].mxu0
      %v3604 = vadd.f32 0.0, %v3603
      %v3605 = vpop.f32.mrb[0].mxu0
      %3606 = vmatprep.mubr.f32.mxu0 0.0
      %3607 = vmatmul.mubr.f32.gmra.mrb[0].mxu0 %v3385
      %v3608 = vpop.f32.mrb[0].mxu0
      %v3609 = vadd.f32 0.0, %v3608
      %v3610 = vpop.f32.mrb[0].mxu0
      %3611 = vmatprep.mubr.f32.mxu0 0.0
      %3612 = vmatmul.mubr.f32.gmra.mrb[0].mxu0 %v3386
      %v3613 = vpop.f32.mrb[0].mxu0
      %v3614 = vadd.f32 0.0, %v3613
      %v3615 = vpop.f32.mrb[0].mxu0
      %3616 = vmatprep.mubr.f32.mxu0 0.0
      %3617 = vmatmul.mubr.f32.gmra.mrb[0].mxu0 %v3387
      %v3618 = vpop.f32.mrb[0].mxu0
      %v3619 = vadd.f32 0.0, %v3618
      %v3620 = vpop.f32.mrb[0].mxu0
      %3621 = vmatprep.mubr.f32.mxu0 0.0
      %3622 = vmatmul.mubr.f32.gmra.mrb[0].mxu0 %v3388
      %v3623 = vpop.f32.mrb[0].mxu0
      %v3624 = vadd.f32 0.0, %v3623
      %v3625 = vpop.f32.mrb[0].mxu0
      %3626 = vmatprep.mubr.f32.mxu0 0.0
      %3627 = vmatmul.mubr.f32.gmra.mrb[0].mxu0 %v3389
      %v3628 = vpop.f32.mrb[0].mxu0
      %v3629 = vadd.f32 0.0, %v3628
      %v3630 = vpop.f32.mrb[0].mxu0
      %3631 = vmatprep.mubr.f32.mxu0 0.0
      %3632 = vmatmul.mubr.f32.gmra.mrb[0].mxu0 %v3390
      %v3633 = vpop.f32.mrb[0].mxu0
      %v3634 = vadd.f32 0.0, %v3633
      %v3635 = vpop.f32.mrb[0].mxu0
      %3636 = vmatprep.mubr.f32.mxu0 0.0
      %3637 = vmatmul.mubr.f32.gmra.mrb[0].mxu0 %v3391
      %v3638 = vpop.f32.mrb[0].mxu0
      %v3639 = vadd.f32 0.0, %v3638
      %v3640 = vpop.f32.mrb[0].mxu0
      %3641 = vmatprep.mubr.f32.mxu0 0.0
      %3642 = vmatmul.mubr.f32.gmra.mrb[0].mxu0 %v3392
      %v3643 = vpop.f32.mrb[0].mxu0
      %v3644 = vadd.f32 0.0, %v3643
      %v3645 = vpop.f32.mrb[0].mxu0
      %3646 = vmatprep.mubr.f32.mxu0 0.0
      %3647 = vmatmul.mubr.f32.gmra.mrb[0].mxu0 %v3393
      %v3648 = vpop.f32.mrb[0].mxu0
      %v3649 = vadd.f32 0.0, %v3648
      %v3650 = vpop.f32.mrb[0].mxu0
      %3651 = vmatprep.mubr.f32.mxu0 0.0
      %3652 = vmatmul.mubr.f32.gmra.mrb[0].mxu0 %v3394
      %v3653 = vpop.f32.mrb[0].mxu0
      %v3654 = vadd.f32 0.0, %v3653
      %v3655 = vpop.f32.mrb[0].mxu0
      %3656 = vmatprep.mubr.f32.mxu0 0.0
      %3657 = vmatmul.mubr.f32.gmra.mrb[0].mxu0 %v3395
      %v3658 = vpop.f32.mrb[0].mxu0
      %v3659 = vadd.f32 0.0, %v3658
      %v3660 = vpop.f32.mrb[0].mxu0
      %3661 = vmatprep.mubr.f32.mxu0 0.0
      %3662 = vmatmul.mubr.f32.gmra.mrb[0].mxu0 %v3396
      %v3663 = vpop.f32.mrb[0].mxu0
      %v3664 = vadd.f32 0.0, %v3663
      %v3665 = vpop.f32.mrb[0].mxu0
      %3666 = vmatprep.mubr.f32.mxu0 0.0
      %3667 = vmatmul.mubr.f32.gmra.mrb[0].mxu0 %v3397
      %v3668 = vpop.f32.mrb[0].mxu0
      %v3669 = vadd.f32 0.0, %v3668
      %v3670 = vpop.f32.mrb[0].mxu0
      %3671 = vmatprep.mubr.f32.mxu0 0.0
      %3672 = vmatmul.mubr.f32.gmra.mrb[0].mxu0 %v3398
      %v3673 = vpop.f32.mrb[0].mxu0
      %v3674 = vadd.f32 0.0, %v3673
      %v3675 = vpop.f32.mrb[0].mxu0
      %3676 = vmatprep.mubr.f32.mxu0 0.0
      %3677 = vmatmul.mubr.f32.gmra.mrb[0].mxu0 %v3399
      %v3678 = vpop.f32.mrb[0].mxu0
      %v3679 = vadd.f32 0.0, %v3678
      %v3680 = vpop.f32.mrb[0].mxu0
      %3681 = vmatprep.mubr.f32.mxu0 0.0
      %3682 = vmatmul.mubr.f32.gmra.mrb[0].mxu0 %v3400
      %v3683 = vpop.f32.mrb[0].mxu0
      %v3684 = vadd.f32 0.0, %v3683
      %v3685 = vpop.f32.mrb[0].mxu0
      %3686 = vmatprep.mubr.f32.mxu0 0.0
      %3687 = vmatmul.mubr.f32.gmra.mrb[0].mxu0 %v3401
      %v3688 = vpop.f32.mrb[0].mxu0
      %v3689 = vadd.f32 0.0, %v3688
      %v3690 = vpop.f32.mrb[0].mxu0
      %3691 = vmatprep.mubr.f32.mxu0 0.0
      %3692 = vmatmul.mubr.f32.gmra.mrb[0].mxu0 %v3402
      %v3693 = vpop.f32.mrb[0].mxu0
      %v3694 = vadd.f32 0.0, %v3693
      %v3695 = vpop.f32.mrb[0].mxu0
      %3696 = vmatprep.mubr.f32.mxu0 0.0
      %3697 = vmatmul.mubr.f32.gmra.mrb[0].mxu0 %v3403
      %v3698 = vpop.f32.mrb[0].mxu0
      %v3699 = vadd.f32 0.0, %v3698
      %v3700 = vpop.f32.mrb[0].mxu0
      %3701 = vmatprep.mubr.f32.mxu0 0.0
      %3702 = vmatmul.mubr.f32.gmra.mrb[0].mxu0 %v3404
      %v3703 = vpop.f32.mrb[0].mxu0
      %v3704 = vadd.f32 0.0, %v3703
      %v3705 = vpop.f32.mrb[0].mxu0
      %3706 = vmatprep.mubr.f32.mxu0 0.0
      %3707 = vmatmul.mubr.f32.gmra.mrb[0].mxu0 %v3405
      %v3708 = vpop.f32.mrb[0].mxu0
      %v3709 = vadd.f32 0.0, %v3708
      %v3710 = vpop.f32.mrb[0].mxu0
      %3711 = vmatprep.mubr.f32.mxu0 0.0
      %3712 = vmatmul.mubr.f32.gmra.mrb[0].mxu0 %v3406
      %v3713 = vpop.f32.mrb[0].mxu0
      %v3714 = vadd.f32 0.0, %v3713
      %v3715 = vpop.f32.mrb[0].mxu0
      %3716 = vmatprep.mubr.f32.mxu0 0.0
      %3717 = vmatmul.mubr.f32.gmra.mrb[0].mxu0 %v3407
      %v3718 = vpop.f32.mrb[0].mxu0
      %v3719 = vadd.f32 0.0, %v3718
      %v3720 = vpop.f32.mrb[0].mxu0
      %3721 = vmatprep.mubr.f32.mxu0 0.0
      %3722 = vmatmul.mubr.f32.gmra.mrb[0].mxu0 %v3408
      %v3723 = vpop.f32.mrb[0].mxu0
      %v3724 = vadd.f32 0.0, %v3723
      %v3725 = vpop.f32.mrb[0].mxu0
      %3726 = vmatprep.mubr.f32.mxu0 0.0
      %3727 = vmatmul.mubr.f32.gmra.mrb[0].mxu0 %v3409
      %v3728 = vpop.f32.mrb[0].mxu0
      %v3729 = vadd.f32 0.0, %v3728
      %v3730 = vpop.f32.mrb[0].mxu0
      %3731 = vdwg.mxu0
      %v3732 = vadd.f32 %v3314, %v3494
      %v3733 = vadd.f32 %v3315, %v3499
      %v3734 = vadd.f32 %v3316, %v3504
      %v3735 = vadd.f32 %v3317, %v3509
      %v3736 = vadd.f32 %v3318, %v3514
      %v3737 = vadd.f32 %v3319, %v3519
      %v3738 = vadd.f32 %v3320, %v3524
      %v3739 = vadd.f32 %v3321, %v3529
      %v3740 = vadd.f32 %v3322, %v3534
      %v3741 = vadd.f32 %v3323, %v3539
      %v3742 = vadd.f32 %v3324, %v3544
      %v3743 = vadd.f32 %v3325, %v3549
      %v3744 = vadd.f32 %v3326, %v3554
      %v3745 = vadd.f32 %v3327, %v3559
      %v3746 = vadd.f32 %v3328, %v3564
      %v3747 = vadd.f32 %v3329, %v3569
      %v3748 = vadd.f32 %v3330, %v3574
      %v3749 = vadd.f32 %v3331, %v3579
      %v3750 = vadd.f32 %v3332, %v3584
      %v3751 = vadd.f32 %v3333, %v3589
      %v3752 = vadd.f32 %v3334, %v3594
      %v3753 = vadd.f32 %v3335, %v3599
      %v3754 = vadd.f32 %v3336, %v3604
      %v3755 = vadd.f32 %v3337, %v3609
      %v3756 = vadd.f32 %v3338, %v3614
      %v3757 = vadd.f32 %v3339, %v3619
      %v3758 = vadd.f32 %v3340, %v3624
      %v3759 = vadd.f32 %v3341, %v3629
      %v3760 = vadd.f32 %v3342, %v3634
      %v3761 = vadd.f32 %v3343, %v3639
      %v3762 = vadd.f32 %v3344, %v3644
      %v3763 = vadd.f32 %v3345, %v3649
      %v3764 = vadd.f32 %v3346, %v3654
      %v3765 = vadd.f32 %v3347, %v3659
      %v3766 = vadd.f32 %v3348, %v3664
      %v3767 = vadd.f32 %v3349, %v3669
      %v3768 = vadd.f32 %v3350, %v3674
      %v3769 = vadd.f32 %v3351, %v3679
      %v3770 = vadd.f32 %v3352, %v3684
      %v3771 = vadd.f32 %v3353, %v3689
      %v3772 = vadd.f32 %v3354, %v3694
      %v3773 = vadd.f32 %v3355, %v3699
      %v3774 = vadd.f32 %v3356, %v3704
      %v3775 = vadd.f32 %v3357, %v3709
      %v3776 = vadd.f32 %v3358, %v3714
      %v3777 = vadd.f32 %v3359, %v3719
      %v3778 = vadd.f32 %v3360, %v3724
      %v3779 = vadd.f32 %v3361, %v3729
      %v3780 = vld [vmem:[#allocation2 + $0x47] sm:$0xff]
      %v3781 = vld [vmem:[#allocation2 + $0x4f] sm:$0xff]
      %v3782 = vld [vmem:[#allocation2 + $0x57] sm:$0xff]
      %v3783 = vld [vmem:[#allocation2 + $0x5f] sm:$0xff]
      %v3784 = vld [vmem:[#allocation2 + $0x67] sm:$0xff]
      %v3785 = vld [vmem:[#allocation2 + $0x6f] sm:$0xff]
      %v3786 = vld [vmem:[#allocation2 + $0x77] sm:$0xff]
      %v3787 = vld [vmem:[#allocation2 + $0x7f] sm:$0xff]
      %v3788 = vld [vmem:[#allocation2 + $0x87] sm:$0xff]
      %v3789 = vld [vmem:[#allocation2 + $0x8f] sm:$0xff]
      %v3790 = vld [vmem:[#allocation2 + $0x97] sm:$0xff]
      %v3791 = vld [vmem:[#allocation2 + $0x9f] sm:$0xff]
      %v3792 = vld [vmem:[#allocation2 + $0xa7] sm:$0xff]
      %v3793 = vld [vmem:[#allocation2 + $0xaf] sm:$0xff]
      %v3794 = vld [vmem:[#allocation2 + $0xb7] sm:$0xff]
      %v3795 = vld [vmem:[#allocation2 + $0xbf] sm:$0xff]
      %v3796 = vld [vmem:[#allocation2 + $0xc7] sm:$0xff]
      %v3797 = vld [vmem:[#allocation2 + $0xcf] sm:$0xff]
      %v3798 = vld [vmem:[#allocation2 + $0xd7] sm:$0xff]
      %v3799 = vld [vmem:[#allocation2 + $0xdf] sm:$0xff]
      %v3800 = vld [vmem:[#allocation2 + $0xe7] sm:$0xff]
      %v3801 = vld [vmem:[#allocation2 + $0xef] sm:$0xff]
      %v3802 = vld [vmem:[#allocation2 + $0xf7] sm:$0xff]
      %v3803 = vld [vmem:[#allocation2 + $0xff] sm:$0xff]
      %v3804 = vld [vmem:[#allocation2 + $0x107] sm:$0xff]
      %v3805 = vld [vmem:[#allocation2 + $0x10f] sm:$0xff]
      %v3806 = vld [vmem:[#allocation2 + $0x117] sm:$0xff]
      %v3807 = vld [vmem:[#allocation2 + $0x11f] sm:$0xff]
      %v3808 = vld [vmem:[#allocation2 + $0x127] sm:$0xff]
      %v3809 = vld [vmem:[#allocation2 + $0x12f] sm:$0xff]
      %v3810 = vld [vmem:[#allocation2 + $0x137] sm:$0xff]
      %v3811 = vld [vmem:[#allocation2 + $0x13f] sm:$0xff]
      %v3812 = vld [vmem:[#allocation2 + $0x147] sm:$0xff]
      %v3813 = vld [vmem:[#allocation2 + $0x14f] sm:$0xff]
      %v3814 = vld [vmem:[#allocation2 + $0x157] sm:$0xff]
      %v3815 = vld [vmem:[#allocation2 + $0x15f] sm:$0xff]
      %v3816 = vld [vmem:[#allocation2 + $0x167] sm:$0xff]
      %v3817 = vld [vmem:[#allocation2 + $0x16f] sm:$0xff]
      %v3818 = vld [vmem:[#allocation2 + $0x177] sm:$0xff]
      %v3819 = vld [vmem:[#allocation2 + $0x17f] sm:$0xff]
      %v3820 = vld [vmem:[#allocation2 + $0x187] sm:$0xff]
      %v3821 = vld [vmem:[#allocation2 + $0x18f] sm:$0xff]
      %v3822 = vld [vmem:[#allocation2 + $0x197] sm:$0xff]
      %v3823 = vld [vmem:[#allocation2 + $0x19f] sm:$0xff]
      %v3824 = vld [vmem:[#allocation2 + $0x1a7] sm:$0xff]
      %v3825 = vld [vmem:[#allocation2 + $0x1af] sm:$0xff]
      %v3826 = vld [vmem:[#allocation2 + $0x1b7] sm:$0xff]
      %v3827 = vld [vmem:[#allocation2 + $0x1bf] sm:$0xff]
      %s3828 = scalar_lea.vmem %s2, 768
      %v3829 = vld [vmem:[%s3828] sm:$0xff]
      %v3830 = vld [vmem:[%s3828 + $0x8] sm:$0xff]
      %v3831 = vld [vmem:[%s3828 + $0x10] sm:$0xff]
      %v3832 = vld [vmem:[%s3828 + $0x18] sm:$0xff]
      %v3833 = vld [vmem:[%s3828 + $0x20] sm:$0xff]
      %v3834 = vld [vmem:[%s3828 + $0x28] sm:$0xff]
      %v3835 = vld [vmem:[%s3828 + $0x30] sm:$0xff]
      %v3836 = vld [vmem:[%s3828 + $0x38] sm:$0xff]
      %v3837 = vld [vmem:[%s3828 + $0x40] sm:$0xff]
      %v3838 = vld [vmem:[%s3828 + $0x48] sm:$0xff]
      %v3839 = vld [vmem:[%s3828 + $0x50] sm:$0xff]
      %v3840 = vld [vmem:[%s3828 + $0x58] sm:$0xff]
      %v3841 = vld [vmem:[%s3828 + $0x60] sm:$0xff]
      %v3842 = vld [vmem:[%s3828 + $0x68] sm:$0xff]
      %v3843 = vld [vmem:[%s3828 + $0x70] sm:$0xff]
      %v3844 = vld [vmem:[%s3828 + $0x78] sm:$0xff]
      %3845 = vmatprep.subr.mxu0 0.0
      %3846 = vmatpush1.msra.mxu0 %v3829
      %3847 = vmatprep.subr.mxu0 0.0
      %3848 = vmatpush1.msra.mxu0 %v3830
      %3849 = vmatprep.subr.mxu0 0.0
      %3850 = vmatpush1.msra.mxu0 %v3831
      %3851 = vmatprep.subr.mxu0 0.0
      %3852 = vmatpush1.msra.mxu0 %v3832
      %3853 = vmatprep.subr.mxu0 0.0
      %3854 = vmatpush1.msra.mxu0 %v3833
      %3855 = vmatprep.subr.mxu0 0.0
      %3856 = vmatpush1.msra.mxu0 %v3834
      %3857 = vmatprep.subr.mxu0 0.0
      %3858 = vmatpush1.msra.mxu0 %v3835
      %3859 = vmatprep.subr.mxu0 0.0
      %3860 = vmatpush1.msra.mxu0 %v3836
      %3861 = vmatprep.subr.mxu0 0.0
      %3862 = vmatpush1.msra.mxu0 %v3837
      %3863 = vmatprep.subr.mxu0 0.0
      %3864 = vmatpush1.msra.mxu0 %v3838
      %3865 = vmatprep.subr.mxu0 0.0
      %3866 = vmatpush1.msra.mxu0 %v3839
      %3867 = vmatprep.subr.mxu0 0.0
      %3868 = vmatpush1.msra.mxu0 %v3840
      %3869 = vmatprep.subr.mxu0 0.0
      %3870 = vmatpush1.msra.mxu0 %v3841
      %3871 = vmatprep.subr.mxu0 0.0
      %3872 = vmatpush1.msra.mxu0 %v3842
      %3873 = vmatprep.subr.mxu0 0.0
      %3874 = vmatpush1.msra.mxu0 %v3843
      %3875 = vmatprep.subr.mxu0 0.0
      %3876 = vmatpush1.msra.mxu0 %v3844
      %3877 = vmatprep.subr.mxu0 0.0
      %3878 = vmatpush1.msra.mxu0 0.0
      %3879 = vmatprep.subr.mxu0 0.0
      %3880 = vmatpush1.msra.mxu0 0.0
      %3881 = vmatprep.subr.mxu0 0.0
      %3882 = vmatpush1.msra.mxu0 0.0
      %3883 = vmatprep.subr.mxu0 0.0
      %3884 = vmatpush1.msra.mxu0 0.0
      %3885 = vmatprep.subr.mxu0 0.0
      %3886 = vmatpush1.msra.mxu0 0.0
      %3887 = vmatprep.subr.mxu0 0.0
      %3888 = vmatpush1.msra.mxu0 0.0
      %3889 = vmatprep.subr.mxu0 0.0
      %3890 = vmatpush1.msra.mxu0 0.0
      %3891 = vmatprep.subr.mxu0 0.0
      %3892 = vmatpush1.msra.mxu0 0.0
      %3893 = vmatprep.subr.mxu0 0.0
      %3894 = vmatpush1.msra.mxu0 0.0
      %3895 = vmatprep.subr.mxu0 0.0
      %3896 = vmatpush1.msra.mxu0 0.0
      %3897 = vmatprep.subr.mxu0 0.0
      %3898 = vmatpush1.msra.mxu0 0.0
      %3899 = vmatprep.subr.mxu0 0.0
      %3900 = vmatpush1.msra.mxu0 0.0
      %3901 = vmatprep.subr.mxu0 0.0
      %3902 = vmatpush1.msra.mxu0 0.0
      %3903 = vmatprep.subr.mxu0 0.0
      %3904 = vmatpush1.msra.mxu0 0.0
      %3905 = vmatprep.subr.mxu0 0.0
      %3906 = vmatpush1.msra.mxu0 0.0
      %3907 = vmatprep.subr.mxu0 0.0
      %3908 = vmatpush1.msra.mxu0 0.0
      %3909 = vmatprep.mubr.f32.mxu0 0.0
      %3910 = vmatmul.mubr.f32.gmra.mrb[0].mxu0 %v3780
      %v3911 = vpop.f32.mrb[0].mxu0
      %v3912 = vadd.f32 0.0, %v3911
      %v3913 = vpop.f32.mrb[0].mxu0
      %3914 = vmatprep.mubr.f32.mxu0 0.0
      %3915 = vmatmul.mubr.f32.gmra.mrb[0].mxu0 %v3781
      %v3916 = vpop.f32.mrb[0].mxu0
      %v3917 = vadd.f32 0.0, %v3916
      %v3918 = vpop.f32.mrb[0].mxu0
      %3919 = vmatprep.mubr.f32.mxu0 0.0
      %3920 = vmatmul.mubr.f32.gmra.mrb[0].mxu0 %v3782
      %v3921 = vpop.f32.mrb[0].mxu0
      %v3922 = vadd.f32 0.0, %v3921
      %v3923 = vpop.f32.mrb[0].mxu0
      %3924 = vmatprep.mubr.f32.mxu0 0.0
      %3925 = vmatmul.mubr.f32.gmra.mrb[0].mxu0 %v3783
      %v3926 = vpop.f32.mrb[0].mxu0
      %v3927 = vadd.f32 0.0, %v3926
      %v3928 = vpop.f32.mrb[0].mxu0
      %3929 = vmatprep.mubr.f32.mxu0 0.0
      %3930 = vmatmul.mubr.f32.gmra.mrb[0].mxu0 %v3784
      %v3931 = vpop.f32.mrb[0].mxu0
      %v3932 = vadd.f32 0.0, %v3931
      %v3933 = vpop.f32.mrb[0].mxu0
      %3934 = vmatprep.mubr.f32.mxu0 0.0
      %3935 = vmatmul.mubr.f32.gmra.mrb[0].mxu0 %v3785
      %v3936 = vpop.f32.mrb[0].mxu0
      %v3937 = vadd.f32 0.0, %v3936
      %v3938 = vpop.f32.mrb[0].mxu0
      %3939 = vmatprep.mubr.f32.mxu0 0.0
      %3940 = vmatmul.mubr.f32.gmra.mrb[0].mxu0 %v3786
      %v3941 = vpop.f32.mrb[0].mxu0
      %v3942 = vadd.f32 0.0, %v3941
      %v3943 = vpop.f32.mrb[0].mxu0
      %3944 = vmatprep.mubr.f32.mxu0 0.0
      %3945 = vmatmul.mubr.f32.gmra.mrb[0].mxu0 %v3787
      %v3946 = vpop.f32.mrb[0].mxu0
      %v3947 = vadd.f32 0.0, %v3946
      %v3948 = vpop.f32.mrb[0].mxu0
      %3949 = vmatprep.mubr.f32.mxu0 0.0
      %3950 = vmatmul.mubr.f32.gmra.mrb[0].mxu0 %v3788
      %v3951 = vpop.f32.mrb[0].mxu0
      %v3952 = vadd.f32 0.0, %v3951
      %v3953 = vpop.f32.mrb[0].mxu0
      %3954 = vmatprep.mubr.f32.mxu0 0.0
      %3955 = vmatmul.mubr.f32.gmra.mrb[0].mxu0 %v3789
      %v3956 = vpop.f32.mrb[0].mxu0
      %v3957 = vadd.f32 0.0, %v3956
      %v3958 = vpop.f32.mrb[0].mxu0
      %3959 = vmatprep.mubr.f32.mxu0 0.0
      %3960 = vmatmul.mubr.f32.gmra.mrb[0].mxu0 %v3790
      %v3961 = vpop.f32.mrb[0].mxu0
      %v3962 = vadd.f32 0.0, %v3961
      %v3963 = vpop.f32.mrb[0].mxu0
      %3964 = vmatprep.mubr.f32.mxu0 0.0
      %3965 = vmatmul.mubr.f32.gmra.mrb[0].mxu0 %v3791
      %v3966 = vpop.f32.mrb[0].mxu0
      %v3967 = vadd.f32 0.0, %v3966
      %v3968 = vpop.f32.mrb[0].mxu0
      %3969 = vmatprep.mubr.f32.mxu0 0.0
      %3970 = vmatmul.mubr.f32.gmra.mrb[0].mxu0 %v3792
      %v3971 = vpop.f32.mrb[0].mxu0
      %v3972 = vadd.f32 0.0, %v3971
      %v3973 = vpop.f32.mrb[0].mxu0
      %3974 = vmatprep.mubr.f32.mxu0 0.0
      %3975 = vmatmul.mubr.f32.gmra.mrb[0].mxu0 %v3793
      %v3976 = vpop.f32.mrb[0].mxu0
      %v3977 = vadd.f32 0.0, %v3976
      %v3978 = vpop.f32.mrb[0].mxu0
      %3979 = vmatprep.mubr.f32.mxu0 0.0
      %3980 = vmatmul.mubr.f32.gmra.mrb[0].mxu0 %v3794
      %v3981 = vpop.f32.mrb[0].mxu0
      %v3982 = vadd.f32 0.0, %v3981
      %v3983 = vpop.f32.mrb[0].mxu0
      %3984 = vmatprep.mubr.f32.mxu0 0.0
      %3985 = vmatmul.mubr.f32.gmra.mrb[0].mxu0 %v3795
      %v3986 = vpop.f32.mrb[0].mxu0
      %v3987 = vadd.f32 0.0, %v3986
      %v3988 = vpop.f32.mrb[0].mxu0
      %3989 = vmatprep.mubr.f32.mxu0 0.0
      %3990 = vmatmul.mubr.f32.gmra.mrb[0].mxu0 %v3796
      %v3991 = vpop.f32.mrb[0].mxu0
      %v3992 = vadd.f32 0.0, %v3991
      %v3993 = vpop.f32.mrb[0].mxu0
      %3994 = vmatprep.mubr.f32.mxu0 0.0
      %3995 = vmatmul.mubr.f32.gmra.mrb[0].mxu0 %v3797
      %v3996 = vpop.f32.mrb[0].mxu0
      %v3997 = vadd.f32 0.0, %v3996
      %v3998 = vpop.f32.mrb[0].mxu0
      %3999 = vmatprep.mubr.f32.mxu0 0.0
      %4000 = vmatmul.mubr.f32.gmra.mrb[0].mxu0 %v3798
      %v4001 = vpop.f32.mrb[0].mxu0
      %v4002 = vadd.f32 0.0, %v4001
      %v4003 = vpop.f32.mrb[0].mxu0
      %4004 = vmatprep.mubr.f32.mxu0 0.0
      %4005 = vmatmul.mubr.f32.gmra.mrb[0].mxu0 %v3799
      %v4006 = vpop.f32.mrb[0].mxu0
      %v4007 = vadd.f32 0.0, %v4006
      %v4008 = vpop.f32.mrb[0].mxu0
      %4009 = vmatprep.mubr.f32.mxu0 0.0
      %4010 = vmatmul.mubr.f32.gmra.mrb[0].mxu0 %v3800
      %v4011 = vpop.f32.mrb[0].mxu0
      %v4012 = vadd.f32 0.0, %v4011
      %v4013 = vpop.f32.mrb[0].mxu0
      %4014 = vmatprep.mubr.f32.mxu0 0.0
      %4015 = vmatmul.mubr.f32.gmra.mrb[0].mxu0 %v3801
      %v4016 = vpop.f32.mrb[0].mxu0
      %v4017 = vadd.f32 0.0, %v4016
      %v4018 = vpop.f32.mrb[0].mxu0
      %4019 = vmatprep.mubr.f32.mxu0 0.0
      %4020 = vmatmul.mubr.f32.gmra.mrb[0].mxu0 %v3802
      %v4021 = vpop.f32.mrb[0].mxu0
      %v4022 = vadd.f32 0.0, %v4021
      %v4023 = vpop.f32.mrb[0].mxu0
      %4024 = vmatprep.mubr.f32.mxu0 0.0
      %4025 = vmatmul.mubr.f32.gmra.mrb[0].mxu0 %v3803
      %v4026 = vpop.f32.mrb[0].mxu0
      %v4027 = vadd.f32 0.0, %v4026
      %v4028 = vpop.f32.mrb[0].mxu0
      %4029 = vmatprep.mubr.f32.mxu0 0.0
      %4030 = vmatmul.mubr.f32.gmra.mrb[0].mxu0 %v3804
      %v4031 = vpop.f32.mrb[0].mxu0
      %v4032 = vadd.f32 0.0, %v4031
      %v4033 = vpop.f32.mrb[0].mxu0
      %4034 = vmatprep.mubr.f32.mxu0 0.0
      %4035 = vmatmul.mubr.f32.gmra.mrb[0].mxu0 %v3805
      %v4036 = vpop.f32.mrb[0].mxu0
      %v4037 = vadd.f32 0.0, %v4036
      %v4038 = vpop.f32.mrb[0].mxu0
      %4039 = vmatprep.mubr.f32.mxu0 0.0
      %4040 = vmatmul.mubr.f32.gmra.mrb[0].mxu0 %v3806
      %v4041 = vpop.f32.mrb[0].mxu0
      %v4042 = vadd.f32 0.0, %v4041
      %v4043 = vpop.f32.mrb[0].mxu0
      %4044 = vmatprep.mubr.f32.mxu0 0.0
      %4045 = vmatmul.mubr.f32.gmra.mrb[0].mxu0 %v3807
      %v4046 = vpop.f32.mrb[0].mxu0
      %v4047 = vadd.f32 0.0, %v4046
      %v4048 = vpop.f32.mrb[0].mxu0
      %4049 = vmatprep.mubr.f32.mxu0 0.0
      %4050 = vmatmul.mubr.f32.gmra.mrb[0].mxu0 %v3808
      %v4051 = vpop.f32.mrb[0].mxu0
      %v4052 = vadd.f32 0.0, %v4051
      %v4053 = vpop.f32.mrb[0].mxu0
      %4054 = vmatprep.mubr.f32.mxu0 0.0
      %4055 = vmatmul.mubr.f32.gmra.mrb[0].mxu0 %v3809
      %v4056 = vpop.f32.mrb[0].mxu0
      %v4057 = vadd.f32 0.0, %v4056
      %v4058 = vpop.f32.mrb[0].mxu0
      %4059 = vmatprep.mubr.f32.mxu0 0.0
      %4060 = vmatmul.mubr.f32.gmra.mrb[0].mxu0 %v3810
      %v4061 = vpop.f32.mrb[0].mxu0
      %v4062 = vadd.f32 0.0, %v4061
      %v4063 = vpop.f32.mrb[0].mxu0
      %4064 = vmatprep.mubr.f32.mxu0 0.0
      %4065 = vmatmul.mubr.f32.gmra.mrb[0].mxu0 %v3811
      %v4066 = vpop.f32.mrb[0].mxu0
      %v4067 = vadd.f32 0.0, %v4066
      %v4068 = vpop.f32.mrb[0].mxu0
      %4069 = vmatprep.mubr.f32.mxu0 0.0
      %4070 = vmatmul.mubr.f32.gmra.mrb[0].mxu0 %v3812
      %v4071 = vpop.f32.mrb[0].mxu0
      %v4072 = vadd.f32 0.0, %v4071
      %v4073 = vpop.f32.mrb[0].mxu0
      %4074 = vmatprep.mubr.f32.mxu0 0.0
      %4075 = vmatmul.mubr.f32.gmra.mrb[0].mxu0 %v3813
      %v4076 = vpop.f32.mrb[0].mxu0
      %v4077 = vadd.f32 0.0, %v4076
      %v4078 = vpop.f32.mrb[0].mxu0
      %4079 = vmatprep.mubr.f32.mxu0 0.0
      %4080 = vmatmul.mubr.f32.gmra.mrb[0].mxu0 %v3814
      %v4081 = vpop.f32.mrb[0].mxu0
      %v4082 = vadd.f32 0.0, %v4081
      %v4083 = vpop.f32.mrb[0].mxu0
      %4084 = vmatprep.mubr.f32.mxu0 0.0
      %4085 = vmatmul.mubr.f32.gmra.mrb[0].mxu0 %v3815
      %v4086 = vpop.f32.mrb[0].mxu0
      %v4087 = vadd.f32 0.0, %v4086
      %v4088 = vpop.f32.mrb[0].mxu0
      %4089 = vmatprep.mubr.f32.mxu0 0.0
      %4090 = vmatmul.mubr.f32.gmra.mrb[0].mxu0 %v3816
      %v4091 = vpop.f32.mrb[0].mxu0
      %v4092 = vadd.f32 0.0, %v4091
      %v4093 = vpop.f32.mrb[0].mxu0
      %4094 = vmatprep.mubr.f32.mxu0 0.0
      %4095 = vmatmul.mubr.f32.gmra.mrb[0].mxu0 %v3817
      %v4096 = vpop.f32.mrb[0].mxu0
      %v4097 = vadd.f32 0.0, %v4096
      %v4098 = vpop.f32.mrb[0].mxu0
      %4099 = vmatprep.mubr.f32.mxu0 0.0
      %4100 = vmatmul.mubr.f32.gmra.mrb[0].mxu0 %v3818
      %v4101 = vpop.f32.mrb[0].mxu0
      %v4102 = vadd.f32 0.0, %v4101
      %v4103 = vpop.f32.mrb[0].mxu0
      %4104 = vmatprep.mubr.f32.mxu0 0.0
      %4105 = vmatmul.mubr.f32.gmra.mrb[0].mxu0 %v3819
      %v4106 = vpop.f32.mrb[0].mxu0
      %v4107 = vadd.f32 0.0, %v4106
      %v4108 = vpop.f32.mrb[0].mxu0
      %4109 = vmatprep.mubr.f32.mxu0 0.0
      %4110 = vmatmul.mubr.f32.gmra.mrb[0].mxu0 %v3820
      %v4111 = vpop.f32.mrb[0].mxu0
      %v4112 = vadd.f32 0.0, %v4111
      %v4113 = vpop.f32.mrb[0].mxu0
      %4114 = vmatprep.mubr.f32.mxu0 0.0
      %4115 = vmatmul.mubr.f32.gmra.mrb[0].mxu0 %v3821
      %v4116 = vpop.f32.mrb[0].mxu0
      %v4117 = vadd.f32 0.0, %v4116
      %v4118 = vpop.f32.mrb[0].mxu0
      %4119 = vmatprep.mubr.f32.mxu0 0.0
      %4120 = vmatmul.mubr.f32.gmra.mrb[0].mxu0 %v3822
      %v4121 = vpop.f32.mrb[0].mxu0
      %v4122 = vadd.f32 0.0, %v4121
      %v4123 = vpop.f32.mrb[0].mxu0
      %4124 = vmatprep.mubr.f32.mxu0 0.0
      %4125 = vmatmul.mubr.f32.gmra.mrb[0].mxu0 %v3823
      %v4126 = vpop.f32.mrb[0].mxu0
      %v4127 = vadd.f32 0.0, %v4126
      %v4128 = vpop.f32.mrb[0].mxu0
      %4129 = vmatprep.mubr.f32.mxu0 0.0
      %4130 = vmatmul.mubr.f32.gmra.mrb[0].mxu0 %v3824
      %v4131 = vpop.f32.mrb[0].mxu0
      %v4132 = vadd.f32 0.0, %v4131
      %v4133 = vpop.f32.mrb[0].mxu0
      %4134 = vmatprep.mubr.f32.mxu0 0.0
      %4135 = vmatmul.mubr.f32.gmra.mrb[0].mxu0 %v3825
      %v4136 = vpop.f32.mrb[0].mxu0
      %v4137 = vadd.f32 0.0, %v4136
      %v4138 = vpop.f32.mrb[0].mxu0
      %4139 = vmatprep.mubr.f32.mxu0 0.0
      %4140 = vmatmul.mubr.f32.gmra.mrb[0].mxu0 %v3826
      %v4141 = vpop.f32.mrb[0].mxu0
      %v4142 = vadd.f32 0.0, %v4141
      %v4143 = vpop.f32.mrb[0].mxu0
      %4144 = vmatprep.mubr.f32.mxu0 0.0
      %4145 = vmatmul.mubr.f32.gmra.mrb[0].mxu0 %v3827
      %v4146 = vpop.f32.mrb[0].mxu0
      %v4147 = vadd.f32 0.0, %v4146
      %v4148 = vpop.f32.mrb[0].mxu0
      %4149 = vdwg.mxu0
      %v4150 = vadd.f32 %v3732, %v3912
      %v4151 = vadd.f32 %v3733, %v3917
      %v4152 = vadd.f32 %v3734, %v3922
      %v4153 = vadd.f32 %v3735, %v3927
      %v4154 = vadd.f32 %v3736, %v3932
      %v4155 = vadd.f32 %v3737, %v3937
      %v4156 = vadd.f32 %v3738, %v3942
      %v4157 = vadd.f32 %v3739, %v3947
      %v4158 = vadd.f32 %v3740, %v3952
      %v4159 = vadd.f32 %v3741, %v3957
      %v4160 = vadd.f32 %v3742, %v3962
      %v4161 = vadd.f32 %v3743, %v3967
      %v4162 = vadd.f32 %v3744, %v3972
      %v4163 = vadd.f32 %v3745, %v3977
      %v4164 = vadd.f32 %v3746, %v3982
      %v4165 = vadd.f32 %v3747, %v3987
      %v4166 = vadd.f32 %v3748, %v3992
      %v4167 = vadd.f32 %v3749, %v3997
      %v4168 = vadd.f32 %v3750, %v4002
      %v4169 = vadd.f32 %v3751, %v4007
      %v4170 = vadd.f32 %v3752, %v4012
      %v4171 = vadd.f32 %v3753, %v4017
      %v4172 = vadd.f32 %v3754, %v4022
      %v4173 = vadd.f32 %v3755, %v4027
      %v4174 = vadd.f32 %v3756, %v4032
      %v4175 = vadd.f32 %v3757, %v4037
      %v4176 = vadd.f32 %v3758, %v4042
      %v4177 = vadd.f32 %v3759, %v4047
      %v4178 = vadd.f32 %v3760, %v4052
      %v4179 = vadd.f32 %v3761, %v4057
      %v4180 = vadd.f32 %v3762, %v4062
      %v4181 = vadd.f32 %v3763, %v4067
      %v4182 = vadd.f32 %v3764, %v4072
      %v4183 = vadd.f32 %v3765, %v4077
      %v4184 = vadd.f32 %v3766, %v4082
      %v4185 = vadd.f32 %v3767, %v4087
      %v4186 = vadd.f32 %v3768, %v4092
      %v4187 = vadd.f32 %v3769, %v4097
      %v4188 = vadd.f32 %v3770, %v4102
      %v4189 = vadd.f32 %v3771, %v4107
      %v4190 = vadd.f32 %v3772, %v4112
      %v4191 = vadd.f32 %v3773, %v4117
      %v4192 = vadd.f32 %v3774, %v4122
      %v4193 = vadd.f32 %v3775, %v4127
      %v4194 = vadd.f32 %v3776, %v4132
      %v4195 = vadd.f32 %v3777, %v4137
      %v4196 = vadd.f32 %v3778, %v4142
      %v4197 = vadd.f32 %v3779, %v4147
      %v4198 = vld [vmem:[#allocation2 + $0x48] sm:$0xff]
      %v4199 = vld [vmem:[#allocation2 + $0x50] sm:$0xff]
      %v4200 = vld [vmem:[#allocation2 + $0x58] sm:$0xff]
      %v4201 = vld [vmem:[#allocation2 + $0x60] sm:$0xff]
      %v4202 = vld [vmem:[#allocation2 + $0x68] sm:$0xff]
      %v4203 = vld [vmem:[#allocation2 + $0x70] sm:$0xff]
      %v4204 = vld [vmem:[#allocation2 + $0x78] sm:$0xff]
      %v4205 = vld [vmem:[#allocation2 + $0x80] sm:$0xff]
      %v4206 = vld [vmem:[#allocation2 + $0x88] sm:$0xff]
      %v4207 = vld [vmem:[#allocation2 + $0x90] sm:$0xff]
      %v4208 = vld [vmem:[#allocation2 + $0x98] sm:$0xff]
      %v4209 = vld [vmem:[#allocation2 + $0xa0] sm:$0xff]
      %v4210 = vld [vmem:[#allocation2 + $0xa8] sm:$0xff]
      %v4211 = vld [vmem:[#allocation2 + $0xb0] sm:$0xff]
      %v4212 = vld [vmem:[#allocation2 + $0xb8] sm:$0xff]
      %v4213 = vld [vmem:[#allocation2 + $0xc0] sm:$0xff]
      %v4214 = vld [vmem:[#allocation2 + $0xc8] sm:$0xff]
      %v4215 = vld [vmem:[#allocation2 + $0xd0] sm:$0xff]
      %v4216 = vld [vmem:[#allocation2 + $0xd8] sm:$0xff]
      %v4217 = vld [vmem:[#allocation2 + $0xe0] sm:$0xff]
      %v4218 = vld [vmem:[#allocation2 + $0xe8] sm:$0xff]
      %v4219 = vld [vmem:[#allocation2 + $0xf0] sm:$0xff]
      %v4220 = vld [vmem:[#allocation2 + $0xf8] sm:$0xff]
      %v4221 = vld [vmem:[#allocation2 + $0x100] sm:$0xff]
      %v4222 = vld [vmem:[#allocation2 + $0x108] sm:$0xff]
      %v4223 = vld [vmem:[#allocation2 + $0x110] sm:$0xff]
      %v4224 = vld [vmem:[#allocation2 + $0x118] sm:$0xff]
      %v4225 = vld [vmem:[#allocation2 + $0x120] sm:$0xff]
      %v4226 = vld [vmem:[#allocation2 + $0x128] sm:$0xff]
      %v4227 = vld [vmem:[#allocation2 + $0x130] sm:$0xff]
      %v4228 = vld [vmem:[#allocation2 + $0x138] sm:$0xff]
      %v4229 = vld [vmem:[#allocation2 + $0x140] sm:$0xff]
      %v4230 = vld [vmem:[#allocation2 + $0x148] sm:$0xff]
      %v4231 = vld [vmem:[#allocation2 + $0x150] sm:$0xff]
      %v4232 = vld [vmem:[#allocation2 + $0x158] sm:$0xff]
      %v4233 = vld [vmem:[#allocation2 + $0x160] sm:$0xff]
      %v4234 = vld [vmem:[#allocation2 + $0x168] sm:$0xff]
      %v4235 = vld [vmem:[#allocation2 + $0x170] sm:$0xff]
      %v4236 = vld [vmem:[#allocation2 + $0x178] sm:$0xff]
      %v4237 = vld [vmem:[#allocation2 + $0x180] sm:$0xff]
      %v4238 = vld [vmem:[#allocation2 + $0x188] sm:$0xff]
      %v4239 = vld [vmem:[#allocation2 + $0x190] sm:$0xff]
      %v4240 = vld [vmem:[#allocation2 + $0x198] sm:$0xff]
      %v4241 = vld [vmem:[#allocation2 + $0x1a0] sm:$0xff]
      %v4242 = vld [vmem:[#allocation2 + $0x1a8] sm:$0xff]
      %v4243 = vld [vmem:[#allocation2 + $0x1b0] sm:$0xff]
      %v4244 = vld [vmem:[#allocation2 + $0x1b8] sm:$0xff]
      %v4245 = vld [vmem:[#allocation2 + $0x1c0] sm:$0xff]
      %s4246 = scalar_lea.vmem %s2, 896
      %v4247 = vld [vmem:[%s4246] sm:$0xff]
      %v4248 = vld [vmem:[%s4246 + $0x8] sm:$0xff]
      %v4249 = vld [vmem:[%s4246 + $0x10] sm:$0xff]
      %v4250 = vld [vmem:[%s4246 + $0x18] sm:$0xff]
      %v4251 = vld [vmem:[%s4246 + $0x20] sm:$0xff]
      %v4252 = vld [vmem:[%s4246 + $0x28] sm:$0xff]
      %v4253 = vld [vmem:[%s4246 + $0x30] sm:$0xff]
      %v4254 = vld [vmem:[%s4246 + $0x38] sm:$0xff]
      %v4255 = vld [vmem:[%s4246 + $0x40] sm:$0xff]
      %v4256 = vld [vmem:[%s4246 + $0x48] sm:$0xff]
      %v4257 = vld [vmem:[%s4246 + $0x50] sm:$0xff]
      %v4258 = vld [vmem:[%s4246 + $0x58] sm:$0xff]
      %v4259 = vld [vmem:[%s4246 + $0x60] sm:$0xff]
      %v4260 = vld [vmem:[%s4246 + $0x68] sm:$0xff]
      %v4261 = vld [vmem:[%s4246 + $0x70] sm:$0xff]
      %v4262 = vld [vmem:[%s4246 + $0x78] sm:$0xff]
      %4263 = vmatprep.subr.mxu0 0.0
      %4264 = vmatpush1.msra.mxu0 %v4247
      %4265 = vmatprep.subr.mxu0 0.0
      %4266 = vmatpush1.msra.mxu0 %v4248
      %4267 = vmatprep.subr.mxu0 0.0
      %4268 = vmatpush1.msra.mxu0 %v4249
      %4269 = vmatprep.subr.mxu0 0.0
      %4270 = vmatpush1.msra.mxu0 %v4250
      %4271 = vmatprep.subr.mxu0 0.0
      %4272 = vmatpush1.msra.mxu0 %v4251
      %4273 = vmatprep.subr.mxu0 0.0
      %4274 = vmatpush1.msra.mxu0 %v4252
      %4275 = vmatprep.subr.mxu0 0.0
      %4276 = vmatpush1.msra.mxu0 %v4253
      %4277 = vmatprep.subr.mxu0 0.0
      %4278 = vmatpush1.msra.mxu0 %v4254
      %4279 = vmatprep.subr.mxu0 0.0
      %4280 = vmatpush1.msra.mxu0 %v4255
      %4281 = vmatprep.subr.mxu0 0.0
      %4282 = vmatpush1.msra.mxu0 %v4256
      %4283 = vmatprep.subr.mxu0 0.0
      %4284 = vmatpush1.msra.mxu0 %v4257
      %4285 = vmatprep.subr.mxu0 0.0
      %4286 = vmatpush1.msra.mxu0 %v4258
      %4287 = vmatprep.subr.mxu0 0.0
      %4288 = vmatpush1.msra.mxu0 %v4259
      %4289 = vmatprep.subr.mxu0 0.0
      %4290 = vmatpush1.msra.mxu0 %v4260
      %4291 = vmatprep.subr.mxu0 0.0
      %4292 = vmatpush1.msra.mxu0 %v4261
      %4293 = vmatprep.subr.mxu0 0.0
      %4294 = vmatpush1.msra.mxu0 %v4262
      %4295 = vmatprep.subr.mxu0 0.0
      %4296 = vmatpush1.msra.mxu0 0.0
      %4297 = vmatprep.subr.mxu0 0.0
      %4298 = vmatpush1.msra.mxu0 0.0
      %4299 = vmatprep.subr.mxu0 0.0
      %4300 = vmatpush1.msra.mxu0 0.0
      %4301 = vmatprep.subr.mxu0 0.0
      %4302 = vmatpush1.msra.mxu0 0.0
      %4303 = vmatprep.subr.mxu0 0.0
      %4304 = vmatpush1.msra.mxu0 0.0
      %4305 = vmatprep.subr.mxu0 0.0
      %4306 = vmatpush1.msra.mxu0 0.0
      %4307 = vmatprep.subr.mxu0 0.0
      %4308 = vmatpush1.msra.mxu0 0.0
      %4309 = vmatprep.subr.mxu0 0.0
      %4310 = vmatpush1.msra.mxu0 0.0
      %4311 = vmatprep.subr.mxu0 0.0
      %4312 = vmatpush1.msra.mxu0 0.0
      %4313 = vmatprep.subr.mxu0 0.0
      %4314 = vmatpush1.msra.mxu0 0.0
      %4315 = vmatprep.subr.mxu0 0.0
      %4316 = vmatpush1.msra.mxu0 0.0
      %4317 = vmatprep.subr.mxu0 0.0
      %4318 = vmatpush1.msra.mxu0 0.0
      %4319 = vmatprep.subr.mxu0 0.0
      %4320 = vmatpush1.msra.mxu0 0.0
      %4321 = vmatprep.subr.mxu0 0.0
      %4322 = vmatpush1.msra.mxu0 0.0
      %4323 = vmatprep.subr.mxu0 0.0
      %4324 = vmatpush1.msra.mxu0 0.0
      %4325 = vmatprep.subr.mxu0 0.0
      %4326 = vmatpush1.msra.mxu0 0.0
      %4327 = vmatprep.mubr.f32.mxu0 0.0
      %4328 = vmatmul.mubr.f32.gmra.mrb[0].mxu0 %v4198
      %v4329 = vpop.f32.mrb[0].mxu0
      %v4330 = vadd.f32 0.0, %v4329
      %v4331 = vpop.f32.mrb[0].mxu0
      %4332 = vmatprep.mubr.f32.mxu0 0.0
      %4333 = vmatmul.mubr.f32.gmra.mrb[0].mxu0 %v4199
      %v4334 = vpop.f32.mrb[0].mxu0
      %v4335 = vadd.f32 0.0, %v4334
      %v4336 = vpop.f32.mrb[0].mxu0
      %4337 = vmatprep.mubr.f32.mxu0 0.0
      %4338 = vmatmul.mubr.f32.gmra.mrb[0].mxu0 %v4200
      %v4339 = vpop.f32.mrb[0].mxu0
      %v4340 = vadd.f32 0.0, %v4339
      %v4341 = vpop.f32.mrb[0].mxu0
      %4342 = vmatprep.mubr.f32.mxu0 0.0
      %4343 = vmatmul.mubr.f32.gmra.mrb[0].mxu0 %v4201
      %v4344 = vpop.f32.mrb[0].mxu0
      %v4345 = vadd.f32 0.0, %v4344
      %v4346 = vpop.f32.mrb[0].mxu0
      %4347 = vmatprep.mubr.f32.mxu0 0.0
      %4348 = vmatmul.mubr.f32.gmra.mrb[0].mxu0 %v4202
      %v4349 = vpop.f32.mrb[0].mxu0
      %v4350 = vadd.f32 0.0, %v4349
      %v4351 = vpop.f32.mrb[0].mxu0
      %4352 = vmatprep.mubr.f32.mxu0 0.0
      %4353 = vmatmul.mubr.f32.gmra.mrb[0].mxu0 %v4203
      %v4354 = vpop.f32.mrb[0].mxu0
      %v4355 = vadd.f32 0.0, %v4354
      %v4356 = vpop.f32.mrb[0].mxu0
      %4357 = vmatprep.mubr.f32.mxu0 0.0
      %4358 = vmatmul.mubr.f32.gmra.mrb[0].mxu0 %v4204
      %v4359 = vpop.f32.mrb[0].mxu0
      %v4360 = vadd.f32 0.0, %v4359
      %v4361 = vpop.f32.mrb[0].mxu0
      %4362 = vmatprep.mubr.f32.mxu0 0.0
      %4363 = vmatmul.mubr.f32.gmra.mrb[0].mxu0 %v4205
      %v4364 = vpop.f32.mrb[0].mxu0
      %v4365 = vadd.f32 0.0, %v4364
      %v4366 = vpop.f32.mrb[0].mxu0
      %4367 = vmatprep.mubr.f32.mxu0 0.0
      %4368 = vmatmul.mubr.f32.gmra.mrb[0].mxu0 %v4206
      %v4369 = vpop.f32.mrb[0].mxu0
      %v4370 = vadd.f32 0.0, %v4369
      %v4371 = vpop.f32.mrb[0].mxu0
      %4372 = vmatprep.mubr.f32.mxu0 0.0
      %4373 = vmatmul.mubr.f32.gmra.mrb[0].mxu0 %v4207
      %v4374 = vpop.f32.mrb[0].mxu0
      %v4375 = vadd.f32 0.0, %v4374
      %v4376 = vpop.f32.mrb[0].mxu0
      %4377 = vmatprep.mubr.f32.mxu0 0.0
      %4378 = vmatmul.mubr.f32.gmra.mrb[0].mxu0 %v4208
      %v4379 = vpop.f32.mrb[0].mxu0
      %v4380 = vadd.f32 0.0, %v4379
      %v4381 = vpop.f32.mrb[0].mxu0
      %4382 = vmatprep.mubr.f32.mxu0 0.0
      %4383 = vmatmul.mubr.f32.gmra.mrb[0].mxu0 %v4209
      %v4384 = vpop.f32.mrb[0].mxu0
      %v4385 = vadd.f32 0.0, %v4384
      %v4386 = vpop.f32.mrb[0].mxu0
      %4387 = vmatprep.mubr.f32.mxu0 0.0
      %4388 = vmatmul.mubr.f32.gmra.mrb[0].mxu0 %v4210
      %v4389 = vpop.f32.mrb[0].mxu0
      %v4390 = vadd.f32 0.0, %v4389
      %v4391 = vpop.f32.mrb[0].mxu0
      %4392 = vmatprep.mubr.f32.mxu0 0.0
      %4393 = vmatmul.mubr.f32.gmra.mrb[0].mxu0 %v4211
      %v4394 = vpop.f32.mrb[0].mxu0
      %v4395 = vadd.f32 0.0, %v4394
      %v4396 = vpop.f32.mrb[0].mxu0
      %4397 = vmatprep.mubr.f32.mxu0 0.0
      %4398 = vmatmul.mubr.f32.gmra.mrb[0].mxu0 %v4212
      %v4399 = vpop.f32.mrb[0].mxu0
      %v4400 = vadd.f32 0.0, %v4399
      %v4401 = vpop.f32.mrb[0].mxu0
      %4402 = vmatprep.mubr.f32.mxu0 0.0
      %4403 = vmatmul.mubr.f32.gmra.mrb[0].mxu0 %v4213
      %v4404 = vpop.f32.mrb[0].mxu0
      %v4405 = vadd.f32 0.0, %v4404
      %v4406 = vpop.f32.mrb[0].mxu0
      %4407 = vmatprep.mubr.f32.mxu0 0.0
      %4408 = vmatmul.mubr.f32.gmra.mrb[0].mxu0 %v4214
      %v4409 = vpop.f32.mrb[0].mxu0
      %v4410 = vadd.f32 0.0, %v4409
      %v4411 = vpop.f32.mrb[0].mxu0
      %4412 = vmatprep.mubr.f32.mxu0 0.0
      %4413 = vmatmul.mubr.f32.gmra.mrb[0].mxu0 %v4215
      %v4414 = vpop.f32.mrb[0].mxu0
      %v4415 = vadd.f32 0.0, %v4414
      %v4416 = vpop.f32.mrb[0].mxu0
      %4417 = vmatprep.mubr.f32.mxu0 0.0
      %4418 = vmatmul.mubr.f32.gmra.mrb[0].mxu0 %v4216
      %v4419 = vpop.f32.mrb[0].mxu0
      %v4420 = vadd.f32 0.0, %v4419
      %v4421 = vpop.f32.mrb[0].mxu0
      %4422 = vmatprep.mubr.f32.mxu0 0.0
      %4423 = vmatmul.mubr.f32.gmra.mrb[0].mxu0 %v4217
      %v4424 = vpop.f32.mrb[0].mxu0
      %v4425 = vadd.f32 0.0, %v4424
      %v4426 = vpop.f32.mrb[0].mxu0
      %4427 = vmatprep.mubr.f32.mxu0 0.0
      %4428 = vmatmul.mubr.f32.gmra.mrb[0].mxu0 %v4218
      %v4429 = vpop.f32.mrb[0].mxu0
      %v4430 = vadd.f32 0.0, %v4429
      %v4431 = vpop.f32.mrb[0].mxu0
      %4432 = vmatprep.mubr.f32.mxu0 0.0
      %4433 = vmatmul.mubr.f32.gmra.mrb[0].mxu0 %v4219
      %v4434 = vpop.f32.mrb[0].mxu0
      %v4435 = vadd.f32 0.0, %v4434
      %v4436 = vpop.f32.mrb[0].mxu0
      %4437 = vmatprep.mubr.f32.mxu0 0.0
      %4438 = vmatmul.mubr.f32.gmra.mrb[0].mxu0 %v4220
      %v4439 = vpop.f32.mrb[0].mxu0
      %v4440 = vadd.f32 0.0, %v4439
      %v4441 = vpop.f32.mrb[0].mxu0
      %4442 = vmatprep.mubr.f32.mxu0 0.0
      %4443 = vmatmul.mubr.f32.gmra.mrb[0].mxu0 %v4221
      %v4444 = vpop.f32.mrb[0].mxu0
      %v4445 = vadd.f32 0.0, %v4444
      %v4446 = vpop.f32.mrb[0].mxu0
      %4447 = vmatprep.mubr.f32.mxu0 0.0
      %4448 = vmatmul.mubr.f32.gmra.mrb[0].mxu0 %v4222
      %v4449 = vpop.f32.mrb[0].mxu0
      %v4450 = vadd.f32 0.0, %v4449
      %v4451 = vpop.f32.mrb[0].mxu0
      %4452 = vmatprep.mubr.f32.mxu0 0.0
      %4453 = vmatmul.mubr.f32.gmra.mrb[0].mxu0 %v4223
      %v4454 = vpop.f32.mrb[0].mxu0
      %v4455 = vadd.f32 0.0, %v4454
      %v4456 = vpop.f32.mrb[0].mxu0
      %4457 = vmatprep.mubr.f32.mxu0 0.0
      %4458 = vmatmul.mubr.f32.gmra.mrb[0].mxu0 %v4224
      %v4459 = vpop.f32.mrb[0].mxu0
      %v4460 = vadd.f32 0.0, %v4459
      %v4461 = vpop.f32.mrb[0].mxu0
      %4462 = vmatprep.mubr.f32.mxu0 0.0
      %4463 = vmatmul.mubr.f32.gmra.mrb[0].mxu0 %v4225
      %v4464 = vpop.f32.mrb[0].mxu0
      %v4465 = vadd.f32 0.0, %v4464
      %v4466 = vpop.f32.mrb[0].mxu0
      %4467 = vmatprep.mubr.f32.mxu0 0.0
      %4468 = vmatmul.mubr.f32.gmra.mrb[0].mxu0 %v4226
      %v4469 = vpop.f32.mrb[0].mxu0
      %v4470 = vadd.f32 0.0, %v4469
      %v4471 = vpop.f32.mrb[0].mxu0
      %4472 = vmatprep.mubr.f32.mxu0 0.0
      %4473 = vmatmul.mubr.f32.gmra.mrb[0].mxu0 %v4227
      %v4474 = vpop.f32.mrb[0].mxu0
      %v4475 = vadd.f32 0.0, %v4474
      %v4476 = vpop.f32.mrb[0].mxu0
      %4477 = vmatprep.mubr.f32.mxu0 0.0
      %4478 = vmatmul.mubr.f32.gmra.mrb[0].mxu0 %v4228
      %v4479 = vpop.f32.mrb[0].mxu0
      %v4480 = vadd.f32 0.0, %v4479
      %v4481 = vpop.f32.mrb[0].mxu0
      %4482 = vmatprep.mubr.f32.mxu0 0.0
      %4483 = vmatmul.mubr.f32.gmra.mrb[0].mxu0 %v4229
      %v4484 = vpop.f32.mrb[0].mxu0
      %v4485 = vadd.f32 0.0, %v4484
      %v4486 = vpop.f32.mrb[0].mxu0
      %4487 = vmatprep.mubr.f32.mxu0 0.0
      %4488 = vmatmul.mubr.f32.gmra.mrb[0].mxu0 %v4230
      %v4489 = vpop.f32.mrb[0].mxu0
      %v4490 = vadd.f32 0.0, %v4489
      %v4491 = vpop.f32.mrb[0].mxu0
      %4492 = vmatprep.mubr.f32.mxu0 0.0
      %4493 = vmatmul.mubr.f32.gmra.mrb[0].mxu0 %v4231
      %v4494 = vpop.f32.mrb[0].mxu0
      %v4495 = vadd.f32 0.0, %v4494
      %v4496 = vpop.f32.mrb[0].mxu0
      %4497 = vmatprep.mubr.f32.mxu0 0.0
      %4498 = vmatmul.mubr.f32.gmra.mrb[0].mxu0 %v4232
      %v4499 = vpop.f32.mrb[0].mxu0
      %v4500 = vadd.f32 0.0, %v4499
      %v4501 = vpop.f32.mrb[0].mxu0
      %4502 = vmatprep.mubr.f32.mxu0 0.0
      %4503 = vmatmul.mubr.f32.gmra.mrb[0].mxu0 %v4233
      %v4504 = vpop.f32.mrb[0].mxu0
      %v4505 = vadd.f32 0.0, %v4504
      %v4506 = vpop.f32.mrb[0].mxu0
      %4507 = vmatprep.mubr.f32.mxu0 0.0
      %4508 = vmatmul.mubr.f32.gmra.mrb[0].mxu0 %v4234
      %v4509 = vpop.f32.mrb[0].mxu0
      %v4510 = vadd.f32 0.0, %v4509
      %v4511 = vpop.f32.mrb[0].mxu0
      %4512 = vmatprep.mubr.f32.mxu0 0.0
      %4513 = vmatmul.mubr.f32.gmra.mrb[0].mxu0 %v4235
      %v4514 = vpop.f32.mrb[0].mxu0
      %v4515 = vadd.f32 0.0, %v4514
      %v4516 = vpop.f32.mrb[0].mxu0
      %4517 = vmatprep.mubr.f32.mxu0 0.0
      %4518 = vmatmul.mubr.f32.gmra.mrb[0].mxu0 %v4236
      %v4519 = vpop.f32.mrb[0].mxu0
      %v4520 = vadd.f32 0.0, %v4519
      %v4521 = vpop.f32.mrb[0].mxu0
      %4522 = vmatprep.mubr.f32.mxu0 0.0
      %4523 = vmatmul.mubr.f32.gmra.mrb[0].mxu0 %v4237
      %v4524 = vpop.f32.mrb[0].mxu0
      %v4525 = vadd.f32 0.0, %v4524
      %v4526 = vpop.f32.mrb[0].mxu0
      %4527 = vmatprep.mubr.f32.mxu0 0.0
      %4528 = vmatmul.mubr.f32.gmra.mrb[0].mxu0 %v4238
      %v4529 = vpop.f32.mrb[0].mxu0
      %v4530 = vadd.f32 0.0, %v4529
      %v4531 = vpop.f32.mrb[0].mxu0
      %4532 = vmatprep.mubr.f32.mxu0 0.0
      %4533 = vmatmul.mubr.f32.gmra.mrb[0].mxu0 %v4239
      %v4534 = vpop.f32.mrb[0].mxu0
      %v4535 = vadd.f32 0.0, %v4534
      %v4536 = vpop.f32.mrb[0].mxu0
      %4537 = vmatprep.mubr.f32.mxu0 0.0
      %4538 = vmatmul.mubr.f32.gmra.mrb[0].mxu0 %v4240
      %v4539 = vpop.f32.mrb[0].mxu0
      %v4540 = vadd.f32 0.0, %v4539
      %v4541 = vpop.f32.mrb[0].mxu0
      %4542 = vmatprep.mubr.f32.mxu0 0.0
      %4543 = vmatmul.mubr.f32.gmra.mrb[0].mxu0 %v4241
      %v4544 = vpop.f32.mrb[0].mxu0
      %v4545 = vadd.f32 0.0, %v4544
      %v4546 = vpop.f32.mrb[0].mxu0
      %4547 = vmatprep.mubr.f32.mxu0 0.0
      %4548 = vmatmul.mubr.f32.gmra.mrb[0].mxu0 %v4242
      %v4549 = vpop.f32.mrb[0].mxu0
      %v4550 = vadd.f32 0.0, %v4549
      %v4551 = vpop.f32.mrb[0].mxu0
      %4552 = vmatprep.mubr.f32.mxu0 0.0
      %4553 = vmatmul.mubr.f32.gmra.mrb[0].mxu0 %v4243
      %v4554 = vpop.f32.mrb[0].mxu0
      %v4555 = vadd.f32 0.0, %v4554
      %v4556 = vpop.f32.mrb[0].mxu0
      %4557 = vmatprep.mubr.f32.mxu0 0.0
      %4558 = vmatmul.mubr.f32.gmra.mrb[0].mxu0 %v4244
      %v4559 = vpop.f32.mrb[0].mxu0
      %v4560 = vadd.f32 0.0, %v4559
      %v4561 = vpop.f32.mrb[0].mxu0
      %4562 = vmatprep.mubr.f32.mxu0 0.0
      %4563 = vmatmul.mubr.f32.gmra.mrb[0].mxu0 %v4245
      %v4564 = vpop.f32.mrb[0].mxu0
      %v4565 = vadd.f32 0.0, %v4564
      %v4566 = vpop.f32.mrb[0].mxu0
      %4567 = vdwg.mxu0
      %v4568 = vadd.f32 %v4150, %v4330
      %v4569 = vadd.f32 %v4151, %v4335
      %v4570 = vadd.f32 %v4152, %v4340
      %v4571 = vadd.f32 %v4153, %v4345
      %v4572 = vadd.f32 %v4154, %v4350
      %v4573 = vadd.f32 %v4155, %v4355
      %v4574 = vadd.f32 %v4156, %v4360
      %v4575 = vadd.f32 %v4157, %v4365
      %v4576 = vadd.f32 %v4158, %v4370
      %v4577 = vadd.f32 %v4159, %v4375
      %v4578 = vadd.f32 %v4160, %v4380
      %v4579 = vadd.f32 %v4161, %v4385
      %v4580 = vadd.f32 %v4162, %v4390
      %v4581 = vadd.f32 %v4163, %v4395
      %v4582 = vadd.f32 %v4164, %v4400
      %v4583 = vadd.f32 %v4165, %v4405
      %v4584 = vadd.f32 %v4166, %v4410
      %v4585 = vadd.f32 %v4167, %v4415
      %v4586 = vadd.f32 %v4168, %v4420
      %v4587 = vadd.f32 %v4169, %v4425
      %v4588 = vadd.f32 %v4170, %v4430
      %v4589 = vadd.f32 %v4171, %v4435
      %v4590 = vadd.f32 %v4172, %v4440
      %v4591 = vadd.f32 %v4173, %v4445
      %v4592 = vadd.f32 %v4174, %v4450
      %v4593 = vadd.f32 %v4175, %v4455
      %v4594 = vadd.f32 %v4176, %v4460
      %v4595 = vadd.f32 %v4177, %v4465
      %v4596 = vadd.f32 %v4178, %v4470
      %v4597 = vadd.f32 %v4179, %v4475
      %v4598 = vadd.f32 %v4180, %v4480
      %v4599 = vadd.f32 %v4181, %v4485
      %v4600 = vadd.f32 %v4182, %v4490
      %v4601 = vadd.f32 %v4183, %v4495
      %v4602 = vadd.f32 %v4184, %v4500
      %v4603 = vadd.f32 %v4185, %v4505
      %v4604 = vadd.f32 %v4186, %v4510
      %v4605 = vadd.f32 %v4187, %v4515
      %v4606 = vadd.f32 %v4188, %v4520
      %v4607 = vadd.f32 %v4189, %v4525
      %v4608 = vadd.f32 %v4190, %v4530
      %v4609 = vadd.f32 %v4191, %v4535
      %v4610 = vadd.f32 %v4192, %v4540
      %v4611 = vadd.f32 %v4193, %v4545
      %v4612 = vadd.f32 %v4194, %v4550
      %v4613 = vadd.f32 %v4195, %v4555
      %v4614 = vadd.f32 %v4196, %v4560
      %v4615 = vadd.f32 %v4197, %v4565
      %v4616 = vld [vmem:[#allocation2 + $0x49] sm:$0xff]
      %v4617 = vld [vmem:[#allocation2 + $0x51] sm:$0xff]
      %v4618 = vld [vmem:[#allocation2 + $0x59] sm:$0xff]
      %v4619 = vld [vmem:[#allocation2 + $0x61] sm:$0xff]
      %v4620 = vld [vmem:[#allocation2 + $0x69] sm:$0xff]
      %v4621 = vld [vmem:[#allocation2 + $0x71] sm:$0xff]
      %v4622 = vld [vmem:[#allocation2 + $0x79] sm:$0xff]
      %v4623 = vld [vmem:[#allocation2 + $0x81] sm:$0xff]
      %v4624 = vld [vmem:[#allocation2 + $0x89] sm:$0xff]
      %v4625 = vld [vmem:[#allocation2 + $0x91] sm:$0xff]
      %v4626 = vld [vmem:[#allocation2 + $0x99] sm:$0xff]
      %v4627 = vld [vmem:[#allocation2 + $0xa1] sm:$0xff]
      %v4628 = vld [vmem:[#allocation2 + $0xa9] sm:$0xff]
      %v4629 = vld [vmem:[#allocation2 + $0xb1] sm:$0xff]
      %v4630 = vld [vmem:[#allocation2 + $0xb9] sm:$0xff]
      %v4631 = vld [vmem:[#allocation2 + $0xc1] sm:$0xff]
      %v4632 = vld [vmem:[#allocation2 + $0xc9] sm:$0xff]
      %v4633 = vld [vmem:[#allocation2 + $0xd1] sm:$0xff]
      %v4634 = vld [vmem:[#allocation2 + $0xd9] sm:$0xff]
      %v4635 = vld [vmem:[#allocation2 + $0xe1] sm:$0xff]
      %v4636 = vld [vmem:[#allocation2 + $0xe9] sm:$0xff]
      %v4637 = vld [vmem:[#allocation2 + $0xf1] sm:$0xff]
      %v4638 = vld [vmem:[#allocation2 + $0xf9] sm:$0xff]
      %v4639 = vld [vmem:[#allocation2 + $0x101] sm:$0xff]
      %v4640 = vld [vmem:[#allocation2 + $0x109] sm:$0xff]
      %v4641 = vld [vmem:[#allocation2 + $0x111] sm:$0xff]
      %v4642 = vld [vmem:[#allocation2 + $0x119] sm:$0xff]
      %v4643 = vld [vmem:[#allocation2 + $0x121] sm:$0xff]
      %v4644 = vld [vmem:[#allocation2 + $0x129] sm:$0xff]
      %v4645 = vld [vmem:[#allocation2 + $0x131] sm:$0xff]
      %v4646 = vld [vmem:[#allocation2 + $0x139] sm:$0xff]
      %v4647 = vld [vmem:[#allocation2 + $0x141] sm:$0xff]
      %v4648 = vld [vmem:[#allocation2 + $0x149] sm:$0xff]
      %v4649 = vld [vmem:[#allocation2 + $0x151] sm:$0xff]
      %v4650 = vld [vmem:[#allocation2 + $0x159] sm:$0xff]
      %v4651 = vld [vmem:[#allocation2 + $0x161] sm:$0xff]
      %v4652 = vld [vmem:[#allocation2 + $0x169] sm:$0xff]
      %v4653 = vld [vmem:[#allocation2 + $0x171] sm:$0xff]
      %v4654 = vld [vmem:[#allocation2 + $0x179] sm:$0xff]
      %v4655 = vld [vmem:[#allocation2 + $0x181] sm:$0xff]
      %v4656 = vld [vmem:[#allocation2 + $0x189] sm:$0xff]
      %v4657 = vld [vmem:[#allocation2 + $0x191] sm:$0xff]
      %v4658 = vld [vmem:[#allocation2 + $0x199] sm:$0xff]
      %v4659 = vld [vmem:[#allocation2 + $0x1a1] sm:$0xff]
      %v4660 = vld [vmem:[#allocation2 + $0x1a9] sm:$0xff]
      %v4661 = vld [vmem:[#allocation2 + $0x1b1] sm:$0xff]
      %v4662 = vld [vmem:[#allocation2 + $0x1b9] sm:$0xff]
      %v4663 = vld [vmem:[#allocation2 + $0x1c1] sm:$0xff]
      %s4664 = scalar_lea.vmem %s2, 1024
      %v4665 = vld [vmem:[%s4664] sm:$0xff]
      %v4666 = vld [vmem:[%s4664 + $0x8] sm:$0xff]
      %v4667 = vld [vmem:[%s4664 + $0x10] sm:$0xff]
      %v4668 = vld [vmem:[%s4664 + $0x18] sm:$0xff]
      %v4669 = vld [vmem:[%s4664 + $0x20] sm:$0xff]
      %v4670 = vld [vmem:[%s4664 + $0x28] sm:$0xff]
      %v4671 = vld [vmem:[%s4664 + $0x30] sm:$0xff]
      %v4672 = vld [vmem:[%s4664 + $0x38] sm:$0xff]
      %v4673 = vld [vmem:[%s4664 + $0x40] sm:$0xff]
      %v4674 = vld [vmem:[%s4664 + $0x48] sm:$0xff]
      %v4675 = vld [vmem:[%s4664 + $0x50] sm:$0xff]
      %v4676 = vld [vmem:[%s4664 + $0x58] sm:$0xff]
      %v4677 = vld [vmem:[%s4664 + $0x60] sm:$0xff]
      %v4678 = vld [vmem:[%s4664 + $0x68] sm:$0xff]
      %v4679 = vld [vmem:[%s4664 + $0x70] sm:$0xff]
      %v4680 = vld [vmem:[%s4664 + $0x78] sm:$0xff]
      %4681 = vmatprep.subr.mxu0 0.0
      %4682 = vmatpush1.msra.mxu0 %v4665
      %4683 = vmatprep.subr.mxu0 0.0
      %4684 = vmatpush1.msra.mxu0 %v4666
      %4685 = vmatprep.subr.mxu0 0.0
      %4686 = vmatpush1.msra.mxu0 %v4667
      %4687 = vmatprep.subr.mxu0 0.0
      %4688 = vmatpush1.msra.mxu0 %v4668
      %4689 = vmatprep.subr.mxu0 0.0
      %4690 = vmatpush1.msra.mxu0 %v4669
      %4691 = vmatprep.subr.mxu0 0.0
      %4692 = vmatpush1.msra.mxu0 %v4670
      %4693 = vmatprep.subr.mxu0 0.0
      %4694 = vmatpush1.msra.mxu0 %v4671
      %4695 = vmatprep.subr.mxu0 0.0
      %4696 = vmatpush1.msra.mxu0 %v4672
      %4697 = vmatprep.subr.mxu0 0.0
      %4698 = vmatpush1.msra.mxu0 %v4673
      %4699 = vmatprep.subr.mxu0 0.0
      %4700 = vmatpush1.msra.mxu0 %v4674
      %4701 = vmatprep.subr.mxu0 0.0
      %4702 = vmatpush1.msra.mxu0 %v4675
      %4703 = vmatprep.subr.mxu0 0.0
      %4704 = vmatpush1.msra.mxu0 %v4676
      %4705 = vmatprep.subr.mxu0 0.0
      %4706 = vmatpush1.msra.mxu0 %v4677
      %4707 = vmatprep.subr.mxu0 0.0
      %4708 = vmatpush1.msra.mxu0 %v4678
      %4709 = vmatprep.subr.mxu0 0.0
      %4710 = vmatpush1.msra.mxu0 %v4679
      %4711 = vmatprep.subr.mxu0 0.0
      %4712 = vmatpush1.msra.mxu0 %v4680
      %4713 = vmatprep.subr.mxu0 0.0
      %4714 = vmatpush1.msra.mxu0 0.0
      %4715 = vmatprep.subr.mxu0 0.0
      %4716 = vmatpush1.msra.mxu0 0.0
      %4717 = vmatprep.subr.mxu0 0.0
      %4718 = vmatpush1.msra.mxu0 0.0
      %4719 = vmatprep.subr.mxu0 0.0
      %4720 = vmatpush1.msra.mxu0 0.0
      %4721 = vmatprep.subr.mxu0 0.0
      %4722 = vmatpush1.msra.mxu0 0.0
      %4723 = vmatprep.subr.mxu0 0.0
      %4724 = vmatpush1.msra.mxu0 0.0
      %4725 = vmatprep.subr.mxu0 0.0
      %4726 = vmatpush1.msra.mxu0 0.0
      %4727 = vmatprep.subr.mxu0 0.0
      %4728 = vmatpush1.msra.mxu0 0.0
      %4729 = vmatprep.subr.mxu0 0.0
      %4730 = vmatpush1.msra.mxu0 0.0
      %4731 = vmatprep.subr.mxu0 0.0
      %4732 = vmatpush1.msra.mxu0 0.0
      %4733 = vmatprep.subr.mxu0 0.0
      %4734 = vmatpush1.msra.mxu0 0.0
      %4735 = vmatprep.subr.mxu0 0.0
      %4736 = vmatpush1.msra.mxu0 0.0
      %4737 = vmatprep.subr.mxu0 0.0
      %4738 = vmatpush1.msra.mxu0 0.0
      %4739 = vmatprep.subr.mxu0 0.0
      %4740 = vmatpush1.msra.mxu0 0.0
      %4741 = vmatprep.subr.mxu0 0.0
      %4742 = vmatpush1.msra.mxu0 0.0
      %4743 = vmatprep.subr.mxu0 0.0
      %4744 = vmatpush1.msra.mxu0 0.0
      %4745 = vmatprep.mubr.f32.mxu0 0.0
      %4746 = vmatmul.mubr.f32.gmra.mrb[0].mxu0 %v4616
      %v4747 = vpop.f32.mrb[0].mxu0
      %v4748 = vadd.f32 0.0, %v4747
      %v4749 = vpop.f32.mrb[0].mxu0
      %4750 = vmatprep.mubr.f32.mxu0 0.0
      %4751 = vmatmul.mubr.f32.gmra.mrb[0].mxu0 %v4617
      %v4752 = vpop.f32.mrb[0].mxu0
      %v4753 = vadd.f32 0.0, %v4752
      %v4754 = vpop.f32.mrb[0].mxu0
      %4755 = vmatprep.mubr.f32.mxu0 0.0
      %4756 = vmatmul.mubr.f32.gmra.mrb[0].mxu0 %v4618
      %v4757 = vpop.f32.mrb[0].mxu0
      %v4758 = vadd.f32 0.0, %v4757
      %v4759 = vpop.f32.mrb[0].mxu0
      %4760 = vmatprep.mubr.f32.mxu0 0.0
      %4761 = vmatmul.mubr.f32.gmra.mrb[0].mxu0 %v4619
      %v4762 = vpop.f32.mrb[0].mxu0
      %v4763 = vadd.f32 0.0, %v4762
      %v4764 = vpop.f32.mrb[0].mxu0
      %4765 = vmatprep.mubr.f32.mxu0 0.0
      %4766 = vmatmul.mubr.f32.gmra.mrb[0].mxu0 %v4620
      %v4767 = vpop.f32.mrb[0].mxu0
      %v4768 = vadd.f32 0.0, %v4767
      %v4769 = vpop.f32.mrb[0].mxu0
      %4770 = vmatprep.mubr.f32.mxu0 0.0
      %4771 = vmatmul.mubr.f32.gmra.mrb[0].mxu0 %v4621
      %v4772 = vpop.f32.mrb[0].mxu0
      %v4773 = vadd.f32 0.0, %v4772
      %v4774 = vpop.f32.mrb[0].mxu0
      %4775 = vmatprep.mubr.f32.mxu0 0.0
      %4776 = vmatmul.mubr.f32.gmra.mrb[0].mxu0 %v4622
      %v4777 = vpop.f32.mrb[0].mxu0
      %v4778 = vadd.f32 0.0, %v4777
      %v4779 = vpop.f32.mrb[0].mxu0
      %4780 = vmatprep.mubr.f32.mxu0 0.0
      %4781 = vmatmul.mubr.f32.gmra.mrb[0].mxu0 %v4623
      %v4782 = vpop.f32.mrb[0].mxu0
      %v4783 = vadd.f32 0.0, %v4782
      %v4784 = vpop.f32.mrb[0].mxu0
      %4785 = vmatprep.mubr.f32.mxu0 0.0
      %4786 = vmatmul.mubr.f32.gmra.mrb[0].mxu0 %v4624
      %v4787 = vpop.f32.mrb[0].mxu0
      %v4788 = vadd.f32 0.0, %v4787
      %v4789 = vpop.f32.mrb[0].mxu0
      %4790 = vmatprep.mubr.f32.mxu0 0.0
      %4791 = vmatmul.mubr.f32.gmra.mrb[0].mxu0 %v4625
      %v4792 = vpop.f32.mrb[0].mxu0
      %v4793 = vadd.f32 0.0, %v4792
      %v4794 = vpop.f32.mrb[0].mxu0
      %4795 = vmatprep.mubr.f32.mxu0 0.0
      %4796 = vmatmul.mubr.f32.gmra.mrb[0].mxu0 %v4626
      %v4797 = vpop.f32.mrb[0].mxu0
      %v4798 = vadd.f32 0.0, %v4797
      %v4799 = vpop.f32.mrb[0].mxu0
      %4800 = vmatprep.mubr.f32.mxu0 0.0
      %4801 = vmatmul.mubr.f32.gmra.mrb[0].mxu0 %v4627
      %v4802 = vpop.f32.mrb[0].mxu0
      %v4803 = vadd.f32 0.0, %v4802
      %v4804 = vpop.f32.mrb[0].mxu0
      %4805 = vmatprep.mubr.f32.mxu0 0.0
      %4806 = vmatmul.mubr.f32.gmra.mrb[0].mxu0 %v4628
      %v4807 = vpop.f32.mrb[0].mxu0
      %v4808 = vadd.f32 0.0, %v4807
      %v4809 = vpop.f32.mrb[0].mxu0
      %4810 = vmatprep.mubr.f32.mxu0 0.0
      %4811 = vmatmul.mubr.f32.gmra.mrb[0].mxu0 %v4629
      %v4812 = vpop.f32.mrb[0].mxu0
      %v4813 = vadd.f32 0.0, %v4812
      %v4814 = vpop.f32.mrb[0].mxu0
      %4815 = vmatprep.mubr.f32.mxu0 0.0
      %4816 = vmatmul.mubr.f32.gmra.mrb[0].mxu0 %v4630
      %v4817 = vpop.f32.mrb[0].mxu0
      %v4818 = vadd.f32 0.0, %v4817
      %v4819 = vpop.f32.mrb[0].mxu0
      %4820 = vmatprep.mubr.f32.mxu0 0.0
      %4821 = vmatmul.mubr.f32.gmra.mrb[0].mxu0 %v4631
      %v4822 = vpop.f32.mrb[0].mxu0
      %v4823 = vadd.f32 0.0, %v4822
      %v4824 = vpop.f32.mrb[0].mxu0
      %4825 = vmatprep.mubr.f32.mxu0 0.0
      %4826 = vmatmul.mubr.f32.gmra.mrb[0].mxu0 %v4632
      %v4827 = vpop.f32.mrb[0].mxu0
      %v4828 = vadd.f32 0.0, %v4827
      %v4829 = vpop.f32.mrb[0].mxu0
      %4830 = vmatprep.mubr.f32.mxu0 0.0
      %4831 = vmatmul.mubr.f32.gmra.mrb[0].mxu0 %v4633
      %v4832 = vpop.f32.mrb[0].mxu0
      %v4833 = vadd.f32 0.0, %v4832
      %v4834 = vpop.f32.mrb[0].mxu0
      %4835 = vmatprep.mubr.f32.mxu0 0.0
      %4836 = vmatmul.mubr.f32.gmra.mrb[0].mxu0 %v4634
      %v4837 = vpop.f32.mrb[0].mxu0
      %v4838 = vadd.f32 0.0, %v4837
      %v4839 = vpop.f32.mrb[0].mxu0
      %4840 = vmatprep.mubr.f32.mxu0 0.0
      %4841 = vmatmul.mubr.f32.gmra.mrb[0].mxu0 %v4635
      %v4842 = vpop.f32.mrb[0].mxu0
      %v4843 = vadd.f32 0.0, %v4842
      %v4844 = vpop.f32.mrb[0].mxu0
      %4845 = vmatprep.mubr.f32.mxu0 0.0
      %4846 = vmatmul.mubr.f32.gmra.mrb[0].mxu0 %v4636
      %v4847 = vpop.f32.mrb[0].mxu0
      %v4848 = vadd.f32 0.0, %v4847
      %v4849 = vpop.f32.mrb[0].mxu0
      %4850 = vmatprep.mubr.f32.mxu0 0.0
      %4851 = vmatmul.mubr.f32.gmra.mrb[0].mxu0 %v4637
      %v4852 = vpop.f32.mrb[0].mxu0
      %v4853 = vadd.f32 0.0, %v4852
      %v4854 = vpop.f32.mrb[0].mxu0
      %4855 = vmatprep.mubr.f32.mxu0 0.0
      %4856 = vmatmul.mubr.f32.gmra.mrb[0].mxu0 %v4638
      %v4857 = vpop.f32.mrb[0].mxu0
      %v4858 = vadd.f32 0.0, %v4857
      %v4859 = vpop.f32.mrb[0].mxu0
      %4860 = vmatprep.mubr.f32.mxu0 0.0
      %4861 = vmatmul.mubr.f32.gmra.mrb[0].mxu0 %v4639
      %v4862 = vpop.f32.mrb[0].mxu0
      %v4863 = vadd.f32 0.0, %v4862
      %v4864 = vpop.f32.mrb[0].mxu0
      %4865 = vmatprep.mubr.f32.mxu0 0.0
      %4866 = vmatmul.mubr.f32.gmra.mrb[0].mxu0 %v4640
      %v4867 = vpop.f32.mrb[0].mxu0
      %v4868 = vadd.f32 0.0, %v4867
      %v4869 = vpop.f32.mrb[0].mxu0
      %4870 = vmatprep.mubr.f32.mxu0 0.0
      %4871 = vmatmul.mubr.f32.gmra.mrb[0].mxu0 %v4641
      %v4872 = vpop.f32.mrb[0].mxu0
      %v4873 = vadd.f32 0.0, %v4872
      %v4874 = vpop.f32.mrb[0].mxu0
      %4875 = vmatprep.mubr.f32.mxu0 0.0
      %4876 = vmatmul.mubr.f32.gmra.mrb[0].mxu0 %v4642
      %v4877 = vpop.f32.mrb[0].mxu0
      %v4878 = vadd.f32 0.0, %v4877
      %v4879 = vpop.f32.mrb[0].mxu0
      %4880 = vmatprep.mubr.f32.mxu0 0.0
      %4881 = vmatmul.mubr.f32.gmra.mrb[0].mxu0 %v4643
      %v4882 = vpop.f32.mrb[0].mxu0
      %v4883 = vadd.f32 0.0, %v4882
      %v4884 = vpop.f32.mrb[0].mxu0
      %4885 = vmatprep.mubr.f32.mxu0 0.0
      %4886 = vmatmul.mubr.f32.gmra.mrb[0].mxu0 %v4644
      %v4887 = vpop.f32.mrb[0].mxu0
      %v4888 = vadd.f32 0.0, %v4887
      %v4889 = vpop.f32.mrb[0].mxu0
      %4890 = vmatprep.mubr.f32.mxu0 0.0
      %4891 = vmatmul.mubr.f32.gmra.mrb[0].mxu0 %v4645
      %v4892 = vpop.f32.mrb[0].mxu0
      %v4893 = vadd.f32 0.0, %v4892
      %v4894 = vpop.f32.mrb[0].mxu0
      %4895 = vmatprep.mubr.f32.mxu0 0.0
      %4896 = vmatmul.mubr.f32.gmra.mrb[0].mxu0 %v4646
      %v4897 = vpop.f32.mrb[0].mxu0
      %v4898 = vadd.f32 0.0, %v4897
      %v4899 = vpop.f32.mrb[0].mxu0
      %4900 = vmatprep.mubr.f32.mxu0 0.0
      %4901 = vmatmul.mubr.f32.gmra.mrb[0].mxu0 %v4647
      %v4902 = vpop.f32.mrb[0].mxu0
      %v4903 = vadd.f32 0.0, %v4902
      %v4904 = vpop.f32.mrb[0].mxu0
      %4905 = vmatprep.mubr.f32.mxu0 0.0
      %4906 = vmatmul.mubr.f32.gmra.mrb[0].mxu0 %v4648
      %v4907 = vpop.f32.mrb[0].mxu0
      %v4908 = vadd.f32 0.0, %v4907
      %v4909 = vpop.f32.mrb[0].mxu0
      %4910 = vmatprep.mubr.f32.mxu0 0.0
      %4911 = vmatmul.mubr.f32.gmra.mrb[0].mxu0 %v4649
      %v4912 = vpop.f32.mrb[0].mxu0
      %v4913 = vadd.f32 0.0, %v4912
      %v4914 = vpop.f32.mrb[0].mxu0
      %4915 = vmatprep.mubr.f32.mxu0 0.0
      %4916 = vmatmul.mubr.f32.gmra.mrb[0].mxu0 %v4650
      %v4917 = vpop.f32.mrb[0].mxu0
      %v4918 = vadd.f32 0.0, %v4917
      %v4919 = vpop.f32.mrb[0].mxu0
      %4920 = vmatprep.mubr.f32.mxu0 0.0
      %4921 = vmatmul.mubr.f32.gmra.mrb[0].mxu0 %v4651
      %v4922 = vpop.f32.mrb[0].mxu0
      %v4923 = vadd.f32 0.0, %v4922
      %v4924 = vpop.f32.mrb[0].mxu0
      %4925 = vmatprep.mubr.f32.mxu0 0.0
      %4926 = vmatmul.mubr.f32.gmra.mrb[0].mxu0 %v4652
      %v4927 = vpop.f32.mrb[0].mxu0
      %v4928 = vadd.f32 0.0, %v4927
      %v4929 = vpop.f32.mrb[0].mxu0
      %4930 = vmatprep.mubr.f32.mxu0 0.0
      %4931 = vmatmul.mubr.f32.gmra.mrb[0].mxu0 %v4653
      %v4932 = vpop.f32.mrb[0].mxu0
      %v4933 = vadd.f32 0.0, %v4932
      %v4934 = vpop.f32.mrb[0].mxu0
      %4935 = vmatprep.mubr.f32.mxu0 0.0
      %4936 = vmatmul.mubr.f32.gmra.mrb[0].mxu0 %v4654
      %v4937 = vpop.f32.mrb[0].mxu0
      %v4938 = vadd.f32 0.0, %v4937
      %v4939 = vpop.f32.mrb[0].mxu0
      %4940 = vmatprep.mubr.f32.mxu0 0.0
      %4941 = vmatmul.mubr.f32.gmra.mrb[0].mxu0 %v4655
      %v4942 = vpop.f32.mrb[0].mxu0
      %v4943 = vadd.f32 0.0, %v4942
      %v4944 = vpop.f32.mrb[0].mxu0
      %4945 = vmatprep.mubr.f32.mxu0 0.0
      %4946 = vmatmul.mubr.f32.gmra.mrb[0].mxu0 %v4656
      %v4947 = vpop.f32.mrb[0].mxu0
      %v4948 = vadd.f32 0.0, %v4947
      %v4949 = vpop.f32.mrb[0].mxu0
      %4950 = vmatprep.mubr.f32.mxu0 0.0
      %4951 = vmatmul.mubr.f32.gmra.mrb[0].mxu0 %v4657
      %v4952 = vpop.f32.mrb[0].mxu0
      %v4953 = vadd.f32 0.0, %v4952
      %v4954 = vpop.f32.mrb[0].mxu0
      %4955 = vmatprep.mubr.f32.mxu0 0.0
      %4956 = vmatmul.mubr.f32.gmra.mrb[0].mxu0 %v4658
      %v4957 = vpop.f32.mrb[0].mxu0
      %v4958 = vadd.f32 0.0, %v4957
      %v4959 = vpop.f32.mrb[0].mxu0
      %4960 = vmatprep.mubr.f32.mxu0 0.0
      %4961 = vmatmul.mubr.f32.gmra.mrb[0].mxu0 %v4659
      %v4962 = vpop.f32.mrb[0].mxu0
      %v4963 = vadd.f32 0.0, %v4962
      %v4964 = vpop.f32.mrb[0].mxu0
      %4965 = vmatprep.mubr.f32.mxu0 0.0
      %4966 = vmatmul.mubr.f32.gmra.mrb[0].mxu0 %v4660
      %v4967 = vpop.f32.mrb[0].mxu0
      %v4968 = vadd.f32 0.0, %v4967
      %v4969 = vpop.f32.mrb[0].mxu0
      %4970 = vmatprep.mubr.f32.mxu0 0.0
      %4971 = vmatmul.mubr.f32.gmra.mrb[0].mxu0 %v4661
      %v4972 = vpop.f32.mrb[0].mxu0
      %v4973 = vadd.f32 0.0, %v4972
      %v4974 = vpop.f32.mrb[0].mxu0
      %4975 = vmatprep.mubr.f32.mxu0 0.0
      %4976 = vmatmul.mubr.f32.gmra.mrb[0].mxu0 %v4662
      %v4977 = vpop.f32.mrb[0].mxu0
      %v4978 = vadd.f32 0.0, %v4977
      %v4979 = vpop.f32.mrb[0].mxu0
      %4980 = vmatprep.mubr.f32.mxu0 0.0
      %4981 = vmatmul.mubr.f32.gmra.mrb[0].mxu0 %v4663
      %v4982 = vpop.f32.mrb[0].mxu0
      %v4983 = vadd.f32 0.0, %v4982
      %v4984 = vpop.f32.mrb[0].mxu0
      %4985 = vdwg.mxu0
      %v4986 = vadd.f32 %v4568, %v4748
      %v4987 = vadd.f32 %v4569, %v4753
      %v4988 = vadd.f32 %v4570, %v4758
      %v4989 = vadd.f32 %v4571, %v4763
      %v4990 = vadd.f32 %v4572, %v4768
      %v4991 = vadd.f32 %v4573, %v4773
      %v4992 = vadd.f32 %v4574, %v4778
      %v4993 = vadd.f32 %v4575, %v4783
      %v4994 = vadd.f32 %v4576, %v4788
      %v4995 = vadd.f32 %v4577, %v4793
      %v4996 = vadd.f32 %v4578, %v4798
      %v4997 = vadd.f32 %v4579, %v4803
      %v4998 = vadd.f32 %v4580, %v4808
      %v4999 = vadd.f32 %v4581, %v4813
      %v5000 = vadd.f32 %v4582, %v4818
      %v5001 = vadd.f32 %v4583, %v4823
      %v5002 = vadd.f32 %v4584, %v4828
      %v5003 = vadd.f32 %v4585, %v4833
      %v5004 = vadd.f32 %v4586, %v4838
      %v5005 = vadd.f32 %v4587, %v4843
      %v5006 = vadd.f32 %v4588, %v4848
      %v5007 = vadd.f32 %v4589, %v4853
      %v5008 = vadd.f32 %v4590, %v4858
      %v5009 = vadd.f32 %v4591, %v4863
      %v5010 = vadd.f32 %v4592, %v4868
      %v5011 = vadd.f32 %v4593, %v4873
      %v5012 = vadd.f32 %v4594, %v4878
      %v5013 = vadd.f32 %v4595, %v4883
      %v5014 = vadd.f32 %v4596, %v4888
      %v5015 = vadd.f32 %v4597, %v4893
      %v5016 = vadd.f32 %v4598, %v4898
      %v5017 = vadd.f32 %v4599, %v4903
      %v5018 = vadd.f32 %v4600, %v4908
      %v5019 = vadd.f32 %v4601, %v4913
      %v5020 = vadd.f32 %v4602, %v4918
      %v5021 = vadd.f32 %v4603, %v4923
      %v5022 = vadd.f32 %v4604, %v4928
      %v5023 = vadd.f32 %v4605, %v4933
      %v5024 = vadd.f32 %v4606, %v4938
      %v5025 = vadd.f32 %v4607, %v4943
      %v5026 = vadd.f32 %v4608, %v4948
      %v5027 = vadd.f32 %v4609, %v4953
      %v5028 = vadd.f32 %v4610, %v4958
      %v5029 = vadd.f32 %v4611, %v4963
      %v5030 = vadd.f32 %v4612, %v4968
      %v5031 = vadd.f32 %v4613, %v4973
      %v5032 = vadd.f32 %v4614, %v4978
      %v5033 = vadd.f32 %v4615, %v4983
      %5035 = vset.pattern.permute.xlu0 0
      %5036 = vperm.xlu0 %5035, %v342
      %v5037 = vpop.permute.xlu0 %5036
      %5040 = vset.pattern.permute.xlu0 0
      %5041 = vperm.xlu0 %5040, %v343
      %v5042 = vpop.permute.xlu0 %5041
      %5045 = vset.pattern.permute.xlu0 0
      %5046 = vperm.xlu0 %5045, %v344
      %v5047 = vpop.permute.xlu0 %5046
      %5050 = vset.pattern.permute.xlu0 0
      %5051 = vperm.xlu0 %5050, %v345
      %v5052 = vpop.permute.xlu0 %5051
      %5055 = vset.pattern.permute.xlu0 0
      %5056 = vperm.xlu0 %5055, %v346
      %v5057 = vpop.permute.xlu0 %5056
      %5060 = vset.pattern.permute.xlu0 0
      %5061 = vperm.xlu0 %5060, %v347
      %v5062 = vpop.permute.xlu0 %5061
      %5065 = vset.pattern.permute.xlu0 0
      %5066 = vperm.xlu0 %5065, %v348
      %v5067 = vpop.permute.xlu0 %5066
      %5070 = vset.pattern.permute.xlu0 0
      %5071 = vperm.xlu0 %5070, %v349
      %v5072 = vpop.permute.xlu0 %5071
      %5075 = vset.pattern.permute.xlu0 0
      %5076 = vperm.xlu0 %5075, %v350
      %v5077 = vpop.permute.xlu0 %5076
      %5080 = vset.pattern.permute.xlu0 0
      %5081 = vperm.xlu0 %5080, %v351
      %v5082 = vpop.permute.xlu0 %5081
      %5085 = vset.pattern.permute.xlu0 0
      %5086 = vperm.xlu0 %5085, %v352
      %v5087 = vpop.permute.xlu0 %5086
      %5090 = vset.pattern.permute.xlu0 0
      %5091 = vperm.xlu0 %5090, %v353
      %v5092 = vpop.permute.xlu0 %5091
      %5095 = vset.pattern.permute.xlu0 0
      %5096 = vperm.xlu0 %5095, %v354
      %v5097 = vpop.permute.xlu0 %5096
      %5100 = vset.pattern.permute.xlu0 0
      %5101 = vperm.xlu0 %5100, %v355
      %v5102 = vpop.permute.xlu0 %5101
      %5105 = vset.pattern.permute.xlu0 0
      %5106 = vperm.xlu0 %5105, %v356
      %v5107 = vpop.permute.xlu0 %5106
      %5110 = vset.pattern.permute.xlu0 0
      %5111 = vperm.xlu0 %5110, %v357
      %v5112 = vpop.permute.xlu0 %5111
      %5115 = vset.pattern.permute.xlu0 0
      %5116 = vperm.xlu0 %5115, %v358
      %v5117 = vpop.permute.xlu0 %5116
      %5120 = vset.pattern.permute.xlu0 0
      %5121 = vperm.xlu0 %5120, %v359
      %v5122 = vpop.permute.xlu0 %5121
      %5125 = vset.pattern.permute.xlu0 0
      %5126 = vperm.xlu0 %5125, %v360
      %v5127 = vpop.permute.xlu0 %5126
      %5130 = vset.pattern.permute.xlu0 0
      %5131 = vperm.xlu0 %5130, %v361
      %v5132 = vpop.permute.xlu0 %5131
      %5135 = vset.pattern.permute.xlu0 0
      %5136 = vperm.xlu0 %5135, %v362
      %v5137 = vpop.permute.xlu0 %5136
      %5140 = vset.pattern.permute.xlu0 0
      %5141 = vperm.xlu0 %5140, %v363
      %v5142 = vpop.permute.xlu0 %5141
      %5145 = vset.pattern.permute.xlu0 0
      %5146 = vperm.xlu0 %5145, %v364
      %v5147 = vpop.permute.xlu0 %5146
      %5150 = vset.pattern.permute.xlu0 0
      %5151 = vperm.xlu0 %5150, %v365
      %v5152 = vpop.permute.xlu0 %5151
      %5155 = vset.pattern.permute.xlu0 0
      %5156 = vperm.xlu0 %5155, %v366
      %v5157 = vpop.permute.xlu0 %5156
      %5160 = vset.pattern.permute.xlu0 0
      %5161 = vperm.xlu0 %5160, %v367
      %v5162 = vpop.permute.xlu0 %5161
      %5165 = vset.pattern.permute.xlu0 0
      %5166 = vperm.xlu0 %5165, %v368
      %v5167 = vpop.permute.xlu0 %5166
      %5170 = vset.pattern.permute.xlu0 0
      %5171 = vperm.xlu0 %5170, %v369
      %v5172 = vpop.permute.xlu0 %5171
      %5175 = vset.pattern.permute.xlu0 0
      %5176 = vperm.xlu0 %5175, %v370
      %v5177 = vpop.permute.xlu0 %5176
      %5180 = vset.pattern.permute.xlu0 0
      %5181 = vperm.xlu0 %5180, %v371
      %v5182 = vpop.permute.xlu0 %5181
      %5185 = vset.pattern.permute.xlu0 0
      %5186 = vperm.xlu0 %5185, %v372
      %v5187 = vpop.permute.xlu0 %5186
      %5190 = vset.pattern.permute.xlu0 0
      %5191 = vperm.xlu0 %5190, %v373
      %v5192 = vpop.permute.xlu0 %5191
      %5195 = vset.pattern.permute.xlu0 0
      %5196 = vperm.xlu0 %5195, %v374
      %v5197 = vpop.permute.xlu0 %5196
      %5200 = vset.pattern.permute.xlu0 0
      %5201 = vperm.xlu0 %5200, %v375
      %v5202 = vpop.permute.xlu0 %5201
      %5205 = vset.pattern.permute.xlu0 0
      %5206 = vperm.xlu0 %5205, %v376
      %v5207 = vpop.permute.xlu0 %5206
      %5210 = vset.pattern.permute.xlu0 0
      %5211 = vperm.xlu0 %5210, %v377
      %v5212 = vpop.permute.xlu0 %5211
      %5215 = vset.pattern.permute.xlu0 0
      %5216 = vperm.xlu0 %5215, %v378
      %v5217 = vpop.permute.xlu0 %5216
      %5220 = vset.pattern.permute.xlu0 0
      %5221 = vperm.xlu0 %5220, %v379
      %v5222 = vpop.permute.xlu0 %5221
      %5225 = vset.pattern.permute.xlu0 0
      %5226 = vperm.xlu0 %5225, %v380
      %v5227 = vpop.permute.xlu0 %5226
      %5230 = vset.pattern.permute.xlu0 0
      %5231 = vperm.xlu0 %5230, %v381
      %v5232 = vpop.permute.xlu0 %5231
      %5235 = vset.pattern.permute.xlu0 0
      %5236 = vperm.xlu0 %5235, %v382
      %v5237 = vpop.permute.xlu0 %5236
      %5240 = vset.pattern.permute.xlu0 0
      %5241 = vperm.xlu0 %5240, %v383
      %v5242 = vpop.permute.xlu0 %5241
      %5245 = vset.pattern.permute.xlu0 0
      %5246 = vperm.xlu0 %5245, %v384
      %v5247 = vpop.permute.xlu0 %5246
      %5250 = vset.pattern.permute.xlu0 0
      %5251 = vperm.xlu0 %5250, %v385
      %v5252 = vpop.permute.xlu0 %5251
      %5255 = vset.pattern.permute.xlu0 0
      %5256 = vperm.xlu0 %5255, %v386
      %v5257 = vpop.permute.xlu0 %5256
      %5260 = vset.pattern.permute.xlu0 0
      %5261 = vperm.xlu0 %5260, %v387
      %v5262 = vpop.permute.xlu0 %5261
      %5265 = vset.pattern.permute.xlu0 0
      %5266 = vperm.xlu0 %5265, %v388
      %v5267 = vpop.permute.xlu0 %5266
      %5270 = vset.pattern.permute.xlu0 0
      %5271 = vperm.xlu0 %5270, %v389
      %v5272 = vpop.permute.xlu0 %5271
      %v5274 = vmul.f32 %v4986, %v5037
      %v5275 = vmul.f32 %v4987, %v5042
      %v5276 = vmul.f32 %v4988, %v5047
      %v5277 = vmul.f32 %v4989, %v5052
      %v5278 = vmul.f32 %v4990, %v5057
      %v5279 = vmul.f32 %v4991, %v5062
      %v5280 = vmul.f32 %v4992, %v5067
      %v5281 = vmul.f32 %v4993, %v5072
      %v5282 = vmul.f32 %v4994, %v5077
      %v5283 = vmul.f32 %v4995, %v5082
      %v5284 = vmul.f32 %v4996, %v5087
      %v5285 = vmul.f32 %v4997, %v5092
      %v5286 = vmul.f32 %v4998, %v5097
      %v5287 = vmul.f32 %v4999, %v5102
      %v5288 = vmul.f32 %v5000, %v5107
      %v5289 = vmul.f32 %v5001, %v5112
      %v5290 = vmul.f32 %v5002, %v5117
      %v5291 = vmul.f32 %v5003, %v5122
      %v5292 = vmul.f32 %v5004, %v5127
      %v5293 = vmul.f32 %v5005, %v5132
      %v5294 = vmul.f32 %v5006, %v5137
      %v5295 = vmul.f32 %v5007, %v5142
      %v5296 = vmul.f32 %v5008, %v5147
      %v5297 = vmul.f32 %v5009, %v5152
      %v5298 = vmul.f32 %v5010, %v5157
      %v5299 = vmul.f32 %v5011, %v5162
      %v5300 = vmul.f32 %v5012, %v5167
      %v5301 = vmul.f32 %v5013, %v5172
      %v5302 = vmul.f32 %v5014, %v5177
      %v5303 = vmul.f32 %v5015, %v5182
      %v5304 = vmul.f32 %v5016, %v5187
      %v5305 = vmul.f32 %v5017, %v5192
      %v5306 = vmul.f32 %v5018, %v5197
      %v5307 = vmul.f32 %v5019, %v5202
      %v5308 = vmul.f32 %v5020, %v5207
      %v5309 = vmul.f32 %v5021, %v5212
      %v5310 = vmul.f32 %v5022, %v5217
      %v5311 = vmul.f32 %v5023, %v5222
      %v5312 = vmul.f32 %v5024, %v5227
      %v5313 = vmul.f32 %v5025, %v5232
      %v5314 = vmul.f32 %v5026, %v5237
      %v5315 = vmul.f32 %v5027, %v5242
      %v5316 = vmul.f32 %v5028, %v5247
      %v5317 = vmul.f32 %v5029, %v5252
      %v5318 = vmul.f32 %v5030, %v5257
      %v5319 = vmul.f32 %v5031, %v5262
      %v5320 = vmul.f32 %v5032, %v5267
      %v5321 = vmul.f32 %v5033, %v5272
      %v5322 = vadd.f32 %v5274, %v5275
      %v5323 = vadd.f32 %v5322, %v5276
      %v5324 = vadd.f32 %v5323, %v5277
      %v5325 = vadd.f32 %v5324, %v5278
      %v5326 = vadd.f32 %v5325, %v5279
      %v5327 = vadd.f32 %v5326, %v5280
      %v5328 = vadd.f32 %v5327, %v5281
      %v5329 = vadd.f32 %v5328, %v5282
      %v5330 = vadd.f32 %v5329, %v5283
      %v5331 = vadd.f32 %v5330, %v5284
      %v5332 = vadd.f32 %v5331, %v5285
      %v5333 = vadd.f32 %v5332, %v5286
      %v5334 = vadd.f32 %v5333, %v5287
      %v5335 = vadd.f32 %v5334, %v5288
      %v5336 = vadd.f32 %v5335, %v5289
      %v5337 = vadd.f32 %v5336, %v5290
      %v5338 = vadd.f32 %v5337, %v5291
      %v5339 = vadd.f32 %v5338, %v5292
      %v5340 = vadd.f32 %v5339, %v5293
      %v5341 = vadd.f32 %v5340, %v5294
      %v5342 = vadd.f32 %v5341, %v5295
      %v5343 = vadd.f32 %v5342, %v5296
      %v5344 = vadd.f32 %v5343, %v5297
      %v5345 = vadd.f32 %v5344, %v5298
      %v5346 = vadd.f32 %v5345, %v5299
      %v5347 = vadd.f32 %v5346, %v5300
      %v5348 = vadd.f32 %v5347, %v5301
      %v5349 = vadd.f32 %v5348, %v5302
      %v5350 = vadd.f32 %v5349, %v5303
      %v5351 = vadd.f32 %v5350, %v5304
      %v5352 = vadd.f32 %v5351, %v5305
      %v5353 = vadd.f32 %v5352, %v5306
      %v5354 = vadd.f32 %v5353, %v5307
      %v5355 = vadd.f32 %v5354, %v5308
      %v5356 = vadd.f32 %v5355, %v5309
      %v5357 = vadd.f32 %v5356, %v5310
      %v5358 = vadd.f32 %v5357, %v5311
      %v5359 = vadd.f32 %v5358, %v5312
      %v5360 = vadd.f32 %v5359, %v5313
      %v5361 = vadd.f32 %v5360, %v5314
      %v5362 = vadd.f32 %v5361, %v5315
      %v5363 = vadd.f32 %v5362, %v5316
      %v5364 = vadd.f32 %v5363, %v5317
      %v5365 = vadd.f32 %v5364, %v5318
      %v5366 = vadd.f32 %v5365, %v5319
      %v5367 = vadd.f32 %v5366, %v5320
      %v5368 = vadd.f32 %v5367, %v5321
      %v5369 = vrot.slane %v5368, 4
      %v5370 = vadd.f32 %v5368, %v5369
      %v5371 = vrot.slane %v5370, 2
      %v5372 = vadd.f32 %v5370, %v5371
      %v5373 = vrot.slane %v5372, 1
      %v5374 = vadd.f32 %v5372, %v5373
      %v5375 = vmul.f32 %v5274, %v4986
      %v5376 = vmul.f32 %v5275, %v4987
      %v5377 = vmul.f32 %v5276, %v4988
      %v5378 = vmul.f32 %v5277, %v4989
      %v5379 = vmul.f32 %v5278, %v4990
      %v5380 = vmul.f32 %v5279, %v4991
      %v5381 = vmul.f32 %v5280, %v4992
      %v5382 = vmul.f32 %v5281, %v4993
      %v5383 = vmul.f32 %v5282, %v4994
      %v5384 = vmul.f32 %v5283, %v4995
      %v5385 = vmul.f32 %v5284, %v4996
      %v5386 = vmul.f32 %v5285, %v4997
      %v5387 = vmul.f32 %v5286, %v4998
      %v5388 = vmul.f32 %v5287, %v4999
      %v5389 = vmul.f32 %v5288, %v5000
      %v5390 = vmul.f32 %v5289, %v5001
      %v5391 = vmul.f32 %v5290, %v5002
      %v5392 = vmul.f32 %v5291, %v5003
      %v5393 = vmul.f32 %v5292, %v5004
      %v5394 = vmul.f32 %v5293, %v5005
      %v5395 = vmul.f32 %v5294, %v5006
      %v5396 = vmul.f32 %v5295, %v5007
      %v5397 = vmul.f32 %v5296, %v5008
      %v5398 = vmul.f32 %v5297, %v5009
      %v5399 = vmul.f32 %v5298, %v5010
      %v5400 = vmul.f32 %v5299, %v5011
      %v5401 = vmul.f32 %v5300, %v5012
      %v5402 = vmul.f32 %v5301, %v5013
      %v5403 = vmul.f32 %v5302, %v5014
      %v5404 = vmul.f32 %v5303, %v5015
      %v5405 = vmul.f32 %v5304, %v5016
      %v5406 = vmul.f32 %v5305, %v5017
      %v5407 = vmul.f32 %v5306, %v5018
      %v5408 = vmul.f32 %v5307, %v5019
      %v5409 = vmul.f32 %v5308, %v5020
      %v5410 = vmul.f32 %v5309, %v5021
      %v5411 = vmul.f32 %v5310, %v5022
      %v5412 = vmul.f32 %v5311, %v5023
      %v5413 = vmul.f32 %v5312, %v5024
      %v5414 = vmul.f32 %v5313, %v5025
      %v5415 = vmul.f32 %v5314, %v5026
      %v5416 = vmul.f32 %v5315, %v5027
      %v5417 = vmul.f32 %v5316, %v5028
      %v5418 = vmul.f32 %v5317, %v5029
      %v5419 = vmul.f32 %v5318, %v5030
      %v5420 = vmul.f32 %v5319, %v5031
      %v5421 = vmul.f32 %v5320, %v5032
      %v5422 = vmul.f32 %v5321, %v5033
      %v5423 = vadd.f32 %v5375, %v5376
      %v5424 = vadd.f32 %v5423, %v5377
      %v5425 = vadd.f32 %v5424, %v5378
      %v5426 = vadd.f32 %v5425, %v5379
      %v5427 = vadd.f32 %v5426, %v5380
      %v5428 = vadd.f32 %v5427, %v5381
      %v5429 = vadd.f32 %v5428, %v5382
      %v5430 = vadd.f32 %v5429, %v5383
      %v5431 = vadd.f32 %v5430, %v5384
      %v5432 = vadd.f32 %v5431, %v5385
      %v5433 = vadd.f32 %v5432, %v5386
      %v5434 = vadd.f32 %v5433, %v5387
      %v5435 = vadd.f32 %v5434, %v5388
      %v5436 = vadd.f32 %v5435, %v5389
      %v5437 = vadd.f32 %v5436, %v5390
      %v5438 = vadd.f32 %v5437, %v5391
      %v5439 = vadd.f32 %v5438, %v5392
      %v5440 = vadd.f32 %v5439, %v5393
      %v5441 = vadd.f32 %v5440, %v5394
      %v5442 = vadd.f32 %v5441, %v5395
      %v5443 = vadd.f32 %v5442, %v5396
      %v5444 = vadd.f32 %v5443, %v5397
      %v5445 = vadd.f32 %v5444, %v5398
      %v5446 = vadd.f32 %v5445, %v5399
      %v5447 = vadd.f32 %v5446, %v5400
      %v5448 = vadd.f32 %v5447, %v5401
      %v5449 = vadd.f32 %v5448, %v5402
      %v5450 = vadd.f32 %v5449, %v5403
      %v5451 = vadd.f32 %v5450, %v5404
      %v5452 = vadd.f32 %v5451, %v5405
      %v5453 = vadd.f32 %v5452, %v5406
      %v5454 = vadd.f32 %v5453, %v5407
      %v5455 = vadd.f32 %v5454, %v5408
      %v5456 = vadd.f32 %v5455, %v5409
      %v5457 = vadd.f32 %v5456, %v5410
      %v5458 = vadd.f32 %v5457, %v5411
      %v5459 = vadd.f32 %v5458, %v5412
      %v5460 = vadd.f32 %v5459, %v5413
      %v5461 = vadd.f32 %v5460, %v5414
      %v5462 = vadd.f32 %v5461, %v5415
      %v5463 = vadd.f32 %v5462, %v5416
      %v5464 = vadd.f32 %v5463, %v5417
      %v5465 = vadd.f32 %v5464, %v5418
      %v5466 = vadd.f32 %v5465, %v5419
      %v5467 = vadd.f32 %v5466, %v5420
      %v5468 = vadd.f32 %v5467, %v5421
      %v5469 = vadd.f32 %v5468, %v5422
      %v5470 = vrot.slane %v5469, 4
      %v5471 = vadd.f32 %v5469, %v5470
      %v5472 = vrot.slane %v5471, 2
      %v5473 = vadd.f32 %v5471, %v5472
      %v5474 = vrot.slane %v5473, 1
      %v5475 = vadd.f32 %v5473, %v5474
      %v5476 = vmul.f32 %v5374, 0.00390625
      %v5477 = vmul.f32 %v5475, 0.00390625
      %v5478 = vmul.f32 %v5476, %v5476
      %v5479 = vsub.f32 %v5477, %v5478
      %v5480 = vmax.f32 %v5479, 0.0
      %v5481 = vsub.f32 %v4986, %v5476
      %v5482 = vsub.f32 %v4987, %v5476
      %v5483 = vsub.f32 %v4988, %v5476
      %v5484 = vsub.f32 %v4989, %v5476
      %v5485 = vsub.f32 %v4990, %v5476
      %v5486 = vsub.f32 %v4991, %v5476
      %v5487 = vsub.f32 %v4992, %v5476
      %v5488 = vsub.f32 %v4993, %v5476
      %v5489 = vsub.f32 %v4994, %v5476
      %v5490 = vsub.f32 %v4995, %v5476
      %v5491 = vsub.f32 %v4996, %v5476
      %v5492 = vsub.f32 %v4997, %v5476
      %v5493 = vsub.f32 %v4998, %v5476
      %v5494 = vsub.f32 %v4999, %v5476
      %v5495 = vsub.f32 %v5000, %v5476
      %v5496 = vsub.f32 %v5001, %v5476
      %v5497 = vsub.f32 %v5002, %v5476
      %v5498 = vsub.f32 %v5003, %v5476
      %v5499 = vsub.f32 %v5004, %v5476
      %v5500 = vsub.f32 %v5005, %v5476
      %v5501 = vsub.f32 %v5006, %v5476
      %v5502 = vsub.f32 %v5007, %v5476
      %v5503 = vsub.f32 %v5008, %v5476
      %v5504 = vsub.f32 %v5009, %v5476
      %v5505 = vsub.f32 %v5010, %v5476
      %v5506 = vsub.f32 %v5011, %v5476
      %v5507 = vsub.f32 %v5012, %v5476
      %v5508 = vsub.f32 %v5013, %v5476
      %v5509 = vsub.f32 %v5014, %v5476
      %v5510 = vsub.f32 %v5015, %v5476
      %v5511 = vsub.f32 %v5016, %v5476
      %v5512 = vsub.f32 %v5017, %v5476
      %v5513 = vsub.f32 %v5018, %v5476
      %v5514 = vsub.f32 %v5019, %v5476
      %v5515 = vsub.f32 %v5020, %v5476
      %v5516 = vsub.f32 %v5021, %v5476
      %v5517 = vsub.f32 %v5022, %v5476
      %v5518 = vsub.f32 %v5023, %v5476
      %v5519 = vsub.f32 %v5024, %v5476
      %v5520 = vsub.f32 %v5025, %v5476
      %v5521 = vsub.f32 %v5026, %v5476
      %v5522 = vsub.f32 %v5027, %v5476
      %v5523 = vsub.f32 %v5028, %v5476
      %v5524 = vsub.f32 %v5029, %v5476
      %v5525 = vsub.f32 %v5030, %v5476
      %v5526 = vsub.f32 %v5031, %v5476
      %v5527 = vsub.f32 %v5032, %v5476
      %v5528 = vsub.f32 %v5033, %v5476
      %v5529 = vadd.f32 %v5480, 1e-05
      %v5530 = vrsqrt.pop %v5529
      %v5531 = vmul.f32 %v5481, %v5530
      %v5532 = vmul.f32 %v5482, %v5530
      %v5533 = vmul.f32 %v5483, %v5530
      %v5534 = vmul.f32 %v5484, %v5530
      %v5535 = vmul.f32 %v5485, %v5530
      %v5536 = vmul.f32 %v5486, %v5530
      %v5537 = vmul.f32 %v5487, %v5530
      %v5538 = vmul.f32 %v5488, %v5530
      %v5539 = vmul.f32 %v5489, %v5530
      %v5540 = vmul.f32 %v5490, %v5530
      %v5541 = vmul.f32 %v5491, %v5530
      %v5542 = vmul.f32 %v5492, %v5530
      %v5543 = vmul.f32 %v5493, %v5530
      %v5544 = vmul.f32 %v5494, %v5530
      %v5545 = vmul.f32 %v5495, %v5530
      %v5546 = vmul.f32 %v5496, %v5530
      %v5547 = vmul.f32 %v5497, %v5530
      %v5548 = vmul.f32 %v5498, %v5530
      %v5549 = vmul.f32 %v5499, %v5530
      %v5550 = vmul.f32 %v5500, %v5530
      %v5551 = vmul.f32 %v5501, %v5530
      %v5552 = vmul.f32 %v5502, %v5530
      %v5553 = vmul.f32 %v5503, %v5530
      %v5554 = vmul.f32 %v5504, %v5530
      %v5555 = vmul.f32 %v5505, %v5530
      %v5556 = vmul.f32 %v5506, %v5530
      %v5557 = vmul.f32 %v5507, %v5530
      %v5558 = vmul.f32 %v5508, %v5530
      %v5559 = vmul.f32 %v5509, %v5530
      %v5560 = vmul.f32 %v5510, %v5530
      %v5561 = vmul.f32 %v5511, %v5530
      %v5562 = vmul.f32 %v5512, %v5530
      %v5563 = vmul.f32 %v5513, %v5530
      %v5564 = vmul.f32 %v5514, %v5530
      %v5565 = vmul.f32 %v5515, %v5530
      %v5566 = vmul.f32 %v5516, %v5530
      %v5567 = vmul.f32 %v5517, %v5530
      %v5568 = vmul.f32 %v5518, %v5530
      %v5569 = vmul.f32 %v5519, %v5530
      %v5570 = vmul.f32 %v5520, %v5530
      %v5571 = vmul.f32 %v5521, %v5530
      %v5572 = vmul.f32 %v5522, %v5530
      %v5573 = vmul.f32 %v5523, %v5530
      %v5574 = vmul.f32 %v5524, %v5530
      %v5575 = vmul.f32 %v5525, %v5530
      %v5576 = vmul.f32 %v5526, %v5530
      %v5577 = vmul.f32 %v5527, %v5530
      %v5578 = vmul.f32 %v5528, %v5530
      %v5579 = vmax.f32 %v5531, 0.0
      %v5580 = vmax.f32 %v5532, 0.0
      %v5581 = vmax.f32 %v5533, 0.0
      %v5582 = vmax.f32 %v5534, 0.0
      %v5583 = vmax.f32 %v5535, 0.0
      %v5584 = vmax.f32 %v5536, 0.0
      %v5585 = vmax.f32 %v5537, 0.0
      %v5586 = vmax.f32 %v5538, 0.0
      %v5587 = vmax.f32 %v5539, 0.0
      %v5588 = vmax.f32 %v5540, 0.0
      %v5589 = vmax.f32 %v5541, 0.0
      %v5590 = vmax.f32 %v5542, 0.0
      %v5591 = vmax.f32 %v5543, 0.0
      %v5592 = vmax.f32 %v5544, 0.0
      %v5593 = vmax.f32 %v5545, 0.0
      %v5594 = vmax.f32 %v5546, 0.0
      %v5595 = vmax.f32 %v5547, 0.0
      %v5596 = vmax.f32 %v5548, 0.0
      %v5597 = vmax.f32 %v5549, 0.0
      %v5598 = vmax.f32 %v5550, 0.0
      %v5599 = vmax.f32 %v5551, 0.0
      %v5600 = vmax.f32 %v5552, 0.0
      %v5601 = vmax.f32 %v5553, 0.0
      %v5602 = vmax.f32 %v5554, 0.0
      %v5603 = vmax.f32 %v5555, 0.0
      %v5604 = vmax.f32 %v5556, 0.0
      %v5605 = vmax.f32 %v5557, 0.0
      %v5606 = vmax.f32 %v5558, 0.0
      %v5607 = vmax.f32 %v5559, 0.0
      %v5608 = vmax.f32 %v5560, 0.0
      %v5609 = vmax.f32 %v5561, 0.0
      %v5610 = vmax.f32 %v5562, 0.0
      %v5611 = vmax.f32 %v5563, 0.0
      %v5612 = vmax.f32 %v5564, 0.0
      %v5613 = vmax.f32 %v5565, 0.0
      %v5614 = vmax.f32 %v5566, 0.0
      %v5615 = vmax.f32 %v5567, 0.0
      %v5616 = vmax.f32 %v5568, 0.0
      %v5617 = vmax.f32 %v5569, 0.0
      %v5618 = vmax.f32 %v5570, 0.0
      %v5619 = vmax.f32 %v5571, 0.0
      %v5620 = vmax.f32 %v5572, 0.0
      %v5621 = vmax.f32 %v5573, 0.0
      %v5622 = vmax.f32 %v5574, 0.0
      %v5623 = vmax.f32 %v5575, 0.0
      %v5624 = vmax.f32 %v5576, 0.0
      %v5625 = vmax.f32 %v5577, 0.0
      %v5626 = vmax.f32 %v5578, 0.0
      %v5627 = vrot.slane %v5579, 6
      %v5628 = vrot.slane %v5580, 6
      %v5629 = vrot.slane %v5581, 6
      %v5630 = vrot.slane %v5582, 6
      %v5631 = vrot.slane %v5583, 6
      %v5632 = vrot.slane %v5584, 6
      %v5633 = vrot.slane %v5585, 6
      %v5634 = vrot.slane %v5586, 6
      %v5635 = vrot.slane %v5587, 6
      %v5636 = vrot.slane %v5588, 6
      %v5637 = vrot.slane %v5589, 6
      %v5638 = vrot.slane %v5590, 6
      %v5639 = vrot.slane %v5591, 6
      %v5640 = vrot.slane %v5592, 6
      %v5641 = vrot.slane %v5593, 6
      %v5642 = vrot.slane %v5594, 6
      %v5643 = vrot.slane %v5595, 6
      %v5644 = vrot.slane %v5596, 6
      %v5645 = vrot.slane %v5597, 6
      %v5646 = vrot.slane %v5598, 6
      %v5647 = vrot.slane %v5599, 6
      %v5648 = vrot.slane %v5600, 6
      %v5649 = vrot.slane %v5601, 6
      %v5650 = vrot.slane %v5602, 6
      %v5651 = vrot.slane %v5603, 6
      %v5652 = vrot.slane %v5604, 6
      %v5653 = vrot.slane %v5605, 6
      %v5654 = vrot.slane %v5606, 6
      %v5655 = vrot.slane %v5607, 6
      %v5656 = vrot.slane %v5608, 6
      %v5657 = vrot.slane %v5609, 6
      %v5658 = vrot.slane %v5610, 6
      %v5659 = vrot.slane %v5611, 6
      %v5660 = vrot.slane %v5612, 6
      %v5661 = vrot.slane %v5613, 6
      %v5662 = vrot.slane %v5614, 6
      %v5663 = vrot.slane %v5615, 6
      %v5664 = vrot.slane %v5616, 6
      %v5665 = vrot.slane %v5617, 6
      %v5666 = vrot.slane %v5618, 6
      %v5667 = vrot.slane %v5619, 6
      %v5668 = vrot.slane %v5620, 6
      %v5669 = vrot.slane %v5621, 6
      %v5670 = vrot.slane %v5622, 6
      %v5671 = vrot.slane %v5623, 6
      %v5672 = vrot.slane %v5624, 6
      %v5673 = vrot.slane %v5625, 6
      %v5674 = vrot.slane %v5626, 6
      %v5675 = vsel %vm590, %v5673, %v5674
      %v5676 = vsel %vm590, %v5672, %v5673
      %v5677 = vsel %vm590, %v5671, %v5672
      %v5678 = vsel %vm590, %v5670, %v5671
      %v5679 = vsel %vm590, %v5669, %v5670
      %v5680 = vsel %vm590, %v5668, %v5669
      %v5681 = vsel %vm590, %v5667, %v5668
      %v5682 = vsel %vm590, %v5666, %v5667
      %v5683 = vsel %vm590, %v5665, %v5666
      %v5684 = vsel %vm590, %v5664, %v5665
      %v5685 = vsel %vm590, %v5663, %v5664
      %v5686 = vsel %vm590, %v5662, %v5663
      %v5687 = vsel %vm590, %v5661, %v5662
      %v5688 = vsel %vm590, %v5660, %v5661
      %v5689 = vsel %vm590, %v5659, %v5660
      %v5690 = vsel %vm590, %v5658, %v5659
      %v5691 = vsel %vm590, %v5657, %v5658
      %v5692 = vsel %vm590, %v5656, %v5657
      %v5693 = vsel %vm590, %v5655, %v5656
      %v5694 = vsel %vm590, %v5654, %v5655
      %v5695 = vsel %vm590, %v5653, %v5654
      %v5696 = vsel %vm590, %v5652, %v5653
      %v5697 = vsel %vm590, %v5651, %v5652
      %v5698 = vsel %vm590, %v5650, %v5651
      %v5699 = vsel %vm590, %v5649, %v5650
      %v5700 = vsel %vm590, %v5648, %v5649
      %v5701 = vsel %vm590, %v5647, %v5648
      %v5702 = vsel %vm590, %v5646, %v5647
      %v5703 = vsel %vm590, %v5645, %v5646
      %v5704 = vsel %vm590, %v5644, %v5645
      %v5705 = vsel %vm590, %v5643, %v5644
      %v5706 = vsel %vm590, %v5642, %v5643
      %v5707 = vsel %vm590, %v5641, %v5642
      %v5708 = vsel %vm590, %v5640, %v5641
      %v5709 = vsel %vm590, %v5639, %v5640
      %v5710 = vsel %vm590, %v5638, %v5639
      %v5711 = vsel %vm590, %v5637, %v5638
      %v5712 = vsel %vm590, %v5636, %v5637
      %v5713 = vsel %vm590, %v5635, %v5636
      %v5714 = vsel %vm590, %v5634, %v5635
      %v5715 = vsel %vm590, %v5633, %v5634
      %v5716 = vsel %vm590, %v5632, %v5633
      %v5717 = vsel %vm590, %v5631, %v5632
      %v5718 = vsel %vm590, %v5630, %v5631
      %v5719 = vsel %vm590, %v5629, %v5630
      %v5720 = vsel %vm590, %v5628, %v5629
      %v5721 = vsel %vm590, %v5627, %v5628
      %v5722 = vsel %vm590, %v5674, %v5627
      %v5723 = vrot.slane %v5579, 2
      %v5724 = vrot.slane %v5580, 2
      %v5725 = vrot.slane %v5581, 2
      %v5726 = vrot.slane %v5582, 2
      %v5727 = vrot.slane %v5583, 2
      %v5728 = vrot.slane %v5584, 2
      %v5729 = vrot.slane %v5585, 2
      %v5730 = vrot.slane %v5586, 2
      %v5731 = vrot.slane %v5587, 2
      %v5732 = vrot.slane %v5588, 2
      %v5733 = vrot.slane %v5589, 2
      %v5734 = vrot.slane %v5590, 2
      %v5735 = vrot.slane %v5591, 2
      %v5736 = vrot.slane %v5592, 2
      %v5737 = vrot.slane %v5593, 2
      %v5738 = vrot.slane %v5594, 2
      %v5739 = vrot.slane %v5595, 2
      %v5740 = vrot.slane %v5596, 2
      %v5741 = vrot.slane %v5597, 2
      %v5742 = vrot.slane %v5598, 2
      %v5743 = vrot.slane %v5599, 2
      %v5744 = vrot.slane %v5600, 2
      %v5745 = vrot.slane %v5601, 2
      %v5746 = vrot.slane %v5602, 2
      %v5747 = vrot.slane %v5603, 2
      %v5748 = vrot.slane %v5604, 2
      %v5749 = vrot.slane %v5605, 2
      %v5750 = vrot.slane %v5606, 2
      %v5751 = vrot.slane %v5607, 2
      %v5752 = vrot.slane %v5608, 2
      %v5753 = vrot.slane %v5609, 2
      %v5754 = vrot.slane %v5610, 2
      %v5755 = vrot.slane %v5611, 2
      %v5756 = vrot.slane %v5612, 2
      %v5757 = vrot.slane %v5613, 2
      %v5758 = vrot.slane %v5614, 2
      %v5759 = vrot.slane %v5615, 2
      %v5760 = vrot.slane %v5616, 2
      %v5761 = vrot.slane %v5617, 2
      %v5762 = vrot.slane %v5618, 2
      %v5763 = vrot.slane %v5619, 2
      %v5764 = vrot.slane %v5620, 2
      %v5765 = vrot.slane %v5621, 2
      %v5766 = vrot.slane %v5622, 2
      %v5767 = vrot.slane %v5623, 2
      %v5768 = vrot.slane %v5624, 2
      %v5769 = vrot.slane %v5625, 2
      %v5770 = vrot.slane %v5626, 2
      %v5771 = vsel %vm687, %v5769, %v5770
      %v5772 = vsel %vm687, %v5768, %v5769
      %v5773 = vsel %vm687, %v5767, %v5768
      %v5774 = vsel %vm687, %v5766, %v5767
      %v5775 = vsel %vm687, %v5765, %v5766
      %v5776 = vsel %vm687, %v5764, %v5765
      %v5777 = vsel %vm687, %v5763, %v5764
      %v5778 = vsel %vm687, %v5762, %v5763
      %v5779 = vsel %vm687, %v5761, %v5762
      %v5780 = vsel %vm687, %v5760, %v5761
      %v5781 = vsel %vm687, %v5759, %v5760
      %v5782 = vsel %vm687, %v5758, %v5759
      %v5783 = vsel %vm687, %v5757, %v5758
      %v5784 = vsel %vm687, %v5756, %v5757
      %v5785 = vsel %vm687, %v5755, %v5756
      %v5786 = vsel %vm687, %v5754, %v5755
      %v5787 = vsel %vm687, %v5753, %v5754
      %v5788 = vsel %vm687, %v5752, %v5753
      %v5789 = vsel %vm687, %v5751, %v5752
      %v5790 = vsel %vm687, %v5750, %v5751
      %v5791 = vsel %vm687, %v5749, %v5750
      %v5792 = vsel %vm687, %v5748, %v5749
      %v5793 = vsel %vm687, %v5747, %v5748
      %v5794 = vsel %vm687, %v5746, %v5747
      %v5795 = vsel %vm687, %v5745, %v5746
      %v5796 = vsel %vm687, %v5744, %v5745
      %v5797 = vsel %vm687, %v5743, %v5744
      %v5798 = vsel %vm687, %v5742, %v5743
      %v5799 = vsel %vm687, %v5741, %v5742
      %v5800 = vsel %vm687, %v5740, %v5741
      %v5801 = vsel %vm687, %v5739, %v5740
      %v5802 = vsel %vm687, %v5738, %v5739
      %v5803 = vsel %vm687, %v5737, %v5738
      %v5804 = vsel %vm687, %v5736, %v5737
      %v5805 = vsel %vm687, %v5735, %v5736
      %v5806 = vsel %vm687, %v5734, %v5735
      %v5807 = vsel %vm687, %v5733, %v5734
      %v5808 = vsel %vm687, %v5732, %v5733
      %v5809 = vsel %vm687, %v5731, %v5732
      %v5810 = vsel %vm687, %v5730, %v5731
      %v5811 = vsel %vm687, %v5729, %v5730
      %v5812 = vsel %vm687, %v5728, %v5729
      %v5813 = vsel %vm687, %v5727, %v5728
      %v5814 = vsel %vm687, %v5726, %v5727
      %v5815 = vsel %vm687, %v5725, %v5726
      %v5816 = vsel %vm687, %v5724, %v5725
      %v5817 = vsel %vm687, %v5723, %v5724
      %v5818 = vsel %vm687, %v5770, %v5723
      %v5819 = vsel %vm928, %v5722, %v5579
      %v5820 = vsel %vm929, %v5721, %v5580
      %v5821 = vsel %vm930, %v5720, %v5581
      %v5822 = vsel %vm931, %v5719, %v5582
      %v5823 = vsel %vm932, %v5718, %v5583
      %v5824 = vsel %vm933, %v5717, %v5584
      %v5825 = vsel %vm934, %v5716, %v5585
      %v5826 = vsel %vm935, %v5715, %v5586
      %v5827 = vsel %vm936, %v5714, %v5587
      %v5828 = vsel %vm937, %v5713, %v5588
      %v5829 = vsel %vm938, %v5712, %v5589
      %v5830 = vsel %vm939, %v5711, %v5590
      %v5831 = vsel %vm940, %v5710, %v5591
      %v5832 = vsel %vm941, %v5709, %v5592
      %v5833 = vsel %vm942, %v5708, %v5593
      %v5834 = vsel %vm943, %v5707, %v5594
      %v5835 = vsel %vm944, %v5706, %v5595
      %v5836 = vsel %vm945, %v5705, %v5596
      %v5837 = vsel %vm946, %v5704, %v5597
      %v5838 = vsel %vm947, %v5703, %v5598
      %v5839 = vsel %vm948, %v5702, %v5599
      %v5840 = vsel %vm949, %v5701, %v5600
      %v5841 = vsel %vm950, %v5700, %v5601
      %v5842 = vsel %vm951, %v5699, %v5602
      %v5843 = vsel %vm952, %v5698, %v5603
      %v5844 = vsel %vm953, %v5697, %v5604
      %v5845 = vsel %vm954, %v5696, %v5605
      %v5846 = vsel %vm955, %v5695, %v5606
      %v5847 = vsel %vm956, %v5694, %v5607
      %v5848 = vsel %vm957, %v5693, %v5608
      %v5849 = vsel %vm958, %v5692, %v5609
      %v5850 = vsel %vm959, %v5691, %v5610
      %v5851 = vsel %vm960, %v5690, %v5611
      %v5852 = vsel %vm961, %v5689, %v5612
      %v5853 = vsel %vm962, %v5688, %v5613
      %v5854 = vsel %vm963, %v5687, %v5614
      %v5855 = vsel %vm964, %v5686, %v5615
      %v5856 = vsel %vm965, %v5685, %v5616
      %v5857 = vsel %vm966, %v5684, %v5617
      %v5858 = vsel %vm967, %v5683, %v5618
      %v5859 = vsel %vm968, %v5682, %v5619
      %v5860 = vsel %vm969, %v5681, %v5620
      %v5861 = vsel %vm970, %v5680, %v5621
      %v5862 = vsel %vm971, %v5679, %v5622
      %v5863 = vsel %vm972, %v5678, %v5623
      %v5864 = vsel %vm973, %v5677, %v5624
      %v5865 = vsel %vm974, %v5676, %v5625
      %v5866 = vsel %vm975, %v5675, %v5626
      %v5867 = vsel %vm1216, %v5817, %v5819
      %v5868 = vsel %vm1217, %v5816, %v5820
      %v5869 = vsel %vm1218, %v5815, %v5821
      %v5870 = vsel %vm1219, %v5814, %v5822
      %v5871 = vsel %vm1220, %v5813, %v5823
      %v5872 = vsel %vm1221, %v5812, %v5824
      %v5873 = vsel %vm1222, %v5811, %v5825
      %v5874 = vsel %vm1223, %v5810, %v5826
      %v5875 = vsel %vm1224, %v5809, %v5827
      %v5876 = vsel %vm1225, %v5808, %v5828
      %v5877 = vsel %vm1226, %v5807, %v5829
      %v5878 = vsel %vm1227, %v5806, %v5830
      %v5879 = vsel %vm1228, %v5805, %v5831
      %v5880 = vsel %vm1229, %v5804, %v5832
      %v5881 = vsel %vm1230, %v5803, %v5833
      %v5882 = vsel %vm1231, %v5802, %v5834
      %v5883 = vsel %vm1232, %v5801, %v5835
      %v5884 = vsel %vm1233, %v5800, %v5836
      %v5885 = vsel %vm1234, %v5799, %v5837
      %v5886 = vsel %vm1235, %v5798, %v5838
      %v5887 = vsel %vm1236, %v5797, %v5839
      %v5888 = vsel %vm1237, %v5796, %v5840
      %v5889 = vsel %vm1238, %v5795, %v5841
      %v5890 = vsel %vm1239, %v5794, %v5842
      %v5891 = vsel %vm1240, %v5793, %v5843
      %v5892 = vsel %vm1241, %v5792, %v5844
      %v5893 = vsel %vm1242, %v5791, %v5845
      %v5894 = vsel %vm1243, %v5790, %v5846
      %v5895 = vsel %vm1244, %v5789, %v5847
      %v5896 = vsel %vm1245, %v5788, %v5848
      %v5897 = vsel %vm1246, %v5787, %v5849
      %v5898 = vsel %vm1247, %v5786, %v5850
      %v5899 = vsel %vm1248, %v5785, %v5851
      %v5900 = vsel %vm1249, %v5784, %v5852
      %v5901 = vsel %vm1250, %v5783, %v5853
      %v5902 = vsel %vm1251, %v5782, %v5854
      %v5903 = vsel %vm1252, %v5781, %v5855
      %v5904 = vsel %vm1253, %v5780, %v5856
      %v5905 = vsel %vm1254, %v5779, %v5857
      %v5906 = vsel %vm1255, %v5778, %v5858
      %v5907 = vsel %vm1256, %v5777, %v5859
      %v5908 = vsel %vm1257, %v5776, %v5860
      %v5909 = vsel %vm1258, %v5775, %v5861
      %v5910 = vsel %vm1259, %v5774, %v5862
      %v5911 = vsel %vm1260, %v5773, %v5863
      %v5912 = vsel %vm1261, %v5772, %v5864
      %v5913 = vsel %vm1262, %v5771, %v5865
      %v5914 = vsel %vm1263, %v5818, %v5866
      %5915 = vst [vmem:[#allocation2 + $0x30] sm:$0xff] %v5867
      %5916 = vst [vmem:[#allocation2 + $0x38] sm:$0xff] %v5868
      %5917 = vst [vmem:[#allocation2 + $0x40] sm:$0xff] %v5869
      %5918 = vst [vmem:[#allocation2 + $0x48] sm:$0xff] %v5870
      %5919 = vst [vmem:[#allocation2 + $0x50] sm:$0xff] %v5871
      %5920 = vst [vmem:[#allocation2 + $0x58] sm:$0xff] %v5872
      %5921 = vst [vmem:[#allocation2 + $0x60] sm:$0xff] %v5873
      %5922 = vst [vmem:[#allocation2 + $0x68] sm:$0xff] %v5874
      %5923 = vst [vmem:[#allocation2 + $0x70] sm:$0xff] %v5875
      %5924 = vst [vmem:[#allocation2 + $0x78] sm:$0xff] %v5876
      %5925 = vst [vmem:[#allocation2 + $0x80] sm:$0xff] %v5877
      %5926 = vst [vmem:[#allocation2 + $0x88] sm:$0xff] %v5878
      %5927 = vst [vmem:[#allocation2 + $0x90] sm:$0xff] %v5879
      %5928 = vst [vmem:[#allocation2 + $0x98] sm:$0xff] %v5880
      %5929 = vst [vmem:[#allocation2 + $0xa0] sm:$0xff] %v5881
      %5930 = vst [vmem:[#allocation2 + $0xa8] sm:$0xff] %v5882
      %5931 = vst [vmem:[#allocation2 + $0xb0] sm:$0xff] %v5883
      %5932 = vst [vmem:[#allocation2 + $0xb8] sm:$0xff] %v5884
      %5933 = vst [vmem:[#allocation2 + $0xc0] sm:$0xff] %v5885
      %5934 = vst [vmem:[#allocation2 + $0xc8] sm:$0xff] %v5886
      %5935 = vst [vmem:[#allocation2 + $0xd0] sm:$0xff] %v5887
      %5936 = vst [vmem:[#allocation2 + $0xd8] sm:$0xff] %v5888
      %5937 = vst [vmem:[#allocation2 + $0xe0] sm:$0xff] %v5889
      %5938 = vst [vmem:[#allocation2 + $0xe8] sm:$0xff] %v5890
      %5939 = vst [vmem:[#allocation2 + $0xf0] sm:$0xff] %v5891
      %5940 = vst [vmem:[#allocation2 + $0xf8] sm:$0xff] %v5892
      %5941 = vst [vmem:[#allocation2 + $0x100] sm:$0xff] %v5893
      %5942 = vst [vmem:[#allocation2 + $0x108] sm:$0xff] %v5894
      %5943 = vst [vmem:[#allocation2 + $0x110] sm:$0xff] %v5895
      %5944 = vst [vmem:[#allocation2 + $0x118] sm:$0xff] %v5896
      %5945 = vst [vmem:[#allocation2 + $0x120] sm:$0xff] %v5897
      %5946 = vst [vmem:[#allocation2 + $0x128] sm:$0xff] %v5898
      %5947 = vst [vmem:[#allocation2 + $0x130] sm:$0xff] %v5899
      %5948 = vst [vmem:[#allocation2 + $0x138] sm:$0xff] %v5900
      %5949 = vst [vmem:[#allocation2 + $0x140] sm:$0xff] %v5901
      %5950 = vst [vmem:[#allocation2 + $0x148] sm:$0xff] %v5902
      %5951 = vst [vmem:[#allocation2 + $0x150] sm:$0xff] %v5903
      %5952 = vst [vmem:[#allocation2 + $0x158] sm:$0xff] %v5904
      %5953 = vst [vmem:[#allocation2 + $0x160] sm:$0xff] %v5905
      %5954 = vst [vmem:[#allocation2 + $0x168] sm:$0xff] %v5906
      %5955 = vst [vmem:[#allocation2 + $0x170] sm:$0xff] %v5907
      %5956 = vst [vmem:[#allocation2 + $0x178] sm:$0xff] %v5908
      %5957 = vst [vmem:[#allocation2 + $0x180] sm:$0xff] %v5909
      %5958 = vst [vmem:[#allocation2 + $0x188] sm:$0xff] %v5910
      %5959 = vst [vmem:[#allocation2 + $0x190] sm:$0xff] %v5911
      %5960 = vst [vmem:[#allocation2 + $0x198] sm:$0xff] %v5912
      %5961 = vst [vmem:[#allocation2 + $0x1a0] sm:$0xff] %v5913
      %5962 = vst [vmem:[#allocation2 + $0x1a8] sm:$0xff] %v5914
      %5963 = vst [vmem:[#allocation2 + $0x18] sm:$0xff] %v5870
      %5964 = vst [vmem:[#allocation2 + $0x20] sm:$0xff] %v5871
      %5965 = vst [vmem:[#allocation2 + $0x28] sm:$0xff] %v5872
      %5966 = vst [vmem:[#allocation2 + $0x1b0] sm:$0xff] %v5909
      %5967 = vst [vmem:[#allocation2 + $0x1b8] sm:$0xff] %v5910
      %5968 = vst [vmem:[#allocation2 + $0x1c0] sm:$0xff] %v5911
      %5969 = vst [vmem:[#allocation2 + $0x16] sm:$0x2] %v5582
      %5970 = vst [vmem:[#allocation2 + $0x2e] sm:$0x2] %v5579
      %5971 = vst [vmem:[#allocation2 + $0x1ae] sm:$0x2] %v5621
      %v5972 = vld [vmem:[#allocation2 + $0x17] sm:$0xff]
      %v5973 = vld [vmem:[#allocation2 + $0x1f] sm:$0xff]
      %v5974 = vld [vmem:[#allocation2 + $0x27] sm:$0xff]
      %v5975 = vld [vmem:[#allocation2 + $0x2f] sm:$0xff]
      %v5976 = vld [vmem:[#allocation2 + $0x37] sm:$0xff]
      %v5977 = vld [vmem:[#allocation2 + $0x3f] sm:$0xff]
      %v5978 = vld [vmem:[#allocation2 + $0x47] sm:$0xff]
      %v5979 = vld [vmem:[#allocation2 + $0x4f] sm:$0xff]
      %v5980 = vld [vmem:[#allocation2 + $0x57] sm:$0xff]
      %v5981 = vld [vmem:[#allocation2 + $0x5f] sm:$0xff]
      %v5982 = vld [vmem:[#allocation2 + $0x67] sm:$0xff]
      %v5983 = vld [vmem:[#allocation2 + $0x6f] sm:$0xff]
      %v5984 = vld [vmem:[#allocation2 + $0x77] sm:$0xff]
      %v5985 = vld [vmem:[#allocation2 + $0x7f] sm:$0xff]
      %v5986 = vld [vmem:[#allocation2 + $0x87] sm:$0xff]
      %v5987 = vld [vmem:[#allocation2 + $0x8f] sm:$0xff]
      %v5988 = vld [vmem:[#allocation2 + $0x97] sm:$0xff]
      %v5989 = vld [vmem:[#allocation2 + $0x9f] sm:$0xff]
      %v5990 = vld [vmem:[#allocation2 + $0xa7] sm:$0xff]
      %v5991 = vld [vmem:[#allocation2 + $0xaf] sm:$0xff]
      %v5992 = vld [vmem:[#allocation2 + $0xb7] sm:$0xff]
      %v5993 = vld [vmem:[#allocation2 + $0xbf] sm:$0xff]
      %v5994 = vld [vmem:[#allocation2 + $0xc7] sm:$0xff]
      %v5995 = vld [vmem:[#allocation2 + $0xcf] sm:$0xff]
      %v5996 = vld [vmem:[#allocation2 + $0xd7] sm:$0xff]
      %v5997 = vld [vmem:[#allocation2 + $0xdf] sm:$0xff]
      %v5998 = vld [vmem:[#allocation2 + $0xe7] sm:$0xff]
      %v5999 = vld [vmem:[#allocation2 + $0xef] sm:$0xff]
      %v6000 = vld [vmem:[#allocation2 + $0xf7] sm:$0xff]
      %v6001 = vld [vmem:[#allocation2 + $0xff] sm:$0xff]
      %v6002 = vld [vmem:[#allocation2 + $0x107] sm:$0xff]
      %v6003 = vld [vmem:[#allocation2 + $0x10f] sm:$0xff]
      %v6004 = vld [vmem:[#allocation2 + $0x117] sm:$0xff]
      %v6005 = vld [vmem:[#allocation2 + $0x11f] sm:$0xff]
      %v6006 = vld [vmem:[#allocation2 + $0x127] sm:$0xff]
      %v6007 = vld [vmem:[#allocation2 + $0x12f] sm:$0xff]
      %v6008 = vld [vmem:[#allocation2 + $0x137] sm:$0xff]
      %v6009 = vld [vmem:[#allocation2 + $0x13f] sm:$0xff]
      %v6010 = vld [vmem:[#allocation2 + $0x147] sm:$0xff]
      %v6011 = vld [vmem:[#allocation2 + $0x14f] sm:$0xff]
      %v6012 = vld [vmem:[#allocation2 + $0x157] sm:$0xff]
      %v6013 = vld [vmem:[#allocation2 + $0x15f] sm:$0xff]
      %v6014 = vld [vmem:[#allocation2 + $0x167] sm:$0xff]
      %v6015 = vld [vmem:[#allocation2 + $0x16f] sm:$0xff]
      %v6016 = vld [vmem:[#allocation2 + $0x177] sm:$0xff]
      %v6017 = vld [vmem:[#allocation2 + $0x17f] sm:$0xff]
      %v6018 = vld [vmem:[#allocation2 + $0x187] sm:$0xff]
      %v6019 = vld [vmem:[#allocation2 + $0x18f] sm:$0xff]
      %v6020 = vld [vmem:[%s3] sm:$0xff]
      %v6021 = vld [vmem:[%s3 + $0x8] sm:$0xff]
      %v6022 = vld [vmem:[%s3 + $0x10] sm:$0xff]
      %v6023 = vld [vmem:[%s3 + $0x18] sm:$0xff]
      %v6024 = vld [vmem:[%s3 + $0x20] sm:$0xff]
      %v6025 = vld [vmem:[%s3 + $0x28] sm:$0xff]
      %v6026 = vld [vmem:[%s3 + $0x30] sm:$0xff]
      %v6027 = vld [vmem:[%s3 + $0x38] sm:$0xff]
      %v6028 = vld [vmem:[%s3 + $0x40] sm:$0xff]
      %v6029 = vld [vmem:[%s3 + $0x48] sm:$0xff]
      %v6030 = vld [vmem:[%s3 + $0x50] sm:$0xff]
      %v6031 = vld [vmem:[%s3 + $0x58] sm:$0xff]
      %v6032 = vld [vmem:[%s3 + $0x60] sm:$0xff]
      %v6033 = vld [vmem:[%s3 + $0x68] sm:$0xff]
      %v6034 = vld [vmem:[%s3 + $0x70] sm:$0xff]
      %v6035 = vld [vmem:[%s3 + $0x78] sm:$0xff]
      %v6036 = vld [vmem:[#allocation2 + $0x18] sm:$0xff]
      %v6037 = vld [vmem:[#allocation2 + $0x20] sm:$0xff]
      %v6038 = vld [vmem:[#allocation2 + $0x28] sm:$0xff]
      %v6039 = vld [vmem:[#allocation2 + $0x30] sm:$0xff]
      %v6040 = vld [vmem:[#allocation2 + $0x38] sm:$0xff]
      %v6041 = vld [vmem:[#allocation2 + $0x40] sm:$0xff]
      %v6042 = vld [vmem:[#allocation2 + $0x48] sm:$0xff]
      %v6043 = vld [vmem:[#allocation2 + $0x50] sm:$0xff]
      %v6044 = vld [vmem:[#allocation2 + $0x58] sm:$0xff]
      %v6045 = vld [vmem:[#allocation2 + $0x60] sm:$0xff]
      %v6046 = vld [vmem:[#allocation2 + $0x68] sm:$0xff]
      %v6047 = vld [vmem:[#allocation2 + $0x70] sm:$0xff]
      %v6048 = vld [vmem:[#allocation2 + $0x78] sm:$0xff]
      %v6049 = vld [vmem:[#allocation2 + $0x80] sm:$0xff]
      %v6050 = vld [vmem:[#allocation2 + $0x88] sm:$0xff]
      %v6051 = vld [vmem:[#allocation2 + $0x90] sm:$0xff]
      %v6052 = vld [vmem:[#allocation2 + $0x98] sm:$0xff]
      %v6053 = vld [vmem:[#allocation2 + $0xa0] sm:$0xff]
      %v6054 = vld [vmem:[#allocation2 + $0xa8] sm:$0xff]
      %v6055 = vld [vmem:[#allocation2 + $0xb0] sm:$0xff]
      %v6056 = vld [vmem:[#allocation2 + $0xb8] sm:$0xff]
      %v6057 = vld [vmem:[#allocation2 + $0xc0] sm:$0xff]
      %v6058 = vld [vmem:[#allocation2 + $0xc8] sm:$0xff]
      %v6059 = vld [vmem:[#allocation2 + $0xd0] sm:$0xff]
      %v6060 = vld [vmem:[#allocation2 + $0xd8] sm:$0xff]
      %v6061 = vld [vmem:[#allocation2 + $0xe0] sm:$0xff]
      %v6062 = vld [vmem:[#allocation2 + $0xe8] sm:$0xff]
      %v6063 = vld [vmem:[#allocation2 + $0xf0] sm:$0xff]
      %v6064 = vld [vmem:[#allocation2 + $0xf8] sm:$0xff]
      %v6065 = vld [vmem:[#allocation2 + $0x100] sm:$0xff]
      %v6066 = vld [vmem:[#allocation2 + $0x108] sm:$0xff]
      %v6067 = vld [vmem:[#allocation2 + $0x110] sm:$0xff]
      %v6068 = vld [vmem:[#allocation2 + $0x118] sm:$0xff]
      %v6069 = vld [vmem:[#allocation2 + $0x120] sm:$0xff]
      %v6070 = vld [vmem:[#allocation2 + $0x128] sm:$0xff]
      %v6071 = vld [vmem:[#allocation2 + $0x130] sm:$0xff]
      %v6072 = vld [vmem:[#allocation2 + $0x138] sm:$0xff]
      %v6073 = vld [vmem:[#allocation2 + $0x140] sm:$0xff]
      %v6074 = vld [vmem:[#allocation2 + $0x148] sm:$0xff]
      %v6075 = vld [vmem:[#allocation2 + $0x150] sm:$0xff]
      %v6076 = vld [vmem:[#allocation2 + $0x158] sm:$0xff]
      %v6077 = vld [vmem:[#allocation2 + $0x160] sm:$0xff]
      %v6078 = vld [vmem:[#allocation2 + $0x168] sm:$0xff]
      %v6079 = vld [vmem:[#allocation2 + $0x170] sm:$0xff]
      %v6080 = vld [vmem:[#allocation2 + $0x178] sm:$0xff]
      %v6081 = vld [vmem:[#allocation2 + $0x180] sm:$0xff]
      %v6082 = vld [vmem:[#allocation2 + $0x188] sm:$0xff]
      %v6083 = vld [vmem:[#allocation2 + $0x190] sm:$0xff]
      %s6084 = scalar_lea.vmem %s3, 128
      %v6085 = vld [vmem:[%s6084] sm:$0xff]
      %v6086 = vld [vmem:[%s6084 + $0x8] sm:$0xff]
      %v6087 = vld [vmem:[%s6084 + $0x10] sm:$0xff]
      %v6088 = vld [vmem:[%s6084 + $0x18] sm:$0xff]
      %v6089 = vld [vmem:[%s6084 + $0x20] sm:$0xff]
      %v6090 = vld [vmem:[%s6084 + $0x28] sm:$0xff]
      %v6091 = vld [vmem:[%s6084 + $0x30] sm:$0xff]
      %v6092 = vld [vmem:[%s6084 + $0x38] sm:$0xff]
      %v6093 = vld [vmem:[%s6084 + $0x40] sm:$0xff]
      %v6094 = vld [vmem:[%s6084 + $0x48] sm:$0xff]
      %v6095 = vld [vmem:[%s6084 + $0x50] sm:$0xff]
      %v6096 = vld [vmem:[%s6084 + $0x58] sm:$0xff]
      %v6097 = vld [vmem:[%s6084 + $0x60] sm:$0xff]
      %v6098 = vld [vmem:[%s6084 + $0x68] sm:$0xff]
      %v6099 = vld [vmem:[%s6084 + $0x70] sm:$0xff]
      %v6100 = vld [vmem:[%s6084 + $0x78] sm:$0xff]
      %6101 = vmatprep.subr.mxu0 0.0
      %6102 = vmatpush1.msra.mxu0 %v6085
      %6103 = vmatprep.subr.mxu0 0.0
      %6104 = vmatpush1.msra.mxu0 %v6086
      %6105 = vmatprep.subr.mxu0 0.0
      %6106 = vmatpush1.msra.mxu0 %v6087
      %6107 = vmatprep.subr.mxu0 0.0
      %6108 = vmatpush1.msra.mxu0 %v6088
      %6109 = vmatprep.subr.mxu0 0.0
      %6110 = vmatpush1.msra.mxu0 %v6089
      %6111 = vmatprep.subr.mxu0 0.0
      %6112 = vmatpush1.msra.mxu0 %v6090
      %6113 = vmatprep.subr.mxu0 0.0
      %6114 = vmatpush1.msra.mxu0 %v6091
      %6115 = vmatprep.subr.mxu0 0.0
      %6116 = vmatpush1.msra.mxu0 %v6092
      %6117 = vmatprep.subr.mxu0 0.0
      %6118 = vmatpush1.msra.mxu0 %v6093
      %6119 = vmatprep.subr.mxu0 0.0
      %6120 = vmatpush1.msra.mxu0 %v6094
      %6121 = vmatprep.subr.mxu0 0.0
      %6122 = vmatpush1.msra.mxu0 %v6095
      %6123 = vmatprep.subr.mxu0 0.0
      %6124 = vmatpush1.msra.mxu0 %v6096
      %6125 = vmatprep.subr.mxu0 0.0
      %6126 = vmatpush1.msra.mxu0 %v6097
      %6127 = vmatprep.subr.mxu0 0.0
      %6128 = vmatpush1.msra.mxu0 %v6098
      %6129 = vmatprep.subr.mxu0 0.0
      %6130 = vmatpush1.msra.mxu0 %v6099
      %6131 = vmatprep.subr.mxu0 0.0
      %6132 = vmatpush1.msra.mxu0 %v6100
      %6133 = vmatprep.subr.mxu0 0.0
      %6134 = vmatpush1.msra.mxu0 0.0
      %6135 = vmatprep.subr.mxu0 0.0
      %6136 = vmatpush1.msra.mxu0 0.0
      %6137 = vmatprep.subr.mxu0 0.0
      %6138 = vmatpush1.msra.mxu0 0.0
      %6139 = vmatprep.subr.mxu0 0.0
      %6140 = vmatpush1.msra.mxu0 0.0
      %6141 = vmatprep.subr.mxu0 0.0
      %6142 = vmatpush1.msra.mxu0 0.0
      %6143 = vmatprep.subr.mxu0 0.0
      %6144 = vmatpush1.msra.mxu0 0.0
      %6145 = vmatprep.subr.mxu0 0.0
      %6146 = vmatpush1.msra.mxu0 0.0
      %6147 = vmatprep.subr.mxu0 0.0
      %6148 = vmatpush1.msra.mxu0 0.0
      %6149 = vmatprep.subr.mxu0 0.0
      %6150 = vmatpush1.msra.mxu0 0.0
      %6151 = vmatprep.subr.mxu0 0.0
      %6152 = vmatpush1.msra.mxu0 0.0
      %6153 = vmatprep.subr.mxu0 0.0
      %6154 = vmatpush1.msra.mxu0 0.0
      %6155 = vmatprep.subr.mxu0 0.0
      %6156 = vmatpush1.msra.mxu0 0.0
      %6157 = vmatprep.subr.mxu0 0.0
      %6158 = vmatpush1.msra.mxu0 0.0
      %6159 = vmatprep.subr.mxu0 0.0
      %6160 = vmatpush1.msra.mxu0 0.0
      %6161 = vmatprep.subr.mxu0 0.0
      %6162 = vmatpush1.msra.mxu0 0.0
      %6163 = vmatprep.subr.mxu0 0.0
      %6164 = vmatpush1.msra.mxu0 0.0
      %6165 = vmatprep.mubr.f32.mxu0 0.0
      %6166 = vmatmul.mubr.f32.gmra.mrb[0].mxu0 %v6036
      %v6167 = vpop.f32.mrb[0].mxu0
      %v6168 = vadd.f32 0.0, %v6167
      %v6169 = vpop.f32.mrb[0].mxu0
      %6170 = vmatprep.mubr.f32.mxu0 0.0
      %6171 = vmatmul.mubr.f32.gmra.mrb[0].mxu0 %v6037
      %v6172 = vpop.f32.mrb[0].mxu0
      %v6173 = vadd.f32 0.0, %v6172
      %v6174 = vpop.f32.mrb[0].mxu0
      %6175 = vmatprep.mubr.f32.mxu0 0.0
      %6176 = vmatmul.mubr.f32.gmra.mrb[0].mxu0 %v6038
      %v6177 = vpop.f32.mrb[0].mxu0
      %v6178 = vadd.f32 0.0, %v6177
      %v6179 = vpop.f32.mrb[0].mxu0
      %6180 = vmatprep.mubr.f32.mxu0 0.0
      %6181 = vmatmul.mubr.f32.gmra.mrb[0].mxu0 %v6039
      %v6182 = vpop.f32.mrb[0].mxu0
      %v6183 = vadd.f32 0.0, %v6182
      %v6184 = vpop.f32.mrb[0].mxu0
      %6185 = vmatprep.mubr.f32.mxu0 0.0
      %6186 = vmatmul.mubr.f32.gmra.mrb[0].mxu0 %v6040
      %v6187 = vpop.f32.mrb[0].mxu0
      %v6188 = vadd.f32 0.0, %v6187
      %v6189 = vpop.f32.mrb[0].mxu0
      %6190 = vmatprep.mubr.f32.mxu0 0.0
      %6191 = vmatmul.mubr.f32.gmra.mrb[0].mxu0 %v6041
      %v6192 = vpop.f32.mrb[0].mxu0
      %v6193 = vadd.f32 0.0, %v6192
      %v6194 = vpop.f32.mrb[0].mxu0
      %6195 = vmatprep.mubr.f32.mxu0 0.0
      %6196 = vmatmul.mubr.f32.gmra.mrb[0].mxu0 %v6042
      %v6197 = vpop.f32.mrb[0].mxu0
      %v6198 = vadd.f32 0.0, %v6197
      %v6199 = vpop.f32.mrb[0].mxu0
      %6200 = vmatprep.mubr.f32.mxu0 0.0
      %6201 = vmatmul.mubr.f32.gmra.mrb[0].mxu0 %v6043
      %v6202 = vpop.f32.mrb[0].mxu0
      %v6203 = vadd.f32 0.0, %v6202
      %v6204 = vpop.f32.mrb[0].mxu0
      %6205 = vmatprep.mubr.f32.mxu0 0.0
      %6206 = vmatmul.mubr.f32.gmra.mrb[0].mxu0 %v6044
      %v6207 = vpop.f32.mrb[0].mxu0
      %v6208 = vadd.f32 0.0, %v6207
      %v6209 = vpop.f32.mrb[0].mxu0
      %6210 = vmatprep.mubr.f32.mxu0 0.0
      %6211 = vmatmul.mubr.f32.gmra.mrb[0].mxu0 %v6045
      %v6212 = vpop.f32.mrb[0].mxu0
      %v6213 = vadd.f32 0.0, %v6212
      %v6214 = vpop.f32.mrb[0].mxu0
      %6215 = vmatprep.mubr.f32.mxu0 0.0
      %6216 = vmatmul.mubr.f32.gmra.mrb[0].mxu0 %v6046
      %v6217 = vpop.f32.mrb[0].mxu0
      %v6218 = vadd.f32 0.0, %v6217
      %v6219 = vpop.f32.mrb[0].mxu0
      %6220 = vmatprep.mubr.f32.mxu0 0.0
      %6221 = vmatmul.mubr.f32.gmra.mrb[0].mxu0 %v6047
      %v6222 = vpop.f32.mrb[0].mxu0
      %v6223 = vadd.f32 0.0, %v6222
      %v6224 = vpop.f32.mrb[0].mxu0
      %6225 = vmatprep.mubr.f32.mxu0 0.0
      %6226 = vmatmul.mubr.f32.gmra.mrb[0].mxu0 %v6048
      %v6227 = vpop.f32.mrb[0].mxu0
      %v6228 = vadd.f32 0.0, %v6227
      %v6229 = vpop.f32.mrb[0].mxu0
      %6230 = vmatprep.mubr.f32.mxu0 0.0
      %6231 = vmatmul.mubr.f32.gmra.mrb[0].mxu0 %v6049
      %v6232 = vpop.f32.mrb[0].mxu0
      %v6233 = vadd.f32 0.0, %v6232
      %v6234 = vpop.f32.mrb[0].mxu0
      %6235 = vmatprep.mubr.f32.mxu0 0.0
      %6236 = vmatmul.mubr.f32.gmra.mrb[0].mxu0 %v6050
      %v6237 = vpop.f32.mrb[0].mxu0
      %v6238 = vadd.f32 0.0, %v6237
      %v6239 = vpop.f32.mrb[0].mxu0
      %6240 = vmatprep.mubr.f32.mxu0 0.0
      %6241 = vmatmul.mubr.f32.gmra.mrb[0].mxu0 %v6051
      %v6242 = vpop.f32.mrb[0].mxu0
      %v6243 = vadd.f32 0.0, %v6242
      %v6244 = vpop.f32.mrb[0].mxu0
      %6245 = vmatprep.mubr.f32.mxu0 0.0
      %6246 = vmatmul.mubr.f32.gmra.mrb[0].mxu0 %v6052
      %v6247 = vpop.f32.mrb[0].mxu0
      %v6248 = vadd.f32 0.0, %v6247
      %v6249 = vpop.f32.mrb[0].mxu0
      %6250 = vmatprep.mubr.f32.mxu0 0.0
      %6251 = vmatmul.mubr.f32.gmra.mrb[0].mxu0 %v6053
      %v6252 = vpop.f32.mrb[0].mxu0
      %v6253 = vadd.f32 0.0, %v6252
      %v6254 = vpop.f32.mrb[0].mxu0
      %6255 = vmatprep.mubr.f32.mxu0 0.0
      %6256 = vmatmul.mubr.f32.gmra.mrb[0].mxu0 %v6054
      %v6257 = vpop.f32.mrb[0].mxu0
      %v6258 = vadd.f32 0.0, %v6257
      %v6259 = vpop.f32.mrb[0].mxu0
      %6260 = vmatprep.mubr.f32.mxu0 0.0
      %6261 = vmatmul.mubr.f32.gmra.mrb[0].mxu0 %v6055
      %v6262 = vpop.f32.mrb[0].mxu0
      %v6263 = vadd.f32 0.0, %v6262
      %v6264 = vpop.f32.mrb[0].mxu0
      %6265 = vmatprep.mubr.f32.mxu0 0.0
      %6266 = vmatmul.mubr.f32.gmra.mrb[0].mxu0 %v6056
      %v6267 = vpop.f32.mrb[0].mxu0
      %v6268 = vadd.f32 0.0, %v6267
      %v6269 = vpop.f32.mrb[0].mxu0
      %6270 = vmatprep.mubr.f32.mxu0 0.0
      %6271 = vmatmul.mubr.f32.gmra.mrb[0].mxu0 %v6057
      %v6272 = vpop.f32.mrb[0].mxu0
      %v6273 = vadd.f32 0.0, %v6272
      %v6274 = vpop.f32.mrb[0].mxu0
      %6275 = vmatprep.mubr.f32.mxu0 0.0
      %6276 = vmatmul.mubr.f32.gmra.mrb[0].mxu0 %v6058
      %v6277 = vpop.f32.mrb[0].mxu0
      %v6278 = vadd.f32 0.0, %v6277
      %v6279 = vpop.f32.mrb[0].mxu0
      %6280 = vmatprep.mubr.f32.mxu0 0.0
      %6281 = vmatmul.mubr.f32.gmra.mrb[0].mxu0 %v6059
      %v6282 = vpop.f32.mrb[0].mxu0
      %v6283 = vadd.f32 0.0, %v6282
      %v6284 = vpop.f32.mrb[0].mxu0
      %6285 = vmatprep.mubr.f32.mxu0 0.0
      %6286 = vmatmul.mubr.f32.gmra.mrb[0].mxu0 %v6060
      %v6287 = vpop.f32.mrb[0].mxu0
      %v6288 = vadd.f32 0.0, %v6287
      %v6289 = vpop.f32.mrb[0].mxu0
      %6290 = vmatprep.mubr.f32.mxu0 0.0
      %6291 = vmatmul.mubr.f32.gmra.mrb[0].mxu0 %v6061
      %v6292 = vpop.f32.mrb[0].mxu0
      %v6293 = vadd.f32 0.0, %v6292
      %v6294 = vpop.f32.mrb[0].mxu0
      %6295 = vmatprep.mubr.f32.mxu0 0.0
      %6296 = vmatmul.mubr.f32.gmra.mrb[0].mxu0 %v6062
      %v6297 = vpop.f32.mrb[0].mxu0
      %v6298 = vadd.f32 0.0, %v6297
      %v6299 = vpop.f32.mrb[0].mxu0
      %6300 = vmatprep.mubr.f32.mxu0 0.0
      %6301 = vmatmul.mubr.f32.gmra.mrb[0].mxu0 %v6063
      %v6302 = vpop.f32.mrb[0].mxu0
      %v6303 = vadd.f32 0.0, %v6302
      %v6304 = vpop.f32.mrb[0].mxu0
      %6305 = vmatprep.mubr.f32.mxu0 0.0
      %6306 = vmatmul.mubr.f32.gmra.mrb[0].mxu0 %v6064
      %v6307 = vpop.f32.mrb[0].mxu0
      %v6308 = vadd.f32 0.0, %v6307
      %v6309 = vpop.f32.mrb[0].mxu0
      %6310 = vmatprep.mubr.f32.mxu0 0.0
      %6311 = vmatmul.mubr.f32.gmra.mrb[0].mxu0 %v6065
      %v6312 = vpop.f32.mrb[0].mxu0
      %v6313 = vadd.f32 0.0, %v6312
      %v6314 = vpop.f32.mrb[0].mxu0
      %6315 = vmatprep.mubr.f32.mxu0 0.0
      %6316 = vmatmul.mubr.f32.gmra.mrb[0].mxu0 %v6066
      %v6317 = vpop.f32.mrb[0].mxu0
      %v6318 = vadd.f32 0.0, %v6317
      %v6319 = vpop.f32.mrb[0].mxu0
      %6320 = vmatprep.mubr.f32.mxu0 0.0
      %6321 = vmatmul.mubr.f32.gmra.mrb[0].mxu0 %v6067
      %v6322 = vpop.f32.mrb[0].mxu0
      %v6323 = vadd.f32 0.0, %v6322
      %v6324 = vpop.f32.mrb[0].mxu0
      %6325 = vmatprep.mubr.f32.mxu0 0.0
      %6326 = vmatmul.mubr.f32.gmra.mrb[0].mxu0 %v6068
      %v6327 = vpop.f32.mrb[0].mxu0
      %v6328 = vadd.f32 0.0, %v6327
      %v6329 = vpop.f32.mrb[0].mxu0
      %6330 = vmatprep.mubr.f32.mxu0 0.0
      %6331 = vmatmul.mubr.f32.gmra.mrb[0].mxu0 %v6069
      %v6332 = vpop.f32.mrb[0].mxu0
      %v6333 = vadd.f32 0.0, %v6332
      %v6334 = vpop.f32.mrb[0].mxu0
      %6335 = vmatprep.mubr.f32.mxu0 0.0
      %6336 = vmatmul.mubr.f32.gmra.mrb[0].mxu0 %v6070
      %v6337 = vpop.f32.mrb[0].mxu0
      %v6338 = vadd.f32 0.0, %v6337
      %v6339 = vpop.f32.mrb[0].mxu0
      %6340 = vmatprep.mubr.f32.mxu0 0.0
      %6341 = vmatmul.mubr.f32.gmra.mrb[0].mxu0 %v6071
      %v6342 = vpop.f32.mrb[0].mxu0
      %v6343 = vadd.f32 0.0, %v6342
      %v6344 = vpop.f32.mrb[0].mxu0
      %6345 = vmatprep.mubr.f32.mxu0 0.0
      %6346 = vmatmul.mubr.f32.gmra.mrb[0].mxu0 %v6072
      %v6347 = vpop.f32.mrb[0].mxu0
      %v6348 = vadd.f32 0.0, %v6347
      %v6349 = vpop.f32.mrb[0].mxu0
      %6350 = vmatprep.mubr.f32.mxu0 0.0
      %6351 = vmatmul.mubr.f32.gmra.mrb[0].mxu0 %v6073
      %v6352 = vpop.f32.mrb[0].mxu0
      %v6353 = vadd.f32 0.0, %v6352
      %v6354 = vpop.f32.mrb[0].mxu0
      %6355 = vmatprep.mubr.f32.mxu0 0.0
      %6356 = vmatmul.mubr.f32.gmra.mrb[0].mxu0 %v6074
      %v6357 = vpop.f32.mrb[0].mxu0
      %v6358 = vadd.f32 0.0, %v6357
      %v6359 = vpop.f32.mrb[0].mxu0
      %6360 = vmatprep.mubr.f32.mxu0 0.0
      %6361 = vmatmul.mubr.f32.gmra.mrb[0].mxu0 %v6075
      %v6362 = vpop.f32.mrb[0].mxu0
      %v6363 = vadd.f32 0.0, %v6362
      %v6364 = vpop.f32.mrb[0].mxu0
      %6365 = vmatprep.mubr.f32.mxu0 0.0
      %6366 = vmatmul.mubr.f32.gmra.mrb[0].mxu0 %v6076
      %v6367 = vpop.f32.mrb[0].mxu0
      %v6368 = vadd.f32 0.0, %v6367
      %v6369 = vpop.f32.mrb[0].mxu0
      %6370 = vmatprep.mubr.f32.mxu0 0.0
      %6371 = vmatmul.mubr.f32.gmra.mrb[0].mxu0 %v6077
      %v6372 = vpop.f32.mrb[0].mxu0
      %v6373 = vadd.f32 0.0, %v6372
      %v6374 = vpop.f32.mrb[0].mxu0
      %6375 = vmatprep.mubr.f32.mxu0 0.0
      %6376 = vmatmul.mubr.f32.gmra.mrb[0].mxu0 %v6078
      %v6377 = vpop.f32.mrb[0].mxu0
      %v6378 = vadd.f32 0.0, %v6377
      %v6379 = vpop.f32.mrb[0].mxu0
      %6380 = vmatprep.mubr.f32.mxu0 0.0
      %6381 = vmatmul.mubr.f32.gmra.mrb[0].mxu0 %v6079
      %v6382 = vpop.f32.mrb[0].mxu0
      %v6383 = vadd.f32 0.0, %v6382
      %v6384 = vpop.f32.mrb[0].mxu0
      %6385 = vmatprep.mubr.f32.mxu0 0.0
      %6386 = vmatmul.mubr.f32.gmra.mrb[0].mxu0 %v6080
      %v6387 = vpop.f32.mrb[0].mxu0
      %v6388 = vadd.f32 0.0, %v6387
      %v6389 = vpop.f32.mrb[0].mxu0
      %6390 = vmatprep.mubr.f32.mxu0 0.0
      %6391 = vmatmul.mubr.f32.gmra.mrb[0].mxu0 %v6081
      %v6392 = vpop.f32.mrb[0].mxu0
      %v6393 = vadd.f32 0.0, %v6392
      %v6394 = vpop.f32.mrb[0].mxu0
      %6395 = vmatprep.mubr.f32.mxu0 0.0
      %6396 = vmatmul.mubr.f32.gmra.mrb[0].mxu0 %v6082
      %v6397 = vpop.f32.mrb[0].mxu0
      %v6398 = vadd.f32 0.0, %v6397
      %v6399 = vpop.f32.mrb[0].mxu0
      %6400 = vmatprep.mubr.f32.mxu0 0.0
      %6401 = vmatmul.mubr.f32.gmra.mrb[0].mxu0 %v6083
      %v6402 = vpop.f32.mrb[0].mxu0
      %v6403 = vadd.f32 0.0, %v6402
      %v6404 = vpop.f32.mrb[0].mxu0
      %6405 = vdwg.mxu0
      %6406 = vmatprep.subr.mxu0 0.0
      %6407 = vmatpush1.msra.mxu0 %v6020
      %6408 = vmatprep.subr.mxu0 0.0
      %6409 = vmatpush1.msra.mxu0 %v6021
      %6410 = vmatprep.subr.mxu0 0.0
      %6411 = vmatpush1.msra.mxu0 %v6022
      %6412 = vmatprep.subr.mxu0 0.0
      %6413 = vmatpush1.msra.mxu0 %v6023
      %6414 = vmatprep.subr.mxu0 0.0
      %6415 = vmatpush1.msra.mxu0 %v6024
      %6416 = vmatprep.subr.mxu0 0.0
      %6417 = vmatpush1.msra.mxu0 %v6025
      %6418 = vmatprep.subr.mxu0 0.0
      %6419 = vmatpush1.msra.mxu0 %v6026
      %6420 = vmatprep.subr.mxu0 0.0
      %6421 = vmatpush1.msra.mxu0 %v6027
      %6422 = vmatprep.subr.mxu0 0.0
      %6423 = vmatpush1.msra.mxu0 %v6028
      %6424 = vmatprep.subr.mxu0 0.0
      %6425 = vmatpush1.msra.mxu0 %v6029
      %6426 = vmatprep.subr.mxu0 0.0
      %6427 = vmatpush1.msra.mxu0 %v6030
      %6428 = vmatprep.subr.mxu0 0.0
      %6429 = vmatpush1.msra.mxu0 %v6031
      %6430 = vmatprep.subr.mxu0 0.0
      %6431 = vmatpush1.msra.mxu0 %v6032
      %6432 = vmatprep.subr.mxu0 0.0
      %6433 = vmatpush1.msra.mxu0 %v6033
      %6434 = vmatprep.subr.mxu0 0.0
      %6435 = vmatpush1.msra.mxu0 %v6034
      %6436 = vmatprep.subr.mxu0 0.0
      %6437 = vmatpush1.msra.mxu0 %v6035
      %6438 = vmatprep.subr.mxu0 0.0
      %6439 = vmatpush1.msra.mxu0 0.0
      %6440 = vmatprep.subr.mxu0 0.0
      %6441 = vmatpush1.msra.mxu0 0.0
      %6442 = vmatprep.subr.mxu0 0.0
      %6443 = vmatpush1.msra.mxu0 0.0
      %6444 = vmatprep.subr.mxu0 0.0
      %6445 = vmatpush1.msra.mxu0 0.0
      %6446 = vmatprep.subr.mxu0 0.0
      %6447 = vmatpush1.msra.mxu0 0.0
      %6448 = vmatprep.subr.mxu0 0.0
      %6449 = vmatpush1.msra.mxu0 0.0
      %6450 = vmatprep.subr.mxu0 0.0
      %6451 = vmatpush1.msra.mxu0 0.0
      %6452 = vmatprep.subr.mxu0 0.0
      %6453 = vmatpush1.msra.mxu0 0.0
      %6454 = vmatprep.subr.mxu0 0.0
      %6455 = vmatpush1.msra.mxu0 0.0
      %6456 = vmatprep.subr.mxu0 0.0
      %6457 = vmatpush1.msra.mxu0 0.0
      %6458 = vmatprep.subr.mxu0 0.0
      %6459 = vmatpush1.msra.mxu0 0.0
      %6460 = vmatprep.subr.mxu0 0.0
      %6461 = vmatpush1.msra.mxu0 0.0
      %6462 = vmatprep.subr.mxu0 0.0
      %6463 = vmatpush1.msra.mxu0 0.0
      %6464 = vmatprep.subr.mxu0 0.0
      %6465 = vmatpush1.msra.mxu0 0.0
      %6466 = vmatprep.subr.mxu0 0.0
      %6467 = vmatpush1.msra.mxu0 0.0
      %6468 = vmatprep.subr.mxu0 0.0
      %6469 = vmatpush1.msra.mxu0 0.0
      %6470 = vmatprep.mubr.f32.mxu0 0.0
      %6471 = vmatmul.mubr.f32.gmra.mrb[0].mxu0 %v5972
      %v6472 = vpop.f32.mrb[0].mxu0
      %v6473 = vadd.f32 %v6168, %v6472
      %v6474 = vpop.f32.mrb[0].mxu0
      %6475 = vmatprep.mubr.f32.mxu0 0.0
      %6476 = vmatmul.mubr.f32.gmra.mrb[0].mxu0 %v5973
      %v6477 = vpop.f32.mrb[0].mxu0
      %v6478 = vadd.f32 %v6173, %v6477
      %v6479 = vpop.f32.mrb[0].mxu0
      %6480 = vmatprep.mubr.f32.mxu0 0.0
      %6481 = vmatmul.mubr.f32.gmra.mrb[0].mxu0 %v5974
      %v6482 = vpop.f32.mrb[0].mxu0
      %v6483 = vadd.f32 %v6178, %v6482
      %v6484 = vpop.f32.mrb[0].mxu0
      %6485 = vmatprep.mubr.f32.mxu0 0.0
      %6486 = vmatmul.mubr.f32.gmra.mrb[0].mxu0 %v5975
      %v6487 = vpop.f32.mrb[0].mxu0
      %v6488 = vadd.f32 %v6183, %v6487
      %v6489 = vpop.f32.mrb[0].mxu0
      %6490 = vmatprep.mubr.f32.mxu0 0.0
      %6491 = vmatmul.mubr.f32.gmra.mrb[0].mxu0 %v5976
      %v6492 = vpop.f32.mrb[0].mxu0
      %v6493 = vadd.f32 %v6188, %v6492
      %v6494 = vpop.f32.mrb[0].mxu0
      %6495 = vmatprep.mubr.f32.mxu0 0.0
      %6496 = vmatmul.mubr.f32.gmra.mrb[0].mxu0 %v5977
      %v6497 = vpop.f32.mrb[0].mxu0
      %v6498 = vadd.f32 %v6193, %v6497
      %v6499 = vpop.f32.mrb[0].mxu0
      %6500 = vmatprep.mubr.f32.mxu0 0.0
      %6501 = vmatmul.mubr.f32.gmra.mrb[0].mxu0 %v5978
      %v6502 = vpop.f32.mrb[0].mxu0
      %v6503 = vadd.f32 %v6198, %v6502
      %v6504 = vpop.f32.mrb[0].mxu0
      %6505 = vmatprep.mubr.f32.mxu0 0.0
      %6506 = vmatmul.mubr.f32.gmra.mrb[0].mxu0 %v5979
      %v6507 = vpop.f32.mrb[0].mxu0
      %v6508 = vadd.f32 %v6203, %v6507
      %v6509 = vpop.f32.mrb[0].mxu0
      %6510 = vmatprep.mubr.f32.mxu0 0.0
      %6511 = vmatmul.mubr.f32.gmra.mrb[0].mxu0 %v5980
      %v6512 = vpop.f32.mrb[0].mxu0
      %v6513 = vadd.f32 %v6208, %v6512
      %v6514 = vpop.f32.mrb[0].mxu0
      %6515 = vmatprep.mubr.f32.mxu0 0.0
      %6516 = vmatmul.mubr.f32.gmra.mrb[0].mxu0 %v5981
      %v6517 = vpop.f32.mrb[0].mxu0
      %v6518 = vadd.f32 %v6213, %v6517
      %v6519 = vpop.f32.mrb[0].mxu0
      %6520 = vmatprep.mubr.f32.mxu0 0.0
      %6521 = vmatmul.mubr.f32.gmra.mrb[0].mxu0 %v5982
      %v6522 = vpop.f32.mrb[0].mxu0
      %v6523 = vadd.f32 %v6218, %v6522
      %v6524 = vpop.f32.mrb[0].mxu0
      %6525 = vmatprep.mubr.f32.mxu0 0.0
      %6526 = vmatmul.mubr.f32.gmra.mrb[0].mxu0 %v5983
      %v6527 = vpop.f32.mrb[0].mxu0
      %v6528 = vadd.f32 %v6223, %v6527
      %v6529 = vpop.f32.mrb[0].mxu0
      %6530 = vmatprep.mubr.f32.mxu0 0.0
      %6531 = vmatmul.mubr.f32.gmra.mrb[0].mxu0 %v5984
      %v6532 = vpop.f32.mrb[0].mxu0
      %v6533 = vadd.f32 %v6228, %v6532
      %v6534 = vpop.f32.mrb[0].mxu0
      %6535 = vmatprep.mubr.f32.mxu0 0.0
      %6536 = vmatmul.mubr.f32.gmra.mrb[0].mxu0 %v5985
      %v6537 = vpop.f32.mrb[0].mxu0
      %v6538 = vadd.f32 %v6233, %v6537
      %v6539 = vpop.f32.mrb[0].mxu0
      %6540 = vmatprep.mubr.f32.mxu0 0.0
      %6541 = vmatmul.mubr.f32.gmra.mrb[0].mxu0 %v5986
      %v6542 = vpop.f32.mrb[0].mxu0
      %v6543 = vadd.f32 %v6238, %v6542
      %v6544 = vpop.f32.mrb[0].mxu0
      %6545 = vmatprep.mubr.f32.mxu0 0.0
      %6546 = vmatmul.mubr.f32.gmra.mrb[0].mxu0 %v5987
      %v6547 = vpop.f32.mrb[0].mxu0
      %v6548 = vadd.f32 %v6243, %v6547
      %v6549 = vpop.f32.mrb[0].mxu0
      %6550 = vmatprep.mubr.f32.mxu0 0.0
      %6551 = vmatmul.mubr.f32.gmra.mrb[0].mxu0 %v5988
      %v6552 = vpop.f32.mrb[0].mxu0
      %v6553 = vadd.f32 %v6248, %v6552
      %v6554 = vpop.f32.mrb[0].mxu0
      %6555 = vmatprep.mubr.f32.mxu0 0.0
      %6556 = vmatmul.mubr.f32.gmra.mrb[0].mxu0 %v5989
      %v6557 = vpop.f32.mrb[0].mxu0
      %v6558 = vadd.f32 %v6253, %v6557
      %v6559 = vpop.f32.mrb[0].mxu0
      %6560 = vmatprep.mubr.f32.mxu0 0.0
      %6561 = vmatmul.mubr.f32.gmra.mrb[0].mxu0 %v5990
      %v6562 = vpop.f32.mrb[0].mxu0
      %v6563 = vadd.f32 %v6258, %v6562
      %v6564 = vpop.f32.mrb[0].mxu0
      %6565 = vmatprep.mubr.f32.mxu0 0.0
      %6566 = vmatmul.mubr.f32.gmra.mrb[0].mxu0 %v5991
      %v6567 = vpop.f32.mrb[0].mxu0
      %v6568 = vadd.f32 %v6263, %v6567
      %v6569 = vpop.f32.mrb[0].mxu0
      %6570 = vmatprep.mubr.f32.mxu0 0.0
      %6571 = vmatmul.mubr.f32.gmra.mrb[0].mxu0 %v5992
      %v6572 = vpop.f32.mrb[0].mxu0
      %v6573 = vadd.f32 %v6268, %v6572
      %v6574 = vpop.f32.mrb[0].mxu0
      %6575 = vmatprep.mubr.f32.mxu0 0.0
      %6576 = vmatmul.mubr.f32.gmra.mrb[0].mxu0 %v5993
      %v6577 = vpop.f32.mrb[0].mxu0
      %v6578 = vadd.f32 %v6273, %v6577
      %v6579 = vpop.f32.mrb[0].mxu0
      %6580 = vmatprep.mubr.f32.mxu0 0.0
      %6581 = vmatmul.mubr.f32.gmra.mrb[0].mxu0 %v5994
      %v6582 = vpop.f32.mrb[0].mxu0
      %v6583 = vadd.f32 %v6278, %v6582
      %v6584 = vpop.f32.mrb[0].mxu0
      %6585 = vmatprep.mubr.f32.mxu0 0.0
      %6586 = vmatmul.mubr.f32.gmra.mrb[0].mxu0 %v5995
      %v6587 = vpop.f32.mrb[0].mxu0
      %v6588 = vadd.f32 %v6283, %v6587
      %v6589 = vpop.f32.mrb[0].mxu0
      %6590 = vmatprep.mubr.f32.mxu0 0.0
      %6591 = vmatmul.mubr.f32.gmra.mrb[0].mxu0 %v5996
      %v6592 = vpop.f32.mrb[0].mxu0
      %v6593 = vadd.f32 %v6288, %v6592
      %v6594 = vpop.f32.mrb[0].mxu0
      %6595 = vmatprep.mubr.f32.mxu0 0.0
      %6596 = vmatmul.mubr.f32.gmra.mrb[0].mxu0 %v5997
      %v6597 = vpop.f32.mrb[0].mxu0
      %v6598 = vadd.f32 %v6293, %v6597
      %v6599 = vpop.f32.mrb[0].mxu0
      %6600 = vmatprep.mubr.f32.mxu0 0.0
      %6601 = vmatmul.mubr.f32.gmra.mrb[0].mxu0 %v5998
      %v6602 = vpop.f32.mrb[0].mxu0
      %v6603 = vadd.f32 %v6298, %v6602
      %v6604 = vpop.f32.mrb[0].mxu0
      %6605 = vmatprep.mubr.f32.mxu0 0.0
      %6606 = vmatmul.mubr.f32.gmra.mrb[0].mxu0 %v5999
      %v6607 = vpop.f32.mrb[0].mxu0
      %v6608 = vadd.f32 %v6303, %v6607
      %v6609 = vpop.f32.mrb[0].mxu0
      %6610 = vmatprep.mubr.f32.mxu0 0.0
      %6611 = vmatmul.mubr.f32.gmra.mrb[0].mxu0 %v6000
      %v6612 = vpop.f32.mrb[0].mxu0
      %v6613 = vadd.f32 %v6308, %v6612
      %v6614 = vpop.f32.mrb[0].mxu0
      %6615 = vmatprep.mubr.f32.mxu0 0.0
      %6616 = vmatmul.mubr.f32.gmra.mrb[0].mxu0 %v6001
      %v6617 = vpop.f32.mrb[0].mxu0
      %v6618 = vadd.f32 %v6313, %v6617
      %v6619 = vpop.f32.mrb[0].mxu0
      %6620 = vmatprep.mubr.f32.mxu0 0.0
      %6621 = vmatmul.mubr.f32.gmra.mrb[0].mxu0 %v6002
      %v6622 = vpop.f32.mrb[0].mxu0
      %v6623 = vadd.f32 %v6318, %v6622
      %v6624 = vpop.f32.mrb[0].mxu0
      %6625 = vmatprep.mubr.f32.mxu0 0.0
      %6626 = vmatmul.mubr.f32.gmra.mrb[0].mxu0 %v6003
      %v6627 = vpop.f32.mrb[0].mxu0
      %v6628 = vadd.f32 %v6323, %v6627
      %v6629 = vpop.f32.mrb[0].mxu0
      %6630 = vmatprep.mubr.f32.mxu0 0.0
      %6631 = vmatmul.mubr.f32.gmra.mrb[0].mxu0 %v6004
      %v6632 = vpop.f32.mrb[0].mxu0
      %v6633 = vadd.f32 %v6328, %v6632
      %v6634 = vpop.f32.mrb[0].mxu0
      %6635 = vmatprep.mubr.f32.mxu0 0.0
      %6636 = vmatmul.mubr.f32.gmra.mrb[0].mxu0 %v6005
      %v6637 = vpop.f32.mrb[0].mxu0
      %v6638 = vadd.f32 %v6333, %v6637
      %v6639 = vpop.f32.mrb[0].mxu0
      %6640 = vmatprep.mubr.f32.mxu0 0.0
      %6641 = vmatmul.mubr.f32.gmra.mrb[0].mxu0 %v6006
      %v6642 = vpop.f32.mrb[0].mxu0
      %v6643 = vadd.f32 %v6338, %v6642
      %v6644 = vpop.f32.mrb[0].mxu0
      %6645 = vmatprep.mubr.f32.mxu0 0.0
      %6646 = vmatmul.mubr.f32.gmra.mrb[0].mxu0 %v6007
      %v6647 = vpop.f32.mrb[0].mxu0
      %v6648 = vadd.f32 %v6343, %v6647
      %v6649 = vpop.f32.mrb[0].mxu0
      %6650 = vmatprep.mubr.f32.mxu0 0.0
      %6651 = vmatmul.mubr.f32.gmra.mrb[0].mxu0 %v6008
      %v6652 = vpop.f32.mrb[0].mxu0
      %v6653 = vadd.f32 %v6348, %v6652
      %v6654 = vpop.f32.mrb[0].mxu0
      %6655 = vmatprep.mubr.f32.mxu0 0.0
      %6656 = vmatmul.mubr.f32.gmra.mrb[0].mxu0 %v6009
      %v6657 = vpop.f32.mrb[0].mxu0
      %v6658 = vadd.f32 %v6353, %v6657
      %v6659 = vpop.f32.mrb[0].mxu0
      %6660 = vmatprep.mubr.f32.mxu0 0.0
      %6661 = vmatmul.mubr.f32.gmra.mrb[0].mxu0 %v6010
      %v6662 = vpop.f32.mrb[0].mxu0
      %v6663 = vadd.f32 %v6358, %v6662
      %v6664 = vpop.f32.mrb[0].mxu0
      %6665 = vmatprep.mubr.f32.mxu0 0.0
      %6666 = vmatmul.mubr.f32.gmra.mrb[0].mxu0 %v6011
      %v6667 = vpop.f32.mrb[0].mxu0
      %v6668 = vadd.f32 %v6363, %v6667
      %v6669 = vpop.f32.mrb[0].mxu0
      %6670 = vmatprep.mubr.f32.mxu0 0.0
      %6671 = vmatmul.mubr.f32.gmra.mrb[0].mxu0 %v6012
      %v6672 = vpop.f32.mrb[0].mxu0
      %v6673 = vadd.f32 %v6368, %v6672
      %v6674 = vpop.f32.mrb[0].mxu0
      %6675 = vmatprep.mubr.f32.mxu0 0.0
      %6676 = vmatmul.mubr.f32.gmra.mrb[0].mxu0 %v6013
      %v6677 = vpop.f32.mrb[0].mxu0
      %v6678 = vadd.f32 %v6373, %v6677
      %v6679 = vpop.f32.mrb[0].mxu0
      %6680 = vmatprep.mubr.f32.mxu0 0.0
      %6681 = vmatmul.mubr.f32.gmra.mrb[0].mxu0 %v6014
      %v6682 = vpop.f32.mrb[0].mxu0
      %v6683 = vadd.f32 %v6378, %v6682
      %v6684 = vpop.f32.mrb[0].mxu0
      %6685 = vmatprep.mubr.f32.mxu0 0.0
      %6686 = vmatmul.mubr.f32.gmra.mrb[0].mxu0 %v6015
      %v6687 = vpop.f32.mrb[0].mxu0
      %v6688 = vadd.f32 %v6383, %v6687
      %v6689 = vpop.f32.mrb[0].mxu0
      %6690 = vmatprep.mubr.f32.mxu0 0.0
      %6691 = vmatmul.mubr.f32.gmra.mrb[0].mxu0 %v6016
      %v6692 = vpop.f32.mrb[0].mxu0
      %v6693 = vadd.f32 %v6388, %v6692
      %v6694 = vpop.f32.mrb[0].mxu0
      %6695 = vmatprep.mubr.f32.mxu0 0.0
      %6696 = vmatmul.mubr.f32.gmra.mrb[0].mxu0 %v6017
      %v6697 = vpop.f32.mrb[0].mxu0
      %v6698 = vadd.f32 %v6393, %v6697
      %v6699 = vpop.f32.mrb[0].mxu0
      %6700 = vmatprep.mubr.f32.mxu0 0.0
      %6701 = vmatmul.mubr.f32.gmra.mrb[0].mxu0 %v6018
      %v6702 = vpop.f32.mrb[0].mxu0
      %v6703 = vadd.f32 %v6398, %v6702
      %v6704 = vpop.f32.mrb[0].mxu0
      %6705 = vmatprep.mubr.f32.mxu0 0.0
      %6706 = vmatmul.mubr.f32.gmra.mrb[0].mxu0 %v6019
      %v6707 = vpop.f32.mrb[0].mxu0
      %v6708 = vadd.f32 %v6403, %v6707
      %v6709 = vpop.f32.mrb[0].mxu0
      %6710 = vdwg.mxu0
      %v6711 = vld [vmem:[#allocation2 + $0x19] sm:$0xff]
      %v6712 = vld [vmem:[#allocation2 + $0x21] sm:$0xff]
      %v6713 = vld [vmem:[#allocation2 + $0x29] sm:$0xff]
      %v6714 = vld [vmem:[#allocation2 + $0x31] sm:$0xff]
      %v6715 = vld [vmem:[#allocation2 + $0x39] sm:$0xff]
      %v6716 = vld [vmem:[#allocation2 + $0x41] sm:$0xff]
      %v6717 = vld [vmem:[#allocation2 + $0x49] sm:$0xff]
      %v6718 = vld [vmem:[#allocation2 + $0x51] sm:$0xff]
      %v6719 = vld [vmem:[#allocation2 + $0x59] sm:$0xff]
      %v6720 = vld [vmem:[#allocation2 + $0x61] sm:$0xff]
      %v6721 = vld [vmem:[#allocation2 + $0x69] sm:$0xff]
      %v6722 = vld [vmem:[#allocation2 + $0x71] sm:$0xff]
      %v6723 = vld [vmem:[#allocation2 + $0x79] sm:$0xff]
      %v6724 = vld [vmem:[#allocation2 + $0x81] sm:$0xff]
      %v6725 = vld [vmem:[#allocation2 + $0x89] sm:$0xff]
      %v6726 = vld [vmem:[#allocation2 + $0x91] sm:$0xff]
      %v6727 = vld [vmem:[#allocation2 + $0x99] sm:$0xff]
      %v6728 = vld [vmem:[#allocation2 + $0xa1] sm:$0xff]
      %v6729 = vld [vmem:[#allocation2 + $0xa9] sm:$0xff]
      %v6730 = vld [vmem:[#allocation2 + $0xb1] sm:$0xff]
      %v6731 = vld [vmem:[#allocation2 + $0xb9] sm:$0xff]
      %v6732 = vld [vmem:[#allocation2 + $0xc1] sm:$0xff]
      %v6733 = vld [vmem:[#allocation2 + $0xc9] sm:$0xff]
      %v6734 = vld [vmem:[#allocation2 + $0xd1] sm:$0xff]
      %v6735 = vld [vmem:[#allocation2 + $0xd9] sm:$0xff]
      %v6736 = vld [vmem:[#allocation2 + $0xe1] sm:$0xff]
      %v6737 = vld [vmem:[#allocation2 + $0xe9] sm:$0xff]
      %v6738 = vld [vmem:[#allocation2 + $0xf1] sm:$0xff]
      %v6739 = vld [vmem:[#allocation2 + $0xf9] sm:$0xff]
      %v6740 = vld [vmem:[#allocation2 + $0x101] sm:$0xff]
      %v6741 = vld [vmem:[#allocation2 + $0x109] sm:$0xff]
      %v6742 = vld [vmem:[#allocation2 + $0x111] sm:$0xff]
      %v6743 = vld [vmem:[#allocation2 + $0x119] sm:$0xff]
      %v6744 = vld [vmem:[#allocation2 + $0x121] sm:$0xff]
      %v6745 = vld [vmem:[#allocation2 + $0x129] sm:$0xff]
      %v6746 = vld [vmem:[#allocation2 + $0x131] sm:$0xff]
      %v6747 = vld [vmem:[#allocation2 + $0x139] sm:$0xff]
      %v6748 = vld [vmem:[#allocation2 + $0x141] sm:$0xff]
      %v6749 = vld [vmem:[#allocation2 + $0x149] sm:$0xff]
      %v6750 = vld [vmem:[#allocation2 + $0x151] sm:$0xff]
      %v6751 = vld [vmem:[#allocation2 + $0x159] sm:$0xff]
      %v6752 = vld [vmem:[#allocation2 + $0x161] sm:$0xff]
      %v6753 = vld [vmem:[#allocation2 + $0x169] sm:$0xff]
      %v6754 = vld [vmem:[#allocation2 + $0x171] sm:$0xff]
      %v6755 = vld [vmem:[#allocation2 + $0x179] sm:$0xff]
      %v6756 = vld [vmem:[#allocation2 + $0x181] sm:$0xff]
      %v6757 = vld [vmem:[#allocation2 + $0x189] sm:$0xff]
      %v6758 = vld [vmem:[#allocation2 + $0x191] sm:$0xff]
      %s6759 = scalar_lea.vmem %s3, 256
      %v6760 = vld [vmem:[%s6759] sm:$0xff]
      %v6761 = vld [vmem:[%s6759 + $0x8] sm:$0xff]
      %v6762 = vld [vmem:[%s6759 + $0x10] sm:$0xff]
      %v6763 = vld [vmem:[%s6759 + $0x18] sm:$0xff]
      %v6764 = vld [vmem:[%s6759 + $0x20] sm:$0xff]
      %v6765 = vld [vmem:[%s6759 + $0x28] sm:$0xff]
      %v6766 = vld [vmem:[%s6759 + $0x30] sm:$0xff]
      %v6767 = vld [vmem:[%s6759 + $0x38] sm:$0xff]
      %v6768 = vld [vmem:[%s6759 + $0x40] sm:$0xff]
      %v6769 = vld [vmem:[%s6759 + $0x48] sm:$0xff]
      %v6770 = vld [vmem:[%s6759 + $0x50] sm:$0xff]
      %v6771 = vld [vmem:[%s6759 + $0x58] sm:$0xff]
      %v6772 = vld [vmem:[%s6759 + $0x60] sm:$0xff]
      %v6773 = vld [vmem:[%s6759 + $0x68] sm:$0xff]
      %v6774 = vld [vmem:[%s6759 + $0x70] sm:$0xff]
      %v6775 = vld [vmem:[%s6759 + $0x78] sm:$0xff]
      %6776 = vmatprep.subr.mxu0 0.0
      %6777 = vmatpush1.msra.mxu0 %v6760
      %6778 = vmatprep.subr.mxu0 0.0
      %6779 = vmatpush1.msra.mxu0 %v6761
      %6780 = vmatprep.subr.mxu0 0.0
      %6781 = vmatpush1.msra.mxu0 %v6762
      %6782 = vmatprep.subr.mxu0 0.0
      %6783 = vmatpush1.msra.mxu0 %v6763
      %6784 = vmatprep.subr.mxu0 0.0
      %6785 = vmatpush1.msra.mxu0 %v6764
      %6786 = vmatprep.subr.mxu0 0.0
      %6787 = vmatpush1.msra.mxu0 %v6765
      %6788 = vmatprep.subr.mxu0 0.0
      %6789 = vmatpush1.msra.mxu0 %v6766
      %6790 = vmatprep.subr.mxu0 0.0
      %6791 = vmatpush1.msra.mxu0 %v6767
      %6792 = vmatprep.subr.mxu0 0.0
      %6793 = vmatpush1.msra.mxu0 %v6768
      %6794 = vmatprep.subr.mxu0 0.0
      %6795 = vmatpush1.msra.mxu0 %v6769
      %6796 = vmatprep.subr.mxu0 0.0
      %6797 = vmatpush1.msra.mxu0 %v6770
      %6798 = vmatprep.subr.mxu0 0.0
      %6799 = vmatpush1.msra.mxu0 %v6771
      %6800 = vmatprep.subr.mxu0 0.0
      %6801 = vmatpush1.msra.mxu0 %v6772
      %6802 = vmatprep.subr.mxu0 0.0
      %6803 = vmatpush1.msra.mxu0 %v6773
      %6804 = vmatprep.subr.mxu0 0.0
      %6805 = vmatpush1.msra.mxu0 %v6774
      %6806 = vmatprep.subr.mxu0 0.0
      %6807 = vmatpush1.msra.mxu0 %v6775
      %6808 = vmatprep.subr.mxu0 0.0
      %6809 = vmatpush1.msra.mxu0 0.0
      %6810 = vmatprep.subr.mxu0 0.0
      %6811 = vmatpush1.msra.mxu0 0.0
      %6812 = vmatprep.subr.mxu0 0.0
      %6813 = vmatpush1.msra.mxu0 0.0
      %6814 = vmatprep.subr.mxu0 0.0
      %6815 = vmatpush1.msra.mxu0 0.0
      %6816 = vmatprep.subr.mxu0 0.0
      %6817 = vmatpush1.msra.mxu0 0.0
      %6818 = vmatprep.subr.mxu0 0.0
      %6819 = vmatpush1.msra.mxu0 0.0
      %6820 = vmatprep.subr.mxu0 0.0
      %6821 = vmatpush1.msra.mxu0 0.0
      %6822 = vmatprep.subr.mxu0 0.0
      %6823 = vmatpush1.msra.mxu0 0.0
      %6824 = vmatprep.subr.mxu0 0.0
      %6825 = vmatpush1.msra.mxu0 0.0
      %6826 = vmatprep.subr.mxu0 0.0
      %6827 = vmatpush1.msra.mxu0 0.0
      %6828 = vmatprep.subr.mxu0 0.0
      %6829 = vmatpush1.msra.mxu0 0.0
      %6830 = vmatprep.subr.mxu0 0.0
      %6831 = vmatpush1.msra.mxu0 0.0
      %6832 = vmatprep.subr.mxu0 0.0
      %6833 = vmatpush1.msra.mxu0 0.0
      %6834 = vmatprep.subr.mxu0 0.0
      %6835 = vmatpush1.msra.mxu0 0.0
      %6836 = vmatprep.subr.mxu0 0.0
      %6837 = vmatpush1.msra.mxu0 0.0
      %6838 = vmatprep.subr.mxu0 0.0
      %6839 = vmatpush1.msra.mxu0 0.0
      %6840 = vmatprep.mubr.f32.mxu0 0.0
      %6841 = vmatmul.mubr.f32.gmra.mrb[0].mxu0 %v6711
      %v6842 = vpop.f32.mrb[0].mxu0
      %v6843 = vadd.f32 0.0, %v6842
      %v6844 = vpop.f32.mrb[0].mxu0
      %6845 = vmatprep.mubr.f32.mxu0 0.0
      %6846 = vmatmul.mubr.f32.gmra.mrb[0].mxu0 %v6712
      %v6847 = vpop.f32.mrb[0].mxu0
      %v6848 = vadd.f32 0.0, %v6847
      %v6849 = vpop.f32.mrb[0].mxu0
      %6850 = vmatprep.mubr.f32.mxu0 0.0
      %6851 = vmatmul.mubr.f32.gmra.mrb[0].mxu0 %v6713
      %v6852 = vpop.f32.mrb[0].mxu0
      %v6853 = vadd.f32 0.0, %v6852
      %v6854 = vpop.f32.mrb[0].mxu0
      %6855 = vmatprep.mubr.f32.mxu0 0.0
      %6856 = vmatmul.mubr.f32.gmra.mrb[0].mxu0 %v6714
      %v6857 = vpop.f32.mrb[0].mxu0
      %v6858 = vadd.f32 0.0, %v6857
      %v6859 = vpop.f32.mrb[0].mxu0
      %6860 = vmatprep.mubr.f32.mxu0 0.0
      %6861 = vmatmul.mubr.f32.gmra.mrb[0].mxu0 %v6715
      %v6862 = vpop.f32.mrb[0].mxu0
      %v6863 = vadd.f32 0.0, %v6862
      %v6864 = vpop.f32.mrb[0].mxu0
      %6865 = vmatprep.mubr.f32.mxu0 0.0
      %6866 = vmatmul.mubr.f32.gmra.mrb[0].mxu0 %v6716
      %v6867 = vpop.f32.mrb[0].mxu0
      %v6868 = vadd.f32 0.0, %v6867
      %v6869 = vpop.f32.mrb[0].mxu0
      %6870 = vmatprep.mubr.f32.mxu0 0.0
      %6871 = vmatmul.mubr.f32.gmra.mrb[0].mxu0 %v6717
      %v6872 = vpop.f32.mrb[0].mxu0
      %v6873 = vadd.f32 0.0, %v6872
      %v6874 = vpop.f32.mrb[0].mxu0
      %6875 = vmatprep.mubr.f32.mxu0 0.0
      %6876 = vmatmul.mubr.f32.gmra.mrb[0].mxu0 %v6718
      %v6877 = vpop.f32.mrb[0].mxu0
      %v6878 = vadd.f32 0.0, %v6877
      %v6879 = vpop.f32.mrb[0].mxu0
      %6880 = vmatprep.mubr.f32.mxu0 0.0
      %6881 = vmatmul.mubr.f32.gmra.mrb[0].mxu0 %v6719
      %v6882 = vpop.f32.mrb[0].mxu0
      %v6883 = vadd.f32 0.0, %v6882
      %v6884 = vpop.f32.mrb[0].mxu0
      %6885 = vmatprep.mubr.f32.mxu0 0.0
      %6886 = vmatmul.mubr.f32.gmra.mrb[0].mxu0 %v6720
      %v6887 = vpop.f32.mrb[0].mxu0
      %v6888 = vadd.f32 0.0, %v6887
      %v6889 = vpop.f32.mrb[0].mxu0
      %6890 = vmatprep.mubr.f32.mxu0 0.0
      %6891 = vmatmul.mubr.f32.gmra.mrb[0].mxu0 %v6721
      %v6892 = vpop.f32.mrb[0].mxu0
      %v6893 = vadd.f32 0.0, %v6892
      %v6894 = vpop.f32.mrb[0].mxu0
      %6895 = vmatprep.mubr.f32.mxu0 0.0
      %6896 = vmatmul.mubr.f32.gmra.mrb[0].mxu0 %v6722
      %v6897 = vpop.f32.mrb[0].mxu0
      %v6898 = vadd.f32 0.0, %v6897
      %v6899 = vpop.f32.mrb[0].mxu0
      %6900 = vmatprep.mubr.f32.mxu0 0.0
      %6901 = vmatmul.mubr.f32.gmra.mrb[0].mxu0 %v6723
      %v6902 = vpop.f32.mrb[0].mxu0
      %v6903 = vadd.f32 0.0, %v6902
      %v6904 = vpop.f32.mrb[0].mxu0
      %6905 = vmatprep.mubr.f32.mxu0 0.0
      %6906 = vmatmul.mubr.f32.gmra.mrb[0].mxu0 %v6724
      %v6907 = vpop.f32.mrb[0].mxu0
      %v6908 = vadd.f32 0.0, %v6907
      %v6909 = vpop.f32.mrb[0].mxu0
      %6910 = vmatprep.mubr.f32.mxu0 0.0
      %6911 = vmatmul.mubr.f32.gmra.mrb[0].mxu0 %v6725
      %v6912 = vpop.f32.mrb[0].mxu0
      %v6913 = vadd.f32 0.0, %v6912
      %v6914 = vpop.f32.mrb[0].mxu0
      %6915 = vmatprep.mubr.f32.mxu0 0.0
      %6916 = vmatmul.mubr.f32.gmra.mrb[0].mxu0 %v6726
      %v6917 = vpop.f32.mrb[0].mxu0
      %v6918 = vadd.f32 0.0, %v6917
      %v6919 = vpop.f32.mrb[0].mxu0
      %6920 = vmatprep.mubr.f32.mxu0 0.0
      %6921 = vmatmul.mubr.f32.gmra.mrb[0].mxu0 %v6727
      %v6922 = vpop.f32.mrb[0].mxu0
      %v6923 = vadd.f32 0.0, %v6922
      %v6924 = vpop.f32.mrb[0].mxu0
      %6925 = vmatprep.mubr.f32.mxu0 0.0
      %6926 = vmatmul.mubr.f32.gmra.mrb[0].mxu0 %v6728
      %v6927 = vpop.f32.mrb[0].mxu0
      %v6928 = vadd.f32 0.0, %v6927
      %v6929 = vpop.f32.mrb[0].mxu0
      %6930 = vmatprep.mubr.f32.mxu0 0.0
      %6931 = vmatmul.mubr.f32.gmra.mrb[0].mxu0 %v6729
      %v6932 = vpop.f32.mrb[0].mxu0
      %v6933 = vadd.f32 0.0, %v6932
      %v6934 = vpop.f32.mrb[0].mxu0
      %6935 = vmatprep.mubr.f32.mxu0 0.0
      %6936 = vmatmul.mubr.f32.gmra.mrb[0].mxu0 %v6730
      %v6937 = vpop.f32.mrb[0].mxu0
      %v6938 = vadd.f32 0.0, %v6937
      %v6939 = vpop.f32.mrb[0].mxu0
      %6940 = vmatprep.mubr.f32.mxu0 0.0
      %6941 = vmatmul.mubr.f32.gmra.mrb[0].mxu0 %v6731
      %v6942 = vpop.f32.mrb[0].mxu0
      %v6943 = vadd.f32 0.0, %v6942
      %v6944 = vpop.f32.mrb[0].mxu0
      %6945 = vmatprep.mubr.f32.mxu0 0.0
      %6946 = vmatmul.mubr.f32.gmra.mrb[0].mxu0 %v6732
      %v6947 = vpop.f32.mrb[0].mxu0
      %v6948 = vadd.f32 0.0, %v6947
      %v6949 = vpop.f32.mrb[0].mxu0
      %6950 = vmatprep.mubr.f32.mxu0 0.0
      %6951 = vmatmul.mubr.f32.gmra.mrb[0].mxu0 %v6733
      %v6952 = vpop.f32.mrb[0].mxu0
      %v6953 = vadd.f32 0.0, %v6952
      %v6954 = vpop.f32.mrb[0].mxu0
      %6955 = vmatprep.mubr.f32.mxu0 0.0
      %6956 = vmatmul.mubr.f32.gmra.mrb[0].mxu0 %v6734
      %v6957 = vpop.f32.mrb[0].mxu0
      %v6958 = vadd.f32 0.0, %v6957
      %v6959 = vpop.f32.mrb[0].mxu0
      %6960 = vmatprep.mubr.f32.mxu0 0.0
      %6961 = vmatmul.mubr.f32.gmra.mrb[0].mxu0 %v6735
      %v6962 = vpop.f32.mrb[0].mxu0
      %v6963 = vadd.f32 0.0, %v6962
      %v6964 = vpop.f32.mrb[0].mxu0
      %6965 = vmatprep.mubr.f32.mxu0 0.0
      %6966 = vmatmul.mubr.f32.gmra.mrb[0].mxu0 %v6736
      %v6967 = vpop.f32.mrb[0].mxu0
      %v6968 = vadd.f32 0.0, %v6967
      %v6969 = vpop.f32.mrb[0].mxu0
      %6970 = vmatprep.mubr.f32.mxu0 0.0
      %6971 = vmatmul.mubr.f32.gmra.mrb[0].mxu0 %v6737
      %v6972 = vpop.f32.mrb[0].mxu0
      %v6973 = vadd.f32 0.0, %v6972
      %v6974 = vpop.f32.mrb[0].mxu0
      %6975 = vmatprep.mubr.f32.mxu0 0.0
      %6976 = vmatmul.mubr.f32.gmra.mrb[0].mxu0 %v6738
      %v6977 = vpop.f32.mrb[0].mxu0
      %v6978 = vadd.f32 0.0, %v6977
      %v6979 = vpop.f32.mrb[0].mxu0
      %6980 = vmatprep.mubr.f32.mxu0 0.0
      %6981 = vmatmul.mubr.f32.gmra.mrb[0].mxu0 %v6739
      %v6982 = vpop.f32.mrb[0].mxu0
      %v6983 = vadd.f32 0.0, %v6982
      %v6984 = vpop.f32.mrb[0].mxu0
      %6985 = vmatprep.mubr.f32.mxu0 0.0
      %6986 = vmatmul.mubr.f32.gmra.mrb[0].mxu0 %v6740
      %v6987 = vpop.f32.mrb[0].mxu0
      %v6988 = vadd.f32 0.0, %v6987
      %v6989 = vpop.f32.mrb[0].mxu0
      %6990 = vmatprep.mubr.f32.mxu0 0.0
      %6991 = vmatmul.mubr.f32.gmra.mrb[0].mxu0 %v6741
      %v6992 = vpop.f32.mrb[0].mxu0
      %v6993 = vadd.f32 0.0, %v6992
      %v6994 = vpop.f32.mrb[0].mxu0
      %6995 = vmatprep.mubr.f32.mxu0 0.0
      %6996 = vmatmul.mubr.f32.gmra.mrb[0].mxu0 %v6742
      %v6997 = vpop.f32.mrb[0].mxu0
      %v6998 = vadd.f32 0.0, %v6997
      %v6999 = vpop.f32.mrb[0].mxu0
      %7000 = vmatprep.mubr.f32.mxu0 0.0
      %7001 = vmatmul.mubr.f32.gmra.mrb[0].mxu0 %v6743
      %v7002 = vpop.f32.mrb[0].mxu0
      %v7003 = vadd.f32 0.0, %v7002
      %v7004 = vpop.f32.mrb[0].mxu0
      %7005 = vmatprep.mubr.f32.mxu0 0.0
      %7006 = vmatmul.mubr.f32.gmra.mrb[0].mxu0 %v6744
      %v7007 = vpop.f32.mrb[0].mxu0
      %v7008 = vadd.f32 0.0, %v7007
      %v7009 = vpop.f32.mrb[0].mxu0
      %7010 = vmatprep.mubr.f32.mxu0 0.0
      %7011 = vmatmul.mubr.f32.gmra.mrb[0].mxu0 %v6745
      %v7012 = vpop.f32.mrb[0].mxu0
      %v7013 = vadd.f32 0.0, %v7012
      %v7014 = vpop.f32.mrb[0].mxu0
      %7015 = vmatprep.mubr.f32.mxu0 0.0
      %7016 = vmatmul.mubr.f32.gmra.mrb[0].mxu0 %v6746
      %v7017 = vpop.f32.mrb[0].mxu0
      %v7018 = vadd.f32 0.0, %v7017
      %v7019 = vpop.f32.mrb[0].mxu0
      %7020 = vmatprep.mubr.f32.mxu0 0.0
      %7021 = vmatmul.mubr.f32.gmra.mrb[0].mxu0 %v6747
      %v7022 = vpop.f32.mrb[0].mxu0
      %v7023 = vadd.f32 0.0, %v7022
      %v7024 = vpop.f32.mrb[0].mxu0
      %7025 = vmatprep.mubr.f32.mxu0 0.0
      %7026 = vmatmul.mubr.f32.gmra.mrb[0].mxu0 %v6748
      %v7027 = vpop.f32.mrb[0].mxu0
      %v7028 = vadd.f32 0.0, %v7027
      %v7029 = vpop.f32.mrb[0].mxu0
      %7030 = vmatprep.mubr.f32.mxu0 0.0
      %7031 = vmatmul.mubr.f32.gmra.mrb[0].mxu0 %v6749
      %v7032 = vpop.f32.mrb[0].mxu0
      %v7033 = vadd.f32 0.0, %v7032
      %v7034 = vpop.f32.mrb[0].mxu0
      %7035 = vmatprep.mubr.f32.mxu0 0.0
      %7036 = vmatmul.mubr.f32.gmra.mrb[0].mxu0 %v6750
      %v7037 = vpop.f32.mrb[0].mxu0
      %v7038 = vadd.f32 0.0, %v7037
      %v7039 = vpop.f32.mrb[0].mxu0
      %7040 = vmatprep.mubr.f32.mxu0 0.0
      %7041 = vmatmul.mubr.f32.gmra.mrb[0].mxu0 %v6751
      %v7042 = vpop.f32.mrb[0].mxu0
      %v7043 = vadd.f32 0.0, %v7042
      %v7044 = vpop.f32.mrb[0].mxu0
      %7045 = vmatprep.mubr.f32.mxu0 0.0
      %7046 = vmatmul.mubr.f32.gmra.mrb[0].mxu0 %v6752
      %v7047 = vpop.f32.mrb[0].mxu0
      %v7048 = vadd.f32 0.0, %v7047
      %v7049 = vpop.f32.mrb[0].mxu0
      %7050 = vmatprep.mubr.f32.mxu0 0.0
      %7051 = vmatmul.mubr.f32.gmra.mrb[0].mxu0 %v6753
      %v7052 = vpop.f32.mrb[0].mxu0
      %v7053 = vadd.f32 0.0, %v7052
      %v7054 = vpop.f32.mrb[0].mxu0
      %7055 = vmatprep.mubr.f32.mxu0 0.0
      %7056 = vmatmul.mubr.f32.gmra.mrb[0].mxu0 %v6754
      %v7057 = vpop.f32.mrb[0].mxu0
      %v7058 = vadd.f32 0.0, %v7057
      %v7059 = vpop.f32.mrb[0].mxu0
      %7060 = vmatprep.mubr.f32.mxu0 0.0
      %7061 = vmatmul.mubr.f32.gmra.mrb[0].mxu0 %v6755
      %v7062 = vpop.f32.mrb[0].mxu0
      %v7063 = vadd.f32 0.0, %v7062
      %v7064 = vpop.f32.mrb[0].mxu0
      %7065 = vmatprep.mubr.f32.mxu0 0.0
      %7066 = vmatmul.mubr.f32.gmra.mrb[0].mxu0 %v6756
      %v7067 = vpop.f32.mrb[0].mxu0
      %v7068 = vadd.f32 0.0, %v7067
      %v7069 = vpop.f32.mrb[0].mxu0
      %7070 = vmatprep.mubr.f32.mxu0 0.0
      %7071 = vmatmul.mubr.f32.gmra.mrb[0].mxu0 %v6757
      %v7072 = vpop.f32.mrb[0].mxu0
      %v7073 = vadd.f32 0.0, %v7072
      %v7074 = vpop.f32.mrb[0].mxu0
      %7075 = vmatprep.mubr.f32.mxu0 0.0
      %7076 = vmatmul.mubr.f32.gmra.mrb[0].mxu0 %v6758
      %v7077 = vpop.f32.mrb[0].mxu0
      %v7078 = vadd.f32 0.0, %v7077
      %v7079 = vpop.f32.mrb[0].mxu0
      %7080 = vdwg.mxu0
      %v7081 = vadd.f32 %v6473, %v6843
      %v7082 = vadd.f32 %v6478, %v6848
      %v7083 = vadd.f32 %v6483, %v6853
      %v7084 = vadd.f32 %v6488, %v6858
      %v7085 = vadd.f32 %v6493, %v6863
      %v7086 = vadd.f32 %v6498, %v6868
      %v7087 = vadd.f32 %v6503, %v6873
      %v7088 = vadd.f32 %v6508, %v6878
      %v7089 = vadd.f32 %v6513, %v6883
      %v7090 = vadd.f32 %v6518, %v6888
      %v7091 = vadd.f32 %v6523, %v6893
      %v7092 = vadd.f32 %v6528, %v6898
      %v7093 = vadd.f32 %v6533, %v6903
      %v7094 = vadd.f32 %v6538, %v6908
      %v7095 = vadd.f32 %v6543, %v6913
      %v7096 = vadd.f32 %v6548, %v6918
      %v7097 = vadd.f32 %v6553, %v6923
      %v7098 = vadd.f32 %v6558, %v6928
      %v7099 = vadd.f32 %v6563, %v6933
      %v7100 = vadd.f32 %v6568, %v6938
      %v7101 = vadd.f32 %v6573, %v6943
      %v7102 = vadd.f32 %v6578, %v6948
      %v7103 = vadd.f32 %v6583, %v6953
      %v7104 = vadd.f32 %v6588, %v6958
      %v7105 = vadd.f32 %v6593, %v6963
      %v7106 = vadd.f32 %v6598, %v6968
      %v7107 = vadd.f32 %v6603, %v6973
      %v7108 = vadd.f32 %v6608, %v6978
      %v7109 = vadd.f32 %v6613, %v6983
      %v7110 = vadd.f32 %v6618, %v6988
      %v7111 = vadd.f32 %v6623, %v6993
      %v7112 = vadd.f32 %v6628, %v6998
      %v7113 = vadd.f32 %v6633, %v7003
      %v7114 = vadd.f32 %v6638, %v7008
      %v7115 = vadd.f32 %v6643, %v7013
      %v7116 = vadd.f32 %v6648, %v7018
      %v7117 = vadd.f32 %v6653, %v7023
      %v7118 = vadd.f32 %v6658, %v7028
      %v7119 = vadd.f32 %v6663, %v7033
      %v7120 = vadd.f32 %v6668, %v7038
      %v7121 = vadd.f32 %v6673, %v7043
      %v7122 = vadd.f32 %v6678, %v7048
      %v7123 = vadd.f32 %v6683, %v7053
      %v7124 = vadd.f32 %v6688, %v7058
      %v7125 = vadd.f32 %v6693, %v7063
      %v7126 = vadd.f32 %v6698, %v7068
      %v7127 = vadd.f32 %v6703, %v7073
      %v7128 = vadd.f32 %v6708, %v7078
      %v7129 = vld [vmem:[#allocation2 + $0x2f] sm:$0xff]
      %v7130 = vld [vmem:[#allocation2 + $0x37] sm:$0xff]
      %v7131 = vld [vmem:[#allocation2 + $0x3f] sm:$0xff]
      %v7132 = vld [vmem:[#allocation2 + $0x47] sm:$0xff]
      %v7133 = vld [vmem:[#allocation2 + $0x4f] sm:$0xff]
      %v7134 = vld [vmem:[#allocation2 + $0x57] sm:$0xff]
      %v7135 = vld [vmem:[#allocation2 + $0x5f] sm:$0xff]
      %v7136 = vld [vmem:[#allocation2 + $0x67] sm:$0xff]
      %v7137 = vld [vmem:[#allocation2 + $0x6f] sm:$0xff]
      %v7138 = vld [vmem:[#allocation2 + $0x77] sm:$0xff]
      %v7139 = vld [vmem:[#allocation2 + $0x7f] sm:$0xff]
      %v7140 = vld [vmem:[#allocation2 + $0x87] sm:$0xff]
      %v7141 = vld [vmem:[#allocation2 + $0x8f] sm:$0xff]
      %v7142 = vld [vmem:[#allocation2 + $0x97] sm:$0xff]
      %v7143 = vld [vmem:[#allocation2 + $0x9f] sm:$0xff]
      %v7144 = vld [vmem:[#allocation2 + $0xa7] sm:$0xff]
      %v7145 = vld [vmem:[#allocation2 + $0xaf] sm:$0xff]
      %v7146 = vld [vmem:[#allocation2 + $0xb7] sm:$0xff]
      %v7147 = vld [vmem:[#allocation2 + $0xbf] sm:$0xff]
      %v7148 = vld [vmem:[#allocation2 + $0xc7] sm:$0xff]
      %v7149 = vld [vmem:[#allocation2 + $0xcf] sm:$0xff]
      %v7150 = vld [vmem:[#allocation2 + $0xd7] sm:$0xff]
      %v7151 = vld [vmem:[#allocation2 + $0xdf] sm:$0xff]
      %v7152 = vld [vmem:[#allocation2 + $0xe7] sm:$0xff]
      %v7153 = vld [vmem:[#allocation2 + $0xef] sm:$0xff]
      %v7154 = vld [vmem:[#allocation2 + $0xf7] sm:$0xff]
      %v7155 = vld [vmem:[#allocation2 + $0xff] sm:$0xff]
      %v7156 = vld [vmem:[#allocation2 + $0x107] sm:$0xff]
      %v7157 = vld [vmem:[#allocation2 + $0x10f] sm:$0xff]
      %v7158 = vld [vmem:[#allocation2 + $0x117] sm:$0xff]
      %v7159 = vld [vmem:[#allocation2 + $0x11f] sm:$0xff]
      %v7160 = vld [vmem:[#allocation2 + $0x127] sm:$0xff]
      %v7161 = vld [vmem:[#allocation2 + $0x12f] sm:$0xff]
      %v7162 = vld [vmem:[#allocation2 + $0x137] sm:$0xff]
      %v7163 = vld [vmem:[#allocation2 + $0x13f] sm:$0xff]
      %v7164 = vld [vmem:[#allocation2 + $0x147] sm:$0xff]
      %v7165 = vld [vmem:[#allocation2 + $0x14f] sm:$0xff]
      %v7166 = vld [vmem:[#allocation2 + $0x157] sm:$0xff]
      %v7167 = vld [vmem:[#allocation2 + $0x15f] sm:$0xff]
      %v7168 = vld [vmem:[#allocation2 + $0x167] sm:$0xff]
      %v7169 = vld [vmem:[#allocation2 + $0x16f] sm:$0xff]
      %v7170 = vld [vmem:[#allocation2 + $0x177] sm:$0xff]
      %v7171 = vld [vmem:[#allocation2 + $0x17f] sm:$0xff]
      %v7172 = vld [vmem:[#allocation2 + $0x187] sm:$0xff]
      %v7173 = vld [vmem:[#allocation2 + $0x18f] sm:$0xff]
      %v7174 = vld [vmem:[#allocation2 + $0x197] sm:$0xff]
      %v7175 = vld [vmem:[#allocation2 + $0x19f] sm:$0xff]
      %v7176 = vld [vmem:[#allocation2 + $0x1a7] sm:$0xff]
      %s7177 = scalar_lea.vmem %s3, 384
      %v7178 = vld [vmem:[%s7177] sm:$0xff]
      %v7179 = vld [vmem:[%s7177 + $0x8] sm:$0xff]
      %v7180 = vld [vmem:[%s7177 + $0x10] sm:$0xff]
      %v7181 = vld [vmem:[%s7177 + $0x18] sm:$0xff]
      %v7182 = vld [vmem:[%s7177 + $0x20] sm:$0xff]
      %v7183 = vld [vmem:[%s7177 + $0x28] sm:$0xff]
      %v7184 = vld [vmem:[%s7177 + $0x30] sm:$0xff]
      %v7185 = vld [vmem:[%s7177 + $0x38] sm:$0xff]
      %v7186 = vld [vmem:[%s7177 + $0x40] sm:$0xff]
      %v7187 = vld [vmem:[%s7177 + $0x48] sm:$0xff]
      %v7188 = vld [vmem:[%s7177 + $0x50] sm:$0xff]
      %v7189 = vld [vmem:[%s7177 + $0x58] sm:$0xff]
      %v7190 = vld [vmem:[%s7177 + $0x60] sm:$0xff]
      %v7191 = vld [vmem:[%s7177 + $0x68] sm:$0xff]
      %v7192 = vld [vmem:[%s7177 + $0x70] sm:$0xff]
      %v7193 = vld [vmem:[%s7177 + $0x78] sm:$0xff]
      %7194 = vmatprep.subr.mxu0 0.0
      %7195 = vmatpush1.msra.mxu0 %v7178
      %7196 = vmatprep.subr.mxu0 0.0
      %7197 = vmatpush1.msra.mxu0 %v7179
      %7198 = vmatprep.subr.mxu0 0.0
      %7199 = vmatpush1.msra.mxu0 %v7180
      %7200 = vmatprep.subr.mxu0 0.0
      %7201 = vmatpush1.msra.mxu0 %v7181
      %7202 = vmatprep.subr.mxu0 0.0
      %7203 = vmatpush1.msra.mxu0 %v7182
      %7204 = vmatprep.subr.mxu0 0.0
      %7205 = vmatpush1.msra.mxu0 %v7183
      %7206 = vmatprep.subr.mxu0 0.0
      %7207 = vmatpush1.msra.mxu0 %v7184
      %7208 = vmatprep.subr.mxu0 0.0
      %7209 = vmatpush1.msra.mxu0 %v7185
      %7210 = vmatprep.subr.mxu0 0.0
      %7211 = vmatpush1.msra.mxu0 %v7186
      %7212 = vmatprep.subr.mxu0 0.0
      %7213 = vmatpush1.msra.mxu0 %v7187
      %7214 = vmatprep.subr.mxu0 0.0
      %7215 = vmatpush1.msra.mxu0 %v7188
      %7216 = vmatprep.subr.mxu0 0.0
      %7217 = vmatpush1.msra.mxu0 %v7189
      %7218 = vmatprep.subr.mxu0 0.0
      %7219 = vmatpush1.msra.mxu0 %v7190
      %7220 = vmatprep.subr.mxu0 0.0
      %7221 = vmatpush1.msra.mxu0 %v7191
      %7222 = vmatprep.subr.mxu0 0.0
      %7223 = vmatpush1.msra.mxu0 %v7192
      %7224 = vmatprep.subr.mxu0 0.0
      %7225 = vmatpush1.msra.mxu0 %v7193
      %7226 = vmatprep.subr.mxu0 0.0
      %7227 = vmatpush1.msra.mxu0 0.0
      %7228 = vmatprep.subr.mxu0 0.0
      %7229 = vmatpush1.msra.mxu0 0.0
      %7230 = vmatprep.subr.mxu0 0.0
      %7231 = vmatpush1.msra.mxu0 0.0
      %7232 = vmatprep.subr.mxu0 0.0
      %7233 = vmatpush1.msra.mxu0 0.0
      %7234 = vmatprep.subr.mxu0 0.0
      %7235 = vmatpush1.msra.mxu0 0.0
      %7236 = vmatprep.subr.mxu0 0.0
      %7237 = vmatpush1.msra.mxu0 0.0
      %7238 = vmatprep.subr.mxu0 0.0
      %7239 = vmatpush1.msra.mxu0 0.0
      %7240 = vmatprep.subr.mxu0 0.0
      %7241 = vmatpush1.msra.mxu0 0.0
      %7242 = vmatprep.subr.mxu0 0.0
      %7243 = vmatpush1.msra.mxu0 0.0
      %7244 = vmatprep.subr.mxu0 0.0
      %7245 = vmatpush1.msra.mxu0 0.0
      %7246 = vmatprep.subr.mxu0 0.0
      %7247 = vmatpush1.msra.mxu0 0.0
      %7248 = vmatprep.subr.mxu0 0.0
      %7249 = vmatpush1.msra.mxu0 0.0
      %7250 = vmatprep.subr.mxu0 0.0
      %7251 = vmatpush1.msra.mxu0 0.0
      %7252 = vmatprep.subr.mxu0 0.0
      %7253 = vmatpush1.msra.mxu0 0.0
      %7254 = vmatprep.subr.mxu0 0.0
      %7255 = vmatpush1.msra.mxu0 0.0
      %7256 = vmatprep.subr.mxu0 0.0
      %7257 = vmatpush1.msra.mxu0 0.0
      %7258 = vmatprep.mubr.f32.mxu0 0.0
      %7259 = vmatmul.mubr.f32.gmra.mrb[0].mxu0 %v7129
      %v7260 = vpop.f32.mrb[0].mxu0
      %v7261 = vadd.f32 0.0, %v7260
      %v7262 = vpop.f32.mrb[0].mxu0
      %7263 = vmatprep.mubr.f32.mxu0 0.0
      %7264 = vmatmul.mubr.f32.gmra.mrb[0].mxu0 %v7130
      %v7265 = vpop.f32.mrb[0].mxu0
      %v7266 = vadd.f32 0.0, %v7265
      %v7267 = vpop.f32.mrb[0].mxu0
      %7268 = vmatprep.mubr.f32.mxu0 0.0
      %7269 = vmatmul.mubr.f32.gmra.mrb[0].mxu0 %v7131
      %v7270 = vpop.f32.mrb[0].mxu0
      %v7271 = vadd.f32 0.0, %v7270
      %v7272 = vpop.f32.mrb[0].mxu0
      %7273 = vmatprep.mubr.f32.mxu0 0.0
      %7274 = vmatmul.mubr.f32.gmra.mrb[0].mxu0 %v7132
      %v7275 = vpop.f32.mrb[0].mxu0
      %v7276 = vadd.f32 0.0, %v7275
      %v7277 = vpop.f32.mrb[0].mxu0
      %7278 = vmatprep.mubr.f32.mxu0 0.0
      %7279 = vmatmul.mubr.f32.gmra.mrb[0].mxu0 %v7133
      %v7280 = vpop.f32.mrb[0].mxu0
      %v7281 = vadd.f32 0.0, %v7280
      %v7282 = vpop.f32.mrb[0].mxu0
      %7283 = vmatprep.mubr.f32.mxu0 0.0
      %7284 = vmatmul.mubr.f32.gmra.mrb[0].mxu0 %v7134
      %v7285 = vpop.f32.mrb[0].mxu0
      %v7286 = vadd.f32 0.0, %v7285
      %v7287 = vpop.f32.mrb[0].mxu0
      %7288 = vmatprep.mubr.f32.mxu0 0.0
      %7289 = vmatmul.mubr.f32.gmra.mrb[0].mxu0 %v7135
      %v7290 = vpop.f32.mrb[0].mxu0
      %v7291 = vadd.f32 0.0, %v7290
      %v7292 = vpop.f32.mrb[0].mxu0
      %7293 = vmatprep.mubr.f32.mxu0 0.0
      %7294 = vmatmul.mubr.f32.gmra.mrb[0].mxu0 %v7136
      %v7295 = vpop.f32.mrb[0].mxu0
      %v7296 = vadd.f32 0.0, %v7295
      %v7297 = vpop.f32.mrb[0].mxu0
      %7298 = vmatprep.mubr.f32.mxu0 0.0
      %7299 = vmatmul.mubr.f32.gmra.mrb[0].mxu0 %v7137
      %v7300 = vpop.f32.mrb[0].mxu0
      %v7301 = vadd.f32 0.0, %v7300
      %v7302 = vpop.f32.mrb[0].mxu0
      %7303 = vmatprep.mubr.f32.mxu0 0.0
      %7304 = vmatmul.mubr.f32.gmra.mrb[0].mxu0 %v7138
      %v7305 = vpop.f32.mrb[0].mxu0
      %v7306 = vadd.f32 0.0, %v7305
      %v7307 = vpop.f32.mrb[0].mxu0
      %7308 = vmatprep.mubr.f32.mxu0 0.0
      %7309 = vmatmul.mubr.f32.gmra.mrb[0].mxu0 %v7139
      %v7310 = vpop.f32.mrb[0].mxu0
      %v7311 = vadd.f32 0.0, %v7310
      %v7312 = vpop.f32.mrb[0].mxu0
      %7313 = vmatprep.mubr.f32.mxu0 0.0
      %7314 = vmatmul.mubr.f32.gmra.mrb[0].mxu0 %v7140
      %v7315 = vpop.f32.mrb[0].mxu0
      %v7316 = vadd.f32 0.0, %v7315
      %v7317 = vpop.f32.mrb[0].mxu0
      %7318 = vmatprep.mubr.f32.mxu0 0.0
      %7319 = vmatmul.mubr.f32.gmra.mrb[0].mxu0 %v7141
      %v7320 = vpop.f32.mrb[0].mxu0
      %v7321 = vadd.f32 0.0, %v7320
      %v7322 = vpop.f32.mrb[0].mxu0
      %7323 = vmatprep.mubr.f32.mxu0 0.0
      %7324 = vmatmul.mubr.f32.gmra.mrb[0].mxu0 %v7142
      %v7325 = vpop.f32.mrb[0].mxu0
      %v7326 = vadd.f32 0.0, %v7325
      %v7327 = vpop.f32.mrb[0].mxu0
      %7328 = vmatprep.mubr.f32.mxu0 0.0
      %7329 = vmatmul.mubr.f32.gmra.mrb[0].mxu0 %v7143
      %v7330 = vpop.f32.mrb[0].mxu0
      %v7331 = vadd.f32 0.0, %v7330
      %v7332 = vpop.f32.mrb[0].mxu0
      %7333 = vmatprep.mubr.f32.mxu0 0.0
      %7334 = vmatmul.mubr.f32.gmra.mrb[0].mxu0 %v7144
      %v7335 = vpop.f32.mrb[0].mxu0
      %v7336 = vadd.f32 0.0, %v7335
      %v7337 = vpop.f32.mrb[0].mxu0
      %7338 = vmatprep.mubr.f32.mxu0 0.0
      %7339 = vmatmul.mubr.f32.gmra.mrb[0].mxu0 %v7145
      %v7340 = vpop.f32.mrb[0].mxu0
      %v7341 = vadd.f32 0.0, %v7340
      %v7342 = vpop.f32.mrb[0].mxu0
      %7343 = vmatprep.mubr.f32.mxu0 0.0
      %7344 = vmatmul.mubr.f32.gmra.mrb[0].mxu0 %v7146
      %v7345 = vpop.f32.mrb[0].mxu0
      %v7346 = vadd.f32 0.0, %v7345
      %v7347 = vpop.f32.mrb[0].mxu0
      %7348 = vmatprep.mubr.f32.mxu0 0.0
      %7349 = vmatmul.mubr.f32.gmra.mrb[0].mxu0 %v7147
      %v7350 = vpop.f32.mrb[0].mxu0
      %v7351 = vadd.f32 0.0, %v7350
      %v7352 = vpop.f32.mrb[0].mxu0
      %7353 = vmatprep.mubr.f32.mxu0 0.0
      %7354 = vmatmul.mubr.f32.gmra.mrb[0].mxu0 %v7148
      %v7355 = vpop.f32.mrb[0].mxu0
      %v7356 = vadd.f32 0.0, %v7355
      %v7357 = vpop.f32.mrb[0].mxu0
      %7358 = vmatprep.mubr.f32.mxu0 0.0
      %7359 = vmatmul.mubr.f32.gmra.mrb[0].mxu0 %v7149
      %v7360 = vpop.f32.mrb[0].mxu0
      %v7361 = vadd.f32 0.0, %v7360
      %v7362 = vpop.f32.mrb[0].mxu0
      %7363 = vmatprep.mubr.f32.mxu0 0.0
      %7364 = vmatmul.mubr.f32.gmra.mrb[0].mxu0 %v7150
      %v7365 = vpop.f32.mrb[0].mxu0
      %v7366 = vadd.f32 0.0, %v7365
      %v7367 = vpop.f32.mrb[0].mxu0
      %7368 = vmatprep.mubr.f32.mxu0 0.0
      %7369 = vmatmul.mubr.f32.gmra.mrb[0].mxu0 %v7151
      %v7370 = vpop.f32.mrb[0].mxu0
      %v7371 = vadd.f32 0.0, %v7370
      %v7372 = vpop.f32.mrb[0].mxu0
      %7373 = vmatprep.mubr.f32.mxu0 0.0
      %7374 = vmatmul.mubr.f32.gmra.mrb[0].mxu0 %v7152
      %v7375 = vpop.f32.mrb[0].mxu0
      %v7376 = vadd.f32 0.0, %v7375
      %v7377 = vpop.f32.mrb[0].mxu0
      %7378 = vmatprep.mubr.f32.mxu0 0.0
      %7379 = vmatmul.mubr.f32.gmra.mrb[0].mxu0 %v7153
      %v7380 = vpop.f32.mrb[0].mxu0
      %v7381 = vadd.f32 0.0, %v7380
      %v7382 = vpop.f32.mrb[0].mxu0
      %7383 = vmatprep.mubr.f32.mxu0 0.0
      %7384 = vmatmul.mubr.f32.gmra.mrb[0].mxu0 %v7154
      %v7385 = vpop.f32.mrb[0].mxu0
      %v7386 = vadd.f32 0.0, %v7385
      %v7387 = vpop.f32.mrb[0].mxu0
      %7388 = vmatprep.mubr.f32.mxu0 0.0
      %7389 = vmatmul.mubr.f32.gmra.mrb[0].mxu0 %v7155
      %v7390 = vpop.f32.mrb[0].mxu0
      %v7391 = vadd.f32 0.0, %v7390
      %v7392 = vpop.f32.mrb[0].mxu0
      %7393 = vmatprep.mubr.f32.mxu0 0.0
      %7394 = vmatmul.mubr.f32.gmra.mrb[0].mxu0 %v7156
      %v7395 = vpop.f32.mrb[0].mxu0
      %v7396 = vadd.f32 0.0, %v7395
      %v7397 = vpop.f32.mrb[0].mxu0
      %7398 = vmatprep.mubr.f32.mxu0 0.0
      %7399 = vmatmul.mubr.f32.gmra.mrb[0].mxu0 %v7157
      %v7400 = vpop.f32.mrb[0].mxu0
      %v7401 = vadd.f32 0.0, %v7400
      %v7402 = vpop.f32.mrb[0].mxu0
      %7403 = vmatprep.mubr.f32.mxu0 0.0
      %7404 = vmatmul.mubr.f32.gmra.mrb[0].mxu0 %v7158
      %v7405 = vpop.f32.mrb[0].mxu0
      %v7406 = vadd.f32 0.0, %v7405
      %v7407 = vpop.f32.mrb[0].mxu0
      %7408 = vmatprep.mubr.f32.mxu0 0.0
      %7409 = vmatmul.mubr.f32.gmra.mrb[0].mxu0 %v7159
      %v7410 = vpop.f32.mrb[0].mxu0
      %v7411 = vadd.f32 0.0, %v7410
      %v7412 = vpop.f32.mrb[0].mxu0
      %7413 = vmatprep.mubr.f32.mxu0 0.0
      %7414 = vmatmul.mubr.f32.gmra.mrb[0].mxu0 %v7160
      %v7415 = vpop.f32.mrb[0].mxu0
      %v7416 = vadd.f32 0.0, %v7415
      %v7417 = vpop.f32.mrb[0].mxu0
      %7418 = vmatprep.mubr.f32.mxu0 0.0
      %7419 = vmatmul.mubr.f32.gmra.mrb[0].mxu0 %v7161
      %v7420 = vpop.f32.mrb[0].mxu0
      %v7421 = vadd.f32 0.0, %v7420
      %v7422 = vpop.f32.mrb[0].mxu0
      %7423 = vmatprep.mubr.f32.mxu0 0.0
      %7424 = vmatmul.mubr.f32.gmra.mrb[0].mxu0 %v7162
      %v7425 = vpop.f32.mrb[0].mxu0
      %v7426 = vadd.f32 0.0, %v7425
      %v7427 = vpop.f32.mrb[0].mxu0
      %7428 = vmatprep.mubr.f32.mxu0 0.0
      %7429 = vmatmul.mubr.f32.gmra.mrb[0].mxu0 %v7163
      %v7430 = vpop.f32.mrb[0].mxu0
      %v7431 = vadd.f32 0.0, %v7430
      %v7432 = vpop.f32.mrb[0].mxu0
      %7433 = vmatprep.mubr.f32.mxu0 0.0
      %7434 = vmatmul.mubr.f32.gmra.mrb[0].mxu0 %v7164
      %v7435 = vpop.f32.mrb[0].mxu0
      %v7436 = vadd.f32 0.0, %v7435
      %v7437 = vpop.f32.mrb[0].mxu0
      %7438 = vmatprep.mubr.f32.mxu0 0.0
      %7439 = vmatmul.mubr.f32.gmra.mrb[0].mxu0 %v7165
      %v7440 = vpop.f32.mrb[0].mxu0
      %v7441 = vadd.f32 0.0, %v7440
      %v7442 = vpop.f32.mrb[0].mxu0
      %7443 = vmatprep.mubr.f32.mxu0 0.0
      %7444 = vmatmul.mubr.f32.gmra.mrb[0].mxu0 %v7166
      %v7445 = vpop.f32.mrb[0].mxu0
      %v7446 = vadd.f32 0.0, %v7445
      %v7447 = vpop.f32.mrb[0].mxu0
      %7448 = vmatprep.mubr.f32.mxu0 0.0
      %7449 = vmatmul.mubr.f32.gmra.mrb[0].mxu0 %v7167
      %v7450 = vpop.f32.mrb[0].mxu0
      %v7451 = vadd.f32 0.0, %v7450
      %v7452 = vpop.f32.mrb[0].mxu0
      %7453 = vmatprep.mubr.f32.mxu0 0.0
      %7454 = vmatmul.mubr.f32.gmra.mrb[0].mxu0 %v7168
      %v7455 = vpop.f32.mrb[0].mxu0
      %v7456 = vadd.f32 0.0, %v7455
      %v7457 = vpop.f32.mrb[0].mxu0
      %7458 = vmatprep.mubr.f32.mxu0 0.0
      %7459 = vmatmul.mubr.f32.gmra.mrb[0].mxu0 %v7169
      %v7460 = vpop.f32.mrb[0].mxu0
      %v7461 = vadd.f32 0.0, %v7460
      %v7462 = vpop.f32.mrb[0].mxu0
      %7463 = vmatprep.mubr.f32.mxu0 0.0
      %7464 = vmatmul.mubr.f32.gmra.mrb[0].mxu0 %v7170
      %v7465 = vpop.f32.mrb[0].mxu0
      %v7466 = vadd.f32 0.0, %v7465
      %v7467 = vpop.f32.mrb[0].mxu0
      %7468 = vmatprep.mubr.f32.mxu0 0.0
      %7469 = vmatmul.mubr.f32.gmra.mrb[0].mxu0 %v7171
      %v7470 = vpop.f32.mrb[0].mxu0
      %v7471 = vadd.f32 0.0, %v7470
      %v7472 = vpop.f32.mrb[0].mxu0
      %7473 = vmatprep.mubr.f32.mxu0 0.0
      %7474 = vmatmul.mubr.f32.gmra.mrb[0].mxu0 %v7172
      %v7475 = vpop.f32.mrb[0].mxu0
      %v7476 = vadd.f32 0.0, %v7475
      %v7477 = vpop.f32.mrb[0].mxu0
      %7478 = vmatprep.mubr.f32.mxu0 0.0
      %7479 = vmatmul.mubr.f32.gmra.mrb[0].mxu0 %v7173
      %v7480 = vpop.f32.mrb[0].mxu0
      %v7481 = vadd.f32 0.0, %v7480
      %v7482 = vpop.f32.mrb[0].mxu0
      %7483 = vmatprep.mubr.f32.mxu0 0.0
      %7484 = vmatmul.mubr.f32.gmra.mrb[0].mxu0 %v7174
      %v7485 = vpop.f32.mrb[0].mxu0
      %v7486 = vadd.f32 0.0, %v7485
      %v7487 = vpop.f32.mrb[0].mxu0
      %7488 = vmatprep.mubr.f32.mxu0 0.0
      %7489 = vmatmul.mubr.f32.gmra.mrb[0].mxu0 %v7175
      %v7490 = vpop.f32.mrb[0].mxu0
      %v7491 = vadd.f32 0.0, %v7490
      %v7492 = vpop.f32.mrb[0].mxu0
      %7493 = vmatprep.mubr.f32.mxu0 0.0
      %7494 = vmatmul.mubr.f32.gmra.mrb[0].mxu0 %v7176
      %v7495 = vpop.f32.mrb[0].mxu0
      %v7496 = vadd.f32 0.0, %v7495
      %v7497 = vpop.f32.mrb[0].mxu0
      %7498 = vdwg.mxu0
      %v7499 = vadd.f32 %v7081, %v7261
      %v7500 = vadd.f32 %v7082, %v7266
      %v7501 = vadd.f32 %v7083, %v7271
      %v7502 = vadd.f32 %v7084, %v7276
      %v7503 = vadd.f32 %v7085, %v7281
      %v7504 = vadd.f32 %v7086, %v7286
      %v7505 = vadd.f32 %v7087, %v7291
      %v7506 = vadd.f32 %v7088, %v7296
      %v7507 = vadd.f32 %v7089, %v7301
      %v7508 = vadd.f32 %v7090, %v7306
      %v7509 = vadd.f32 %v7091, %v7311
      %v7510 = vadd.f32 %v7092, %v7316
      %v7511 = vadd.f32 %v7093, %v7321
      %v7512 = vadd.f32 %v7094, %v7326
      %v7513 = vadd.f32 %v7095, %v7331
      %v7514 = vadd.f32 %v7096, %v7336
      %v7515 = vadd.f32 %v7097, %v7341
      %v7516 = vadd.f32 %v7098, %v7346
      %v7517 = vadd.f32 %v7099, %v7351
      %v7518 = vadd.f32 %v7100, %v7356
      %v7519 = vadd.f32 %v7101, %v7361
      %v7520 = vadd.f32 %v7102, %v7366
      %v7521 = vadd.f32 %v7103, %v7371
      %v7522 = vadd.f32 %v7104, %v7376
      %v7523 = vadd.f32 %v7105, %v7381
      %v7524 = vadd.f32 %v7106, %v7386
      %v7525 = vadd.f32 %v7107, %v7391
      %v7526 = vadd.f32 %v7108, %v7396
      %v7527 = vadd.f32 %v7109, %v7401
      %v7528 = vadd.f32 %v7110, %v7406
      %v7529 = vadd.f32 %v7111, %v7411
      %v7530 = vadd.f32 %v7112, %v7416
      %v7531 = vadd.f32 %v7113, %v7421
      %v7532 = vadd.f32 %v7114, %v7426
      %v7533 = vadd.f32 %v7115, %v7431
      %v7534 = vadd.f32 %v7116, %v7436
      %v7535 = vadd.f32 %v7117, %v7441
      %v7536 = vadd.f32 %v7118, %v7446
      %v7537 = vadd.f32 %v7119, %v7451
      %v7538 = vadd.f32 %v7120, %v7456
      %v7539 = vadd.f32 %v7121, %v7461
      %v7540 = vadd.f32 %v7122, %v7466
      %v7541 = vadd.f32 %v7123, %v7471
      %v7542 = vadd.f32 %v7124, %v7476
      %v7543 = vadd.f32 %v7125, %v7481
      %v7544 = vadd.f32 %v7126, %v7486
      %v7545 = vadd.f32 %v7127, %v7491
      %v7546 = vadd.f32 %v7128, %v7496
      %v7547 = vld [vmem:[#allocation2 + $0x30] sm:$0xff]
      %v7548 = vld [vmem:[#allocation2 + $0x38] sm:$0xff]
      %v7549 = vld [vmem:[#allocation2 + $0x40] sm:$0xff]
      %v7550 = vld [vmem:[#allocation2 + $0x48] sm:$0xff]
      %v7551 = vld [vmem:[#allocation2 + $0x50] sm:$0xff]
      %v7552 = vld [vmem:[#allocation2 + $0x58] sm:$0xff]
      %v7553 = vld [vmem:[#allocation2 + $0x60] sm:$0xff]
      %v7554 = vld [vmem:[#allocation2 + $0x68] sm:$0xff]
      %v7555 = vld [vmem:[#allocation2 + $0x70] sm:$0xff]
      %v7556 = vld [vmem:[#allocation2 + $0x78] sm:$0xff]
      %v7557 = vld [vmem:[#allocation2 + $0x80] sm:$0xff]
      %v7558 = vld [vmem:[#allocation2 + $0x88] sm:$0xff]
      %v7559 = vld [vmem:[#allocation2 + $0x90] sm:$0xff]
      %v7560 = vld [vmem:[#allocation2 + $0x98] sm:$0xff]
      %v7561 = vld [vmem:[#allocation2 + $0xa0] sm:$0xff]
      %v7562 = vld [vmem:[#allocation2 + $0xa8] sm:$0xff]
      %v7563 = vld [vmem:[#allocation2 + $0xb0] sm:$0xff]
      %v7564 = vld [vmem:[#allocation2 + $0xb8] sm:$0xff]
      %v7565 = vld [vmem:[#allocation2 + $0xc0] sm:$0xff]
      %v7566 = vld [vmem:[#allocation2 + $0xc8] sm:$0xff]
      %v7567 = vld [vmem:[#allocation2 + $0xd0] sm:$0xff]
      %v7568 = vld [vmem:[#allocation2 + $0xd8] sm:$0xff]
      %v7569 = vld [vmem:[#allocation2 + $0xe0] sm:$0xff]
      %v7570 = vld [vmem:[#allocation2 + $0xe8] sm:$0xff]
      %v7571 = vld [vmem:[#allocation2 + $0xf0] sm:$0xff]
      %v7572 = vld [vmem:[#allocation2 + $0xf8] sm:$0xff]
      %v7573 = vld [vmem:[#allocation2 + $0x100] sm:$0xff]
      %v7574 = vld [vmem:[#allocation2 + $0x108] sm:$0xff]
      %v7575 = vld [vmem:[#allocation2 + $0x110] sm:$0xff]
      %v7576 = vld [vmem:[#allocation2 + $0x118] sm:$0xff]
      %v7577 = vld [vmem:[#allocation2 + $0x120] sm:$0xff]
      %v7578 = vld [vmem:[#allocation2 + $0x128] sm:$0xff]
      %v7579 = vld [vmem:[#allocation2 + $0x130] sm:$0xff]
      %v7580 = vld [vmem:[#allocation2 + $0x138] sm:$0xff]
      %v7581 = vld [vmem:[#allocation2 + $0x140] sm:$0xff]
      %v7582 = vld [vmem:[#allocation2 + $0x148] sm:$0xff]
      %v7583 = vld [vmem:[#allocation2 + $0x150] sm:$0xff]
      %v7584 = vld [vmem:[#allocation2 + $0x158] sm:$0xff]
      %v7585 = vld [vmem:[#allocation2 + $0x160] sm:$0xff]
      %v7586 = vld [vmem:[#allocation2 + $0x168] sm:$0xff]
      %v7587 = vld [vmem:[#allocation2 + $0x170] sm:$0xff]
      %v7588 = vld [vmem:[#allocation2 + $0x178] sm:$0xff]
      %v7589 = vld [vmem:[#allocation2 + $0x180] sm:$0xff]
      %v7590 = vld [vmem:[#allocation2 + $0x188] sm:$0xff]
      %v7591 = vld [vmem:[#allocation2 + $0x190] sm:$0xff]
      %v7592 = vld [vmem:[#allocation2 + $0x198] sm:$0xff]
      %v7593 = vld [vmem:[#allocation2 + $0x1a0] sm:$0xff]
      %v7594 = vld [vmem:[#allocation2 + $0x1a8] sm:$0xff]
      %s7595 = scalar_lea.vmem %s3, 512
      %v7596 = vld [vmem:[%s7595] sm:$0xff]
      %v7597 = vld [vmem:[%s7595 + $0x8] sm:$0xff]
      %v7598 = vld [vmem:[%s7595 + $0x10] sm:$0xff]
      %v7599 = vld [vmem:[%s7595 + $0x18] sm:$0xff]
      %v7600 = vld [vmem:[%s7595 + $0x20] sm:$0xff]
      %v7601 = vld [vmem:[%s7595 + $0x28] sm:$0xff]
      %v7602 = vld [vmem:[%s7595 + $0x30] sm:$0xff]
      %v7603 = vld [vmem:[%s7595 + $0x38] sm:$0xff]
      %v7604 = vld [vmem:[%s7595 + $0x40] sm:$0xff]
      %v7605 = vld [vmem:[%s7595 + $0x48] sm:$0xff]
      %v7606 = vld [vmem:[%s7595 + $0x50] sm:$0xff]
      %v7607 = vld [vmem:[%s7595 + $0x58] sm:$0xff]
      %v7608 = vld [vmem:[%s7595 + $0x60] sm:$0xff]
      %v7609 = vld [vmem:[%s7595 + $0x68] sm:$0xff]
      %v7610 = vld [vmem:[%s7595 + $0x70] sm:$0xff]
      %v7611 = vld [vmem:[%s7595 + $0x78] sm:$0xff]
      %7612 = vmatprep.subr.mxu0 0.0
      %7613 = vmatpush1.msra.mxu0 %v7596
      %7614 = vmatprep.subr.mxu0 0.0
      %7615 = vmatpush1.msra.mxu0 %v7597
      %7616 = vmatprep.subr.mxu0 0.0
      %7617 = vmatpush1.msra.mxu0 %v7598
      %7618 = vmatprep.subr.mxu0 0.0
      %7619 = vmatpush1.msra.mxu0 %v7599
      %7620 = vmatprep.subr.mxu0 0.0
      %7621 = vmatpush1.msra.mxu0 %v7600
      %7622 = vmatprep.subr.mxu0 0.0
      %7623 = vmatpush1.msra.mxu0 %v7601
      %7624 = vmatprep.subr.mxu0 0.0
      %7625 = vmatpush1.msra.mxu0 %v7602
      %7626 = vmatprep.subr.mxu0 0.0
      %7627 = vmatpush1.msra.mxu0 %v7603
      %7628 = vmatprep.subr.mxu0 0.0
      %7629 = vmatpush1.msra.mxu0 %v7604
      %7630 = vmatprep.subr.mxu0 0.0
      %7631 = vmatpush1.msra.mxu0 %v7605
      %7632 = vmatprep.subr.mxu0 0.0
      %7633 = vmatpush1.msra.mxu0 %v7606
      %7634 = vmatprep.subr.mxu0 0.0
      %7635 = vmatpush1.msra.mxu0 %v7607
      %7636 = vmatprep.subr.mxu0 0.0
      %7637 = vmatpush1.msra.mxu0 %v7608
      %7638 = vmatprep.subr.mxu0 0.0
      %7639 = vmatpush1.msra.mxu0 %v7609
      %7640 = vmatprep.subr.mxu0 0.0
      %7641 = vmatpush1.msra.mxu0 %v7610
      %7642 = vmatprep.subr.mxu0 0.0
      %7643 = vmatpush1.msra.mxu0 %v7611
      %7644 = vmatprep.subr.mxu0 0.0
      %7645 = vmatpush1.msra.mxu0 0.0
      %7646 = vmatprep.subr.mxu0 0.0
      %7647 = vmatpush1.msra.mxu0 0.0
      %7648 = vmatprep.subr.mxu0 0.0
      %7649 = vmatpush1.msra.mxu0 0.0
      %7650 = vmatprep.subr.mxu0 0.0
      %7651 = vmatpush1.msra.mxu0 0.0
      %7652 = vmatprep.subr.mxu0 0.0
      %7653 = vmatpush1.msra.mxu0 0.0
      %7654 = vmatprep.subr.mxu0 0.0
      %7655 = vmatpush1.msra.mxu0 0.0
      %7656 = vmatprep.subr.mxu0 0.0
      %7657 = vmatpush1.msra.mxu0 0.0
      %7658 = vmatprep.subr.mxu0 0.0
      %7659 = vmatpush1.msra.mxu0 0.0
      %7660 = vmatprep.subr.mxu0 0.0
      %7661 = vmatpush1.msra.mxu0 0.0
      %7662 = vmatprep.subr.mxu0 0.0
      %7663 = vmatpush1.msra.mxu0 0.0
      %7664 = vmatprep.subr.mxu0 0.0
      %7665 = vmatpush1.msra.mxu0 0.0
      %7666 = vmatprep.subr.mxu0 0.0
      %7667 = vmatpush1.msra.mxu0 0.0
      %7668 = vmatprep.subr.mxu0 0.0
      %7669 = vmatpush1.msra.mxu0 0.0
      %7670 = vmatprep.subr.mxu0 0.0
      %7671 = vmatpush1.msra.mxu0 0.0
      %7672 = vmatprep.subr.mxu0 0.0
      %7673 = vmatpush1.msra.mxu0 0.0
      %7674 = vmatprep.subr.mxu0 0.0
      %7675 = vmatpush1.msra.mxu0 0.0
      %7676 = vmatprep.mubr.f32.mxu0 0.0
      %7677 = vmatmul.mubr.f32.gmra.mrb[0].mxu0 %v7547
      %v7678 = vpop.f32.mrb[0].mxu0
      %v7679 = vadd.f32 0.0, %v7678
      %v7680 = vpop.f32.mrb[0].mxu0
      %7681 = vmatprep.mubr.f32.mxu0 0.0
      %7682 = vmatmul.mubr.f32.gmra.mrb[0].mxu0 %v7548
      %v7683 = vpop.f32.mrb[0].mxu0
      %v7684 = vadd.f32 0.0, %v7683
      %v7685 = vpop.f32.mrb[0].mxu0
      %7686 = vmatprep.mubr.f32.mxu0 0.0
      %7687 = vmatmul.mubr.f32.gmra.mrb[0].mxu0 %v7549
      %v7688 = vpop.f32.mrb[0].mxu0
      %v7689 = vadd.f32 0.0, %v7688
      %v7690 = vpop.f32.mrb[0].mxu0
      %7691 = vmatprep.mubr.f32.mxu0 0.0
      %7692 = vmatmul.mubr.f32.gmra.mrb[0].mxu0 %v7550
      %v7693 = vpop.f32.mrb[0].mxu0
      %v7694 = vadd.f32 0.0, %v7693
      %v7695 = vpop.f32.mrb[0].mxu0
      %7696 = vmatprep.mubr.f32.mxu0 0.0
      %7697 = vmatmul.mubr.f32.gmra.mrb[0].mxu0 %v7551
      %v7698 = vpop.f32.mrb[0].mxu0
      %v7699 = vadd.f32 0.0, %v7698
      %v7700 = vpop.f32.mrb[0].mxu0
      %7701 = vmatprep.mubr.f32.mxu0 0.0
      %7702 = vmatmul.mubr.f32.gmra.mrb[0].mxu0 %v7552
      %v7703 = vpop.f32.mrb[0].mxu0
      %v7704 = vadd.f32 0.0, %v7703
      %v7705 = vpop.f32.mrb[0].mxu0
      %7706 = vmatprep.mubr.f32.mxu0 0.0
      %7707 = vmatmul.mubr.f32.gmra.mrb[0].mxu0 %v7553
      %v7708 = vpop.f32.mrb[0].mxu0
      %v7709 = vadd.f32 0.0, %v7708
      %v7710 = vpop.f32.mrb[0].mxu0
      %7711 = vmatprep.mubr.f32.mxu0 0.0
      %7712 = vmatmul.mubr.f32.gmra.mrb[0].mxu0 %v7554
      %v7713 = vpop.f32.mrb[0].mxu0
      %v7714 = vadd.f32 0.0, %v7713
      %v7715 = vpop.f32.mrb[0].mxu0
      %7716 = vmatprep.mubr.f32.mxu0 0.0
      %7717 = vmatmul.mubr.f32.gmra.mrb[0].mxu0 %v7555
      %v7718 = vpop.f32.mrb[0].mxu0
      %v7719 = vadd.f32 0.0, %v7718
      %v7720 = vpop.f32.mrb[0].mxu0
      %7721 = vmatprep.mubr.f32.mxu0 0.0
      %7722 = vmatmul.mubr.f32.gmra.mrb[0].mxu0 %v7556
      %v7723 = vpop.f32.mrb[0].mxu0
      %v7724 = vadd.f32 0.0, %v7723
      %v7725 = vpop.f32.mrb[0].mxu0
      %7726 = vmatprep.mubr.f32.mxu0 0.0
      %7727 = vmatmul.mubr.f32.gmra.mrb[0].mxu0 %v7557
      %v7728 = vpop.f32.mrb[0].mxu0
      %v7729 = vadd.f32 0.0, %v7728
      %v7730 = vpop.f32.mrb[0].mxu0
      %7731 = vmatprep.mubr.f32.mxu0 0.0
      %7732 = vmatmul.mubr.f32.gmra.mrb[0].mxu0 %v7558
      %v7733 = vpop.f32.mrb[0].mxu0
      %v7734 = vadd.f32 0.0, %v7733
      %v7735 = vpop.f32.mrb[0].mxu0
      %7736 = vmatprep.mubr.f32.mxu0 0.0
      %7737 = vmatmul.mubr.f32.gmra.mrb[0].mxu0 %v7559
      %v7738 = vpop.f32.mrb[0].mxu0
      %v7739 = vadd.f32 0.0, %v7738
      %v7740 = vpop.f32.mrb[0].mxu0
      %7741 = vmatprep.mubr.f32.mxu0 0.0
      %7742 = vmatmul.mubr.f32.gmra.mrb[0].mxu0 %v7560
      %v7743 = vpop.f32.mrb[0].mxu0
      %v7744 = vadd.f32 0.0, %v7743
      %v7745 = vpop.f32.mrb[0].mxu0
      %7746 = vmatprep.mubr.f32.mxu0 0.0
      %7747 = vmatmul.mubr.f32.gmra.mrb[0].mxu0 %v7561
      %v7748 = vpop.f32.mrb[0].mxu0
      %v7749 = vadd.f32 0.0, %v7748
      %v7750 = vpop.f32.mrb[0].mxu0
      %7751 = vmatprep.mubr.f32.mxu0 0.0
      %7752 = vmatmul.mubr.f32.gmra.mrb[0].mxu0 %v7562
      %v7753 = vpop.f32.mrb[0].mxu0
      %v7754 = vadd.f32 0.0, %v7753
      %v7755 = vpop.f32.mrb[0].mxu0
      %7756 = vmatprep.mubr.f32.mxu0 0.0
      %7757 = vmatmul.mubr.f32.gmra.mrb[0].mxu0 %v7563
      %v7758 = vpop.f32.mrb[0].mxu0
      %v7759 = vadd.f32 0.0, %v7758
      %v7760 = vpop.f32.mrb[0].mxu0
      %7761 = vmatprep.mubr.f32.mxu0 0.0
      %7762 = vmatmul.mubr.f32.gmra.mrb[0].mxu0 %v7564
      %v7763 = vpop.f32.mrb[0].mxu0
      %v7764 = vadd.f32 0.0, %v7763
      %v7765 = vpop.f32.mrb[0].mxu0
      %7766 = vmatprep.mubr.f32.mxu0 0.0
      %7767 = vmatmul.mubr.f32.gmra.mrb[0].mxu0 %v7565
      %v7768 = vpop.f32.mrb[0].mxu0
      %v7769 = vadd.f32 0.0, %v7768
      %v7770 = vpop.f32.mrb[0].mxu0
      %7771 = vmatprep.mubr.f32.mxu0 0.0
      %7772 = vmatmul.mubr.f32.gmra.mrb[0].mxu0 %v7566
      %v7773 = vpop.f32.mrb[0].mxu0
      %v7774 = vadd.f32 0.0, %v7773
      %v7775 = vpop.f32.mrb[0].mxu0
      %7776 = vmatprep.mubr.f32.mxu0 0.0
      %7777 = vmatmul.mubr.f32.gmra.mrb[0].mxu0 %v7567
      %v7778 = vpop.f32.mrb[0].mxu0
      %v7779 = vadd.f32 0.0, %v7778
      %v7780 = vpop.f32.mrb[0].mxu0
      %7781 = vmatprep.mubr.f32.mxu0 0.0
      %7782 = vmatmul.mubr.f32.gmra.mrb[0].mxu0 %v7568
      %v7783 = vpop.f32.mrb[0].mxu0
      %v7784 = vadd.f32 0.0, %v7783
      %v7785 = vpop.f32.mrb[0].mxu0
      %7786 = vmatprep.mubr.f32.mxu0 0.0
      %7787 = vmatmul.mubr.f32.gmra.mrb[0].mxu0 %v7569
      %v7788 = vpop.f32.mrb[0].mxu0
      %v7789 = vadd.f32 0.0, %v7788
      %v7790 = vpop.f32.mrb[0].mxu0
      %7791 = vmatprep.mubr.f32.mxu0 0.0
      %7792 = vmatmul.mubr.f32.gmra.mrb[0].mxu0 %v7570
      %v7793 = vpop.f32.mrb[0].mxu0
      %v7794 = vadd.f32 0.0, %v7793
      %v7795 = vpop.f32.mrb[0].mxu0
      %7796 = vmatprep.mubr.f32.mxu0 0.0
      %7797 = vmatmul.mubr.f32.gmra.mrb[0].mxu0 %v7571
      %v7798 = vpop.f32.mrb[0].mxu0
      %v7799 = vadd.f32 0.0, %v7798
      %v7800 = vpop.f32.mrb[0].mxu0
      %7801 = vmatprep.mubr.f32.mxu0 0.0
      %7802 = vmatmul.mubr.f32.gmra.mrb[0].mxu0 %v7572
      %v7803 = vpop.f32.mrb[0].mxu0
      %v7804 = vadd.f32 0.0, %v7803
      %v7805 = vpop.f32.mrb[0].mxu0
      %7806 = vmatprep.mubr.f32.mxu0 0.0
      %7807 = vmatmul.mubr.f32.gmra.mrb[0].mxu0 %v7573
      %v7808 = vpop.f32.mrb[0].mxu0
      %v7809 = vadd.f32 0.0, %v7808
      %v7810 = vpop.f32.mrb[0].mxu0
      %7811 = vmatprep.mubr.f32.mxu0 0.0
      %7812 = vmatmul.mubr.f32.gmra.mrb[0].mxu0 %v7574
      %v7813 = vpop.f32.mrb[0].mxu0
      %v7814 = vadd.f32 0.0, %v7813
      %v7815 = vpop.f32.mrb[0].mxu0
      %7816 = vmatprep.mubr.f32.mxu0 0.0
      %7817 = vmatmul.mubr.f32.gmra.mrb[0].mxu0 %v7575
      %v7818 = vpop.f32.mrb[0].mxu0
      %v7819 = vadd.f32 0.0, %v7818
      %v7820 = vpop.f32.mrb[0].mxu0
      %7821 = vmatprep.mubr.f32.mxu0 0.0
      %7822 = vmatmul.mubr.f32.gmra.mrb[0].mxu0 %v7576
      %v7823 = vpop.f32.mrb[0].mxu0
      %v7824 = vadd.f32 0.0, %v7823
      %v7825 = vpop.f32.mrb[0].mxu0
      %7826 = vmatprep.mubr.f32.mxu0 0.0
      %7827 = vmatmul.mubr.f32.gmra.mrb[0].mxu0 %v7577
      %v7828 = vpop.f32.mrb[0].mxu0
      %v7829 = vadd.f32 0.0, %v7828
      %v7830 = vpop.f32.mrb[0].mxu0
      %7831 = vmatprep.mubr.f32.mxu0 0.0
      %7832 = vmatmul.mubr.f32.gmra.mrb[0].mxu0 %v7578
      %v7833 = vpop.f32.mrb[0].mxu0
      %v7834 = vadd.f32 0.0, %v7833
      %v7835 = vpop.f32.mrb[0].mxu0
      %7836 = vmatprep.mubr.f32.mxu0 0.0
      %7837 = vmatmul.mubr.f32.gmra.mrb[0].mxu0 %v7579
      %v7838 = vpop.f32.mrb[0].mxu0
      %v7839 = vadd.f32 0.0, %v7838
      %v7840 = vpop.f32.mrb[0].mxu0
      %7841 = vmatprep.mubr.f32.mxu0 0.0
      %7842 = vmatmul.mubr.f32.gmra.mrb[0].mxu0 %v7580
      %v7843 = vpop.f32.mrb[0].mxu0
      %v7844 = vadd.f32 0.0, %v7843
      %v7845 = vpop.f32.mrb[0].mxu0
      %7846 = vmatprep.mubr.f32.mxu0 0.0
      %7847 = vmatmul.mubr.f32.gmra.mrb[0].mxu0 %v7581
      %v7848 = vpop.f32.mrb[0].mxu0
      %v7849 = vadd.f32 0.0, %v7848
      %v7850 = vpop.f32.mrb[0].mxu0
      %7851 = vmatprep.mubr.f32.mxu0 0.0
      %7852 = vmatmul.mubr.f32.gmra.mrb[0].mxu0 %v7582
      %v7853 = vpop.f32.mrb[0].mxu0
      %v7854 = vadd.f32 0.0, %v7853
      %v7855 = vpop.f32.mrb[0].mxu0
      %7856 = vmatprep.mubr.f32.mxu0 0.0
      %7857 = vmatmul.mubr.f32.gmra.mrb[0].mxu0 %v7583
      %v7858 = vpop.f32.mrb[0].mxu0
      %v7859 = vadd.f32 0.0, %v7858
      %v7860 = vpop.f32.mrb[0].mxu0
      %7861 = vmatprep.mubr.f32.mxu0 0.0
      %7862 = vmatmul.mubr.f32.gmra.mrb[0].mxu0 %v7584
      %v7863 = vpop.f32.mrb[0].mxu0
      %v7864 = vadd.f32 0.0, %v7863
      %v7865 = vpop.f32.mrb[0].mxu0
      %7866 = vmatprep.mubr.f32.mxu0 0.0
      %7867 = vmatmul.mubr.f32.gmra.mrb[0].mxu0 %v7585
      %v7868 = vpop.f32.mrb[0].mxu0
      %v7869 = vadd.f32 0.0, %v7868
      %v7870 = vpop.f32.mrb[0].mxu0
      %7871 = vmatprep.mubr.f32.mxu0 0.0
      %7872 = vmatmul.mubr.f32.gmra.mrb[0].mxu0 %v7586
      %v7873 = vpop.f32.mrb[0].mxu0
      %v7874 = vadd.f32 0.0, %v7873
      %v7875 = vpop.f32.mrb[0].mxu0
      %7876 = vmatprep.mubr.f32.mxu0 0.0
      %7877 = vmatmul.mubr.f32.gmra.mrb[0].mxu0 %v7587
      %v7878 = vpop.f32.mrb[0].mxu0
      %v7879 = vadd.f32 0.0, %v7878
      %v7880 = vpop.f32.mrb[0].mxu0
      %7881 = vmatprep.mubr.f32.mxu0 0.0
      %7882 = vmatmul.mubr.f32.gmra.mrb[0].mxu0 %v7588
      %v7883 = vpop.f32.mrb[0].mxu0
      %v7884 = vadd.f32 0.0, %v7883
      %v7885 = vpop.f32.mrb[0].mxu0
      %7886 = vmatprep.mubr.f32.mxu0 0.0
      %7887 = vmatmul.mubr.f32.gmra.mrb[0].mxu0 %v7589
      %v7888 = vpop.f32.mrb[0].mxu0
      %v7889 = vadd.f32 0.0, %v7888
      %v7890 = vpop.f32.mrb[0].mxu0
      %7891 = vmatprep.mubr.f32.mxu0 0.0
      %7892 = vmatmul.mubr.f32.gmra.mrb[0].mxu0 %v7590
      %v7893 = vpop.f32.mrb[0].mxu0
      %v7894 = vadd.f32 0.0, %v7893
      %v7895 = vpop.f32.mrb[0].mxu0
      %7896 = vmatprep.mubr.f32.mxu0 0.0
      %7897 = vmatmul.mubr.f32.gmra.mrb[0].mxu0 %v7591
      %v7898 = vpop.f32.mrb[0].mxu0
      %v7899 = vadd.f32 0.0, %v7898
      %v7900 = vpop.f32.mrb[0].mxu0
      %7901 = vmatprep.mubr.f32.mxu0 0.0
      %7902 = vmatmul.mubr.f32.gmra.mrb[0].mxu0 %v7592
      %v7903 = vpop.f32.mrb[0].mxu0
      %v7904 = vadd.f32 0.0, %v7903
      %v7905 = vpop.f32.mrb[0].mxu0
      %7906 = vmatprep.mubr.f32.mxu0 0.0
      %7907 = vmatmul.mubr.f32.gmra.mrb[0].mxu0 %v7593
      %v7908 = vpop.f32.mrb[0].mxu0
      %v7909 = vadd.f32 0.0, %v7908
      %v7910 = vpop.f32.mrb[0].mxu0
      %7911 = vmatprep.mubr.f32.mxu0 0.0
      %7912 = vmatmul.mubr.f32.gmra.mrb[0].mxu0 %v7594
      %v7913 = vpop.f32.mrb[0].mxu0
      %v7914 = vadd.f32 0.0, %v7913
      %v7915 = vpop.f32.mrb[0].mxu0
      %7916 = vdwg.mxu0
      %v7917 = vadd.f32 %v7499, %v7679
      %v7918 = vadd.f32 %v7500, %v7684
      %v7919 = vadd.f32 %v7501, %v7689
      %v7920 = vadd.f32 %v7502, %v7694
      %v7921 = vadd.f32 %v7503, %v7699
      %v7922 = vadd.f32 %v7504, %v7704
      %v7923 = vadd.f32 %v7505, %v7709
      %v7924 = vadd.f32 %v7506, %v7714
      %v7925 = vadd.f32 %v7507, %v7719
      %v7926 = vadd.f32 %v7508, %v7724
      %v7927 = vadd.f32 %v7509, %v7729
      %v7928 = vadd.f32 %v7510, %v7734
      %v7929 = vadd.f32 %v7511, %v7739
      %v7930 = vadd.f32 %v7512, %v7744
      %v7931 = vadd.f32 %v7513, %v7749
      %v7932 = vadd.f32 %v7514, %v7754
      %v7933 = vadd.f32 %v7515, %v7759
      %v7934 = vadd.f32 %v7516, %v7764
      %v7935 = vadd.f32 %v7517, %v7769
      %v7936 = vadd.f32 %v7518, %v7774
      %v7937 = vadd.f32 %v7519, %v7779
      %v7938 = vadd.f32 %v7520, %v7784
      %v7939 = vadd.f32 %v7521, %v7789
      %v7940 = vadd.f32 %v7522, %v7794
      %v7941 = vadd.f32 %v7523, %v7799
      %v7942 = vadd.f32 %v7524, %v7804
      %v7943 = vadd.f32 %v7525, %v7809
      %v7944 = vadd.f32 %v7526, %v7814
      %v7945 = vadd.f32 %v7527, %v7819
      %v7946 = vadd.f32 %v7528, %v7824
      %v7947 = vadd.f32 %v7529, %v7829
      %v7948 = vadd.f32 %v7530, %v7834
      %v7949 = vadd.f32 %v7531, %v7839
      %v7950 = vadd.f32 %v7532, %v7844
      %v7951 = vadd.f32 %v7533, %v7849
      %v7952 = vadd.f32 %v7534, %v7854
      %v7953 = vadd.f32 %v7535, %v7859
      %v7954 = vadd.f32 %v7536, %v7864
      %v7955 = vadd.f32 %v7537, %v7869
      %v7956 = vadd.f32 %v7538, %v7874
      %v7957 = vadd.f32 %v7539, %v7879
      %v7958 = vadd.f32 %v7540, %v7884
      %v7959 = vadd.f32 %v7541, %v7889
      %v7960 = vadd.f32 %v7542, %v7894
      %v7961 = vadd.f32 %v7543, %v7899
      %v7962 = vadd.f32 %v7544, %v7904
      %v7963 = vadd.f32 %v7545, %v7909
      %v7964 = vadd.f32 %v7546, %v7914
      %v7965 = vld [vmem:[#allocation2 + $0x31] sm:$0xff]
      %v7966 = vld [vmem:[#allocation2 + $0x39] sm:$0xff]
      %v7967 = vld [vmem:[#allocation2 + $0x41] sm:$0xff]
      %v7968 = vld [vmem:[#allocation2 + $0x49] sm:$0xff]
      %v7969 = vld [vmem:[#allocation2 + $0x51] sm:$0xff]
      %v7970 = vld [vmem:[#allocation2 + $0x59] sm:$0xff]
      %v7971 = vld [vmem:[#allocation2 + $0x61] sm:$0xff]
      %v7972 = vld [vmem:[#allocation2 + $0x69] sm:$0xff]
      %v7973 = vld [vmem:[#allocation2 + $0x71] sm:$0xff]
      %v7974 = vld [vmem:[#allocation2 + $0x79] sm:$0xff]
      %v7975 = vld [vmem:[#allocation2 + $0x81] sm:$0xff]
      %v7976 = vld [vmem:[#allocation2 + $0x89] sm:$0xff]
      %v7977 = vld [vmem:[#allocation2 + $0x91] sm:$0xff]
      %v7978 = vld [vmem:[#allocation2 + $0x99] sm:$0xff]
      %v7979 = vld [vmem:[#allocation2 + $0xa1] sm:$0xff]
      %v7980 = vld [vmem:[#allocation2 + $0xa9] sm:$0xff]
      %v7981 = vld [vmem:[#allocation2 + $0xb1] sm:$0xff]
      %v7982 = vld [vmem:[#allocation2 + $0xb9] sm:$0xff]
      %v7983 = vld [vmem:[#allocation2 + $0xc1] sm:$0xff]
      %v7984 = vld [vmem:[#allocation2 + $0xc9] sm:$0xff]
      %v7985 = vld [vmem:[#allocation2 + $0xd1] sm:$0xff]
      %v7986 = vld [vmem:[#allocation2 + $0xd9] sm:$0xff]
      %v7987 = vld [vmem:[#allocation2 + $0xe1] sm:$0xff]
      %v7988 = vld [vmem:[#allocation2 + $0xe9] sm:$0xff]
      %v7989 = vld [vmem:[#allocation2 + $0xf1] sm:$0xff]
      %v7990 = vld [vmem:[#allocation2 + $0xf9] sm:$0xff]
      %v7991 = vld [vmem:[#allocation2 + $0x101] sm:$0xff]
      %v7992 = vld [vmem:[#allocation2 + $0x109] sm:$0xff]
      %v7993 = vld [vmem:[#allocation2 + $0x111] sm:$0xff]
      %v7994 = vld [vmem:[#allocation2 + $0x119] sm:$0xff]
      %v7995 = vld [vmem:[#allocation2 + $0x121] sm:$0xff]
      %v7996 = vld [vmem:[#allocation2 + $0x129] sm:$0xff]
      %v7997 = vld [vmem:[#allocation2 + $0x131] sm:$0xff]
      %v7998 = vld [vmem:[#allocation2 + $0x139] sm:$0xff]
      %v7999 = vld [vmem:[#allocation2 + $0x141] sm:$0xff]
      %v8000 = vld [vmem:[#allocation2 + $0x149] sm:$0xff]
      %v8001 = vld [vmem:[#allocation2 + $0x151] sm:$0xff]
      %v8002 = vld [vmem:[#allocation2 + $0x159] sm:$0xff]
      %v8003 = vld [vmem:[#allocation2 + $0x161] sm:$0xff]
      %v8004 = vld [vmem:[#allocation2 + $0x169] sm:$0xff]
      %v8005 = vld [vmem:[#allocation2 + $0x171] sm:$0xff]
      %v8006 = vld [vmem:[#allocation2 + $0x179] sm:$0xff]
      %v8007 = vld [vmem:[#allocation2 + $0x181] sm:$0xff]
      %v8008 = vld [vmem:[#allocation2 + $0x189] sm:$0xff]
      %v8009 = vld [vmem:[#allocation2 + $0x191] sm:$0xff]
      %v8010 = vld [vmem:[#allocation2 + $0x199] sm:$0xff]
      %v8011 = vld [vmem:[#allocation2 + $0x1a1] sm:$0xff]
      %v8012 = vld [vmem:[#allocation2 + $0x1a9] sm:$0xff]
      %s8013 = scalar_lea.vmem %s3, 640
      %v8014 = vld [vmem:[%s8013] sm:$0xff]
      %v8015 = vld [vmem:[%s8013 + $0x8] sm:$0xff]
      %v8016 = vld [vmem:[%s8013 + $0x10] sm:$0xff]
      %v8017 = vld [vmem:[%s8013 + $0x18] sm:$0xff]
      %v8018 = vld [vmem:[%s8013 + $0x20] sm:$0xff]
      %v8019 = vld [vmem:[%s8013 + $0x28] sm:$0xff]
      %v8020 = vld [vmem:[%s8013 + $0x30] sm:$0xff]
      %v8021 = vld [vmem:[%s8013 + $0x38] sm:$0xff]
      %v8022 = vld [vmem:[%s8013 + $0x40] sm:$0xff]
      %v8023 = vld [vmem:[%s8013 + $0x48] sm:$0xff]
      %v8024 = vld [vmem:[%s8013 + $0x50] sm:$0xff]
      %v8025 = vld [vmem:[%s8013 + $0x58] sm:$0xff]
      %v8026 = vld [vmem:[%s8013 + $0x60] sm:$0xff]
      %v8027 = vld [vmem:[%s8013 + $0x68] sm:$0xff]
      %v8028 = vld [vmem:[%s8013 + $0x70] sm:$0xff]
      %v8029 = vld [vmem:[%s8013 + $0x78] sm:$0xff]
      %8030 = vmatprep.subr.mxu0 0.0
      %8031 = vmatpush1.msra.mxu0 %v8014
      %8032 = vmatprep.subr.mxu0 0.0
      %8033 = vmatpush1.msra.mxu0 %v8015
      %8034 = vmatprep.subr.mxu0 0.0
      %8035 = vmatpush1.msra.mxu0 %v8016
      %8036 = vmatprep.subr.mxu0 0.0
      %8037 = vmatpush1.msra.mxu0 %v8017
      %8038 = vmatprep.subr.mxu0 0.0
      %8039 = vmatpush1.msra.mxu0 %v8018
      %8040 = vmatprep.subr.mxu0 0.0
      %8041 = vmatpush1.msra.mxu0 %v8019
      %8042 = vmatprep.subr.mxu0 0.0
      %8043 = vmatpush1.msra.mxu0 %v8020
      %8044 = vmatprep.subr.mxu0 0.0
      %8045 = vmatpush1.msra.mxu0 %v8021
      %8046 = vmatprep.subr.mxu0 0.0
      %8047 = vmatpush1.msra.mxu0 %v8022
      %8048 = vmatprep.subr.mxu0 0.0
      %8049 = vmatpush1.msra.mxu0 %v8023
      %8050 = vmatprep.subr.mxu0 0.0
      %8051 = vmatpush1.msra.mxu0 %v8024
      %8052 = vmatprep.subr.mxu0 0.0
      %8053 = vmatpush1.msra.mxu0 %v8025
      %8054 = vmatprep.subr.mxu0 0.0
      %8055 = vmatpush1.msra.mxu0 %v8026
      %8056 = vmatprep.subr.mxu0 0.0
      %8057 = vmatpush1.msra.mxu0 %v8027
      %8058 = vmatprep.subr.mxu0 0.0
      %8059 = vmatpush1.msra.mxu0 %v8028
      %8060 = vmatprep.subr.mxu0 0.0
      %8061 = vmatpush1.msra.mxu0 %v8029
      %8062 = vmatprep.subr.mxu0 0.0
      %8063 = vmatpush1.msra.mxu0 0.0
      %8064 = vmatprep.subr.mxu0 0.0
      %8065 = vmatpush1.msra.mxu0 0.0
      %8066 = vmatprep.subr.mxu0 0.0
      %8067 = vmatpush1.msra.mxu0 0.0
      %8068 = vmatprep.subr.mxu0 0.0
      %8069 = vmatpush1.msra.mxu0 0.0
      %8070 = vmatprep.subr.mxu0 0.0
      %8071 = vmatpush1.msra.mxu0 0.0
      %8072 = vmatprep.subr.mxu0 0.0
      %8073 = vmatpush1.msra.mxu0 0.0
      %8074 = vmatprep.subr.mxu0 0.0
      %8075 = vmatpush1.msra.mxu0 0.0
      %8076 = vmatprep.subr.mxu0 0.0
      %8077 = vmatpush1.msra.mxu0 0.0
      %8078 = vmatprep.subr.mxu0 0.0
      %8079 = vmatpush1.msra.mxu0 0.0
      %8080 = vmatprep.subr.mxu0 0.0
      %8081 = vmatpush1.msra.mxu0 0.0
      %8082 = vmatprep.subr.mxu0 0.0
      %8083 = vmatpush1.msra.mxu0 0.0
      %8084 = vmatprep.subr.mxu0 0.0
      %8085 = vmatpush1.msra.mxu0 0.0
      %8086 = vmatprep.subr.mxu0 0.0
      %8087 = vmatpush1.msra.mxu0 0.0
      %8088 = vmatprep.subr.mxu0 0.0
      %8089 = vmatpush1.msra.mxu0 0.0
      %8090 = vmatprep.subr.mxu0 0.0
      %8091 = vmatpush1.msra.mxu0 0.0
      %8092 = vmatprep.subr.mxu0 0.0
      %8093 = vmatpush1.msra.mxu0 0.0
      %8094 = vmatprep.mubr.f32.mxu0 0.0
      %8095 = vmatmul.mubr.f32.gmra.mrb[0].mxu0 %v7965
      %v8096 = vpop.f32.mrb[0].mxu0
      %v8097 = vadd.f32 0.0, %v8096
      %v8098 = vpop.f32.mrb[0].mxu0
      %8099 = vmatprep.mubr.f32.mxu0 0.0
      %8100 = vmatmul.mubr.f32.gmra.mrb[0].mxu0 %v7966
      %v8101 = vpop.f32.mrb[0].mxu0
      %v8102 = vadd.f32 0.0, %v8101
      %v8103 = vpop.f32.mrb[0].mxu0
      %8104 = vmatprep.mubr.f32.mxu0 0.0
      %8105 = vmatmul.mubr.f32.gmra.mrb[0].mxu0 %v7967
      %v8106 = vpop.f32.mrb[0].mxu0
      %v8107 = vadd.f32 0.0, %v8106
      %v8108 = vpop.f32.mrb[0].mxu0
      %8109 = vmatprep.mubr.f32.mxu0 0.0
      %8110 = vmatmul.mubr.f32.gmra.mrb[0].mxu0 %v7968
      %v8111 = vpop.f32.mrb[0].mxu0
      %v8112 = vadd.f32 0.0, %v8111
      %v8113 = vpop.f32.mrb[0].mxu0
      %8114 = vmatprep.mubr.f32.mxu0 0.0
      %8115 = vmatmul.mubr.f32.gmra.mrb[0].mxu0 %v7969
      %v8116 = vpop.f32.mrb[0].mxu0
      %v8117 = vadd.f32 0.0, %v8116
      %v8118 = vpop.f32.mrb[0].mxu0
      %8119 = vmatprep.mubr.f32.mxu0 0.0
      %8120 = vmatmul.mubr.f32.gmra.mrb[0].mxu0 %v7970
      %v8121 = vpop.f32.mrb[0].mxu0
      %v8122 = vadd.f32 0.0, %v8121
      %v8123 = vpop.f32.mrb[0].mxu0
      %8124 = vmatprep.mubr.f32.mxu0 0.0
      %8125 = vmatmul.mubr.f32.gmra.mrb[0].mxu0 %v7971
      %v8126 = vpop.f32.mrb[0].mxu0
      %v8127 = vadd.f32 0.0, %v8126
      %v8128 = vpop.f32.mrb[0].mxu0
      %8129 = vmatprep.mubr.f32.mxu0 0.0
      %8130 = vmatmul.mubr.f32.gmra.mrb[0].mxu0 %v7972
      %v8131 = vpop.f32.mrb[0].mxu0
      %v8132 = vadd.f32 0.0, %v8131
      %v8133 = vpop.f32.mrb[0].mxu0
      %8134 = vmatprep.mubr.f32.mxu0 0.0
      %8135 = vmatmul.mubr.f32.gmra.mrb[0].mxu0 %v7973
      %v8136 = vpop.f32.mrb[0].mxu0
      %v8137 = vadd.f32 0.0, %v8136
      %v8138 = vpop.f32.mrb[0].mxu0
      %8139 = vmatprep.mubr.f32.mxu0 0.0
      %8140 = vmatmul.mubr.f32.gmra.mrb[0].mxu0 %v7974
      %v8141 = vpop.f32.mrb[0].mxu0
      %v8142 = vadd.f32 0.0, %v8141
      %v8143 = vpop.f32.mrb[0].mxu0
      %8144 = vmatprep.mubr.f32.mxu0 0.0
      %8145 = vmatmul.mubr.f32.gmra.mrb[0].mxu0 %v7975
      %v8146 = vpop.f32.mrb[0].mxu0
      %v8147 = vadd.f32 0.0, %v8146
      %v8148 = vpop.f32.mrb[0].mxu0
      %8149 = vmatprep.mubr.f32.mxu0 0.0
      %8150 = vmatmul.mubr.f32.gmra.mrb[0].mxu0 %v7976
      %v8151 = vpop.f32.mrb[0].mxu0
      %v8152 = vadd.f32 0.0, %v8151
      %v8153 = vpop.f32.mrb[0].mxu0
      %8154 = vmatprep.mubr.f32.mxu0 0.0
      %8155 = vmatmul.mubr.f32.gmra.mrb[0].mxu0 %v7977
      %v8156 = vpop.f32.mrb[0].mxu0
      %v8157 = vadd.f32 0.0, %v8156
      %v8158 = vpop.f32.mrb[0].mxu0
      %8159 = vmatprep.mubr.f32.mxu0 0.0
      %8160 = vmatmul.mubr.f32.gmra.mrb[0].mxu0 %v7978
      %v8161 = vpop.f32.mrb[0].mxu0
      %v8162 = vadd.f32 0.0, %v8161
      %v8163 = vpop.f32.mrb[0].mxu0
      %8164 = vmatprep.mubr.f32.mxu0 0.0
      %8165 = vmatmul.mubr.f32.gmra.mrb[0].mxu0 %v7979
      %v8166 = vpop.f32.mrb[0].mxu0
      %v8167 = vadd.f32 0.0, %v8166
      %v8168 = vpop.f32.mrb[0].mxu0
      %8169 = vmatprep.mubr.f32.mxu0 0.0
      %8170 = vmatmul.mubr.f32.gmra.mrb[0].mxu0 %v7980
      %v8171 = vpop.f32.mrb[0].mxu0
      %v8172 = vadd.f32 0.0, %v8171
      %v8173 = vpop.f32.mrb[0].mxu0
      %8174 = vmatprep.mubr.f32.mxu0 0.0
      %8175 = vmatmul.mubr.f32.gmra.mrb[0].mxu0 %v7981
      %v8176 = vpop.f32.mrb[0].mxu0
      %v8177 = vadd.f32 0.0, %v8176
      %v8178 = vpop.f32.mrb[0].mxu0
      %8179 = vmatprep.mubr.f32.mxu0 0.0
      %8180 = vmatmul.mubr.f32.gmra.mrb[0].mxu0 %v7982
      %v8181 = vpop.f32.mrb[0].mxu0
      %v8182 = vadd.f32 0.0, %v8181
      %v8183 = vpop.f32.mrb[0].mxu0
      %8184 = vmatprep.mubr.f32.mxu0 0.0
      %8185 = vmatmul.mubr.f32.gmra.mrb[0].mxu0 %v7983
      %v8186 = vpop.f32.mrb[0].mxu0
      %v8187 = vadd.f32 0.0, %v8186
      %v8188 = vpop.f32.mrb[0].mxu0
      %8189 = vmatprep.mubr.f32.mxu0 0.0
      %8190 = vmatmul.mubr.f32.gmra.mrb[0].mxu0 %v7984
      %v8191 = vpop.f32.mrb[0].mxu0
      %v8192 = vadd.f32 0.0, %v8191
      %v8193 = vpop.f32.mrb[0].mxu0
      %8194 = vmatprep.mubr.f32.mxu0 0.0
      %8195 = vmatmul.mubr.f32.gmra.mrb[0].mxu0 %v7985
      %v8196 = vpop.f32.mrb[0].mxu0
      %v8197 = vadd.f32 0.0, %v8196
      %v8198 = vpop.f32.mrb[0].mxu0
      %8199 = vmatprep.mubr.f32.mxu0 0.0
      %8200 = vmatmul.mubr.f32.gmra.mrb[0].mxu0 %v7986
      %v8201 = vpop.f32.mrb[0].mxu0
      %v8202 = vadd.f32 0.0, %v8201
      %v8203 = vpop.f32.mrb[0].mxu0
      %8204 = vmatprep.mubr.f32.mxu0 0.0
      %8205 = vmatmul.mubr.f32.gmra.mrb[0].mxu0 %v7987
      %v8206 = vpop.f32.mrb[0].mxu0
      %v8207 = vadd.f32 0.0, %v8206
      %v8208 = vpop.f32.mrb[0].mxu0
      %8209 = vmatprep.mubr.f32.mxu0 0.0
      %8210 = vmatmul.mubr.f32.gmra.mrb[0].mxu0 %v7988
      %v8211 = vpop.f32.mrb[0].mxu0
      %v8212 = vadd.f32 0.0, %v8211
      %v8213 = vpop.f32.mrb[0].mxu0
      %8214 = vmatprep.mubr.f32.mxu0 0.0
      %8215 = vmatmul.mubr.f32.gmra.mrb[0].mxu0 %v7989
      %v8216 = vpop.f32.mrb[0].mxu0
      %v8217 = vadd.f32 0.0, %v8216
      %v8218 = vpop.f32.mrb[0].mxu0
      %8219 = vmatprep.mubr.f32.mxu0 0.0
      %8220 = vmatmul.mubr.f32.gmra.mrb[0].mxu0 %v7990
      %v8221 = vpop.f32.mrb[0].mxu0
      %v8222 = vadd.f32 0.0, %v8221
      %v8223 = vpop.f32.mrb[0].mxu0
      %8224 = vmatprep.mubr.f32.mxu0 0.0
      %8225 = vmatmul.mubr.f32.gmra.mrb[0].mxu0 %v7991
      %v8226 = vpop.f32.mrb[0].mxu0
      %v8227 = vadd.f32 0.0, %v8226
      %v8228 = vpop.f32.mrb[0].mxu0
      %8229 = vmatprep.mubr.f32.mxu0 0.0
      %8230 = vmatmul.mubr.f32.gmra.mrb[0].mxu0 %v7992
      %v8231 = vpop.f32.mrb[0].mxu0
      %v8232 = vadd.f32 0.0, %v8231
      %v8233 = vpop.f32.mrb[0].mxu0
      %8234 = vmatprep.mubr.f32.mxu0 0.0
      %8235 = vmatmul.mubr.f32.gmra.mrb[0].mxu0 %v7993
      %v8236 = vpop.f32.mrb[0].mxu0
      %v8237 = vadd.f32 0.0, %v8236
      %v8238 = vpop.f32.mrb[0].mxu0
      %8239 = vmatprep.mubr.f32.mxu0 0.0
      %8240 = vmatmul.mubr.f32.gmra.mrb[0].mxu0 %v7994
      %v8241 = vpop.f32.mrb[0].mxu0
      %v8242 = vadd.f32 0.0, %v8241
      %v8243 = vpop.f32.mrb[0].mxu0
      %8244 = vmatprep.mubr.f32.mxu0 0.0
      %8245 = vmatmul.mubr.f32.gmra.mrb[0].mxu0 %v7995
      %v8246 = vpop.f32.mrb[0].mxu0
      %v8247 = vadd.f32 0.0, %v8246
      %v8248 = vpop.f32.mrb[0].mxu0
      %8249 = vmatprep.mubr.f32.mxu0 0.0
      %8250 = vmatmul.mubr.f32.gmra.mrb[0].mxu0 %v7996
      %v8251 = vpop.f32.mrb[0].mxu0
      %v8252 = vadd.f32 0.0, %v8251
      %v8253 = vpop.f32.mrb[0].mxu0
      %8254 = vmatprep.mubr.f32.mxu0 0.0
      %8255 = vmatmul.mubr.f32.gmra.mrb[0].mxu0 %v7997
      %v8256 = vpop.f32.mrb[0].mxu0
      %v8257 = vadd.f32 0.0, %v8256
      %v8258 = vpop.f32.mrb[0].mxu0
      %8259 = vmatprep.mubr.f32.mxu0 0.0
      %8260 = vmatmul.mubr.f32.gmra.mrb[0].mxu0 %v7998
      %v8261 = vpop.f32.mrb[0].mxu0
      %v8262 = vadd.f32 0.0, %v8261
      %v8263 = vpop.f32.mrb[0].mxu0
      %8264 = vmatprep.mubr.f32.mxu0 0.0
      %8265 = vmatmul.mubr.f32.gmra.mrb[0].mxu0 %v7999
      %v8266 = vpop.f32.mrb[0].mxu0
      %v8267 = vadd.f32 0.0, %v8266
      %v8268 = vpop.f32.mrb[0].mxu0
      %8269 = vmatprep.mubr.f32.mxu0 0.0
      %8270 = vmatmul.mubr.f32.gmra.mrb[0].mxu0 %v8000
      %v8271 = vpop.f32.mrb[0].mxu0
      %v8272 = vadd.f32 0.0, %v8271
      %v8273 = vpop.f32.mrb[0].mxu0
      %8274 = vmatprep.mubr.f32.mxu0 0.0
      %8275 = vmatmul.mubr.f32.gmra.mrb[0].mxu0 %v8001
      %v8276 = vpop.f32.mrb[0].mxu0
      %v8277 = vadd.f32 0.0, %v8276
      %v8278 = vpop.f32.mrb[0].mxu0
      %8279 = vmatprep.mubr.f32.mxu0 0.0
      %8280 = vmatmul.mubr.f32.gmra.mrb[0].mxu0 %v8002
      %v8281 = vpop.f32.mrb[0].mxu0
      %v8282 = vadd.f32 0.0, %v8281
      %v8283 = vpop.f32.mrb[0].mxu0
      %8284 = vmatprep.mubr.f32.mxu0 0.0
      %8285 = vmatmul.mubr.f32.gmra.mrb[0].mxu0 %v8003
      %v8286 = vpop.f32.mrb[0].mxu0
      %v8287 = vadd.f32 0.0, %v8286
      %v8288 = vpop.f32.mrb[0].mxu0
      %8289 = vmatprep.mubr.f32.mxu0 0.0
      %8290 = vmatmul.mubr.f32.gmra.mrb[0].mxu0 %v8004
      %v8291 = vpop.f32.mrb[0].mxu0
      %v8292 = vadd.f32 0.0, %v8291
      %v8293 = vpop.f32.mrb[0].mxu0
      %8294 = vmatprep.mubr.f32.mxu0 0.0
      %8295 = vmatmul.mubr.f32.gmra.mrb[0].mxu0 %v8005
      %v8296 = vpop.f32.mrb[0].mxu0
      %v8297 = vadd.f32 0.0, %v8296
      %v8298 = vpop.f32.mrb[0].mxu0
      %8299 = vmatprep.mubr.f32.mxu0 0.0
      %8300 = vmatmul.mubr.f32.gmra.mrb[0].mxu0 %v8006
      %v8301 = vpop.f32.mrb[0].mxu0
      %v8302 = vadd.f32 0.0, %v8301
      %v8303 = vpop.f32.mrb[0].mxu0
      %8304 = vmatprep.mubr.f32.mxu0 0.0
      %8305 = vmatmul.mubr.f32.gmra.mrb[0].mxu0 %v8007
      %v8306 = vpop.f32.mrb[0].mxu0
      %v8307 = vadd.f32 0.0, %v8306
      %v8308 = vpop.f32.mrb[0].mxu0
      %8309 = vmatprep.mubr.f32.mxu0 0.0
      %8310 = vmatmul.mubr.f32.gmra.mrb[0].mxu0 %v8008
      %v8311 = vpop.f32.mrb[0].mxu0
      %v8312 = vadd.f32 0.0, %v8311
      %v8313 = vpop.f32.mrb[0].mxu0
      %8314 = vmatprep.mubr.f32.mxu0 0.0
      %8315 = vmatmul.mubr.f32.gmra.mrb[0].mxu0 %v8009
      %v8316 = vpop.f32.mrb[0].mxu0
      %v8317 = vadd.f32 0.0, %v8316
      %v8318 = vpop.f32.mrb[0].mxu0
      %8319 = vmatprep.mubr.f32.mxu0 0.0
      %8320 = vmatmul.mubr.f32.gmra.mrb[0].mxu0 %v8010
      %v8321 = vpop.f32.mrb[0].mxu0
      %v8322 = vadd.f32 0.0, %v8321
      %v8323 = vpop.f32.mrb[0].mxu0
      %8324 = vmatprep.mubr.f32.mxu0 0.0
      %8325 = vmatmul.mubr.f32.gmra.mrb[0].mxu0 %v8011
      %v8326 = vpop.f32.mrb[0].mxu0
      %v8327 = vadd.f32 0.0, %v8326
      %v8328 = vpop.f32.mrb[0].mxu0
      %8329 = vmatprep.mubr.f32.mxu0 0.0
      %8330 = vmatmul.mubr.f32.gmra.mrb[0].mxu0 %v8012
      %v8331 = vpop.f32.mrb[0].mxu0
      %v8332 = vadd.f32 0.0, %v8331
      %v8333 = vpop.f32.mrb[0].mxu0
      %8334 = vdwg.mxu0
      %v8335 = vadd.f32 %v7917, %v8097
      %v8336 = vadd.f32 %v7918, %v8102
      %v8337 = vadd.f32 %v7919, %v8107
      %v8338 = vadd.f32 %v7920, %v8112
      %v8339 = vadd.f32 %v7921, %v8117
      %v8340 = vadd.f32 %v7922, %v8122
      %v8341 = vadd.f32 %v7923, %v8127
      %v8342 = vadd.f32 %v7924, %v8132
      %v8343 = vadd.f32 %v7925, %v8137
      %v8344 = vadd.f32 %v7926, %v8142
      %v8345 = vadd.f32 %v7927, %v8147
      %v8346 = vadd.f32 %v7928, %v8152
      %v8347 = vadd.f32 %v7929, %v8157
      %v8348 = vadd.f32 %v7930, %v8162
      %v8349 = vadd.f32 %v7931, %v8167
      %v8350 = vadd.f32 %v7932, %v8172
      %v8351 = vadd.f32 %v7933, %v8177
      %v8352 = vadd.f32 %v7934, %v8182
      %v8353 = vadd.f32 %v7935, %v8187
      %v8354 = vadd.f32 %v7936, %v8192
      %v8355 = vadd.f32 %v7937, %v8197
      %v8356 = vadd.f32 %v7938, %v8202
      %v8357 = vadd.f32 %v7939, %v8207
      %v8358 = vadd.f32 %v7940, %v8212
      %v8359 = vadd.f32 %v7941, %v8217
      %v8360 = vadd.f32 %v7942, %v8222
      %v8361 = vadd.f32 %v7943, %v8227
      %v8362 = vadd.f32 %v7944, %v8232
      %v8363 = vadd.f32 %v7945, %v8237
      %v8364 = vadd.f32 %v7946, %v8242
      %v8365 = vadd.f32 %v7947, %v8247
      %v8366 = vadd.f32 %v7948, %v8252
      %v8367 = vadd.f32 %v7949, %v8257
      %v8368 = vadd.f32 %v7950, %v8262
      %v8369 = vadd.f32 %v7951, %v8267
      %v8370 = vadd.f32 %v7952, %v8272
      %v8371 = vadd.f32 %v7953, %v8277
      %v8372 = vadd.f32 %v7954, %v8282
      %v8373 = vadd.f32 %v7955, %v8287
      %v8374 = vadd.f32 %v7956, %v8292
      %v8375 = vadd.f32 %v7957, %v8297
      %v8376 = vadd.f32 %v7958, %v8302
      %v8377 = vadd.f32 %v7959, %v8307
      %v8378 = vadd.f32 %v7960, %v8312
      %v8379 = vadd.f32 %v7961, %v8317
      %v8380 = vadd.f32 %v7962, %v8322
      %v8381 = vadd.f32 %v7963, %v8327
      %v8382 = vadd.f32 %v7964, %v8332
      %v8383 = vld [vmem:[#allocation2 + $0x47] sm:$0xff]
      %v8384 = vld [vmem:[#allocation2 + $0x4f] sm:$0xff]
      %v8385 = vld [vmem:[#allocation2 + $0x57] sm:$0xff]
      %v8386 = vld [vmem:[#allocation2 + $0x5f] sm:$0xff]
      %v8387 = vld [vmem:[#allocation2 + $0x67] sm:$0xff]
      %v8388 = vld [vmem:[#allocation2 + $0x6f] sm:$0xff]
      %v8389 = vld [vmem:[#allocation2 + $0x77] sm:$0xff]
      %v8390 = vld [vmem:[#allocation2 + $0x7f] sm:$0xff]
      %v8391 = vld [vmem:[#allocation2 + $0x87] sm:$0xff]
      %v8392 = vld [vmem:[#allocation2 + $0x8f] sm:$0xff]
      %v8393 = vld [vmem:[#allocation2 + $0x97] sm:$0xff]
      %v8394 = vld [vmem:[#allocation2 + $0x9f] sm:$0xff]
      %v8395 = vld [vmem:[#allocation2 + $0xa7] sm:$0xff]
      %v8396 = vld [vmem:[#allocation2 + $0xaf] sm:$0xff]
      %v8397 = vld [vmem:[#allocation2 + $0xb7] sm:$0xff]
      %v8398 = vld [vmem:[#allocation2 + $0xbf] sm:$0xff]
      %v8399 = vld [vmem:[#allocation2 + $0xc7] sm:$0xff]
      %v8400 = vld [vmem:[#allocation2 + $0xcf] sm:$0xff]
      %v8401 = vld [vmem:[#allocation2 + $0xd7] sm:$0xff]
      %v8402 = vld [vmem:[#allocation2 + $0xdf] sm:$0xff]
      %v8403 = vld [vmem:[#allocation2 + $0xe7] sm:$0xff]
      %v8404 = vld [vmem:[#allocation2 + $0xef] sm:$0xff]
      %v8405 = vld [vmem:[#allocation2 + $0xf7] sm:$0xff]
      %v8406 = vld [vmem:[#allocation2 + $0xff] sm:$0xff]
      %v8407 = vld [vmem:[#allocation2 + $0x107] sm:$0xff]
      %v8408 = vld [vmem:[#allocation2 + $0x10f] sm:$0xff]
      %v8409 = vld [vmem:[#allocation2 + $0x117] sm:$0xff]
      %v8410 = vld [vmem:[#allocation2 + $0x11f] sm:$0xff]
      %v8411 = vld [vmem:[#allocation2 + $0x127] sm:$0xff]
      %v8412 = vld [vmem:[#allocation2 + $0x12f] sm:$0xff]
      %v8413 = vld [vmem:[#allocation2 + $0x137] sm:$0xff]
      %v8414 = vld [vmem:[#allocation2 + $0x13f] sm:$0xff]
      %v8415 = vld [vmem:[#allocation2 + $0x147] sm:$0xff]
      %v8416 = vld [vmem:[#allocation2 + $0x14f] sm:$0xff]
      %v8417 = vld [vmem:[#allocation2 + $0x157] sm:$0xff]
      %v8418 = vld [vmem:[#allocation2 + $0x15f] sm:$0xff]
      %v8419 = vld [vmem:[#allocation2 + $0x167] sm:$0xff]
      %v8420 = vld [vmem:[#allocation2 + $0x16f] sm:$0xff]
      %v8421 = vld [vmem:[#allocation2 + $0x177] sm:$0xff]
      %v8422 = vld [vmem:[#allocation2 + $0x17f] sm:$0xff]
      %v8423 = vld [vmem:[#allocation2 + $0x187] sm:$0xff]
      %v8424 = vld [vmem:[#allocation2 + $0x18f] sm:$0xff]
      %v8425 = vld [vmem:[#allocation2 + $0x197] sm:$0xff]
      %v8426 = vld [vmem:[#allocation2 + $0x19f] sm:$0xff]
      %v8427 = vld [vmem:[#allocation2 + $0x1a7] sm:$0xff]
      %v8428 = vld [vmem:[#allocation2 + $0x1af] sm:$0xff]
      %v8429 = vld [vmem:[#allocation2 + $0x1b7] sm:$0xff]
      %v8430 = vld [vmem:[#allocation2 + $0x1bf] sm:$0xff]
      %s8431 = scalar_lea.vmem %s3, 768
      %v8432 = vld [vmem:[%s8431] sm:$0xff]
      %v8433 = vld [vmem:[%s8431 + $0x8] sm:$0xff]
      %v8434 = vld [vmem:[%s8431 + $0x10] sm:$0xff]
      %v8435 = vld [vmem:[%s8431 + $0x18] sm:$0xff]
      %v8436 = vld [vmem:[%s8431 + $0x20] sm:$0xff]
      %v8437 = vld [vmem:[%s8431 + $0x28] sm:$0xff]
      %v8438 = vld [vmem:[%s8431 + $0x30] sm:$0xff]
      %v8439 = vld [vmem:[%s8431 + $0x38] sm:$0xff]
      %v8440 = vld [vmem:[%s8431 + $0x40] sm:$0xff]
      %v8441 = vld [vmem:[%s8431 + $0x48] sm:$0xff]
      %v8442 = vld [vmem:[%s8431 + $0x50] sm:$0xff]
      %v8443 = vld [vmem:[%s8431 + $0x58] sm:$0xff]
      %v8444 = vld [vmem:[%s8431 + $0x60] sm:$0xff]
      %v8445 = vld [vmem:[%s8431 + $0x68] sm:$0xff]
      %v8446 = vld [vmem:[%s8431 + $0x70] sm:$0xff]
      %v8447 = vld [vmem:[%s8431 + $0x78] sm:$0xff]
      %8448 = vmatprep.subr.mxu0 0.0
      %8449 = vmatpush1.msra.mxu0 %v8432
      %8450 = vmatprep.subr.mxu0 0.0
      %8451 = vmatpush1.msra.mxu0 %v8433
      %8452 = vmatprep.subr.mxu0 0.0
      %8453 = vmatpush1.msra.mxu0 %v8434
      %8454 = vmatprep.subr.mxu0 0.0
      %8455 = vmatpush1.msra.mxu0 %v8435
      %8456 = vmatprep.subr.mxu0 0.0
      %8457 = vmatpush1.msra.mxu0 %v8436
      %8458 = vmatprep.subr.mxu0 0.0
      %8459 = vmatpush1.msra.mxu0 %v8437
      %8460 = vmatprep.subr.mxu0 0.0
      %8461 = vmatpush1.msra.mxu0 %v8438
      %8462 = vmatprep.subr.mxu0 0.0
      %8463 = vmatpush1.msra.mxu0 %v8439
      %8464 = vmatprep.subr.mxu0 0.0
      %8465 = vmatpush1.msra.mxu0 %v8440
      %8466 = vmatprep.subr.mxu0 0.0
      %8467 = vmatpush1.msra.mxu0 %v8441
      %8468 = vmatprep.subr.mxu0 0.0
      %8469 = vmatpush1.msra.mxu0 %v8442
      %8470 = vmatprep.subr.mxu0 0.0
      %8471 = vmatpush1.msra.mxu0 %v8443
      %8472 = vmatprep.subr.mxu0 0.0
      %8473 = vmatpush1.msra.mxu0 %v8444
      %8474 = vmatprep.subr.mxu0 0.0
      %8475 = vmatpush1.msra.mxu0 %v8445
      %8476 = vmatprep.subr.mxu0 0.0
      %8477 = vmatpush1.msra.mxu0 %v8446
      %8478 = vmatprep.subr.mxu0 0.0
      %8479 = vmatpush1.msra.mxu0 %v8447
      %8480 = vmatprep.subr.mxu0 0.0
      %8481 = vmatpush1.msra.mxu0 0.0
      %8482 = vmatprep.subr.mxu0 0.0
      %8483 = vmatpush1.msra.mxu0 0.0
      %8484 = vmatprep.subr.mxu0 0.0
      %8485 = vmatpush1.msra.mxu0 0.0
      %8486 = vmatprep.subr.mxu0 0.0
      %8487 = vmatpush1.msra.mxu0 0.0
      %8488 = vmatprep.subr.mxu0 0.0
      %8489 = vmatpush1.msra.mxu0 0.0
      %8490 = vmatprep.subr.mxu0 0.0
      %8491 = vmatpush1.msra.mxu0 0.0
      %8492 = vmatprep.subr.mxu0 0.0
      %8493 = vmatpush1.msra.mxu0 0.0
      %8494 = vmatprep.subr.mxu0 0.0
      %8495 = vmatpush1.msra.mxu0 0.0
      %8496 = vmatprep.subr.mxu0 0.0
      %8497 = vmatpush1.msra.mxu0 0.0
      %8498 = vmatprep.subr.mxu0 0.0
      %8499 = vmatpush1.msra.mxu0 0.0
      %8500 = vmatprep.subr.mxu0 0.0
      %8501 = vmatpush1.msra.mxu0 0.0
      %8502 = vmatprep.subr.mxu0 0.0
      %8503 = vmatpush1.msra.mxu0 0.0
      %8504 = vmatprep.subr.mxu0 0.0
      %8505 = vmatpush1.msra.mxu0 0.0
      %8506 = vmatprep.subr.mxu0 0.0
      %8507 = vmatpush1.msra.mxu0 0.0
      %8508 = vmatprep.subr.mxu0 0.0
      %8509 = vmatpush1.msra.mxu0 0.0
      %8510 = vmatprep.subr.mxu0 0.0
      %8511 = vmatpush1.msra.mxu0 0.0
      %8512 = vmatprep.mubr.f32.mxu0 0.0
      %8513 = vmatmul.mubr.f32.gmra.mrb[0].mxu0 %v8383
      %v8514 = vpop.f32.mrb[0].mxu0
      %v8515 = vadd.f32 0.0, %v8514
      %v8516 = vpop.f32.mrb[0].mxu0
      %8517 = vmatprep.mubr.f32.mxu0 0.0
      %8518 = vmatmul.mubr.f32.gmra.mrb[0].mxu0 %v8384
      %v8519 = vpop.f32.mrb[0].mxu0
      %v8520 = vadd.f32 0.0, %v8519
      %v8521 = vpop.f32.mrb[0].mxu0
      %8522 = vmatprep.mubr.f32.mxu0 0.0
      %8523 = vmatmul.mubr.f32.gmra.mrb[0].mxu0 %v8385
      %v8524 = vpop.f32.mrb[0].mxu0
      %v8525 = vadd.f32 0.0, %v8524
      %v8526 = vpop.f32.mrb[0].mxu0
      %8527 = vmatprep.mubr.f32.mxu0 0.0
      %8528 = vmatmul.mubr.f32.gmra.mrb[0].mxu0 %v8386
      %v8529 = vpop.f32.mrb[0].mxu0
      %v8530 = vadd.f32 0.0, %v8529
      %v8531 = vpop.f32.mrb[0].mxu0
      %8532 = vmatprep.mubr.f32.mxu0 0.0
      %8533 = vmatmul.mubr.f32.gmra.mrb[0].mxu0 %v8387
      %v8534 = vpop.f32.mrb[0].mxu0
      %v8535 = vadd.f32 0.0, %v8534
      %v8536 = vpop.f32.mrb[0].mxu0
      %8537 = vmatprep.mubr.f32.mxu0 0.0
      %8538 = vmatmul.mubr.f32.gmra.mrb[0].mxu0 %v8388
      %v8539 = vpop.f32.mrb[0].mxu0
      %v8540 = vadd.f32 0.0, %v8539
      %v8541 = vpop.f32.mrb[0].mxu0
      %8542 = vmatprep.mubr.f32.mxu0 0.0
      %8543 = vmatmul.mubr.f32.gmra.mrb[0].mxu0 %v8389
      %v8544 = vpop.f32.mrb[0].mxu0
      %v8545 = vadd.f32 0.0, %v8544
      %v8546 = vpop.f32.mrb[0].mxu0
      %8547 = vmatprep.mubr.f32.mxu0 0.0
      %8548 = vmatmul.mubr.f32.gmra.mrb[0].mxu0 %v8390
      %v8549 = vpop.f32.mrb[0].mxu0
      %v8550 = vadd.f32 0.0, %v8549
      %v8551 = vpop.f32.mrb[0].mxu0
      %8552 = vmatprep.mubr.f32.mxu0 0.0
      %8553 = vmatmul.mubr.f32.gmra.mrb[0].mxu0 %v8391
      %v8554 = vpop.f32.mrb[0].mxu0
      %v8555 = vadd.f32 0.0, %v8554
      %v8556 = vpop.f32.mrb[0].mxu0
      %8557 = vmatprep.mubr.f32.mxu0 0.0
      %8558 = vmatmul.mubr.f32.gmra.mrb[0].mxu0 %v8392
      %v8559 = vpop.f32.mrb[0].mxu0
      %v8560 = vadd.f32 0.0, %v8559
      %v8561 = vpop.f32.mrb[0].mxu0
      %8562 = vmatprep.mubr.f32.mxu0 0.0
      %8563 = vmatmul.mubr.f32.gmra.mrb[0].mxu0 %v8393
      %v8564 = vpop.f32.mrb[0].mxu0
      %v8565 = vadd.f32 0.0, %v8564
      %v8566 = vpop.f32.mrb[0].mxu0
      %8567 = vmatprep.mubr.f32.mxu0 0.0
      %8568 = vmatmul.mubr.f32.gmra.mrb[0].mxu0 %v8394
      %v8569 = vpop.f32.mrb[0].mxu0
      %v8570 = vadd.f32 0.0, %v8569
      %v8571 = vpop.f32.mrb[0].mxu0
      %8572 = vmatprep.mubr.f32.mxu0 0.0
      %8573 = vmatmul.mubr.f32.gmra.mrb[0].mxu0 %v8395
      %v8574 = vpop.f32.mrb[0].mxu0
      %v8575 = vadd.f32 0.0, %v8574
      %v8576 = vpop.f32.mrb[0].mxu0
      %8577 = vmatprep.mubr.f32.mxu0 0.0
      %8578 = vmatmul.mubr.f32.gmra.mrb[0].mxu0 %v8396
      %v8579 = vpop.f32.mrb[0].mxu0
      %v8580 = vadd.f32 0.0, %v8579
      %v8581 = vpop.f32.mrb[0].mxu0
      %8582 = vmatprep.mubr.f32.mxu0 0.0
      %8583 = vmatmul.mubr.f32.gmra.mrb[0].mxu0 %v8397
      %v8584 = vpop.f32.mrb[0].mxu0
      %v8585 = vadd.f32 0.0, %v8584
      %v8586 = vpop.f32.mrb[0].mxu0
      %8587 = vmatprep.mubr.f32.mxu0 0.0
      %8588 = vmatmul.mubr.f32.gmra.mrb[0].mxu0 %v8398
      %v8589 = vpop.f32.mrb[0].mxu0
      %v8590 = vadd.f32 0.0, %v8589
      %v8591 = vpop.f32.mrb[0].mxu0
      %8592 = vmatprep.mubr.f32.mxu0 0.0
      %8593 = vmatmul.mubr.f32.gmra.mrb[0].mxu0 %v8399
      %v8594 = vpop.f32.mrb[0].mxu0
      %v8595 = vadd.f32 0.0, %v8594
      %v8596 = vpop.f32.mrb[0].mxu0
      %8597 = vmatprep.mubr.f32.mxu0 0.0
      %8598 = vmatmul.mubr.f32.gmra.mrb[0].mxu0 %v8400
      %v8599 = vpop.f32.mrb[0].mxu0
      %v8600 = vadd.f32 0.0, %v8599
      %v8601 = vpop.f32.mrb[0].mxu0
      %8602 = vmatprep.mubr.f32.mxu0 0.0
      %8603 = vmatmul.mubr.f32.gmra.mrb[0].mxu0 %v8401
      %v8604 = vpop.f32.mrb[0].mxu0
      %v8605 = vadd.f32 0.0, %v8604
      %v8606 = vpop.f32.mrb[0].mxu0
      %8607 = vmatprep.mubr.f32.mxu0 0.0
      %8608 = vmatmul.mubr.f32.gmra.mrb[0].mxu0 %v8402
      %v8609 = vpop.f32.mrb[0].mxu0
      %v8610 = vadd.f32 0.0, %v8609
      %v8611 = vpop.f32.mrb[0].mxu0
      %8612 = vmatprep.mubr.f32.mxu0 0.0
      %8613 = vmatmul.mubr.f32.gmra.mrb[0].mxu0 %v8403
      %v8614 = vpop.f32.mrb[0].mxu0
      %v8615 = vadd.f32 0.0, %v8614
      %v8616 = vpop.f32.mrb[0].mxu0
      %8617 = vmatprep.mubr.f32.mxu0 0.0
      %8618 = vmatmul.mubr.f32.gmra.mrb[0].mxu0 %v8404
      %v8619 = vpop.f32.mrb[0].mxu0
      %v8620 = vadd.f32 0.0, %v8619
      %v8621 = vpop.f32.mrb[0].mxu0
      %8622 = vmatprep.mubr.f32.mxu0 0.0
      %8623 = vmatmul.mubr.f32.gmra.mrb[0].mxu0 %v8405
      %v8624 = vpop.f32.mrb[0].mxu0
      %v8625 = vadd.f32 0.0, %v8624
      %v8626 = vpop.f32.mrb[0].mxu0
      %8627 = vmatprep.mubr.f32.mxu0 0.0
      %8628 = vmatmul.mubr.f32.gmra.mrb[0].mxu0 %v8406
      %v8629 = vpop.f32.mrb[0].mxu0
      %v8630 = vadd.f32 0.0, %v8629
      %v8631 = vpop.f32.mrb[0].mxu0
      %8632 = vmatprep.mubr.f32.mxu0 0.0
      %8633 = vmatmul.mubr.f32.gmra.mrb[0].mxu0 %v8407
      %v8634 = vpop.f32.mrb[0].mxu0
      %v8635 = vadd.f32 0.0, %v8634
      %v8636 = vpop.f32.mrb[0].mxu0
      %8637 = vmatprep.mubr.f32.mxu0 0.0
      %8638 = vmatmul.mubr.f32.gmra.mrb[0].mxu0 %v8408
      %v8639 = vpop.f32.mrb[0].mxu0
      %v8640 = vadd.f32 0.0, %v8639
      %v8641 = vpop.f32.mrb[0].mxu0
      %8642 = vmatprep.mubr.f32.mxu0 0.0
      %8643 = vmatmul.mubr.f32.gmra.mrb[0].mxu0 %v8409
      %v8644 = vpop.f32.mrb[0].mxu0
      %v8645 = vadd.f32 0.0, %v8644
      %v8646 = vpop.f32.mrb[0].mxu0
      %8647 = vmatprep.mubr.f32.mxu0 0.0
      %8648 = vmatmul.mubr.f32.gmra.mrb[0].mxu0 %v8410
      %v8649 = vpop.f32.mrb[0].mxu0
      %v8650 = vadd.f32 0.0, %v8649
      %v8651 = vpop.f32.mrb[0].mxu0
      %8652 = vmatprep.mubr.f32.mxu0 0.0
      %8653 = vmatmul.mubr.f32.gmra.mrb[0].mxu0 %v8411
      %v8654 = vpop.f32.mrb[0].mxu0
      %v8655 = vadd.f32 0.0, %v8654
      %v8656 = vpop.f32.mrb[0].mxu0
      %8657 = vmatprep.mubr.f32.mxu0 0.0
      %8658 = vmatmul.mubr.f32.gmra.mrb[0].mxu0 %v8412
      %v8659 = vpop.f32.mrb[0].mxu0
      %v8660 = vadd.f32 0.0, %v8659
      %v8661 = vpop.f32.mrb[0].mxu0
      %8662 = vmatprep.mubr.f32.mxu0 0.0
      %8663 = vmatmul.mubr.f32.gmra.mrb[0].mxu0 %v8413
      %v8664 = vpop.f32.mrb[0].mxu0
      %v8665 = vadd.f32 0.0, %v8664
      %v8666 = vpop.f32.mrb[0].mxu0
      %8667 = vmatprep.mubr.f32.mxu0 0.0
      %8668 = vmatmul.mubr.f32.gmra.mrb[0].mxu0 %v8414
      %v8669 = vpop.f32.mrb[0].mxu0
      %v8670 = vadd.f32 0.0, %v8669
      %v8671 = vpop.f32.mrb[0].mxu0
      %8672 = vmatprep.mubr.f32.mxu0 0.0
      %8673 = vmatmul.mubr.f32.gmra.mrb[0].mxu0 %v8415
      %v8674 = vpop.f32.mrb[0].mxu0
      %v8675 = vadd.f32 0.0, %v8674
      %v8676 = vpop.f32.mrb[0].mxu0
      %8677 = vmatprep.mubr.f32.mxu0 0.0
      %8678 = vmatmul.mubr.f32.gmra.mrb[0].mxu0 %v8416
      %v8679 = vpop.f32.mrb[0].mxu0
      %v8680 = vadd.f32 0.0, %v8679
      %v8681 = vpop.f32.mrb[0].mxu0
      %8682 = vmatprep.mubr.f32.mxu0 0.0
      %8683 = vmatmul.mubr.f32.gmra.mrb[0].mxu0 %v8417
      %v8684 = vpop.f32.mrb[0].mxu0
      %v8685 = vadd.f32 0.0, %v8684
      %v8686 = vpop.f32.mrb[0].mxu0
      %8687 = vmatprep.mubr.f32.mxu0 0.0
      %8688 = vmatmul.mubr.f32.gmra.mrb[0].mxu0 %v8418
      %v8689 = vpop.f32.mrb[0].mxu0
      %v8690 = vadd.f32 0.0, %v8689
      %v8691 = vpop.f32.mrb[0].mxu0
      %8692 = vmatprep.mubr.f32.mxu0 0.0
      %8693 = vmatmul.mubr.f32.gmra.mrb[0].mxu0 %v8419
      %v8694 = vpop.f32.mrb[0].mxu0
      %v8695 = vadd.f32 0.0, %v8694
      %v8696 = vpop.f32.mrb[0].mxu0
      %8697 = vmatprep.mubr.f32.mxu0 0.0
      %8698 = vmatmul.mubr.f32.gmra.mrb[0].mxu0 %v8420
      %v8699 = vpop.f32.mrb[0].mxu0
      %v8700 = vadd.f32 0.0, %v8699
      %v8701 = vpop.f32.mrb[0].mxu0
      %8702 = vmatprep.mubr.f32.mxu0 0.0
      %8703 = vmatmul.mubr.f32.gmra.mrb[0].mxu0 %v8421
      %v8704 = vpop.f32.mrb[0].mxu0
      %v8705 = vadd.f32 0.0, %v8704
      %v8706 = vpop.f32.mrb[0].mxu0
      %8707 = vmatprep.mubr.f32.mxu0 0.0
      %8708 = vmatmul.mubr.f32.gmra.mrb[0].mxu0 %v8422
      %v8709 = vpop.f32.mrb[0].mxu0
      %v8710 = vadd.f32 0.0, %v8709
      %v8711 = vpop.f32.mrb[0].mxu0
      %8712 = vmatprep.mubr.f32.mxu0 0.0
      %8713 = vmatmul.mubr.f32.gmra.mrb[0].mxu0 %v8423
      %v8714 = vpop.f32.mrb[0].mxu0
      %v8715 = vadd.f32 0.0, %v8714
      %v8716 = vpop.f32.mrb[0].mxu0
      %8717 = vmatprep.mubr.f32.mxu0 0.0
      %8718 = vmatmul.mubr.f32.gmra.mrb[0].mxu0 %v8424
      %v8719 = vpop.f32.mrb[0].mxu0
      %v8720 = vadd.f32 0.0, %v8719
      %v8721 = vpop.f32.mrb[0].mxu0
      %8722 = vmatprep.mubr.f32.mxu0 0.0
      %8723 = vmatmul.mubr.f32.gmra.mrb[0].mxu0 %v8425
      %v8724 = vpop.f32.mrb[0].mxu0
      %v8725 = vadd.f32 0.0, %v8724
      %v8726 = vpop.f32.mrb[0].mxu0
      %8727 = vmatprep.mubr.f32.mxu0 0.0
      %8728 = vmatmul.mubr.f32.gmra.mrb[0].mxu0 %v8426
      %v8729 = vpop.f32.mrb[0].mxu0
      %v8730 = vadd.f32 0.0, %v8729
      %v8731 = vpop.f32.mrb[0].mxu0
      %8732 = vmatprep.mubr.f32.mxu0 0.0
      %8733 = vmatmul.mubr.f32.gmra.mrb[0].mxu0 %v8427
      %v8734 = vpop.f32.mrb[0].mxu0
      %v8735 = vadd.f32 0.0, %v8734
      %v8736 = vpop.f32.mrb[0].mxu0
      %8737 = vmatprep.mubr.f32.mxu0 0.0
      %8738 = vmatmul.mubr.f32.gmra.mrb[0].mxu0 %v8428
      %v8739 = vpop.f32.mrb[0].mxu0
      %v8740 = vadd.f32 0.0, %v8739
      %v8741 = vpop.f32.mrb[0].mxu0
      %8742 = vmatprep.mubr.f32.mxu0 0.0
      %8743 = vmatmul.mubr.f32.gmra.mrb[0].mxu0 %v8429
      %v8744 = vpop.f32.mrb[0].mxu0
      %v8745 = vadd.f32 0.0, %v8744
      %v8746 = vpop.f32.mrb[0].mxu0
      %8747 = vmatprep.mubr.f32.mxu0 0.0
      %8748 = vmatmul.mubr.f32.gmra.mrb[0].mxu0 %v8430
      %v8749 = vpop.f32.mrb[0].mxu0
      %v8750 = vadd.f32 0.0, %v8749
      %v8751 = vpop.f32.mrb[0].mxu0
      %8752 = vdwg.mxu0
      %v8753 = vadd.f32 %v8335, %v8515
      %v8754 = vadd.f32 %v8336, %v8520
      %v8755 = vadd.f32 %v8337, %v8525
      %v8756 = vadd.f32 %v8338, %v8530
      %v8757 = vadd.f32 %v8339, %v8535
      %v8758 = vadd.f32 %v8340, %v8540
      %v8759 = vadd.f32 %v8341, %v8545
      %v8760 = vadd.f32 %v8342, %v8550
      %v8761 = vadd.f32 %v8343, %v8555
      %v8762 = vadd.f32 %v8344, %v8560
      %v8763 = vadd.f32 %v8345, %v8565
      %v8764 = vadd.f32 %v8346, %v8570
      %v8765 = vadd.f32 %v8347, %v8575
      %v8766 = vadd.f32 %v8348, %v8580
      %v8767 = vadd.f32 %v8349, %v8585
      %v8768 = vadd.f32 %v8350, %v8590
      %v8769 = vadd.f32 %v8351, %v8595
      %v8770 = vadd.f32 %v8352, %v8600
      %v8771 = vadd.f32 %v8353, %v8605
      %v8772 = vadd.f32 %v8354, %v8610
      %v8773 = vadd.f32 %v8355, %v8615
      %v8774 = vadd.f32 %v8356, %v8620
      %v8775 = vadd.f32 %v8357, %v8625
      %v8776 = vadd.f32 %v8358, %v8630
      %v8777 = vadd.f32 %v8359, %v8635
      %v8778 = vadd.f32 %v8360, %v8640
      %v8779 = vadd.f32 %v8361, %v8645
      %v8780 = vadd.f32 %v8362, %v8650
      %v8781 = vadd.f32 %v8363, %v8655
      %v8782 = vadd.f32 %v8364, %v8660
      %v8783 = vadd.f32 %v8365, %v8665
      %v8784 = vadd.f32 %v8366, %v8670
      %v8785 = vadd.f32 %v8367, %v8675
      %v8786 = vadd.f32 %v8368, %v8680
      %v8787 = vadd.f32 %v8369, %v8685
      %v8788 = vadd.f32 %v8370, %v8690
      %v8789 = vadd.f32 %v8371, %v8695
      %v8790 = vadd.f32 %v8372, %v8700
      %v8791 = vadd.f32 %v8373, %v8705
      %v8792 = vadd.f32 %v8374, %v8710
      %v8793 = vadd.f32 %v8375, %v8715
      %v8794 = vadd.f32 %v8376, %v8720
      %v8795 = vadd.f32 %v8377, %v8725
      %v8796 = vadd.f32 %v8378, %v8730
      %v8797 = vadd.f32 %v8379, %v8735
      %v8798 = vadd.f32 %v8380, %v8740
      %v8799 = vadd.f32 %v8381, %v8745
      %v8800 = vadd.f32 %v8382, %v8750
      %v8801 = vld [vmem:[#allocation2 + $0x48] sm:$0xff]
      %v8802 = vld [vmem:[#allocation2 + $0x50] sm:$0xff]
      %v8803 = vld [vmem:[#allocation2 + $0x58] sm:$0xff]
      %v8804 = vld [vmem:[#allocation2 + $0x60] sm:$0xff]
      %v8805 = vld [vmem:[#allocation2 + $0x68] sm:$0xff]
      %v8806 = vld [vmem:[#allocation2 + $0x70] sm:$0xff]
      %v8807 = vld [vmem:[#allocation2 + $0x78] sm:$0xff]
      %v8808 = vld [vmem:[#allocation2 + $0x80] sm:$0xff]
      %v8809 = vld [vmem:[#allocation2 + $0x88] sm:$0xff]
      %v8810 = vld [vmem:[#allocation2 + $0x90] sm:$0xff]
      %v8811 = vld [vmem:[#allocation2 + $0x98] sm:$0xff]
      %v8812 = vld [vmem:[#allocation2 + $0xa0] sm:$0xff]
      %v8813 = vld [vmem:[#allocation2 + $0xa8] sm:$0xff]
      %v8814 = vld [vmem:[#allocation2 + $0xb0] sm:$0xff]
      %v8815 = vld [vmem:[#allocation2 + $0xb8] sm:$0xff]
      %v8816 = vld [vmem:[#allocation2 + $0xc0] sm:$0xff]
      %v8817 = vld [vmem:[#allocation2 + $0xc8] sm:$0xff]
      %v8818 = vld [vmem:[#allocation2 + $0xd0] sm:$0xff]
      %v8819 = vld [vmem:[#allocation2 + $0xd8] sm:$0xff]
      %v8820 = vld [vmem:[#allocation2 + $0xe0] sm:$0xff]
      %v8821 = vld [vmem:[#allocation2 + $0xe8] sm:$0xff]
      %v8822 = vld [vmem:[#allocation2 + $0xf0] sm:$0xff]
      %v8823 = vld [vmem:[#allocation2 + $0xf8] sm:$0xff]
      %v8824 = vld [vmem:[#allocation2 + $0x100] sm:$0xff]
      %v8825 = vld [vmem:[#allocation2 + $0x108] sm:$0xff]
      %v8826 = vld [vmem:[#allocation2 + $0x110] sm:$0xff]
      %v8827 = vld [vmem:[#allocation2 + $0x118] sm:$0xff]
      %v8828 = vld [vmem:[#allocation2 + $0x120] sm:$0xff]
      %v8829 = vld [vmem:[#allocation2 + $0x128] sm:$0xff]
      %v8830 = vld [vmem:[#allocation2 + $0x130] sm:$0xff]
      %v8831 = vld [vmem:[#allocation2 + $0x138] sm:$0xff]
      %v8832 = vld [vmem:[#allocation2 + $0x140] sm:$0xff]
      %v8833 = vld [vmem:[#allocation2 + $0x148] sm:$0xff]
      %v8834 = vld [vmem:[#allocation2 + $0x150] sm:$0xff]
      %v8835 = vld [vmem:[#allocation2 + $0x158] sm:$0xff]
      %v8836 = vld [vmem:[#allocation2 + $0x160] sm:$0xff]
      %v8837 = vld [vmem:[#allocation2 + $0x168] sm:$0xff]
      %v8838 = vld [vmem:[#allocation2 + $0x170] sm:$0xff]
      %v8839 = vld [vmem:[#allocation2 + $0x178] sm:$0xff]
      %v8840 = vld [vmem:[#allocation2 + $0x180] sm:$0xff]
      %v8841 = vld [vmem:[#allocation2 + $0x188] sm:$0xff]
      %v8842 = vld [vmem:[#allocation2 + $0x190] sm:$0xff]
      %v8843 = vld [vmem:[#allocation2 + $0x198] sm:$0xff]
      %v8844 = vld [vmem:[#allocation2 + $0x1a0] sm:$0xff]
      %v8845 = vld [vmem:[#allocation2 + $0x1a8] sm:$0xff]
      %v8846 = vld [vmem:[#allocation2 + $0x1b0] sm:$0xff]
      %v8847 = vld [vmem:[#allocation2 + $0x1b8] sm:$0xff]
      %v8848 = vld [vmem:[#allocation2 + $0x1c0] sm:$0xff]
      %s8849 = scalar_lea.vmem %s3, 896
      %v8850 = vld [vmem:[%s8849] sm:$0xff]
      %v8851 = vld [vmem:[%s8849 + $0x8] sm:$0xff]
      %v8852 = vld [vmem:[%s8849 + $0x10] sm:$0xff]
      %v8853 = vld [vmem:[%s8849 + $0x18] sm:$0xff]
      %v8854 = vld [vmem:[%s8849 + $0x20] sm:$0xff]
      %v8855 = vld [vmem:[%s8849 + $0x28] sm:$0xff]
      %v8856 = vld [vmem:[%s8849 + $0x30] sm:$0xff]
      %v8857 = vld [vmem:[%s8849 + $0x38] sm:$0xff]
      %v8858 = vld [vmem:[%s8849 + $0x40] sm:$0xff]
      %v8859 = vld [vmem:[%s8849 + $0x48] sm:$0xff]
      %v8860 = vld [vmem:[%s8849 + $0x50] sm:$0xff]
      %v8861 = vld [vmem:[%s8849 + $0x58] sm:$0xff]
      %v8862 = vld [vmem:[%s8849 + $0x60] sm:$0xff]
      %v8863 = vld [vmem:[%s8849 + $0x68] sm:$0xff]
      %v8864 = vld [vmem:[%s8849 + $0x70] sm:$0xff]
      %v8865 = vld [vmem:[%s8849 + $0x78] sm:$0xff]
      %8866 = vmatprep.subr.mxu0 0.0
      %8867 = vmatpush1.msra.mxu0 %v8850
      %8868 = vmatprep.subr.mxu0 0.0
      %8869 = vmatpush1.msra.mxu0 %v8851
      %8870 = vmatprep.subr.mxu0 0.0
      %8871 = vmatpush1.msra.mxu0 %v8852
      %8872 = vmatprep.subr.mxu0 0.0
      %8873 = vmatpush1.msra.mxu0 %v8853
      %8874 = vmatprep.subr.mxu0 0.0
      %8875 = vmatpush1.msra.mxu0 %v8854
      %8876 = vmatprep.subr.mxu0 0.0
      %8877 = vmatpush1.msra.mxu0 %v8855
      %8878 = vmatprep.subr.mxu0 0.0
      %8879 = vmatpush1.msra.mxu0 %v8856
      %8880 = vmatprep.subr.mxu0 0.0
      %8881 = vmatpush1.msra.mxu0 %v8857
      %8882 = vmatprep.subr.mxu0 0.0
      %8883 = vmatpush1.msra.mxu0 %v8858
      %8884 = vmatprep.subr.mxu0 0.0
      %8885 = vmatpush1.msra.mxu0 %v8859
      %8886 = vmatprep.subr.mxu0 0.0
      %8887 = vmatpush1.msra.mxu0 %v8860
      %8888 = vmatprep.subr.mxu0 0.0
      %8889 = vmatpush1.msra.mxu0 %v8861
      %8890 = vmatprep.subr.mxu0 0.0
      %8891 = vmatpush1.msra.mxu0 %v8862
      %8892 = vmatprep.subr.mxu0 0.0
      %8893 = vmatpush1.msra.mxu0 %v8863
      %8894 = vmatprep.subr.mxu0 0.0
      %8895 = vmatpush1.msra.mxu0 %v8864
      %8896 = vmatprep.subr.mxu0 0.0
      %8897 = vmatpush1.msra.mxu0 %v8865
      %8898 = vmatprep.subr.mxu0 0.0
      %8899 = vmatpush1.msra.mxu0 0.0
      %8900 = vmatprep.subr.mxu0 0.0
      %8901 = vmatpush1.msra.mxu0 0.0
      %8902 = vmatprep.subr.mxu0 0.0
      %8903 = vmatpush1.msra.mxu0 0.0
      %8904 = vmatprep.subr.mxu0 0.0
      %8905 = vmatpush1.msra.mxu0 0.0
      %8906 = vmatprep.subr.mxu0 0.0
      %8907 = vmatpush1.msra.mxu0 0.0
      %8908 = vmatprep.subr.mxu0 0.0
      %8909 = vmatpush1.msra.mxu0 0.0
      %8910 = vmatprep.subr.mxu0 0.0
      %8911 = vmatpush1.msra.mxu0 0.0
      %8912 = vmatprep.subr.mxu0 0.0
      %8913 = vmatpush1.msra.mxu0 0.0
      %8914 = vmatprep.subr.mxu0 0.0
      %8915 = vmatpush1.msra.mxu0 0.0
      %8916 = vmatprep.subr.mxu0 0.0
      %8917 = vmatpush1.msra.mxu0 0.0
      %8918 = vmatprep.subr.mxu0 0.0
      %8919 = vmatpush1.msra.mxu0 0.0
      %8920 = vmatprep.subr.mxu0 0.0
      %8921 = vmatpush1.msra.mxu0 0.0
      %8922 = vmatprep.subr.mxu0 0.0
      %8923 = vmatpush1.msra.mxu0 0.0
      %8924 = vmatprep.subr.mxu0 0.0
      %8925 = vmatpush1.msra.mxu0 0.0
      %8926 = vmatprep.subr.mxu0 0.0
      %8927 = vmatpush1.msra.mxu0 0.0
      %8928 = vmatprep.subr.mxu0 0.0
      %8929 = vmatpush1.msra.mxu0 0.0
      %8930 = vmatprep.mubr.f32.mxu0 0.0
      %8931 = vmatmul.mubr.f32.gmra.mrb[0].mxu0 %v8801
      %v8932 = vpop.f32.mrb[0].mxu0
      %v8933 = vadd.f32 0.0, %v8932
      %v8934 = vpop.f32.mrb[0].mxu0
      %8935 = vmatprep.mubr.f32.mxu0 0.0
      %8936 = vmatmul.mubr.f32.gmra.mrb[0].mxu0 %v8802
      %v8937 = vpop.f32.mrb[0].mxu0
      %v8938 = vadd.f32 0.0, %v8937
      %v8939 = vpop.f32.mrb[0].mxu0
      %8940 = vmatprep.mubr.f32.mxu0 0.0
      %8941 = vmatmul.mubr.f32.gmra.mrb[0].mxu0 %v8803
      %v8942 = vpop.f32.mrb[0].mxu0
      %v8943 = vadd.f32 0.0, %v8942
      %v8944 = vpop.f32.mrb[0].mxu0
      %8945 = vmatprep.mubr.f32.mxu0 0.0
      %8946 = vmatmul.mubr.f32.gmra.mrb[0].mxu0 %v8804
      %v8947 = vpop.f32.mrb[0].mxu0
      %v8948 = vadd.f32 0.0, %v8947
      %v8949 = vpop.f32.mrb[0].mxu0
      %8950 = vmatprep.mubr.f32.mxu0 0.0
      %8951 = vmatmul.mubr.f32.gmra.mrb[0].mxu0 %v8805
      %v8952 = vpop.f32.mrb[0].mxu0
      %v8953 = vadd.f32 0.0, %v8952
      %v8954 = vpop.f32.mrb[0].mxu0
      %8955 = vmatprep.mubr.f32.mxu0 0.0
      %8956 = vmatmul.mubr.f32.gmra.mrb[0].mxu0 %v8806
      %v8957 = vpop.f32.mrb[0].mxu0
      %v8958 = vadd.f32 0.0, %v8957
      %v8959 = vpop.f32.mrb[0].mxu0
      %8960 = vmatprep.mubr.f32.mxu0 0.0
      %8961 = vmatmul.mubr.f32.gmra.mrb[0].mxu0 %v8807
      %v8962 = vpop.f32.mrb[0].mxu0
      %v8963 = vadd.f32 0.0, %v8962
      %v8964 = vpop.f32.mrb[0].mxu0
      %8965 = vmatprep.mubr.f32.mxu0 0.0
      %8966 = vmatmul.mubr.f32.gmra.mrb[0].mxu0 %v8808
      %v8967 = vpop.f32.mrb[0].mxu0
      %v8968 = vadd.f32 0.0, %v8967
      %v8969 = vpop.f32.mrb[0].mxu0
      %8970 = vmatprep.mubr.f32.mxu0 0.0
      %8971 = vmatmul.mubr.f32.gmra.mrb[0].mxu0 %v8809
      %v8972 = vpop.f32.mrb[0].mxu0
      %v8973 = vadd.f32 0.0, %v8972
      %v8974 = vpop.f32.mrb[0].mxu0
      %8975 = vmatprep.mubr.f32.mxu0 0.0
      %8976 = vmatmul.mubr.f32.gmra.mrb[0].mxu0 %v8810
      %v8977 = vpop.f32.mrb[0].mxu0
      %v8978 = vadd.f32 0.0, %v8977
      %v8979 = vpop.f32.mrb[0].mxu0
      %8980 = vmatprep.mubr.f32.mxu0 0.0
      %8981 = vmatmul.mubr.f32.gmra.mrb[0].mxu0 %v8811
      %v8982 = vpop.f32.mrb[0].mxu0
      %v8983 = vadd.f32 0.0, %v8982
      %v8984 = vpop.f32.mrb[0].mxu0
      %8985 = vmatprep.mubr.f32.mxu0 0.0
      %8986 = vmatmul.mubr.f32.gmra.mrb[0].mxu0 %v8812
      %v8987 = vpop.f32.mrb[0].mxu0
      %v8988 = vadd.f32 0.0, %v8987
      %v8989 = vpop.f32.mrb[0].mxu0
      %8990 = vmatprep.mubr.f32.mxu0 0.0
      %8991 = vmatmul.mubr.f32.gmra.mrb[0].mxu0 %v8813
      %v8992 = vpop.f32.mrb[0].mxu0
      %v8993 = vadd.f32 0.0, %v8992
      %v8994 = vpop.f32.mrb[0].mxu0
      %8995 = vmatprep.mubr.f32.mxu0 0.0
      %8996 = vmatmul.mubr.f32.gmra.mrb[0].mxu0 %v8814
      %v8997 = vpop.f32.mrb[0].mxu0
      %v8998 = vadd.f32 0.0, %v8997
      %v8999 = vpop.f32.mrb[0].mxu0
      %9000 = vmatprep.mubr.f32.mxu0 0.0
      %9001 = vmatmul.mubr.f32.gmra.mrb[0].mxu0 %v8815
      %v9002 = vpop.f32.mrb[0].mxu0
      %v9003 = vadd.f32 0.0, %v9002
      %v9004 = vpop.f32.mrb[0].mxu0
      %9005 = vmatprep.mubr.f32.mxu0 0.0
      %9006 = vmatmul.mubr.f32.gmra.mrb[0].mxu0 %v8816
      %v9007 = vpop.f32.mrb[0].mxu0
      %v9008 = vadd.f32 0.0, %v9007
      %v9009 = vpop.f32.mrb[0].mxu0
      %9010 = vmatprep.mubr.f32.mxu0 0.0
      %9011 = vmatmul.mubr.f32.gmra.mrb[0].mxu0 %v8817
      %v9012 = vpop.f32.mrb[0].mxu0
      %v9013 = vadd.f32 0.0, %v9012
      %v9014 = vpop.f32.mrb[0].mxu0
      %9015 = vmatprep.mubr.f32.mxu0 0.0
      %9016 = vmatmul.mubr.f32.gmra.mrb[0].mxu0 %v8818
      %v9017 = vpop.f32.mrb[0].mxu0
      %v9018 = vadd.f32 0.0, %v9017
      %v9019 = vpop.f32.mrb[0].mxu0
      %9020 = vmatprep.mubr.f32.mxu0 0.0
      %9021 = vmatmul.mubr.f32.gmra.mrb[0].mxu0 %v8819
      %v9022 = vpop.f32.mrb[0].mxu0
      %v9023 = vadd.f32 0.0, %v9022
      %v9024 = vpop.f32.mrb[0].mxu0
      %9025 = vmatprep.mubr.f32.mxu0 0.0
      %9026 = vmatmul.mubr.f32.gmra.mrb[0].mxu0 %v8820
      %v9027 = vpop.f32.mrb[0].mxu0
      %v9028 = vadd.f32 0.0, %v9027
      %v9029 = vpop.f32.mrb[0].mxu0
      %9030 = vmatprep.mubr.f32.mxu0 0.0
      %9031 = vmatmul.mubr.f32.gmra.mrb[0].mxu0 %v8821
      %v9032 = vpop.f32.mrb[0].mxu0
      %v9033 = vadd.f32 0.0, %v9032
      %v9034 = vpop.f32.mrb[0].mxu0
      %9035 = vmatprep.mubr.f32.mxu0 0.0
      %9036 = vmatmul.mubr.f32.gmra.mrb[0].mxu0 %v8822
      %v9037 = vpop.f32.mrb[0].mxu0
      %v9038 = vadd.f32 0.0, %v9037
      %v9039 = vpop.f32.mrb[0].mxu0
      %9040 = vmatprep.mubr.f32.mxu0 0.0
      %9041 = vmatmul.mubr.f32.gmra.mrb[0].mxu0 %v8823
      %v9042 = vpop.f32.mrb[0].mxu0
      %v9043 = vadd.f32 0.0, %v9042
      %v9044 = vpop.f32.mrb[0].mxu0
      %9045 = vmatprep.mubr.f32.mxu0 0.0
      %9046 = vmatmul.mubr.f32.gmra.mrb[0].mxu0 %v8824
      %v9047 = vpop.f32.mrb[0].mxu0
      %v9048 = vadd.f32 0.0, %v9047
      %v9049 = vpop.f32.mrb[0].mxu0
      %9050 = vmatprep.mubr.f32.mxu0 0.0
      %9051 = vmatmul.mubr.f32.gmra.mrb[0].mxu0 %v8825
      %v9052 = vpop.f32.mrb[0].mxu0
      %v9053 = vadd.f32 0.0, %v9052
      %v9054 = vpop.f32.mrb[0].mxu0
      %9055 = vmatprep.mubr.f32.mxu0 0.0
      %9056 = vmatmul.mubr.f32.gmra.mrb[0].mxu0 %v8826
      %v9057 = vpop.f32.mrb[0].mxu0
      %v9058 = vadd.f32 0.0, %v9057
      %v9059 = vpop.f32.mrb[0].mxu0
      %9060 = vmatprep.mubr.f32.mxu0 0.0
      %9061 = vmatmul.mubr.f32.gmra.mrb[0].mxu0 %v8827
      %v9062 = vpop.f32.mrb[0].mxu0
      %v9063 = vadd.f32 0.0, %v9062
      %v9064 = vpop.f32.mrb[0].mxu0
      %9065 = vmatprep.mubr.f32.mxu0 0.0
      %9066 = vmatmul.mubr.f32.gmra.mrb[0].mxu0 %v8828
      %v9067 = vpop.f32.mrb[0].mxu0
      %v9068 = vadd.f32 0.0, %v9067
      %v9069 = vpop.f32.mrb[0].mxu0
      %9070 = vmatprep.mubr.f32.mxu0 0.0
      %9071 = vmatmul.mubr.f32.gmra.mrb[0].mxu0 %v8829
      %v9072 = vpop.f32.mrb[0].mxu0
      %v9073 = vadd.f32 0.0, %v9072
      %v9074 = vpop.f32.mrb[0].mxu0
      %9075 = vmatprep.mubr.f32.mxu0 0.0
      %9076 = vmatmul.mubr.f32.gmra.mrb[0].mxu0 %v8830
      %v9077 = vpop.f32.mrb[0].mxu0
      %v9078 = vadd.f32 0.0, %v9077
      %v9079 = vpop.f32.mrb[0].mxu0
      %9080 = vmatprep.mubr.f32.mxu0 0.0
      %9081 = vmatmul.mubr.f32.gmra.mrb[0].mxu0 %v8831
      %v9082 = vpop.f32.mrb[0].mxu0
      %v9083 = vadd.f32 0.0, %v9082
      %v9084 = vpop.f32.mrb[0].mxu0
      %9085 = vmatprep.mubr.f32.mxu0 0.0
      %9086 = vmatmul.mubr.f32.gmra.mrb[0].mxu0 %v8832
      %v9087 = vpop.f32.mrb[0].mxu0
      %v9088 = vadd.f32 0.0, %v9087
      %v9089 = vpop.f32.mrb[0].mxu0
      %9090 = vmatprep.mubr.f32.mxu0 0.0
      %9091 = vmatmul.mubr.f32.gmra.mrb[0].mxu0 %v8833
      %v9092 = vpop.f32.mrb[0].mxu0
      %v9093 = vadd.f32 0.0, %v9092
      %v9094 = vpop.f32.mrb[0].mxu0
      %9095 = vmatprep.mubr.f32.mxu0 0.0
      %9096 = vmatmul.mubr.f32.gmra.mrb[0].mxu0 %v8834
      %v9097 = vpop.f32.mrb[0].mxu0
      %v9098 = vadd.f32 0.0, %v9097
      %v9099 = vpop.f32.mrb[0].mxu0
      %9100 = vmatprep.mubr.f32.mxu0 0.0
      %9101 = vmatmul.mubr.f32.gmra.mrb[0].mxu0 %v8835
      %v9102 = vpop.f32.mrb[0].mxu0
      %v9103 = vadd.f32 0.0, %v9102
      %v9104 = vpop.f32.mrb[0].mxu0
      %9105 = vmatprep.mubr.f32.mxu0 0.0
      %9106 = vmatmul.mubr.f32.gmra.mrb[0].mxu0 %v8836
      %v9107 = vpop.f32.mrb[0].mxu0
      %v9108 = vadd.f32 0.0, %v9107
      %v9109 = vpop.f32.mrb[0].mxu0
      %9110 = vmatprep.mubr.f32.mxu0 0.0
      %9111 = vmatmul.mubr.f32.gmra.mrb[0].mxu0 %v8837
      %v9112 = vpop.f32.mrb[0].mxu0
      %v9113 = vadd.f32 0.0, %v9112
      %v9114 = vpop.f32.mrb[0].mxu0
      %9115 = vmatprep.mubr.f32.mxu0 0.0
      %9116 = vmatmul.mubr.f32.gmra.mrb[0].mxu0 %v8838
      %v9117 = vpop.f32.mrb[0].mxu0
      %v9118 = vadd.f32 0.0, %v9117
      %v9119 = vpop.f32.mrb[0].mxu0
      %9120 = vmatprep.mubr.f32.mxu0 0.0
      %9121 = vmatmul.mubr.f32.gmra.mrb[0].mxu0 %v8839
      %v9122 = vpop.f32.mrb[0].mxu0
      %v9123 = vadd.f32 0.0, %v9122
      %v9124 = vpop.f32.mrb[0].mxu0
      %9125 = vmatprep.mubr.f32.mxu0 0.0
      %9126 = vmatmul.mubr.f32.gmra.mrb[0].mxu0 %v8840
      %v9127 = vpop.f32.mrb[0].mxu0
      %v9128 = vadd.f32 0.0, %v9127
      %v9129 = vpop.f32.mrb[0].mxu0
      %9130 = vmatprep.mubr.f32.mxu0 0.0
      %9131 = vmatmul.mubr.f32.gmra.mrb[0].mxu0 %v8841
      %v9132 = vpop.f32.mrb[0].mxu0
      %v9133 = vadd.f32 0.0, %v9132
      %v9134 = vpop.f32.mrb[0].mxu0
      %9135 = vmatprep.mubr.f32.mxu0 0.0
      %9136 = vmatmul.mubr.f32.gmra.mrb[0].mxu0 %v8842
      %v9137 = vpop.f32.mrb[0].mxu0
      %v9138 = vadd.f32 0.0, %v9137
      %v9139 = vpop.f32.mrb[0].mxu0
      %9140 = vmatprep.mubr.f32.mxu0 0.0
      %9141 = vmatmul.mubr.f32.gmra.mrb[0].mxu0 %v8843
      %v9142 = vpop.f32.mrb[0].mxu0
      %v9143 = vadd.f32 0.0, %v9142
      %v9144 = vpop.f32.mrb[0].mxu0
      %9145 = vmatprep.mubr.f32.mxu0 0.0
      %9146 = vmatmul.mubr.f32.gmra.mrb[0].mxu0 %v8844
      %v9147 = vpop.f32.mrb[0].mxu0
      %v9148 = vadd.f32 0.0, %v9147
      %v9149 = vpop.f32.mrb[0].mxu0
      %9150 = vmatprep.mubr.f32.mxu0 0.0
      %9151 = vmatmul.mubr.f32.gmra.mrb[0].mxu0 %v8845
      %v9152 = vpop.f32.mrb[0].mxu0
      %v9153 = vadd.f32 0.0, %v9152
      %v9154 = vpop.f32.mrb[0].mxu0
      %9155 = vmatprep.mubr.f32.mxu0 0.0
      %9156 = vmatmul.mubr.f32.gmra.mrb[0].mxu0 %v8846
      %v9157 = vpop.f32.mrb[0].mxu0
      %v9158 = vadd.f32 0.0, %v9157
      %v9159 = vpop.f32.mrb[0].mxu0
      %9160 = vmatprep.mubr.f32.mxu0 0.0
      %9161 = vmatmul.mubr.f32.gmra.mrb[0].mxu0 %v8847
      %v9162 = vpop.f32.mrb[0].mxu0
      %v9163 = vadd.f32 0.0, %v9162
      %v9164 = vpop.f32.mrb[0].mxu0
      %9165 = vmatprep.mubr.f32.mxu0 0.0
      %9166 = vmatmul.mubr.f32.gmra.mrb[0].mxu0 %v8848
      %v9167 = vpop.f32.mrb[0].mxu0
      %v9168 = vadd.f32 0.0, %v9167
      %v9169 = vpop.f32.mrb[0].mxu0
      %9170 = vdwg.mxu0
      %v9171 = vadd.f32 %v8753, %v8933
      %v9172 = vadd.f32 %v8754, %v8938
      %v9173 = vadd.f32 %v8755, %v8943
      %v9174 = vadd.f32 %v8756, %v8948
      %v9175 = vadd.f32 %v8757, %v8953
      %v9176 = vadd.f32 %v8758, %v8958
      %v9177 = vadd.f32 %v8759, %v8963
      %v9178 = vadd.f32 %v8760, %v8968
      %v9179 = vadd.f32 %v8761, %v8973
      %v9180 = vadd.f32 %v8762, %v8978
      %v9181 = vadd.f32 %v8763, %v8983
      %v9182 = vadd.f32 %v8764, %v8988
      %v9183 = vadd.f32 %v8765, %v8993
      %v9184 = vadd.f32 %v8766, %v8998
      %v9185 = vadd.f32 %v8767, %v9003
      %v9186 = vadd.f32 %v8768, %v9008
      %v9187 = vadd.f32 %v8769, %v9013
      %v9188 = vadd.f32 %v8770, %v9018
      %v9189 = vadd.f32 %v8771, %v9023
      %v9190 = vadd.f32 %v8772, %v9028
      %v9191 = vadd.f32 %v8773, %v9033
      %v9192 = vadd.f32 %v8774, %v9038
      %v9193 = vadd.f32 %v8775, %v9043
      %v9194 = vadd.f32 %v8776, %v9048
      %v9195 = vadd.f32 %v8777, %v9053
      %v9196 = vadd.f32 %v8778, %v9058
      %v9197 = vadd.f32 %v8779, %v9063
      %v9198 = vadd.f32 %v8780, %v9068
      %v9199 = vadd.f32 %v8781, %v9073
      %v9200 = vadd.f32 %v8782, %v9078
      %v9201 = vadd.f32 %v8783, %v9083
      %v9202 = vadd.f32 %v8784, %v9088
      %v9203 = vadd.f32 %v8785, %v9093
      %v9204 = vadd.f32 %v8786, %v9098
      %v9205 = vadd.f32 %v8787, %v9103
      %v9206 = vadd.f32 %v8788, %v9108
      %v9207 = vadd.f32 %v8789, %v9113
      %v9208 = vadd.f32 %v8790, %v9118
      %v9209 = vadd.f32 %v8791, %v9123
      %v9210 = vadd.f32 %v8792, %v9128
      %v9211 = vadd.f32 %v8793, %v9133
      %v9212 = vadd.f32 %v8794, %v9138
      %v9213 = vadd.f32 %v8795, %v9143
      %v9214 = vadd.f32 %v8796, %v9148
      %v9215 = vadd.f32 %v8797, %v9153
      %v9216 = vadd.f32 %v8798, %v9158
      %v9217 = vadd.f32 %v8799, %v9163
      %v9218 = vadd.f32 %v8800, %v9168
      %v9219 = vld [vmem:[#allocation2 + $0x49] sm:$0xff]
      %v9220 = vld [vmem:[#allocation2 + $0x51] sm:$0xff]
      %v9221 = vld [vmem:[#allocation2 + $0x59] sm:$0xff]
      %v9222 = vld [vmem:[#allocation2 + $0x61] sm:$0xff]
      %v9223 = vld [vmem:[#allocation2 + $0x69] sm:$0xff]
      %v9224 = vld [vmem:[#allocation2 + $0x71] sm:$0xff]
      %v9225 = vld [vmem:[#allocation2 + $0x79] sm:$0xff]
      %v9226 = vld [vmem:[#allocation2 + $0x81] sm:$0xff]
      %v9227 = vld [vmem:[#allocation2 + $0x89] sm:$0xff]
      %v9228 = vld [vmem:[#allocation2 + $0x91] sm:$0xff]
      %v9229 = vld [vmem:[#allocation2 + $0x99] sm:$0xff]
      %v9230 = vld [vmem:[#allocation2 + $0xa1] sm:$0xff]
      %v9231 = vld [vmem:[#allocation2 + $0xa9] sm:$0xff]
      %v9232 = vld [vmem:[#allocation2 + $0xb1] sm:$0xff]
      %v9233 = vld [vmem:[#allocation2 + $0xb9] sm:$0xff]
      %v9234 = vld [vmem:[#allocation2 + $0xc1] sm:$0xff]
      %v9235 = vld [vmem:[#allocation2 + $0xc9] sm:$0xff]
      %v9236 = vld [vmem:[#allocation2 + $0xd1] sm:$0xff]
      %v9237 = vld [vmem:[#allocation2 + $0xd9] sm:$0xff]
      %v9238 = vld [vmem:[#allocation2 + $0xe1] sm:$0xff]
      %v9239 = vld [vmem:[#allocation2 + $0xe9] sm:$0xff]
      %v9240 = vld [vmem:[#allocation2 + $0xf1] sm:$0xff]
      %v9241 = vld [vmem:[#allocation2 + $0xf9] sm:$0xff]
      %v9242 = vld [vmem:[#allocation2 + $0x101] sm:$0xff]
      %v9243 = vld [vmem:[#allocation2 + $0x109] sm:$0xff]
      %v9244 = vld [vmem:[#allocation2 + $0x111] sm:$0xff]
      %v9245 = vld [vmem:[#allocation2 + $0x119] sm:$0xff]
      %v9246 = vld [vmem:[#allocation2 + $0x121] sm:$0xff]
      %v9247 = vld [vmem:[#allocation2 + $0x129] sm:$0xff]
      %v9248 = vld [vmem:[#allocation2 + $0x131] sm:$0xff]
      %v9249 = vld [vmem:[#allocation2 + $0x139] sm:$0xff]
      %v9250 = vld [vmem:[#allocation2 + $0x141] sm:$0xff]
      %v9251 = vld [vmem:[#allocation2 + $0x149] sm:$0xff]
      %v9252 = vld [vmem:[#allocation2 + $0x151] sm:$0xff]
      %v9253 = vld [vmem:[#allocation2 + $0x159] sm:$0xff]
      %v9254 = vld [vmem:[#allocation2 + $0x161] sm:$0xff]
      %v9255 = vld [vmem:[#allocation2 + $0x169] sm:$0xff]
      %v9256 = vld [vmem:[#allocation2 + $0x171] sm:$0xff]
      %v9257 = vld [vmem:[#allocation2 + $0x179] sm:$0xff]
      %v9258 = vld [vmem:[#allocation2 + $0x181] sm:$0xff]
      %v9259 = vld [vmem:[#allocation2 + $0x189] sm:$0xff]
      %v9260 = vld [vmem:[#allocation2 + $0x191] sm:$0xff]
      %v9261 = vld [vmem:[#allocation2 + $0x199] sm:$0xff]
      %v9262 = vld [vmem:[#allocation2 + $0x1a1] sm:$0xff]
      %v9263 = vld [vmem:[#allocation2 + $0x1a9] sm:$0xff]
      %v9264 = vld [vmem:[#allocation2 + $0x1b1] sm:$0xff]
      %v9265 = vld [vmem:[#allocation2 + $0x1b9] sm:$0xff]
      %v9266 = vld [vmem:[#allocation2 + $0x1c1] sm:$0xff]
      %s9267 = scalar_lea.vmem %s3, 1024
      %v9268 = vld [vmem:[%s9267] sm:$0xff]
      %v9269 = vld [vmem:[%s9267 + $0x8] sm:$0xff]
      %v9270 = vld [vmem:[%s9267 + $0x10] sm:$0xff]
      %v9271 = vld [vmem:[%s9267 + $0x18] sm:$0xff]
      %v9272 = vld [vmem:[%s9267 + $0x20] sm:$0xff]
      %v9273 = vld [vmem:[%s9267 + $0x28] sm:$0xff]
      %v9274 = vld [vmem:[%s9267 + $0x30] sm:$0xff]
      %v9275 = vld [vmem:[%s9267 + $0x38] sm:$0xff]
      %v9276 = vld [vmem:[%s9267 + $0x40] sm:$0xff]
      %v9277 = vld [vmem:[%s9267 + $0x48] sm:$0xff]
      %v9278 = vld [vmem:[%s9267 + $0x50] sm:$0xff]
      %v9279 = vld [vmem:[%s9267 + $0x58] sm:$0xff]
      %v9280 = vld [vmem:[%s9267 + $0x60] sm:$0xff]
      %v9281 = vld [vmem:[%s9267 + $0x68] sm:$0xff]
      %v9282 = vld [vmem:[%s9267 + $0x70] sm:$0xff]
      %v9283 = vld [vmem:[%s9267 + $0x78] sm:$0xff]
      %9284 = vmatprep.subr.mxu0 0.0
      %9285 = vmatpush1.msra.mxu0 %v9268
      %9286 = vmatprep.subr.mxu0 0.0
      %9287 = vmatpush1.msra.mxu0 %v9269
      %9288 = vmatprep.subr.mxu0 0.0
      %9289 = vmatpush1.msra.mxu0 %v9270
      %9290 = vmatprep.subr.mxu0 0.0
      %9291 = vmatpush1.msra.mxu0 %v9271
      %9292 = vmatprep.subr.mxu0 0.0
      %9293 = vmatpush1.msra.mxu0 %v9272
      %9294 = vmatprep.subr.mxu0 0.0
      %9295 = vmatpush1.msra.mxu0 %v9273
      %9296 = vmatprep.subr.mxu0 0.0
      %9297 = vmatpush1.msra.mxu0 %v9274
      %9298 = vmatprep.subr.mxu0 0.0
      %9299 = vmatpush1.msra.mxu0 %v9275
      %9300 = vmatprep.subr.mxu0 0.0
      %9301 = vmatpush1.msra.mxu0 %v9276
      %9302 = vmatprep.subr.mxu0 0.0
      %9303 = vmatpush1.msra.mxu0 %v9277
      %9304 = vmatprep.subr.mxu0 0.0
      %9305 = vmatpush1.msra.mxu0 %v9278
      %9306 = vmatprep.subr.mxu0 0.0
      %9307 = vmatpush1.msra.mxu0 %v9279
      %9308 = vmatprep.subr.mxu0 0.0
      %9309 = vmatpush1.msra.mxu0 %v9280
      %9310 = vmatprep.subr.mxu0 0.0
      %9311 = vmatpush1.msra.mxu0 %v9281
      %9312 = vmatprep.subr.mxu0 0.0
      %9313 = vmatpush1.msra.mxu0 %v9282
      %9314 = vmatprep.subr.mxu0 0.0
      %9315 = vmatpush1.msra.mxu0 %v9283
      %9316 = vmatprep.subr.mxu0 0.0
      %9317 = vmatpush1.msra.mxu0 0.0
      %9318 = vmatprep.subr.mxu0 0.0
      %9319 = vmatpush1.msra.mxu0 0.0
      %9320 = vmatprep.subr.mxu0 0.0
      %9321 = vmatpush1.msra.mxu0 0.0
      %9322 = vmatprep.subr.mxu0 0.0
      %9323 = vmatpush1.msra.mxu0 0.0
      %9324 = vmatprep.subr.mxu0 0.0
      %9325 = vmatpush1.msra.mxu0 0.0
      %9326 = vmatprep.subr.mxu0 0.0
      %9327 = vmatpush1.msra.mxu0 0.0
      %9328 = vmatprep.subr.mxu0 0.0
      %9329 = vmatpush1.msra.mxu0 0.0
      %9330 = vmatprep.subr.mxu0 0.0
      %9331 = vmatpush1.msra.mxu0 0.0
      %9332 = vmatprep.subr.mxu0 0.0
      %9333 = vmatpush1.msra.mxu0 0.0
      %9334 = vmatprep.subr.mxu0 0.0
      %9335 = vmatpush1.msra.mxu0 0.0
      %9336 = vmatprep.subr.mxu0 0.0
      %9337 = vmatpush1.msra.mxu0 0.0
      %9338 = vmatprep.subr.mxu0 0.0
      %9339 = vmatpush1.msra.mxu0 0.0
      %9340 = vmatprep.subr.mxu0 0.0
      %9341 = vmatpush1.msra.mxu0 0.0
      %9342 = vmatprep.subr.mxu0 0.0
      %9343 = vmatpush1.msra.mxu0 0.0
      %9344 = vmatprep.subr.mxu0 0.0
      %9345 = vmatpush1.msra.mxu0 0.0
      %9346 = vmatprep.subr.mxu0 0.0
      %9347 = vmatpush1.msra.mxu0 0.0
      %9348 = vmatprep.mubr.f32.mxu0 0.0
      %9349 = vmatmul.mubr.f32.gmra.mrb[0].mxu0 %v9219
      %v9350 = vpop.f32.mrb[0].mxu0
      %v9351 = vadd.f32 0.0, %v9350
      %v9352 = vpop.f32.mrb[0].mxu0
      %9353 = vmatprep.mubr.f32.mxu0 0.0
      %9354 = vmatmul.mubr.f32.gmra.mrb[0].mxu0 %v9220
      %v9355 = vpop.f32.mrb[0].mxu0
      %v9356 = vadd.f32 0.0, %v9355
      %v9357 = vpop.f32.mrb[0].mxu0
      %9358 = vmatprep.mubr.f32.mxu0 0.0
      %9359 = vmatmul.mubr.f32.gmra.mrb[0].mxu0 %v9221
      %v9360 = vpop.f32.mrb[0].mxu0
      %v9361 = vadd.f32 0.0, %v9360
      %v9362 = vpop.f32.mrb[0].mxu0
      %9363 = vmatprep.mubr.f32.mxu0 0.0
      %9364 = vmatmul.mubr.f32.gmra.mrb[0].mxu0 %v9222
      %v9365 = vpop.f32.mrb[0].mxu0
      %v9366 = vadd.f32 0.0, %v9365
      %v9367 = vpop.f32.mrb[0].mxu0
      %9368 = vmatprep.mubr.f32.mxu0 0.0
      %9369 = vmatmul.mubr.f32.gmra.mrb[0].mxu0 %v9223
      %v9370 = vpop.f32.mrb[0].mxu0
      %v9371 = vadd.f32 0.0, %v9370
      %v9372 = vpop.f32.mrb[0].mxu0
      %9373 = vmatprep.mubr.f32.mxu0 0.0
      %9374 = vmatmul.mubr.f32.gmra.mrb[0].mxu0 %v9224
      %v9375 = vpop.f32.mrb[0].mxu0
      %v9376 = vadd.f32 0.0, %v9375
      %v9377 = vpop.f32.mrb[0].mxu0
      %9378 = vmatprep.mubr.f32.mxu0 0.0
      %9379 = vmatmul.mubr.f32.gmra.mrb[0].mxu0 %v9225
      %v9380 = vpop.f32.mrb[0].mxu0
      %v9381 = vadd.f32 0.0, %v9380
      %v9382 = vpop.f32.mrb[0].mxu0
      %9383 = vmatprep.mubr.f32.mxu0 0.0
      %9384 = vmatmul.mubr.f32.gmra.mrb[0].mxu0 %v9226
      %v9385 = vpop.f32.mrb[0].mxu0
      %v9386 = vadd.f32 0.0, %v9385
      %v9387 = vpop.f32.mrb[0].mxu0
      %9388 = vmatprep.mubr.f32.mxu0 0.0
      %9389 = vmatmul.mubr.f32.gmra.mrb[0].mxu0 %v9227
      %v9390 = vpop.f32.mrb[0].mxu0
      %v9391 = vadd.f32 0.0, %v9390
      %v9392 = vpop.f32.mrb[0].mxu0
      %9393 = vmatprep.mubr.f32.mxu0 0.0
      %9394 = vmatmul.mubr.f32.gmra.mrb[0].mxu0 %v9228
      %v9395 = vpop.f32.mrb[0].mxu0
      %v9396 = vadd.f32 0.0, %v9395
      %v9397 = vpop.f32.mrb[0].mxu0
      %9398 = vmatprep.mubr.f32.mxu0 0.0
      %9399 = vmatmul.mubr.f32.gmra.mrb[0].mxu0 %v9229
      %v9400 = vpop.f32.mrb[0].mxu0
      %v9401 = vadd.f32 0.0, %v9400
      %v9402 = vpop.f32.mrb[0].mxu0
      %9403 = vmatprep.mubr.f32.mxu0 0.0
      %9404 = vmatmul.mubr.f32.gmra.mrb[0].mxu0 %v9230
      %v9405 = vpop.f32.mrb[0].mxu0
      %v9406 = vadd.f32 0.0, %v9405
      %v9407 = vpop.f32.mrb[0].mxu0
      %9408 = vmatprep.mubr.f32.mxu0 0.0
      %9409 = vmatmul.mubr.f32.gmra.mrb[0].mxu0 %v9231
      %v9410 = vpop.f32.mrb[0].mxu0
      %v9411 = vadd.f32 0.0, %v9410
      %v9412 = vpop.f32.mrb[0].mxu0
      %9413 = vmatprep.mubr.f32.mxu0 0.0
      %9414 = vmatmul.mubr.f32.gmra.mrb[0].mxu0 %v9232
      %v9415 = vpop.f32.mrb[0].mxu0
      %v9416 = vadd.f32 0.0, %v9415
      %v9417 = vpop.f32.mrb[0].mxu0
      %9418 = vmatprep.mubr.f32.mxu0 0.0
      %9419 = vmatmul.mubr.f32.gmra.mrb[0].mxu0 %v9233
      %v9420 = vpop.f32.mrb[0].mxu0
      %v9421 = vadd.f32 0.0, %v9420
      %v9422 = vpop.f32.mrb[0].mxu0
      %9423 = vmatprep.mubr.f32.mxu0 0.0
      %9424 = vmatmul.mubr.f32.gmra.mrb[0].mxu0 %v9234
      %v9425 = vpop.f32.mrb[0].mxu0
      %v9426 = vadd.f32 0.0, %v9425
      %v9427 = vpop.f32.mrb[0].mxu0
      %9428 = vmatprep.mubr.f32.mxu0 0.0
      %9429 = vmatmul.mubr.f32.gmra.mrb[0].mxu0 %v9235
      %v9430 = vpop.f32.mrb[0].mxu0
      %v9431 = vadd.f32 0.0, %v9430
      %v9432 = vpop.f32.mrb[0].mxu0
      %9433 = vmatprep.mubr.f32.mxu0 0.0
      %9434 = vmatmul.mubr.f32.gmra.mrb[0].mxu0 %v9236
      %v9435 = vpop.f32.mrb[0].mxu0
      %v9436 = vadd.f32 0.0, %v9435
      %v9437 = vpop.f32.mrb[0].mxu0
      %9438 = vmatprep.mubr.f32.mxu0 0.0
      %9439 = vmatmul.mubr.f32.gmra.mrb[0].mxu0 %v9237
      %v9440 = vpop.f32.mrb[0].mxu0
      %v9441 = vadd.f32 0.0, %v9440
      %v9442 = vpop.f32.mrb[0].mxu0
      %9443 = vmatprep.mubr.f32.mxu0 0.0
      %9444 = vmatmul.mubr.f32.gmra.mrb[0].mxu0 %v9238
      %v9445 = vpop.f32.mrb[0].mxu0
      %v9446 = vadd.f32 0.0, %v9445
      %v9447 = vpop.f32.mrb[0].mxu0
      %9448 = vmatprep.mubr.f32.mxu0 0.0
      %9449 = vmatmul.mubr.f32.gmra.mrb[0].mxu0 %v9239
      %v9450 = vpop.f32.mrb[0].mxu0
      %v9451 = vadd.f32 0.0, %v9450
      %v9452 = vpop.f32.mrb[0].mxu0
      %9453 = vmatprep.mubr.f32.mxu0 0.0
      %9454 = vmatmul.mubr.f32.gmra.mrb[0].mxu0 %v9240
      %v9455 = vpop.f32.mrb[0].mxu0
      %v9456 = vadd.f32 0.0, %v9455
      %v9457 = vpop.f32.mrb[0].mxu0
      %9458 = vmatprep.mubr.f32.mxu0 0.0
      %9459 = vmatmul.mubr.f32.gmra.mrb[0].mxu0 %v9241
      %v9460 = vpop.f32.mrb[0].mxu0
      %v9461 = vadd.f32 0.0, %v9460
      %v9462 = vpop.f32.mrb[0].mxu0
      %9463 = vmatprep.mubr.f32.mxu0 0.0
      %9464 = vmatmul.mubr.f32.gmra.mrb[0].mxu0 %v9242
      %v9465 = vpop.f32.mrb[0].mxu0
      %v9466 = vadd.f32 0.0, %v9465
      %v9467 = vpop.f32.mrb[0].mxu0
      %9468 = vmatprep.mubr.f32.mxu0 0.0
      %9469 = vmatmul.mubr.f32.gmra.mrb[0].mxu0 %v9243
      %v9470 = vpop.f32.mrb[0].mxu0
      %v9471 = vadd.f32 0.0, %v9470
      %v9472 = vpop.f32.mrb[0].mxu0
      %9473 = vmatprep.mubr.f32.mxu0 0.0
      %9474 = vmatmul.mubr.f32.gmra.mrb[0].mxu0 %v9244
      %v9475 = vpop.f32.mrb[0].mxu0
      %v9476 = vadd.f32 0.0, %v9475
      %v9477 = vpop.f32.mrb[0].mxu0
      %9478 = vmatprep.mubr.f32.mxu0 0.0
      %9479 = vmatmul.mubr.f32.gmra.mrb[0].mxu0 %v9245
      %v9480 = vpop.f32.mrb[0].mxu0
      %v9481 = vadd.f32 0.0, %v9480
      %v9482 = vpop.f32.mrb[0].mxu0
      %9483 = vmatprep.mubr.f32.mxu0 0.0
      %9484 = vmatmul.mubr.f32.gmra.mrb[0].mxu0 %v9246
      %v9485 = vpop.f32.mrb[0].mxu0
      %v9486 = vadd.f32 0.0, %v9485
      %v9487 = vpop.f32.mrb[0].mxu0
      %9488 = vmatprep.mubr.f32.mxu0 0.0
      %9489 = vmatmul.mubr.f32.gmra.mrb[0].mxu0 %v9247
      %v9490 = vpop.f32.mrb[0].mxu0
      %v9491 = vadd.f32 0.0, %v9490
      %v9492 = vpop.f32.mrb[0].mxu0
      %9493 = vmatprep.mubr.f32.mxu0 0.0
      %9494 = vmatmul.mubr.f32.gmra.mrb[0].mxu0 %v9248
      %v9495 = vpop.f32.mrb[0].mxu0
      %v9496 = vadd.f32 0.0, %v9495
      %v9497 = vpop.f32.mrb[0].mxu0
      %9498 = vmatprep.mubr.f32.mxu0 0.0
      %9499 = vmatmul.mubr.f32.gmra.mrb[0].mxu0 %v9249
      %v9500 = vpop.f32.mrb[0].mxu0
      %v9501 = vadd.f32 0.0, %v9500
      %v9502 = vpop.f32.mrb[0].mxu0
      %9503 = vmatprep.mubr.f32.mxu0 0.0
      %9504 = vmatmul.mubr.f32.gmra.mrb[0].mxu0 %v9250
      %v9505 = vpop.f32.mrb[0].mxu0
      %v9506 = vadd.f32 0.0, %v9505
      %v9507 = vpop.f32.mrb[0].mxu0
      %9508 = vmatprep.mubr.f32.mxu0 0.0
      %9509 = vmatmul.mubr.f32.gmra.mrb[0].mxu0 %v9251
      %v9510 = vpop.f32.mrb[0].mxu0
      %v9511 = vadd.f32 0.0, %v9510
      %v9512 = vpop.f32.mrb[0].mxu0
      %9513 = vmatprep.mubr.f32.mxu0 0.0
      %9514 = vmatmul.mubr.f32.gmra.mrb[0].mxu0 %v9252
      %v9515 = vpop.f32.mrb[0].mxu0
      %v9516 = vadd.f32 0.0, %v9515
      %v9517 = vpop.f32.mrb[0].mxu0
      %9518 = vmatprep.mubr.f32.mxu0 0.0
      %9519 = vmatmul.mubr.f32.gmra.mrb[0].mxu0 %v9253
      %v9520 = vpop.f32.mrb[0].mxu0
      %v9521 = vadd.f32 0.0, %v9520
      %v9522 = vpop.f32.mrb[0].mxu0
      %9523 = vmatprep.mubr.f32.mxu0 0.0
      %9524 = vmatmul.mubr.f32.gmra.mrb[0].mxu0 %v9254
      %v9525 = vpop.f32.mrb[0].mxu0
      %v9526 = vadd.f32 0.0, %v9525
      %v9527 = vpop.f32.mrb[0].mxu0
      %9528 = vmatprep.mubr.f32.mxu0 0.0
      %9529 = vmatmul.mubr.f32.gmra.mrb[0].mxu0 %v9255
      %v9530 = vpop.f32.mrb[0].mxu0
      %v9531 = vadd.f32 0.0, %v9530
      %v9532 = vpop.f32.mrb[0].mxu0
      %9533 = vmatprep.mubr.f32.mxu0 0.0
      %9534 = vmatmul.mubr.f32.gmra.mrb[0].mxu0 %v9256
      %v9535 = vpop.f32.mrb[0].mxu0
      %v9536 = vadd.f32 0.0, %v9535
      %v9537 = vpop.f32.mrb[0].mxu0
      %9538 = vmatprep.mubr.f32.mxu0 0.0
      %9539 = vmatmul.mubr.f32.gmra.mrb[0].mxu0 %v9257
      %v9540 = vpop.f32.mrb[0].mxu0
      %v9541 = vadd.f32 0.0, %v9540
      %v9542 = vpop.f32.mrb[0].mxu0
      %9543 = vmatprep.mubr.f32.mxu0 0.0
      %9544 = vmatmul.mubr.f32.gmra.mrb[0].mxu0 %v9258
      %v9545 = vpop.f32.mrb[0].mxu0
      %v9546 = vadd.f32 0.0, %v9545
      %v9547 = vpop.f32.mrb[0].mxu0
      %9548 = vmatprep.mubr.f32.mxu0 0.0
      %9549 = vmatmul.mubr.f32.gmra.mrb[0].mxu0 %v9259
      %v9550 = vpop.f32.mrb[0].mxu0
      %v9551 = vadd.f32 0.0, %v9550
      %v9552 = vpop.f32.mrb[0].mxu0
      %9553 = vmatprep.mubr.f32.mxu0 0.0
      %9554 = vmatmul.mubr.f32.gmra.mrb[0].mxu0 %v9260
      %v9555 = vpop.f32.mrb[0].mxu0
      %v9556 = vadd.f32 0.0, %v9555
      %v9557 = vpop.f32.mrb[0].mxu0
      %9558 = vmatprep.mubr.f32.mxu0 0.0
      %9559 = vmatmul.mubr.f32.gmra.mrb[0].mxu0 %v9261
      %v9560 = vpop.f32.mrb[0].mxu0
      %v9561 = vadd.f32 0.0, %v9560
      %v9562 = vpop.f32.mrb[0].mxu0
      %9563 = vmatprep.mubr.f32.mxu0 0.0
      %9564 = vmatmul.mubr.f32.gmra.mrb[0].mxu0 %v9262
      %v9565 = vpop.f32.mrb[0].mxu0
      %v9566 = vadd.f32 0.0, %v9565
      %v9567 = vpop.f32.mrb[0].mxu0
      %9568 = vmatprep.mubr.f32.mxu0 0.0
      %9569 = vmatmul.mubr.f32.gmra.mrb[0].mxu0 %v9263
      %v9570 = vpop.f32.mrb[0].mxu0
      %v9571 = vadd.f32 0.0, %v9570
      %v9572 = vpop.f32.mrb[0].mxu0
      %9573 = vmatprep.mubr.f32.mxu0 0.0
      %9574 = vmatmul.mubr.f32.gmra.mrb[0].mxu0 %v9264
      %v9575 = vpop.f32.mrb[0].mxu0
      %v9576 = vadd.f32 0.0, %v9575
      %v9577 = vpop.f32.mrb[0].mxu0
      %9578 = vmatprep.mubr.f32.mxu0 0.0
      %9579 = vmatmul.mubr.f32.gmra.mrb[0].mxu0 %v9265
      %v9580 = vpop.f32.mrb[0].mxu0
      %v9581 = vadd.f32 0.0, %v9580
      %v9582 = vpop.f32.mrb[0].mxu0
      %9583 = vmatprep.mubr.f32.mxu0 0.0
      %9584 = vmatmul.mubr.f32.gmra.mrb[0].mxu0 %v9266
      %v9585 = vpop.f32.mrb[0].mxu0
      %v9586 = vadd.f32 0.0, %v9585
      %v9587 = vpop.f32.mrb[0].mxu0
      %9588 = vdwg.mxu0
      %v9589 = vadd.f32 %v9171, %v9351
      %v9590 = vadd.f32 %v9172, %v9356
      %v9591 = vadd.f32 %v9173, %v9361
      %v9592 = vadd.f32 %v9174, %v9366
      %v9593 = vadd.f32 %v9175, %v9371
      %v9594 = vadd.f32 %v9176, %v9376
      %v9595 = vadd.f32 %v9177, %v9381
      %v9596 = vadd.f32 %v9178, %v9386
      %v9597 = vadd.f32 %v9179, %v9391
      %v9598 = vadd.f32 %v9180, %v9396
      %v9599 = vadd.f32 %v9181, %v9401
      %v9600 = vadd.f32 %v9182, %v9406
      %v9601 = vadd.f32 %v9183, %v9411
      %v9602 = vadd.f32 %v9184, %v9416
      %v9603 = vadd.f32 %v9185, %v9421
      %v9604 = vadd.f32 %v9186, %v9426
      %v9605 = vadd.f32 %v9187, %v9431
      %v9606 = vadd.f32 %v9188, %v9436
      %v9607 = vadd.f32 %v9189, %v9441
      %v9608 = vadd.f32 %v9190, %v9446
      %v9609 = vadd.f32 %v9191, %v9451
      %v9610 = vadd.f32 %v9192, %v9456
      %v9611 = vadd.f32 %v9193, %v9461
      %v9612 = vadd.f32 %v9194, %v9466
      %v9613 = vadd.f32 %v9195, %v9471
      %v9614 = vadd.f32 %v9196, %v9476
      %v9615 = vadd.f32 %v9197, %v9481
      %v9616 = vadd.f32 %v9198, %v9486
      %v9617 = vadd.f32 %v9199, %v9491
      %v9618 = vadd.f32 %v9200, %v9496
      %v9619 = vadd.f32 %v9201, %v9501
      %v9620 = vadd.f32 %v9202, %v9506
      %v9621 = vadd.f32 %v9203, %v9511
      %v9622 = vadd.f32 %v9204, %v9516
      %v9623 = vadd.f32 %v9205, %v9521
      %v9624 = vadd.f32 %v9206, %v9526
      %v9625 = vadd.f32 %v9207, %v9531
      %v9626 = vadd.f32 %v9208, %v9536
      %v9627 = vadd.f32 %v9209, %v9541
      %v9628 = vadd.f32 %v9210, %v9546
      %v9629 = vadd.f32 %v9211, %v9551
      %v9630 = vadd.f32 %v9212, %v9556
      %v9631 = vadd.f32 %v9213, %v9561
      %v9632 = vadd.f32 %v9214, %v9566
      %v9633 = vadd.f32 %v9215, %v9571
      %v9634 = vadd.f32 %v9216, %v9576
      %v9635 = vadd.f32 %v9217, %v9581
      %v9636 = vadd.f32 %v9218, %v9586
      %v9637 = vmul.f32 %v9589, %v5037
      %v9638 = vmul.f32 %v9590, %v5042
      %v9639 = vmul.f32 %v9591, %v5047
      %v9640 = vmul.f32 %v9592, %v5052
      %v9641 = vmul.f32 %v9593, %v5057
      %v9642 = vmul.f32 %v9594, %v5062
      %v9643 = vmul.f32 %v9595, %v5067
      %v9644 = vmul.f32 %v9596, %v5072
      %v9645 = vmul.f32 %v9597, %v5077
      %v9646 = vmul.f32 %v9598, %v5082
      %v9647 = vmul.f32 %v9599, %v5087
      %v9648 = vmul.f32 %v9600, %v5092
      %v9649 = vmul.f32 %v9601, %v5097
      %v9650 = vmul.f32 %v9602, %v5102
      %v9651 = vmul.f32 %v9603, %v5107
      %v9652 = vmul.f32 %v9604, %v5112
      %v9653 = vmul.f32 %v9605, %v5117
      %v9654 = vmul.f32 %v9606, %v5122
      %v9655 = vmul.f32 %v9607, %v5127
      %v9656 = vmul.f32 %v9608, %v5132
      %v9657 = vmul.f32 %v9609, %v5137
      %v9658 = vmul.f32 %v9610, %v5142
      %v9659 = vmul.f32 %v9611, %v5147
      %v9660 = vmul.f32 %v9612, %v5152
      %v9661 = vmul.f32 %v9613, %v5157
      %v9662 = vmul.f32 %v9614, %v5162
      %v9663 = vmul.f32 %v9615, %v5167
      %v9664 = vmul.f32 %v9616, %v5172
      %v9665 = vmul.f32 %v9617, %v5177
      %v9666 = vmul.f32 %v9618, %v5182
      %v9667 = vmul.f32 %v9619, %v5187
      %v9668 = vmul.f32 %v9620, %v5192
      %v9669 = vmul.f32 %v9621, %v5197
      %v9670 = vmul.f32 %v9622, %v5202
      %v9671 = vmul.f32 %v9623, %v5207
      %v9672 = vmul.f32 %v9624, %v5212
      %v9673 = vmul.f32 %v9625, %v5217
      %v9674 = vmul.f32 %v9626, %v5222
      %v9675 = vmul.f32 %v9627, %v5227
      %v9676 = vmul.f32 %v9628, %v5232
      %v9677 = vmul.f32 %v9629, %v5237
      %v9678 = vmul.f32 %v9630, %v5242
      %v9679 = vmul.f32 %v9631, %v5247
      %v9680 = vmul.f32 %v9632, %v5252
      %v9681 = vmul.f32 %v9633, %v5257
      %v9682 = vmul.f32 %v9634, %v5262
      %v9683 = vmul.f32 %v9635, %v5267
      %v9684 = vmul.f32 %v9636, %v5272
      %v9685 = vadd.f32 %v9637, %v9638
      %v9686 = vadd.f32 %v9685, %v9639
      %v9687 = vadd.f32 %v9686, %v9640
      %v9688 = vadd.f32 %v9687, %v9641
      %v9689 = vadd.f32 %v9688, %v9642
      %v9690 = vadd.f32 %v9689, %v9643
      %v9691 = vadd.f32 %v9690, %v9644
      %v9692 = vadd.f32 %v9691, %v9645
      %v9693 = vadd.f32 %v9692, %v9646
      %v9694 = vadd.f32 %v9693, %v9647
      %v9695 = vadd.f32 %v9694, %v9648
      %v9696 = vadd.f32 %v9695, %v9649
      %v9697 = vadd.f32 %v9696, %v9650
      %v9698 = vadd.f32 %v9697, %v9651
      %v9699 = vadd.f32 %v9698, %v9652
      %v9700 = vadd.f32 %v9699, %v9653
      %v9701 = vadd.f32 %v9700, %v9654
      %v9702 = vadd.f32 %v9701, %v9655
      %v9703 = vadd.f32 %v9702, %v9656
      %v9704 = vadd.f32 %v9703, %v9657
      %v9705 = vadd.f32 %v9704, %v9658
      %v9706 = vadd.f32 %v9705, %v9659
      %v9707 = vadd.f32 %v9706, %v9660
      %v9708 = vadd.f32 %v9707, %v9661
      %v9709 = vadd.f32 %v9708, %v9662
      %v9710 = vadd.f32 %v9709, %v9663
      %v9711 = vadd.f32 %v9710, %v9664
      %v9712 = vadd.f32 %v9711, %v9665
      %v9713 = vadd.f32 %v9712, %v9666
      %v9714 = vadd.f32 %v9713, %v9667
      %v9715 = vadd.f32 %v9714, %v9668
      %v9716 = vadd.f32 %v9715, %v9669
      %v9717 = vadd.f32 %v9716, %v9670
      %v9718 = vadd.f32 %v9717, %v9671
      %v9719 = vadd.f32 %v9718, %v9672
      %v9720 = vadd.f32 %v9719, %v9673
      %v9721 = vadd.f32 %v9720, %v9674
      %v9722 = vadd.f32 %v9721, %v9675
      %v9723 = vadd.f32 %v9722, %v9676
      %v9724 = vadd.f32 %v9723, %v9677
      %v9725 = vadd.f32 %v9724, %v9678
      %v9726 = vadd.f32 %v9725, %v9679
      %v9727 = vadd.f32 %v9726, %v9680
      %v9728 = vadd.f32 %v9727, %v9681
      %v9729 = vadd.f32 %v9728, %v9682
      %v9730 = vadd.f32 %v9729, %v9683
      %v9731 = vadd.f32 %v9730, %v9684
      %v9732 = vrot.slane %v9731, 4
      %v9733 = vadd.f32 %v9731, %v9732
      %v9734 = vrot.slane %v9733, 2
      %v9735 = vadd.f32 %v9733, %v9734
      %v9736 = vrot.slane %v9735, 1
      %v9737 = vadd.f32 %v9735, %v9736
      %v9738 = vmul.f32 %v9637, %v9589
      %v9739 = vmul.f32 %v9638, %v9590
      %v9740 = vmul.f32 %v9639, %v9591
      %v9741 = vmul.f32 %v9640, %v9592
      %v9742 = vmul.f32 %v9641, %v9593
      %v9743 = vmul.f32 %v9642, %v9594
      %v9744 = vmul.f32 %v9643, %v9595
      %v9745 = vmul.f32 %v9644, %v9596
      %v9746 = vmul.f32 %v9645, %v9597
      %v9747 = vmul.f32 %v9646, %v9598
      %v9748 = vmul.f32 %v9647, %v9599
      %v9749 = vmul.f32 %v9648, %v9600
      %v9750 = vmul.f32 %v9649, %v9601
      %v9751 = vmul.f32 %v9650, %v9602
      %v9752 = vmul.f32 %v9651, %v9603
      %v9753 = vmul.f32 %v9652, %v9604
      %v9754 = vmul.f32 %v9653, %v9605
      %v9755 = vmul.f32 %v9654, %v9606
      %v9756 = vmul.f32 %v9655, %v9607
      %v9757 = vmul.f32 %v9656, %v9608
      %v9758 = vmul.f32 %v9657, %v9609
      %v9759 = vmul.f32 %v9658, %v9610
      %v9760 = vmul.f32 %v9659, %v9611
      %v9761 = vmul.f32 %v9660, %v9612
      %v9762 = vmul.f32 %v9661, %v9613
      %v9763 = vmul.f32 %v9662, %v9614
      %v9764 = vmul.f32 %v9663, %v9615
      %v9765 = vmul.f32 %v9664, %v9616
      %v9766 = vmul.f32 %v9665, %v9617
      %v9767 = vmul.f32 %v9666, %v9618
      %v9768 = vmul.f32 %v9667, %v9619
      %v9769 = vmul.f32 %v9668, %v9620
      %v9770 = vmul.f32 %v9669, %v9621
      %v9771 = vmul.f32 %v9670, %v9622
      %v9772 = vmul.f32 %v9671, %v9623
      %v9773 = vmul.f32 %v9672, %v9624
      %v9774 = vmul.f32 %v9673, %v9625
      %v9775 = vmul.f32 %v9674, %v9626
      %v9776 = vmul.f32 %v9675, %v9627
      %v9777 = vmul.f32 %v9676, %v9628
      %v9778 = vmul.f32 %v9677, %v9629
      %v9779 = vmul.f32 %v9678, %v9630
      %v9780 = vmul.f32 %v9679, %v9631
      %v9781 = vmul.f32 %v9680, %v9632
      %v9782 = vmul.f32 %v9681, %v9633
      %v9783 = vmul.f32 %v9682, %v9634
      %v9784 = vmul.f32 %v9683, %v9635
      %v9785 = vmul.f32 %v9684, %v9636
      %v9786 = vadd.f32 %v9738, %v9739
      %v9787 = vadd.f32 %v9786, %v9740
      %v9788 = vadd.f32 %v9787, %v9741
      %v9789 = vadd.f32 %v9788, %v9742
      %v9790 = vadd.f32 %v9789, %v9743
      %v9791 = vadd.f32 %v9790, %v9744
      %v9792 = vadd.f32 %v9791, %v9745
      %v9793 = vadd.f32 %v9792, %v9746
      %v9794 = vadd.f32 %v9793, %v9747
      %v9795 = vadd.f32 %v9794, %v9748
      %v9796 = vadd.f32 %v9795, %v9749
      %v9797 = vadd.f32 %v9796, %v9750
      %v9798 = vadd.f32 %v9797, %v9751
      %v9799 = vadd.f32 %v9798, %v9752
      %v9800 = vadd.f32 %v9799, %v9753
      %v9801 = vadd.f32 %v9800, %v9754
      %v9802 = vadd.f32 %v9801, %v9755
      %v9803 = vadd.f32 %v9802, %v9756
      %v9804 = vadd.f32 %v9803, %v9757
      %v9805 = vadd.f32 %v9804, %v9758
      %v9806 = vadd.f32 %v9805, %v9759
      %v9807 = vadd.f32 %v9806, %v9760
      %v9808 = vadd.f32 %v9807, %v9761
      %v9809 = vadd.f32 %v9808, %v9762
      %v9810 = vadd.f32 %v9809, %v9763
      %v9811 = vadd.f32 %v9810, %v9764
      %v9812 = vadd.f32 %v9811, %v9765
      %v9813 = vadd.f32 %v9812, %v9766
      %v9814 = vadd.f32 %v9813, %v9767
      %v9815 = vadd.f32 %v9814, %v9768
      %v9816 = vadd.f32 %v9815, %v9769
      %v9817 = vadd.f32 %v9816, %v9770
      %v9818 = vadd.f32 %v9817, %v9771
      %v9819 = vadd.f32 %v9818, %v9772
      %v9820 = vadd.f32 %v9819, %v9773
      %v9821 = vadd.f32 %v9820, %v9774
      %v9822 = vadd.f32 %v9821, %v9775
      %v9823 = vadd.f32 %v9822, %v9776
      %v9824 = vadd.f32 %v9823, %v9777
      %v9825 = vadd.f32 %v9824, %v9778
      %v9826 = vadd.f32 %v9825, %v9779
      %v9827 = vadd.f32 %v9826, %v9780
      %v9828 = vadd.f32 %v9827, %v9781
      %v9829 = vadd.f32 %v9828, %v9782
      %v9830 = vadd.f32 %v9829, %v9783
      %v9831 = vadd.f32 %v9830, %v9784
      %v9832 = vadd.f32 %v9831, %v9785
      %v9833 = vrot.slane %v9832, 4
      %v9834 = vadd.f32 %v9832, %v9833
      %v9835 = vrot.slane %v9834, 2
      %v9836 = vadd.f32 %v9834, %v9835
      %v9837 = vrot.slane %v9836, 1
      %v9838 = vadd.f32 %v9836, %v9837
      %v9839 = vmul.f32 %v9737, 0.00390625
      %v9840 = vmul.f32 %v9838, 0.00390625
      %v9841 = vmul.f32 %v9839, %v9839
      %v9842 = vsub.f32 %v9840, %v9841
      %v9843 = vmax.f32 %v9842, 0.0
      %v9844 = vsub.f32 %v9589, %v9839
      %v9845 = vsub.f32 %v9590, %v9839
      %v9846 = vsub.f32 %v9591, %v9839
      %v9847 = vsub.f32 %v9592, %v9839
      %v9848 = vsub.f32 %v9593, %v9839
      %v9849 = vsub.f32 %v9594, %v9839
      %v9850 = vsub.f32 %v9595, %v9839
      %v9851 = vsub.f32 %v9596, %v9839
      %v9852 = vsub.f32 %v9597, %v9839
      %v9853 = vsub.f32 %v9598, %v9839
      %v9854 = vsub.f32 %v9599, %v9839
      %v9855 = vsub.f32 %v9600, %v9839
      %v9856 = vsub.f32 %v9601, %v9839
      %v9857 = vsub.f32 %v9602, %v9839
      %v9858 = vsub.f32 %v9603, %v9839
      %v9859 = vsub.f32 %v9604, %v9839
      %v9860 = vsub.f32 %v9605, %v9839
      %v9861 = vsub.f32 %v9606, %v9839
      %v9862 = vsub.f32 %v9607, %v9839
      %v9863 = vsub.f32 %v9608, %v9839
      %v9864 = vsub.f32 %v9609, %v9839
      %v9865 = vsub.f32 %v9610, %v9839
      %v9866 = vsub.f32 %v9611, %v9839
      %v9867 = vsub.f32 %v9612, %v9839
      %v9868 = vsub.f32 %v9613, %v9839
      %v9869 = vsub.f32 %v9614, %v9839
      %v9870 = vsub.f32 %v9615, %v9839
      %v9871 = vsub.f32 %v9616, %v9839
      %v9872 = vsub.f32 %v9617, %v9839
      %v9873 = vsub.f32 %v9618, %v9839
      %v9874 = vsub.f32 %v9619, %v9839
      %v9875 = vsub.f32 %v9620, %v9839
      %v9876 = vsub.f32 %v9621, %v9839
      %v9877 = vsub.f32 %v9622, %v9839
      %v9878 = vsub.f32 %v9623, %v9839
      %v9879 = vsub.f32 %v9624, %v9839
      %v9880 = vsub.f32 %v9625, %v9839
      %v9881 = vsub.f32 %v9626, %v9839
      %v9882 = vsub.f32 %v9627, %v9839
      %v9883 = vsub.f32 %v9628, %v9839
      %v9884 = vsub.f32 %v9629, %v9839
      %v9885 = vsub.f32 %v9630, %v9839
      %v9886 = vsub.f32 %v9631, %v9839
      %v9887 = vsub.f32 %v9632, %v9839
      %v9888 = vsub.f32 %v9633, %v9839
      %v9889 = vsub.f32 %v9634, %v9839
      %v9890 = vsub.f32 %v9635, %v9839
      %v9891 = vsub.f32 %v9636, %v9839
      %v9892 = vadd.f32 %v9843, 1e-05
      %v9893 = vrsqrt.pop %v9892
      %v9894 = vmul.f32 %v9844, %v9893
      %v9895 = vmul.f32 %v9845, %v9893
      %v9896 = vmul.f32 %v9846, %v9893
      %v9897 = vmul.f32 %v9847, %v9893
      %v9898 = vmul.f32 %v9848, %v9893
      %v9899 = vmul.f32 %v9849, %v9893
      %v9900 = vmul.f32 %v9850, %v9893
      %v9901 = vmul.f32 %v9851, %v9893
      %v9902 = vmul.f32 %v9852, %v9893
      %v9903 = vmul.f32 %v9853, %v9893
      %v9904 = vmul.f32 %v9854, %v9893
      %v9905 = vmul.f32 %v9855, %v9893
      %v9906 = vmul.f32 %v9856, %v9893
      %v9907 = vmul.f32 %v9857, %v9893
      %v9908 = vmul.f32 %v9858, %v9893
      %v9909 = vmul.f32 %v9859, %v9893
      %v9910 = vmul.f32 %v9860, %v9893
      %v9911 = vmul.f32 %v9861, %v9893
      %v9912 = vmul.f32 %v9862, %v9893
      %v9913 = vmul.f32 %v9863, %v9893
      %v9914 = vmul.f32 %v9864, %v9893
      %v9915 = vmul.f32 %v9865, %v9893
      %v9916 = vmul.f32 %v9866, %v9893
      %v9917 = vmul.f32 %v9867, %v9893
      %v9918 = vmul.f32 %v9868, %v9893
      %v9919 = vmul.f32 %v9869, %v9893
      %v9920 = vmul.f32 %v9870, %v9893
      %v9921 = vmul.f32 %v9871, %v9893
      %v9922 = vmul.f32 %v9872, %v9893
      %v9923 = vmul.f32 %v9873, %v9893
      %v9924 = vmul.f32 %v9874, %v9893
      %v9925 = vmul.f32 %v9875, %v9893
      %v9926 = vmul.f32 %v9876, %v9893
      %v9927 = vmul.f32 %v9877, %v9893
      %v9928 = vmul.f32 %v9878, %v9893
      %v9929 = vmul.f32 %v9879, %v9893
      %v9930 = vmul.f32 %v9880, %v9893
      %v9931 = vmul.f32 %v9881, %v9893
      %v9932 = vmul.f32 %v9882, %v9893
      %v9933 = vmul.f32 %v9883, %v9893
      %v9934 = vmul.f32 %v9884, %v9893
      %v9935 = vmul.f32 %v9885, %v9893
      %v9936 = vmul.f32 %v9886, %v9893
      %v9937 = vmul.f32 %v9887, %v9893
      %v9938 = vmul.f32 %v9888, %v9893
      %v9939 = vmul.f32 %v9889, %v9893
      %v9940 = vmul.f32 %v9890, %v9893
      %v9941 = vmul.f32 %v9891, %v9893
      %v9942 = vld [vmem:[%s192] sm:$0xff]
      %v9943 = vld [vmem:[%s192 + $0x8] sm:$0xff]
      %v9944 = vld [vmem:[%s192 + $0x10] sm:$0xff]
      %v9945 = vld [vmem:[%s192 + $0x18] sm:$0xff]
      %v9946 = vld [vmem:[%s192 + $0x20] sm:$0xff]
      %v9947 = vld [vmem:[%s192 + $0x28] sm:$0xff]
      %v9948 = vld [vmem:[%s192 + $0x30] sm:$0xff]
      %v9949 = vld [vmem:[%s192 + $0x38] sm:$0xff]
      %v9950 = vld [vmem:[%s192 + $0x40] sm:$0xff]
      %v9951 = vld [vmem:[%s192 + $0x48] sm:$0xff]
      %v9952 = vld [vmem:[%s192 + $0x50] sm:$0xff]
      %v9953 = vld [vmem:[%s192 + $0x58] sm:$0xff]
      %v9954 = vld [vmem:[%s192 + $0x60] sm:$0xff]
      %v9955 = vld [vmem:[%s192 + $0x68] sm:$0xff]
      %v9956 = vld [vmem:[%s192 + $0x70] sm:$0xff]
      %v9957 = vld [vmem:[%s192 + $0x78] sm:$0xff]
      %v9958 = vld [vmem:[%s192 + $0x80] sm:$0xff]
      %v9959 = vld [vmem:[%s192 + $0x88] sm:$0xff]
      %v9960 = vld [vmem:[%s192 + $0x90] sm:$0xff]
      %v9961 = vld [vmem:[%s192 + $0x98] sm:$0xff]
      %v9962 = vld [vmem:[%s192 + $0xa0] sm:$0xff]
      %v9963 = vld [vmem:[%s192 + $0xa8] sm:$0xff]
      %v9964 = vld [vmem:[%s192 + $0xb0] sm:$0xff]
      %v9965 = vld [vmem:[%s192 + $0xb8] sm:$0xff]
      %v9966 = vld [vmem:[%s192 + $0xc0] sm:$0xff]
      %v9967 = vld [vmem:[%s192 + $0xc8] sm:$0xff]
      %v9968 = vld [vmem:[%s192 + $0xd0] sm:$0xff]
      %v9969 = vld [vmem:[%s192 + $0xd8] sm:$0xff]
      %v9970 = vld [vmem:[%s192 + $0xe0] sm:$0xff]
      %v9971 = vld [vmem:[%s192 + $0xe8] sm:$0xff]
      %v9972 = vld [vmem:[%s192 + $0xf0] sm:$0xff]
      %v9973 = vld [vmem:[%s192 + $0xf8] sm:$0xff]
      %v9974 = vld [vmem:[%s192 + $0x100] sm:$0xff]
      %v9975 = vld [vmem:[%s192 + $0x108] sm:$0xff]
      %v9976 = vld [vmem:[%s192 + $0x110] sm:$0xff]
      %v9977 = vld [vmem:[%s192 + $0x118] sm:$0xff]
      %v9978 = vld [vmem:[%s192 + $0x120] sm:$0xff]
      %v9979 = vld [vmem:[%s192 + $0x128] sm:$0xff]
      %v9980 = vld [vmem:[%s192 + $0x130] sm:$0xff]
      %v9981 = vld [vmem:[%s192 + $0x138] sm:$0xff]
      %v9982 = vld [vmem:[%s192 + $0x140] sm:$0xff]
      %v9983 = vld [vmem:[%s192 + $0x148] sm:$0xff]
      %v9984 = vld [vmem:[%s192 + $0x150] sm:$0xff]
      %v9985 = vld [vmem:[%s192 + $0x158] sm:$0xff]
      %v9986 = vld [vmem:[%s192 + $0x160] sm:$0xff]
      %v9987 = vld [vmem:[%s192 + $0x168] sm:$0xff]
      %v9988 = vld [vmem:[%s192 + $0x170] sm:$0xff]
      %v9989 = vld [vmem:[%s192 + $0x178] sm:$0xff]
      %v9990 = vadd.f32 %v9942, %v9894
      %v9991 = vadd.f32 %v9943, %v9895
      %v9992 = vadd.f32 %v9944, %v9896
      %v9993 = vadd.f32 %v9945, %v9897
      %v9994 = vadd.f32 %v9946, %v9898
      %v9995 = vadd.f32 %v9947, %v9899
      %v9996 = vadd.f32 %v9948, %v9900
      %v9997 = vadd.f32 %v9949, %v9901
      %v9998 = vadd.f32 %v9950, %v9902
      %v9999 = vadd.f32 %v9951, %v9903
      %v10000 = vadd.f32 %v9952, %v9904
      %v10001 = vadd.f32 %v9953, %v9905
      %v10002 = vadd.f32 %v9954, %v9906
      %v10003 = vadd.f32 %v9955, %v9907
      %v10004 = vadd.f32 %v9956, %v9908
      %v10005 = vadd.f32 %v9957, %v9909
      %v10006 = vadd.f32 %v9958, %v9910
      %v10007 = vadd.f32 %v9959, %v9911
      %v10008 = vadd.f32 %v9960, %v9912
      %v10009 = vadd.f32 %v9961, %v9913
      %v10010 = vadd.f32 %v9962, %v9914
      %v10011 = vadd.f32 %v9963, %v9915
      %v10012 = vadd.f32 %v9964, %v9916
      %v10013 = vadd.f32 %v9965, %v9917
      %v10014 = vadd.f32 %v9966, %v9918
      %v10015 = vadd.f32 %v9967, %v9919
      %v10016 = vadd.f32 %v9968, %v9920
      %v10017 = vadd.f32 %v9969, %v9921
      %v10018 = vadd.f32 %v9970, %v9922
      %v10019 = vadd.f32 %v9971, %v9923
      %v10020 = vadd.f32 %v9972, %v9924
      %v10021 = vadd.f32 %v9973, %v9925
      %v10022 = vadd.f32 %v9974, %v9926
      %v10023 = vadd.f32 %v9975, %v9927
      %v10024 = vadd.f32 %v9976, %v9928
      %v10025 = vadd.f32 %v9977, %v9929
      %v10026 = vadd.f32 %v9978, %v9930
      %v10027 = vadd.f32 %v9979, %v9931
      %v10028 = vadd.f32 %v9980, %v9932
      %v10029 = vadd.f32 %v9981, %v9933
      %v10030 = vadd.f32 %v9982, %v9934
      %v10031 = vadd.f32 %v9983, %v9935
      %v10032 = vadd.f32 %v9984, %v9936
      %v10033 = vadd.f32 %v9985, %v9937
      %v10034 = vadd.f32 %v9986, %v9938
      %v10035 = vadd.f32 %v9987, %v9939
      %v10036 = vadd.f32 %v9988, %v9940
      %v10037 = vadd.f32 %v9989, %v9941
      %10038 = vst [vmem:[%s197] sm:$0xff] %v9990
      %10039 = vst [vmem:[%s197 + $0x8] sm:$0xff] %v9991
      %10040 = vst [vmem:[%s197 + $0x10] sm:$0xff] %v9992
      %10041 = vst [vmem:[%s197 + $0x18] sm:$0xff] %v9993
      %10042 = vst [vmem:[%s197 + $0x20] sm:$0xff] %v9994
      %10043 = vst [vmem:[%s197 + $0x28] sm:$0xff] %v9995
      %10044 = vst [vmem:[%s197 + $0x30] sm:$0xff] %v9996
      %10045 = vst [vmem:[%s197 + $0x38] sm:$0xff] %v9997
      %10046 = vst [vmem:[%s197 + $0x40] sm:$0xff] %v9998
      %10047 = vst [vmem:[%s197 + $0x48] sm:$0xff] %v9999
      %10048 = vst [vmem:[%s197 + $0x50] sm:$0xff] %v10000
      %10049 = vst [vmem:[%s197 + $0x58] sm:$0xff] %v10001
      %10050 = vst [vmem:[%s197 + $0x60] sm:$0xff] %v10002
      %10051 = vst [vmem:[%s197 + $0x68] sm:$0xff] %v10003
      %10052 = vst [vmem:[%s197 + $0x70] sm:$0xff] %v10004
      %10053 = vst [vmem:[%s197 + $0x78] sm:$0xff] %v10005
      %10054 = vst [vmem:[%s197 + $0x80] sm:$0xff] %v10006
      %10055 = vst [vmem:[%s197 + $0x88] sm:$0xff] %v10007
      %10056 = vst [vmem:[%s197 + $0x90] sm:$0xff] %v10008
      %10057 = vst [vmem:[%s197 + $0x98] sm:$0xff] %v10009
      %10058 = vst [vmem:[%s197 + $0xa0] sm:$0xff] %v10010
      %10059 = vst [vmem:[%s197 + $0xa8] sm:$0xff] %v10011
      %10060 = vst [vmem:[%s197 + $0xb0] sm:$0xff] %v10012
      %10061 = vst [vmem:[%s197 + $0xb8] sm:$0xff] %v10013
      %10062 = vst [vmem:[%s197 + $0xc0] sm:$0xff] %v10014
      %10063 = vst [vmem:[%s197 + $0xc8] sm:$0xff] %v10015
      %10064 = vst [vmem:[%s197 + $0xd0] sm:$0xff] %v10016
      %10065 = vst [vmem:[%s197 + $0xd8] sm:$0xff] %v10017
      %10066 = vst [vmem:[%s197 + $0xe0] sm:$0xff] %v10018
      %10067 = vst [vmem:[%s197 + $0xe8] sm:$0xff] %v10019
      %10068 = vst [vmem:[%s197 + $0xf0] sm:$0xff] %v10020
      %10069 = vst [vmem:[%s197 + $0xf8] sm:$0xff] %v10021
      %10070 = vst [vmem:[%s197 + $0x100] sm:$0xff] %v10022
      %10071 = vst [vmem:[%s197 + $0x108] sm:$0xff] %v10023
      %10072 = vst [vmem:[%s197 + $0x110] sm:$0xff] %v10024
      %10073 = vst [vmem:[%s197 + $0x118] sm:$0xff] %v10025
      %10074 = vst [vmem:[%s197 + $0x120] sm:$0xff] %v10026
      %10075 = vst [vmem:[%s197 + $0x128] sm:$0xff] %v10027
      %10076 = vst [vmem:[%s197 + $0x130] sm:$0xff] %v10028
      %10077 = vst [vmem:[%s197 + $0x138] sm:$0xff] %v10029
      %10078 = vst [vmem:[%s197 + $0x140] sm:$0xff] %v10030
      %10079 = vst [vmem:[%s197 + $0x148] sm:$0xff] %v10031
      %10080 = vst [vmem:[%s197 + $0x150] sm:$0xff] %v10032
      %10081 = vst [vmem:[%s197 + $0x158] sm:$0xff] %v10033
      %10082 = vst [vmem:[%s197 + $0x160] sm:$0xff] %v10034
      %10083 = vst [vmem:[%s197 + $0x168] sm:$0xff] %v10035
      %10084 = vst [vmem:[%s197 + $0x170] sm:$0xff] %v10036
      %10085 = vst [vmem:[%s197 + $0x178] sm:$0xff] %v10037
      %p10086 = scmp.lt.s32.totalorder %s15, 1
      %s10087 = scalar_select %p10086, %s15, 1
      %s10088 = smul.addr %s10087, 48
      %s10089 = smul.addr %s10088, 8
      %s10090 = scalar_lea.vmem %s4, %s10089
      // Predicated region
      $region37: #{resnet_block_forward.1} parent=35 // pred_check
        %p10091 = pneg %p122
      $region38: #{resnet_block_forward.1} parent=35 // pred_check_branch
        %10093 = sbr.rel (%p10091) target = $region40
      $region39: #{resnet_block_forward.1} parent=35 // pred_region
        _
      $region40: #{resnet_block_forward.1} parent=35 // pred_fallthru
        _
    $region36: #{resnet_block_forward.1} parent=5 // pred_fallthru
      _
    %p10094 = scmp.le.s32.totalorder 2, %s10
    // Predicated region
    $region41: #{resnet_block_forward.1} parent=5 // pred_check
      %p10095 = pneg %p10094
    $region42: #{resnet_block_forward.1} parent=5 // pred_check_branch
      %10097 = sbr.rel (%p10095) target = $region44
    $region43: #{resnet_block_forward.1} parent=5 // pred_region
      %s10098 = ssub.s32 %s10, 2
      // Predicated region
      $region45: #{resnet_block_forward.1} parent=43 // pred_check
        %p10099 = pneg %p128
      $region46: #{resnet_block_forward.1} parent=43 // pred_check_branch
        %10101 = sbr.rel (%p10099) target = $region48
      $region47: #{resnet_block_forward.1} parent=43 // pred_region
        %p10102 = scmp.lt.s32.totalorder %s16, 1
        %s10103 = scalar_select %p10102, %s16, 1
        %s10104 = smul.addr %s10103, 48
        %s10105 = smul.addr %s10104, 8
        %s10106 = scalar_lea.vmem %s4, %s10105
      $region48: #{resnet_block_forward.1} parent=43 // pred_fallthru
        _
    $region44: #{resnet_block_forward.1} parent=5 // pred_fallthru
      _
  $region6: #{resnet_block_forward.1} parent=0 // loop_footer
    %s14 = sadd.s32 1, %s10
  $region7: #{resnet_block_forward.1} parent=0 // loop_footer_branch
    %9 = sbr.rel target = $region3
  $region8: #{resnet_block_forward.1} parent=0 // loop_exit
    _

</llo_original>
